<compile_context>
chip_gen: v5e
topology: v5e:2x2
jax: 0.10.0
libtpu: 0.0.40
codegen_flags: <defaults>
</compile_context>

<pallas_src>
import jax
import jax.numpy as jnp
from jax.experimental import pallas as pl
from jax.experimental.pallas import tpu as pltpu

EPS = 1e-5
CP = 128  # lane-padded channel count (one full 128-lane vreg width)


def _full_spec(shape):
    """BlockSpec covering the whole array (single grid step)."""
    nd = len(shape)
    return pl.BlockSpec(shape, lambda *_: (0,) * nd)


def _basic_block_kernel(x_ref, w1_ref, g1_ref, b1_ref, w2_ref, g2_ref, b2_ref,
                        o_ref, xpad_ref):
    """Fused conv1+bn1+relu -> conv2+bn2+add+relu, all resident in VMEM.

    x_ref   : (N, H, W, CP)     f32   NHWC input, channels zero-padded to CP
    w*_ref  : (9*CP, CP)        bf16  im2col-flattened, channel-padded weights
    g*,b*   : (1, CP)           f32   BN gamma/beta, channel-padded with zeros
    o_ref   : (N, H, W, CP)     f32   lane-dense output (first C channels valid)
    xpad_ref: (N, H+2, W+2, CP) f32   VMEM halo scratch, reused by both stages
    """
    N, H, W, CPk = x_ref.shape
    M = N * H * W
    inv_m = 1.0 / float(M)

    # Zero the halo scratch once; the 1-pixel spatial border stays zero for
    # both stages (we only ever overwrite the interior).
    xpad_ref[...] = jnp.zeros_like(xpad_ref)

    # Stage-1 input: lane-dense x written into the interior of the halo buffer
    # (in-kernel spatial padding, no XLA pad round trip).
    x_val = x_ref[...]
    xpad_ref[:, 1:H + 1, 1:W + 1, :] = x_val

    def conv3x3_bn(w_flat_ref, g_ref, b_ref):
        """3x3 conv (pad=1, stride=1, no bias) + training-mode BatchNorm."""
        xp = xpad_ref[...]                                   # (N, Hp, Wp, CP) f32
        # Hoist the kx shifts: 3 W-axis (sublane) slices total, kx=0 aligned,
        # instead of 9 misaligned slice+reshape relayouts.
        shifted = [xp[:, :, kx:kx + W, :] for kx in range(3)]
        cols = []
        for ky in range(3):
            for kx in range(3):
                # H-slices are cheap (H is not a sublane/lane dim); the reshape
                # is layout-trivial since W % 8 == 0 and CP == 128 lanes.
                cols.append(shifted[kx][:, ky:ky + H, :, :]
                            .reshape(M, CPk).astype(jnp.bfloat16))
        # One MXU matmul with K = 9*CP (bf16 operands, f32 accumulation).
        patches = jnp.concatenate(cols, axis=-1)             # (M, 9*CP) bf16
        acc = jnp.dot(patches, w_flat_ref[...],
                      preferred_element_type=jnp.float32)    # (M, CP)   f32
        # BatchNorm2d (training-mode batch stats) in ONE pass over acc:
        # per-channel mean and biased variance over all N, H, W.
        mean = jnp.sum(acc, axis=0, keepdims=True) * inv_m
        var = jnp.sum(acc * acc, axis=0, keepdims=True) * inv_m - mean * mean
        return (acc - mean) * jax.lax.rsqrt(var + EPS) * g_ref[...] + b_ref[...]

    # Stage 1: conv1 + bn1 + relu.  y1 stays in VMEM.
    y1 = jnp.maximum(conv3x3_bn(w1_ref, g1_ref, b1_ref), 0.0)      # (M, CP) f32
    # Stage-2 input: overwrite the interior of the (still zero-bordered) halo
    # scratch with y1 -- no HBM write/read of the intermediate activation.
    xpad_ref[:, 1:H + 1, 1:W + 1, :] = y1.reshape(N, H, W, CPk)

    # Stage 2: conv2 + bn2 + residual add + relu (identity in f32; its padded
    # channels are zero so the padded output channels stay exactly zero).
    y2 = conv3x3_bn(w2_ref, g2_ref, b2_ref)                        # (M, CP) f32
    identity = x_val.reshape(M, CPk)
    o_ref[...] = jnp.maximum(y2 + identity, 0.0).reshape(N, H, W, CPk)


def _prep_conv_weight(w):
    """(3,3,Cin,Cout) HWIO f32 -> (9*CP, CP) bf16, zero-padded channels.

    Row ordering matches the kernel's im2col column order:
    flat K index = (ky*3 + kx)*CP + cin.
    """
    cin, cout = w.shape[2], w.shape[3]
    wp = jnp.zeros((3, 3, CP, CP), jnp.float32).at[:, :, :cin, :cout].set(w)
    return wp.reshape(9 * CP, CP).astype(jnp.bfloat16)


def _pad_vec(v):
    """(C,) f32 -> (1, CP) f32, zero-padded."""
    return jnp.zeros((1, CP), jnp.float32).at[0, :v.shape[0]].set(v)


@jax.jit
def basic_block_forward(x_nchw, w1, g1, b1, w2, g2, b2):
    """BasicBlock forward.  x_nchw: (N, C, H, W).  Conv weights are HWIO."""
    N, C, H, W = x_nchw.shape
    assert C <= CP, "TODO(synk): C > 128 needs channel-block tiling"

    # NCHW -> NHWC, zero-pad channels to CP lanes in the wrapper so the kernel
    # input is lane-dense (no lane-misaligned concat inside the kernel).
    x_nhwc = jnp.transpose(x_nchw, (0, 2, 3, 1)).astype(jnp.float32)
    x_nhwc = jnp.pad(x_nhwc, ((0, 0), (0, 0), (0, 0), (0, CP - C)))

    args = (x_nhwc,
            _prep_conv_weight(w1), _pad_vec(g1), _pad_vec(b1),
            _prep_conv_weight(w2), _pad_vec(g2), _pad_vec(b2))

    out_padded = pl.pallas_call(
        _basic_block_kernel,
        out_shape=jax.ShapeDtypeStruct((N, H, W, CP), jnp.float32),
        grid=(1,),
        in_specs=[_full_spec(a.shape) for a in args],
        out_specs=_full_spec((N, H, W, CP)),
        scratch_shapes=[pltpu.VMEM((N, H + 2, W + 2, CP), jnp.float32)],
        compiler_params=pltpu.CompilerParams(
            dimension_semantics=("arbitrary",),
            vmem_limit_bytes=32 * 1024 * 1024),
    )(*args)

    return jnp.transpose(out_padded[..., :C], (0, 3, 1, 2))        # back to NCHW


def _reference(x_nchw, w1, g1, b1, w2, g2, b2, matmul_dtype=jnp.float32):
    """Pure-JAX reference.  matmul_dtype=bf16 gives a precision-matched check
    (the kernel feeds bf16 operands to the MXU, accumulating in f32)."""
    def conv(x, w):
        return jax.lax.conv_general_dilated(
            x.astype(matmul_dtype), w.astype(matmul_dtype),
            window_strides=(1, 1), padding="SAME",
            dimension_numbers=("NHWC", "HWIO", "NHWC"),
            preferred_element_type=jnp.float32)

    def bn(x, g, b):
        m = jnp.mean(x, axis=(0, 1, 2), keepdims=True)
        v = jnp.mean(jnp.square(x - m), axis=(0, 1, 2), keepdims=True)
        return (x - m) * jax.lax.rsqrt(v + EPS) * g.reshape(1, 1, 1, -1) \
            + b.reshape(1, 1, 1, -1)

    xh = jnp.transpose(x_nchw, (0, 2, 3, 1)).astype(jnp.float32)
    y = jax.nn.relu(bn(conv(xh, w1), g1, b1))
    y = jax.nn.relu(bn(conv(y, w2), g2, b2) + xh)
    return jnp.transpose(y, (0, 3, 1, 2))


if __name__ == "__main__":
    N, C, H, W = 2, 4, 16, 16          # inplanes = planes = 4, stride = 1
    planes = C

    key = jax.random.PRNGKey(0)
    kx_, k1, k2 = jax.random.split(key, 3)
    x = jax.random.normal(kx_, (N, C, H, W), dtype=jnp.float32)

    # Deterministic synthetic parameters (shapes from the module's __init__).
    w1 = 0.1 * jax.random.normal(k1, (3, 3, C, planes), dtype=jnp.float32)       # conv1 HWIO
    w2 = 0.1 * jax.random.normal(k2, (3, 3, planes, planes), dtype=jnp.float32)  # conv2 HWIO
    g1 = jnp.ones((planes,), jnp.float32)   # bn1 gamma
    b1 = jnp.zeros((planes,), jnp.float32)  # bn1 beta
    g2 = jnp.ones((planes,), jnp.float32)   # bn2 gamma
    b2 = jnp.zeros((planes,), jnp.float32)  # bn2 beta

    out = jax.block_until_ready(basic_block_forward(x, w1, g1, b1, w2, g2, b2))
    assert out.shape == (N, planes, H, W), out.shape

    # Strict check vs a precision-matched (bf16 matmul operand) reference.
    ref_bf16 = jax.block_until_ready(
        _reference(x, w1, g1, b1, w2, g2, b2, matmul_dtype=jnp.bfloat16))
    if not jnp.allclose(out, ref_bf16, atol=3e-3, rtol=3e-3):
        raise AssertionError(
            "Pallas BasicBlock mismatch vs bf16-matched JAX reference: "
            f"max abs err = {jnp.max(jnp.abs(out - ref_bf16))}")

    # Looser sanity check vs the full-f32 (PyTorch-semantics) reference; the
    # gap is the expected bf16 MXU-input rounding.
    ref_f32 = jax.block_until_ready(
        _reference(x, w1, g1, b1, w2, g2, b2, matmul_dtype=jnp.float32))
    if not jnp.allclose(out, ref_f32, atol=5e-2, rtol=5e-2):
        raise AssertionError(
            "Pallas BasicBlock mismatch vs f32 JAX reference: "
            f"max abs err = {jnp.max(jnp.abs(out - ref_f32))}")

    print("KERNEL_OK")
</pallas_src>

<mosaic_0001>
module attributes {stable_mosaic.version = 11 : i64} {
  func.func @_basic_block_kernel(%arg0: i32, %arg1: memref<2x16x16x128xf32, #tpu.memory_space<vmem>>, %arg2: memref<1152x128xbf16, #tpu.memory_space<vmem>>, %arg3: memref<1x128xf32, #tpu.memory_space<vmem>>, %arg4: memref<1x128xf32, #tpu.memory_space<vmem>>, %arg5: memref<1152x128xbf16, #tpu.memory_space<vmem>>, %arg6: memref<1x128xf32, #tpu.memory_space<vmem>>, %arg7: memref<1x128xf32, #tpu.memory_space<vmem>>, %arg8: memref<2x16x16x128xf32, #tpu.memory_space<vmem>>, %arg9: memref<2x18x18x128xf32, #tpu.memory_space<vmem>>) attributes {dimension_semantics = [#tpu.dimension_semantics<arbitrary>], iteration_bounds = array<i64: 1>, scalar_prefetch = 0 : i64, scratch_operands = 1 : i64, tpu.core_type = #tpu.core_type<tc>, window_params = [{pipeline_mode = #tpu.pipeline_mode<synchronous>, transform_indices = @transform_0, window_bounds = array<i64: 2, 16, 16, 128>}, {pipeline_mode = #tpu.pipeline_mode<synchronous>, transform_indices = @transform_1, window_bounds = array<i64: 1152, 128>}, {pipeline_mode = #tpu.pipeline_mode<synchronous>, transform_indices = @transform_2, window_bounds = array<i64: 1, 128>}, {pipeline_mode = #tpu.pipeline_mode<synchronous>, transform_indices = @transform_3, window_bounds = array<i64: 1, 128>}, {pipeline_mode = #tpu.pipeline_mode<synchronous>, transform_indices = @transform_4, window_bounds = array<i64: 1152, 128>}, {pipeline_mode = #tpu.pipeline_mode<synchronous>, transform_indices = @transform_5, window_bounds = array<i64: 1, 128>}, {pipeline_mode = #tpu.pipeline_mode<synchronous>, transform_indices = @transform_6, window_bounds = array<i64: 1, 128>}, {pipeline_mode = #tpu.pipeline_mode<synchronous>, transform_indices = @transform_7, window_bounds = array<i64: 2, 16, 16, 128>}]} {
    %cst = arith.constant 0.000000e+00 : f32
    %0 = vector.broadcast %cst : f32 to vector<2x18x18x128xf32>
    %c0 = arith.constant 0 : index
    %c0_0 = arith.constant 0 : index
    %c0_1 = arith.constant 0 : index
    %c0_2 = arith.constant 0 : index
    %1 = vector.load %arg9[%c0, %c0_0, %c0_1, %c0_2] : memref<2x18x18x128xf32, #tpu.memory_space<vmem>>, vector<2x18x18x128xf32>
    tpu.vector_store %arg9[%c0, %c0_0, %c0_1, %c0_2], %0 {strides = array<i32>} : memref<2x18x18x128xf32, #tpu.memory_space<vmem>>, vector<2x18x18x128xf32>,
    %c0_3 = arith.constant 0 : index
    %c0_4 = arith.constant 0 : index
    %c0_5 = arith.constant 0 : index
    %c0_6 = arith.constant 0 : index
    %2 = vector.load %arg1[%c0_3, %c0_4, %c0_5, %c0_6] : memref<2x16x16x128xf32, #tpu.memory_space<vmem>>, vector<2x16x16x128xf32>
    %c0_7 = arith.constant 0 : index
    %c1 = arith.constant 1 : index
    %c1_8 = arith.constant 1 : index
    %c0_9 = arith.constant 0 : index
    %3 = vector.load %arg9[%c0_7, %c1, %c1_8, %c0_9] : memref<2x18x18x128xf32, #tpu.memory_space<vmem>>, vector<2x16x16x128xf32>
    tpu.vector_store %arg9[%c0_7, %c1, %c1_8, %c0_9], %2 {strides = array<i32>} : memref<2x18x18x128xf32, #tpu.memory_space<vmem>>, vector<2x16x16x128xf32>,
    %c0_10 = arith.constant 0 : index
    %c0_11 = arith.constant 0 : index
    %c0_12 = arith.constant 0 : index
    %c0_13 = arith.constant 0 : index
    %4 = vector.load %arg9[%c0_10, %c0_11, %c0_12, %c0_13] : memref<2x18x18x128xf32, #tpu.memory_space<vmem>>, vector<2x18x18x128xf32>
    %5 = vector.extract_strided_slice %4 {offsets = [0, 0, 0, 0], sizes = [2, 18, 16, 128], strides = [1, 1, 1, 1]} : vector<2x18x18x128xf32> to vector<2x18x16x128xf32>
    %6 = vector.extract_strided_slice %4 {offsets = [0, 0, 1, 0], sizes = [2, 18, 16, 128], strides = [1, 1, 1, 1]} : vector<2x18x18x128xf32> to vector<2x18x16x128xf32>
    %7 = vector.extract_strided_slice %4 {offsets = [0, 0, 2, 0], sizes = [2, 18, 16, 128], strides = [1, 1, 1, 1]} : vector<2x18x18x128xf32> to vector<2x18x16x128xf32>
    %8 = vector.extract_strided_slice %5 {offsets = [0, 0, 0, 0], sizes = [2, 16, 16, 128], strides = [1, 1, 1, 1]} : vector<2x18x16x128xf32> to vector<2x16x16x128xf32>
    %9 = vector.shape_cast %8 : vector<2x16x16x128xf32> to vector<512x128xf32>
    %10 = arith.truncf %9 : vector<512x128xf32> to vector<512x128xbf16>
    %11 = vector.extract_strided_slice %6 {offsets = [0, 0, 0, 0], sizes = [2, 16, 16, 128], strides = [1, 1, 1, 1]} : vector<2x18x16x128xf32> to vector<2x16x16x128xf32>
    %12 = vector.shape_cast %11 : vector<2x16x16x128xf32> to vector<512x128xf32>
    %13 = arith.truncf %12 : vector<512x128xf32> to vector<512x128xbf16>
    %14 = vector.extract_strided_slice %7 {offsets = [0, 0, 0, 0], sizes = [2, 16, 16, 128], strides = [1, 1, 1, 1]} : vector<2x18x16x128xf32> to vector<2x16x16x128xf32>
    %15 = vector.shape_cast %14 : vector<2x16x16x128xf32> to vector<512x128xf32>
    %16 = arith.truncf %15 : vector<512x128xf32> to vector<512x128xbf16>
    %17 = vector.extract_strided_slice %5 {offsets = [0, 1, 0, 0], sizes = [2, 16, 16, 128], strides = [1, 1, 1, 1]} : vector<2x18x16x128xf32> to vector<2x16x16x128xf32>
    %18 = vector.shape_cast %17 : vector<2x16x16x128xf32> to vector<512x128xf32>
    %19 = arith.truncf %18 : vector<512x128xf32> to vector<512x128xbf16>
    %20 = vector.extract_strided_slice %6 {offsets = [0, 1, 0, 0], sizes = [2, 16, 16, 128], strides = [1, 1, 1, 1]} : vector<2x18x16x128xf32> to vector<2x16x16x128xf32>
    %21 = vector.shape_cast %20 : vector<2x16x16x128xf32> to vector<512x128xf32>
    %22 = arith.truncf %21 : vector<512x128xf32> to vector<512x128xbf16>
    %23 = vector.extract_strided_slice %7 {offsets = [0, 1, 0, 0], sizes = [2, 16, 16, 128], strides = [1, 1, 1, 1]} : vector<2x18x16x128xf32> to vector<2x16x16x128xf32>
    %24 = vector.shape_cast %23 : vector<2x16x16x128xf32> to vector<512x128xf32>
    %25 = arith.truncf %24 : vector<512x128xf32> to vector<512x128xbf16>
    %26 = vector.extract_strided_slice %5 {offsets = [0, 2, 0, 0], sizes = [2, 16, 16, 128], strides = [1, 1, 1, 1]} : vector<2x18x16x128xf32> to vector<2x16x16x128xf32>
    %27 = vector.shape_cast %26 : vector<2x16x16x128xf32> to vector<512x128xf32>
    %28 = arith.truncf %27 : vector<512x128xf32> to vector<512x128xbf16>
    %29 = vector.extract_strided_slice %6 {offsets = [0, 2, 0, 0], sizes = [2, 16, 16, 128], strides = [1, 1, 1, 1]} : vector<2x18x16x128xf32> to vector<2x16x16x128xf32>
    %30 = vector.shape_cast %29 : vector<2x16x16x128xf32> to vector<512x128xf32>
    %31 = arith.truncf %30 : vector<512x128xf32> to vector<512x128xbf16>
    %32 = vector.extract_strided_slice %7 {offsets = [0, 2, 0, 0], sizes = [2, 16, 16, 128], strides = [1, 1, 1, 1]} : vector<2x18x16x128xf32> to vector<2x16x16x128xf32>
    %33 = vector.shape_cast %32 : vector<2x16x16x128xf32> to vector<512x128xf32>
    %34 = arith.truncf %33 : vector<512x128xf32> to vector<512x128xbf16>
    %35 = tpu.concatenate %10, %13, %16, %19, %22, %25, %28, %31, %34 in 1 : vector<512x128xbf16>, vector<512x128xbf16>, vector<512x128xbf16>, vector<512x128xbf16>, vector<512x128xbf16>, vector<512x128xbf16>, vector<512x128xbf16>, vector<512x128xbf16>, vector<512x128xbf16> -> vector<512x1152xbf16>
    %c0_14 = arith.constant 0 : index
    %c0_15 = arith.constant 0 : index
    %36 = vector.load %arg2[%c0_14, %c0_15] : memref<1152x128xbf16, #tpu.memory_space<vmem>>, vector<1152x128xbf16>
    %cst_16 = arith.constant dense<0.000000e+00> : vector<512x128xf32>
    %37 = tpu.matmul %35, %36, %cst_16 {dimension_numbers = #tpu.dot_dimension_numbers<[1], [0], [0], [1], [0, 0, 1, 1], [], []>} : vector<512x1152xbf16>, vector<1152x128xbf16>, vector<512x128xf32> -> vector<512x128xf32>
    %cst_17 = arith.constant dense<0.000000e+00> : vector<128xf32>
    %38 = vector.multi_reduction <add>, %37, %cst_17 [0] : vector<512x128xf32> to vector<128xf32>
    %39 = vector.shape_cast %38 : vector<128xf32> to vector<1x128xf32>
    %cst_18 = arith.constant 0.001953125 : f32
    %40 = vector.broadcast %cst_18 : f32 to vector<1x128xf32>
    %41 = arith.mulf %39, %40 : vector<1x128xf32>
    %42 = arith.mulf %37, %37 : vector<512x128xf32>
    %cst_19 = arith.constant dense<0.000000e+00> : vector<128xf32>
    %43 = vector.multi_reduction <add>, %42, %cst_19 [0] : vector<512x128xf32> to vector<128xf32>
    %44 = vector.shape_cast %43 : vector<128xf32> to vector<1x128xf32>
    %cst_20 = arith.constant 0.001953125 : f32
    %45 = vector.broadcast %cst_20 : f32 to vector<1x128xf32>
    %46 = arith.mulf %44, %45 : vector<1x128xf32>
    %47 = arith.mulf %41, %41 : vector<1x128xf32>
    %48 = arith.subf %46, %47 : vector<1x128xf32>
    %49 = vector.broadcast %41 : vector<1x128xf32> to vector<512x128xf32>
    %50 = arith.subf %37, %49 : vector<512x128xf32>
    %cst_21 = arith.constant 9.99999974E-6 : f32
    %51 = vector.broadcast %cst_21 : f32 to vector<1x128xf32>
    %52 = arith.addf %48, %51 : vector<1x128xf32>
    %53 = math.rsqrt %52 : vector<1x128xf32>
    %54 = vector.broadcast %53 : vector<1x128xf32> to vector<512x128xf32>
    %55 = arith.mulf %50, %54 : vector<512x128xf32>
    %c0_22 = arith.constant 0 : index
    %c0_23 = arith.constant 0 : index
    %56 = vector.load %arg3[%c0_22, %c0_23] : memref<1x128xf32, #tpu.memory_space<vmem>>, vector<1x128xf32>
    %57 = vector.broadcast %56 : vector<1x128xf32> to vector<512x128xf32>
    %58 = arith.mulf %55, %57 : vector<512x128xf32>
    %c0_24 = arith.constant 0 : index
    %c0_25 = arith.constant 0 : index
    %59 = vector.load %arg4[%c0_24, %c0_25] : memref<1x128xf32, #tpu.memory_space<vmem>>, vector<1x128xf32>
    %60 = vector.broadcast %59 : vector<1x128xf32> to vector<512x128xf32>
    %61 = arith.addf %58, %60 : vector<512x128xf32>
    %cst_26 = arith.constant 0.000000e+00 : f32
    %62 = vector.broadcast %cst_26 : f32 to vector<512x128xf32>
    %63 = arith.maximumf %61, %62 : vector<512x128xf32>
    %64 = vector.shape_cast %63 : vector<512x128xf32> to vector<2x16x16x128xf32>
    %c0_27 = arith.constant 0 : index
    %c1_28 = arith.constant 1 : index
    %c1_29 = arith.constant 1 : index
    %c0_30 = arith.constant 0 : index
    %65 = vector.load %arg9[%c0_27, %c1_28, %c1_29, %c0_30] : memref<2x18x18x128xf32, #tpu.memory_space<vmem>>, vector<2x16x16x128xf32>
    tpu.vector_store %arg9[%c0_27, %c1_28, %c1_29, %c0_30], %64 {strides = array<i32>} : memref<2x18x18x128xf32, #tpu.memory_space<vmem>>, vector<2x16x16x128xf32>,
    %c0_31 = arith.constant 0 : index
    %c0_32 = arith.constant 0 : index
    %c0_33 = arith.constant 0 : index
    %c0_34 = arith.constant 0 : index
    %66 = vector.load %arg9[%c0_31, %c0_32, %c0_33, %c0_34] : memref<2x18x18x128xf32, #tpu.memory_space<vmem>>, vector<2x18x18x128xf32>
    %67 = vector.extract_strided_slice %66 {offsets = [0, 0, 0, 0], sizes = [2, 18, 16, 128], strides = [1, 1, 1, 1]} : vector<2x18x18x128xf32> to vector<2x18x16x128xf32>
    %68 = vector.extract_strided_slice %66 {offsets = [0, 0, 1, 0], sizes = [2, 18, 16, 128], strides = [1, 1, 1, 1]} : vector<2x18x18x128xf32> to vector<2x18x16x128xf32>
    %69 = vector.extract_strided_slice %66 {offsets = [0, 0, 2, 0], sizes = [2, 18, 16, 128], strides = [1, 1, 1, 1]} : vector<2x18x18x128xf32> to vector<2x18x16x128xf32>
    %70 = vector.extract_strided_slice %67 {offsets = [0, 0, 0, 0], sizes = [2, 16, 16, 128], strides = [1, 1, 1, 1]} : vector<2x18x16x128xf32> to vector<2x16x16x128xf32>
    %71 = vector.shape_cast %70 : vector<2x16x16x128xf32> to vector<512x128xf32>
    %72 = arith.truncf %71 : vector<512x128xf32> to vector<512x128xbf16>
    %73 = vector.extract_strided_slice %68 {offsets = [0, 0, 0, 0], sizes = [2, 16, 16, 128], strides = [1, 1, 1, 1]} : vector<2x18x16x128xf32> to vector<2x16x16x128xf32>
    %74 = vector.shape_cast %73 : vector<2x16x16x128xf32> to vector<512x128xf32>
    %75 = arith.truncf %74 : vector<512x128xf32> to vector<512x128xbf16>
    %76 = vector.extract_strided_slice %69 {offsets = [0, 0, 0, 0], sizes = [2, 16, 16, 128], strides = [1, 1, 1, 1]} : vector<2x18x16x128xf32> to vector<2x16x16x128xf32>
    %77 = vector.shape_cast %76 : vector<2x16x16x128xf32> to vector<512x128xf32>
    %78 = arith.truncf %77 : vector<512x128xf32> to vector<512x128xbf16>
    %79 = vector.extract_strided_slice %67 {offsets = [0, 1, 0, 0], sizes = [2, 16, 16, 128], strides = [1, 1, 1, 1]} : vector<2x18x16x128xf32> to vector<2x16x16x128xf32>
    %80 = vector.shape_cast %79 : vector<2x16x16x128xf32> to vector<512x128xf32>
    %81 = arith.truncf %80 : vector<512x128xf32> to vector<512x128xbf16>
    %82 = vector.extract_strided_slice %68 {offsets = [0, 1, 0, 0], sizes = [2, 16, 16, 128], strides = [1, 1, 1, 1]} : vector<2x18x16x128xf32> to vector<2x16x16x128xf32>
    %83 = vector.shape_cast %82 : vector<2x16x16x128xf32> to vector<512x128xf32>
    %84 = arith.truncf %83 : vector<512x128xf32> to vector<512x128xbf16>
    %85 = vector.extract_strided_slice %69 {offsets = [0, 1, 0, 0], sizes = [2, 16, 16, 128], strides = [1, 1, 1, 1]} : vector<2x18x16x128xf32> to vector<2x16x16x128xf32>
    %86 = vector.shape_cast %85 : vector<2x16x16x128xf32> to vector<512x128xf32>
    %87 = arith.truncf %86 : vector<512x128xf32> to vector<512x128xbf16>
    %88 = vector.extract_strided_slice %67 {offsets = [0, 2, 0, 0], sizes = [2, 16, 16, 128], strides = [1, 1, 1, 1]} : vector<2x18x16x128xf32> to vector<2x16x16x128xf32>
    %89 = vector.shape_cast %88 : vector<2x16x16x128xf32> to vector<512x128xf32>
    %90 = arith.truncf %89 : vector<512x128xf32> to vector<512x128xbf16>
    %91 = vector.extract_strided_slice %68 {offsets = [0, 2, 0, 0], sizes = [2, 16, 16, 128], strides = [1, 1, 1, 1]} : vector<2x18x16x128xf32> to vector<2x16x16x128xf32>
    %92 = vector.shape_cast %91 : vector<2x16x16x128xf32> to vector<512x128xf32>
    %93 = arith.truncf %92 : vector<512x128xf32> to vector<512x128xbf16>
    %94 = vector.extract_strided_slice %69 {offsets = [0, 2, 0, 0], sizes = [2, 16, 16, 128], strides = [1, 1, 1, 1]} : vector<2x18x16x128xf32> to vector<2x16x16x128xf32>
    %95 = vector.shape_cast %94 : vector<2x16x16x128xf32> to vector<512x128xf32>
    %96 = arith.truncf %95 : vector<512x128xf32> to vector<512x128xbf16>
    %97 = tpu.concatenate %72, %75, %78, %81, %84, %87, %90, %93, %96 in 1 : vector<512x128xbf16>, vector<512x128xbf16>, vector<512x128xbf16>, vector<512x128xbf16>, vector<512x128xbf16>, vector<512x128xbf16>, vector<512x128xbf16>, vector<512x128xbf16>, vector<512x128xbf16> -> vector<512x1152xbf16>
    %c0_35 = arith.constant 0 : index
    %c0_36 = arith.constant 0 : index
    %98 = vector.load %arg5[%c0_35, %c0_36] : memref<1152x128xbf16, #tpu.memory_space<vmem>>, vector<1152x128xbf16>
    %cst_37 = arith.constant dense<0.000000e+00> : vector<512x128xf32>
    %99 = tpu.matmul %97, %98, %cst_37 {dimension_numbers = #tpu.dot_dimension_numbers<[1], [0], [0], [1], [0, 0, 1, 1], [], []>} : vector<512x1152xbf16>, vector<1152x128xbf16>, vector<512x128xf32> -> vector<512x128xf32>
    %cst_38 = arith.constant dense<0.000000e+00> : vector<128xf32>
    %100 = vector.multi_reduction <add>, %99, %cst_38 [0] : vector<512x128xf32> to vector<128xf32>
    %101 = vector.shape_cast %100 : vector<128xf32> to vector<1x128xf32>
    %cst_39 = arith.constant 0.001953125 : f32
    %102 = vector.broadcast %cst_39 : f32 to vector<1x128xf32>
    %103 = arith.mulf %101, %102 : vector<1x128xf32>
    %104 = arith.mulf %99, %99 : vector<512x128xf32>
    %cst_40 = arith.constant dense<0.000000e+00> : vector<128xf32>
    %105 = vector.multi_reduction <add>, %104, %cst_40 [0] : vector<512x128xf32> to vector<128xf32>
    %106 = vector.shape_cast %105 : vector<128xf32> to vector<1x128xf32>
    %cst_41 = arith.constant 0.001953125 : f32
    %107 = vector.broadcast %cst_41 : f32 to vector<1x128xf32>
    %108 = arith.mulf %106, %107 : vector<1x128xf32>
    %109 = arith.mulf %103, %103 : vector<1x128xf32>
    %110 = arith.subf %108, %109 : vector<1x128xf32>
    %111 = vector.broadcast %103 : vector<1x128xf32> to vector<512x128xf32>
    %112 = arith.subf %99, %111 : vector<512x128xf32>
    %cst_42 = arith.constant 9.99999974E-6 : f32
    %113 = vector.broadcast %cst_42 : f32 to vector<1x128xf32>
    %114 = arith.addf %110, %113 : vector<1x128xf32>
    %115 = math.rsqrt %114 : vector<1x128xf32>
    %116 = vector.broadcast %115 : vector<1x128xf32> to vector<512x128xf32>
    %117 = arith.mulf %112, %116 : vector<512x128xf32>
    %c0_43 = arith.constant 0 : index
    %c0_44 = arith.constant 0 : index
    %118 = vector.load %arg6[%c0_43, %c0_44] : memref<1x128xf32, #tpu.memory_space<vmem>>, vector<1x128xf32>
    %119 = vector.broadcast %118 : vector<1x128xf32> to vector<512x128xf32>
    %120 = arith.mulf %117, %119 : vector<512x128xf32>
    %c0_45 = arith.constant 0 : index
    %c0_46 = arith.constant 0 : index
    %121 = vector.load %arg7[%c0_45, %c0_46] : memref<1x128xf32, #tpu.memory_space<vmem>>, vector<1x128xf32>
    %122 = vector.broadcast %121 : vector<1x128xf32> to vector<512x128xf32>
    %123 = arith.addf %120, %122 : vector<512x128xf32>
    %124 = vector.shape_cast %2 : vector<2x16x16x128xf32> to vector<512x128xf32>
    %125 = arith.addf %123, %124 : vector<512x128xf32>
    %cst_47 = arith.constant 0.000000e+00 : f32
    %126 = vector.broadcast %cst_47 : f32 to vector<512x128xf32>
    %127 = arith.maximumf %125, %126 : vector<512x128xf32>
    %128 = vector.shape_cast %127 : vector<512x128xf32> to vector<2x16x16x128xf32>
    %c0_48 = arith.constant 0 : index
    %c0_49 = arith.constant 0 : index
    %c0_50 = arith.constant 0 : index
    %c0_51 = arith.constant 0 : index
    %129 = vector.load %arg8[%c0_48, %c0_49, %c0_50, %c0_51] : memref<2x16x16x128xf32, #tpu.memory_space<vmem>>, vector<2x16x16x128xf32>
    tpu.vector_store %arg8[%c0_48, %c0_49, %c0_50, %c0_51], %128 {strides = array<i32>} : memref<2x16x16x128xf32, #tpu.memory_space<vmem>>, vector<2x16x16x128xf32>,
    return
  }
  func.func @transform_0(%arg0: i32) -> (i32, i32, i32, i32) {
    %c0_i32 = arith.constant 0 : i32
    %c0_i32_0 = arith.constant 0 : i32
    %c0_i32_1 = arith.constant 0 : i32
    %c0_i32_2 = arith.constant 0 : i32
    %c0_i32_3 = arith.constant 0 : i32
    return %c0_i32, %c0_i32_0, %c0_i32_1, %c0_i32_2 : i32, i32, i32, i32
  }
  func.func @transform_1(%arg0: i32) -> (i32, i32) {
    %c0_i32 = arith.constant 0 : i32
    %c0_i32_0 = arith.constant 0 : i32
    %c0_i32_1 = arith.constant 0 : i32
    return %c0_i32, %c0_i32_0 : i32, i32
  }
  func.func @transform_2(%arg0: i32) -> (i32, i32) {
    %c0_i32 = arith.constant 0 : i32
    %c0_i32_0 = arith.constant 0 : i32
    %c0_i32_1 = arith.constant 0 : i32
    return %c0_i32, %c0_i32_0 : i32, i32
  }
  func.func @transform_3(%arg0: i32) -> (i32, i32) {
    %c0_i32 = arith.constant 0 : i32
    %c0_i32_0 = arith.constant 0 : i32
    %c0_i32_1 = arith.constant 0 : i32
    return %c0_i32, %c0_i32_0 : i32, i32
  }
  func.func @transform_4(%arg0: i32) -> (i32, i32) {
    %c0_i32 = arith.constant 0 : i32
    %c0_i32_0 = arith.constant 0 : i32
    %c0_i32_1 = arith.constant 0 : i32
    return %c0_i32, %c0_i32_0 : i32, i32
  }
  func.func @transform_5(%arg0: i32) -> (i32, i32) {
    %c0_i32 = arith.constant 0 : i32
    %c0_i32_0 = arith.constant 0 : i32
    %c0_i32_1 = arith.constant 0 : i32
    return %c0_i32, %c0_i32_0 : i32, i32
  }
  func.func @transform_6(%arg0: i32) -> (i32, i32) {
    %c0_i32 = arith.constant 0 : i32
    %c0_i32_0 = arith.constant 0 : i32
    %c0_i32_1 = arith.constant 0 : i32
    return %c0_i32, %c0_i32_0 : i32, i32
  }
  func.func @transform_7(%arg0: i32) -> (i32, i32, i32, i32) {
    %c0_i32 = arith.constant 0 : i32
    %c0_i32_0 = arith.constant 0 : i32
    %c0_i32_1 = arith.constant 0 : i32
    %c0_i32_2 = arith.constant 0 : i32
    %c0_i32_3 = arith.constant 0 : i32
    return %c0_i32, %c0_i32_0, %c0_i32_1, %c0_i32_2 : i32, i32, i32, i32
  }
}

</mosaic_0001>

<llo_original>
// kernel: basic_block_forward.1
$region0: #{basic_block_forward.1}
  #allocation0 [shape = 'u32[]', space=smem, size = 0x4, offset = 0x4, fixed_abs, tag = 'smem constant byte address 0x4 - core index']
  #allocation1 [shape = 'u32[72,128]{1,0:T(1,128)}', space=vmem, size = 0x9000, scoped, tag = 'internal scratch']
  #allocation2 [shape = 'f32[2,18,18,128]{3,2,1,0:T(8,128)}', space=vmem, size = 0x6c000, scoped, tag = 'scratch operand']
  %s0 = inlined_call_operand.vmem [shape: f32[2,16,16,128], index: 0, kind: input, shape index: {}]
  %s1 = inlined_call_operand.vmem [shape: bf16[1152,128], index: 1, kind: input, shape index: {}]
  %s2 = inlined_call_operand.vmem [shape: f32[1,128], index: 2, kind: input, shape index: {}]
  %s3 = inlined_call_operand.vmem [shape: f32[1,128], index: 3, kind: input, shape index: {}]
  %s4 = inlined_call_operand.vmem [shape: bf16[1152,128], index: 4, kind: input, shape index: {}]
  %s5 = inlined_call_operand.vmem [shape: f32[1,128], index: 5, kind: input, shape index: {}]
  %s6 = inlined_call_operand.vmem [shape: f32[1,128], index: 6, kind: input, shape index: {}]
  %s7 = inlined_call_operand.vmem [shape: f32[2,16,16,128], index: 7, kind: output, shape index: {}]
  %s8 = sld [smem:[#allocation0]]
  $region38: #{basic_block_forward.1} parent=0
    _
  %s10 = ssub.s32 1, %s8
  %s11 = scalar_select 0, %s10, %s8
  // Predicated region
  $region2: #{basic_block_forward.1} parent=0 // pred_check
    _
  $region3: #{basic_block_forward.1} parent=0 // pred_check_branch
    %13 = sbr.rel (0) target = $region5
  $region4: #{basic_block_forward.1} parent=0 // pred_region
    _
  $region5: #{basic_block_forward.1} parent=0 // pred_fallthru
    _
  // Predicated region
  $region6: #{basic_block_forward.1} parent=0 // pred_check
    _
  $region7: #{basic_block_forward.1} parent=0 // pred_check_branch
    %15 = sbr.rel (0) target = $region9
  $region8: #{basic_block_forward.1} parent=0 // pred_region
    _
  $region9: #{basic_block_forward.1} parent=0 // pred_fallthru
    _
  // Predicated region
  $region10: #{basic_block_forward.1} parent=0 // pred_check
    _
  $region11: #{basic_block_forward.1} parent=0 // pred_check_branch
    %17 = sbr.rel (0) target = $region13
  $region12: #{basic_block_forward.1} parent=0 // pred_region
    _
  $region13: #{basic_block_forward.1} parent=0 // pred_fallthru
    _
  // Predicated region
  $region14: #{basic_block_forward.1} parent=0 // pred_check
    _
  $region15: #{basic_block_forward.1} parent=0 // pred_check_branch
    %19 = sbr.rel (0) target = $region17
  $region16: #{basic_block_forward.1} parent=0 // pred_region
    _
  $region17: #{basic_block_forward.1} parent=0 // pred_fallthru
    _
  // Predicated region
  $region18: #{basic_block_forward.1} parent=0 // pred_check
    _
  $region19: #{basic_block_forward.1} parent=0 // pred_check_branch
    %21 = sbr.rel (0) target = $region21
  $region20: #{basic_block_forward.1} parent=0 // pred_region
    _
  $region21: #{basic_block_forward.1} parent=0 // pred_fallthru
    _
  // Predicated region
  $region22: #{basic_block_forward.1} parent=0 // pred_check
    _
  $region23: #{basic_block_forward.1} parent=0 // pred_check_branch
    %23 = sbr.rel (0) target = $region25
  $region24: #{basic_block_forward.1} parent=0 // pred_region
    _
  $region25: #{basic_block_forward.1} parent=0 // pred_fallthru
    _
  // Predicated region
  $region26: #{basic_block_forward.1} parent=0 // pred_check
    _
  $region27: #{basic_block_forward.1} parent=0 // pred_check_branch
    %25 = sbr.rel (0) target = $region29
  $region28: #{basic_block_forward.1} parent=0 // pred_region
    _
  $region29: #{basic_block_forward.1} parent=0 // pred_fallthru
    _
  %26 = vst [vmem:[#allocation2] sm:$0xff] 0.0
  %27 = vst [vmem:[#allocation2 + $0x8] sm:$0xff] 0.0
  %28 = vst [vmem:[#allocation2 + $0x10] sm:$0x3] 0.0
  %29 = vst [vmem:[#allocation2 + $0x18] sm:$0xff] 0.0
  %30 = vst [vmem:[#allocation2 + $0x20] sm:$0xff] 0.0
  %31 = vst [vmem:[#allocation2 + $0x28] sm:$0x3] 0.0
  %32 = vst [vmem:[#allocation2 + $0x30] sm:$0xff] 0.0
  %33 = vst [vmem:[#allocation2 + $0x38] sm:$0xff] 0.0
  %34 = vst [vmem:[#allocation2 + $0x40] sm:$0x3] 0.0
  %35 = vst [vmem:[#allocation2 + $0x48] sm:$0xff] 0.0
  %36 = vst [vmem:[#allocation2 + $0x50] sm:$0xff] 0.0
  %37 = vst [vmem:[#allocation2 + $0x58] sm:$0x3] 0.0
  %38 = vst [vmem:[#allocation2 + $0x60] sm:$0xff] 0.0
  %39 = vst [vmem:[#allocation2 + $0x68] sm:$0xff] 0.0
  %40 = vst [vmem:[#allocation2 + $0x70] sm:$0x3] 0.0
  %41 = vst [vmem:[#allocation2 + $0x78] sm:$0xff] 0.0
  %42 = vst [vmem:[#allocation2 + $0x80] sm:$0xff] 0.0
  %43 = vst [vmem:[#allocation2 + $0x88] sm:$0x3] 0.0
  %44 = vst [vmem:[#allocation2 + $0x90] sm:$0xff] 0.0
  %45 = vst [vmem:[#allocation2 + $0x98] sm:$0xff] 0.0
  %46 = vst [vmem:[#allocation2 + $0xa0] sm:$0x3] 0.0
  %47 = vst [vmem:[#allocation2 + $0xa8] sm:$0xff] 0.0
  %48 = vst [vmem:[#allocation2 + $0xb0] sm:$0xff] 0.0
  %49 = vst [vmem:[#allocation2 + $0xb8] sm:$0x3] 0.0
  %50 = vst [vmem:[#allocation2 + $0xc0] sm:$0xff] 0.0
  %51 = vst [vmem:[#allocation2 + $0xc8] sm:$0xff] 0.0
  %52 = vst [vmem:[#allocation2 + $0xd0] sm:$0x3] 0.0
  %53 = vst [vmem:[#allocation2 + $0xd8] sm:$0xff] 0.0
  %54 = vst [vmem:[#allocation2 + $0xe0] sm:$0xff] 0.0
  %55 = vst [vmem:[#allocation2 + $0xe8] sm:$0x3] 0.0
  %56 = vst [vmem:[#allocation2 + $0xf0] sm:$0xff] 0.0
  %57 = vst [vmem:[#allocation2 + $0xf8] sm:$0xff] 0.0
  %58 = vst [vmem:[#allocation2 + $0x100] sm:$0x3] 0.0
  %59 = vst [vmem:[#allocation2 + $0x108] sm:$0xff] 0.0
  %60 = vst [vmem:[#allocation2 + $0x110] sm:$0xff] 0.0
  %61 = vst [vmem:[#allocation2 + $0x118] sm:$0x3] 0.0
  %62 = vst [vmem:[#allocation2 + $0x120] sm:$0xff] 0.0
  %63 = vst [vmem:[#allocation2 + $0x128] sm:$0xff] 0.0
  %64 = vst [vmem:[#allocation2 + $0x130] sm:$0x3] 0.0
  %65 = vst [vmem:[#allocation2 + $0x138] sm:$0xff] 0.0
  %66 = vst [vmem:[#allocation2 + $0x140] sm:$0xff] 0.0
  %67 = vst [vmem:[#allocation2 + $0x148] sm:$0x3] 0.0
  %68 = vst [vmem:[#allocation2 + $0x150] sm:$0xff] 0.0
  %69 = vst [vmem:[#allocation2 + $0x158] sm:$0xff] 0.0
  %70 = vst [vmem:[#allocation2 + $0x160] sm:$0x3] 0.0
  %71 = vst [vmem:[#allocation2 + $0x168] sm:$0xff] 0.0
  %72 = vst [vmem:[#allocation2 + $0x170] sm:$0xff] 0.0
  %73 = vst [vmem:[#allocation2 + $0x178] sm:$0x3] 0.0
  %74 = vst [vmem:[#allocation2 + $0x180] sm:$0xff] 0.0
  %75 = vst [vmem:[#allocation2 + $0x188] sm:$0xff] 0.0
  %76 = vst [vmem:[#allocation2 + $0x190] sm:$0x3] 0.0
  %77 = vst [vmem:[#allocation2 + $0x198] sm:$0xff] 0.0
  %78 = vst [vmem:[#allocation2 + $0x1a0] sm:$0xff] 0.0
  %79 = vst [vmem:[#allocation2 + $0x1a8] sm:$0x3] 0.0
  %80 = vst [vmem:[#allocation2 + $0x1b0] sm:$0xff] 0.0
  %81 = vst [vmem:[#allocation2 + $0x1b8] sm:$0xff] 0.0
  %82 = vst [vmem:[#allocation2 + $0x1c0] sm:$0x3] 0.0
  %83 = vst [vmem:[#allocation2 + $0x1c8] sm:$0xff] 0.0
  %84 = vst [vmem:[#allocation2 + $0x1d0] sm:$0xff] 0.0
  %85 = vst [vmem:[#allocation2 + $0x1d8] sm:$0x3] 0.0
  %86 = vst [vmem:[#allocation2 + $0x1e0] sm:$0xff] 0.0
  %87 = vst [vmem:[#allocation2 + $0x1e8] sm:$0xff] 0.0
  %88 = vst [vmem:[#allocation2 + $0x1f0] sm:$0x3] 0.0
  %89 = vst [vmem:[#allocation2 + $0x1f8] sm:$0xff] 0.0
  %90 = vst [vmem:[#allocation2 + $0x200] sm:$0xff] 0.0
  %91 = vst [vmem:[#allocation2 + $0x208] sm:$0x3] 0.0
  %92 = vst [vmem:[#allocation2 + $0x210] sm:$0xff] 0.0
  %93 = vst [vmem:[#allocation2 + $0x218] sm:$0xff] 0.0
  %94 = vst [vmem:[#allocation2 + $0x220] sm:$0x3] 0.0
  %95 = vst [vmem:[#allocation2 + $0x228] sm:$0xff] 0.0
  %96 = vst [vmem:[#allocation2 + $0x230] sm:$0xff] 0.0
  %97 = vst [vmem:[#allocation2 + $0x238] sm:$0x3] 0.0
  %98 = vst [vmem:[#allocation2 + $0x240] sm:$0xff] 0.0
  %99 = vst [vmem:[#allocation2 + $0x248] sm:$0xff] 0.0
  %100 = vst [vmem:[#allocation2 + $0x250] sm:$0x3] 0.0
  %101 = vst [vmem:[#allocation2 + $0x258] sm:$0xff] 0.0
  %102 = vst [vmem:[#allocation2 + $0x260] sm:$0xff] 0.0
  %103 = vst [vmem:[#allocation2 + $0x268] sm:$0x3] 0.0
  %104 = vst [vmem:[#allocation2 + $0x270] sm:$0xff] 0.0
  %105 = vst [vmem:[#allocation2 + $0x278] sm:$0xff] 0.0
  %106 = vst [vmem:[#allocation2 + $0x280] sm:$0x3] 0.0
  %107 = vst [vmem:[#allocation2 + $0x288] sm:$0xff] 0.0
  %108 = vst [vmem:[#allocation2 + $0x290] sm:$0xff] 0.0
  %109 = vst [vmem:[#allocation2 + $0x298] sm:$0x3] 0.0
  %110 = vst [vmem:[#allocation2 + $0x2a0] sm:$0xff] 0.0
  %111 = vst [vmem:[#allocation2 + $0x2a8] sm:$0xff] 0.0
  %112 = vst [vmem:[#allocation2 + $0x2b0] sm:$0x3] 0.0
  %113 = vst [vmem:[#allocation2 + $0x2b8] sm:$0xff] 0.0
  %114 = vst [vmem:[#allocation2 + $0x2c0] sm:$0xff] 0.0
  %115 = vst [vmem:[#allocation2 + $0x2c8] sm:$0x3] 0.0
  %116 = vst [vmem:[#allocation2 + $0x2d0] sm:$0xff] 0.0
  %117 = vst [vmem:[#allocation2 + $0x2d8] sm:$0xff] 0.0
  %118 = vst [vmem:[#allocation2 + $0x2e0] sm:$0x3] 0.0
  %119 = vst [vmem:[#allocation2 + $0x2e8] sm:$0xff] 0.0
  %120 = vst [vmem:[#allocation2 + $0x2f0] sm:$0xff] 0.0
  %121 = vst [vmem:[#allocation2 + $0x2f8] sm:$0x3] 0.0
  %122 = vst [vmem:[#allocation2 + $0x300] sm:$0xff] 0.0
  %123 = vst [vmem:[#allocation2 + $0x308] sm:$0xff] 0.0
  %124 = vst [vmem:[#allocation2 + $0x310] sm:$0x3] 0.0
  %125 = vst [vmem:[#allocation2 + $0x318] sm:$0xff] 0.0
  %126 = vst [vmem:[#allocation2 + $0x320] sm:$0xff] 0.0
  %127 = vst [vmem:[#allocation2 + $0x328] sm:$0x3] 0.0
  %128 = vst [vmem:[#allocation2 + $0x330] sm:$0xff] 0.0
  %129 = vst [vmem:[#allocation2 + $0x338] sm:$0xff] 0.0
  %130 = vst [vmem:[#allocation2 + $0x340] sm:$0x3] 0.0
  %131 = vst [vmem:[#allocation2 + $0x348] sm:$0xff] 0.0
  %132 = vst [vmem:[#allocation2 + $0x350] sm:$0xff] 0.0
  %133 = vst [vmem:[#allocation2 + $0x358] sm:$0x3] 0.0
  %v134 = vld [vmem:[%s0] sm:$0xff]
  %v135 = vld [vmem:[%s0 + $0x8] sm:$0xff]
  %v136 = vld [vmem:[%s0 + $0x10] sm:$0xff]
  %v137 = vld [vmem:[%s0 + $0x18] sm:$0xff]
  %v138 = vld [vmem:[%s0 + $0x20] sm:$0xff]
  %v139 = vld [vmem:[%s0 + $0x28] sm:$0xff]
  %v140 = vld [vmem:[%s0 + $0x30] sm:$0xff]
  %v141 = vld [vmem:[%s0 + $0x38] sm:$0xff]
  %v142 = vld [vmem:[%s0 + $0x40] sm:$0xff]
  %v143 = vld [vmem:[%s0 + $0x48] sm:$0xff]
  %v144 = vld [vmem:[%s0 + $0x50] sm:$0xff]
  %v145 = vld [vmem:[%s0 + $0x58] sm:$0xff]
  %v146 = vld [vmem:[%s0 + $0x60] sm:$0xff]
  %v147 = vld [vmem:[%s0 + $0x68] sm:$0xff]
  %v148 = vld [vmem:[%s0 + $0x70] sm:$0xff]
  %v149 = vld [vmem:[%s0 + $0x78] sm:$0xff]
  %v150 = vld [vmem:[%s0 + $0x80] sm:$0xff]
  %v151 = vld [vmem:[%s0 + $0x88] sm:$0xff]
  %v152 = vld [vmem:[%s0 + $0x90] sm:$0xff]
  %v153 = vld [vmem:[%s0 + $0x98] sm:$0xff]
  %v154 = vld [vmem:[%s0 + $0xa0] sm:$0xff]
  %v155 = vld [vmem:[%s0 + $0xa8] sm:$0xff]
  %v156 = vld [vmem:[%s0 + $0xb0] sm:$0xff]
  %v157 = vld [vmem:[%s0 + $0xb8] sm:$0xff]
  %v158 = vld [vmem:[%s0 + $0xc0] sm:$0xff]
  %v159 = vld [vmem:[%s0 + $0xc8] sm:$0xff]
  %v160 = vld [vmem:[%s0 + $0xd0] sm:$0xff]
  %v161 = vld [vmem:[%s0 + $0xd8] sm:$0xff]
  %v162 = vld [vmem:[%s0 + $0xe0] sm:$0xff]
  %v163 = vld [vmem:[%s0 + $0xe8] sm:$0xff]
  %v164 = vld [vmem:[%s0 + $0xf0] sm:$0xff]
  %v165 = vld [vmem:[%s0 + $0xf8] sm:$0xff]
  %v166 = vld [vmem:[%s0 + $0x100] sm:$0xff]
  %v167 = vld [vmem:[%s0 + $0x108] sm:$0xff]
  %v168 = vld [vmem:[%s0 + $0x110] sm:$0xff]
  %v169 = vld [vmem:[%s0 + $0x118] sm:$0xff]
  %v170 = vld [vmem:[%s0 + $0x120] sm:$0xff]
  %v171 = vld [vmem:[%s0 + $0x128] sm:$0xff]
  %v172 = vld [vmem:[%s0 + $0x130] sm:$0xff]
  %v173 = vld [vmem:[%s0 + $0x138] sm:$0xff]
  %v174 = vld [vmem:[%s0 + $0x140] sm:$0xff]
  %v175 = vld [vmem:[%s0 + $0x148] sm:$0xff]
  %v176 = vld [vmem:[%s0 + $0x150] sm:$0xff]
  %v177 = vld [vmem:[%s0 + $0x158] sm:$0xff]
  %v178 = vld [vmem:[%s0 + $0x160] sm:$0xff]
  %v179 = vld [vmem:[%s0 + $0x168] sm:$0xff]
  %v180 = vld [vmem:[%s0 + $0x170] sm:$0xff]
  %v181 = vld [vmem:[%s0 + $0x178] sm:$0xff]
  %v182 = vld [vmem:[%s0 + $0x180] sm:$0xff]
  %v183 = vld [vmem:[%s0 + $0x188] sm:$0xff]
  %v184 = vld [vmem:[%s0 + $0x190] sm:$0xff]
  %v185 = vld [vmem:[%s0 + $0x198] sm:$0xff]
  %v186 = vld [vmem:[%s0 + $0x1a0] sm:$0xff]
  %v187 = vld [vmem:[%s0 + $0x1a8] sm:$0xff]
  %v188 = vld [vmem:[%s0 + $0x1b0] sm:$0xff]
  %v189 = vld [vmem:[%s0 + $0x1b8] sm:$0xff]
  %v190 = vld [vmem:[%s0 + $0x1c0] sm:$0xff]
  %v191 = vld [vmem:[%s0 + $0x1c8] sm:$0xff]
  %v192 = vld [vmem:[%s0 + $0x1d0] sm:$0xff]
  %v193 = vld [vmem:[%s0 + $0x1d8] sm:$0xff]
  %v194 = vld [vmem:[%s0 + $0x1e0] sm:$0xff]
  %v195 = vld [vmem:[%s0 + $0x1e8] sm:$0xff]
  %v196 = vld [vmem:[%s0 + $0x1f0] sm:$0xff]
  %v197 = vld [vmem:[%s0 + $0x1f8] sm:$0xff]
  %s198 = scalar_lea.vmem [#allocation2], 24
  %199 = vst [vmem:[%s198 + $0x1] sm:$0xff] %v134
  %200 = vst [vmem:[%s198 + $0x9] sm:$0xff] %v135
  %201 = vst [vmem:[%s198 + $0x19] sm:$0xff] %v136
  %202 = vst [vmem:[%s198 + $0x21] sm:$0xff] %v137
  %203 = vst [vmem:[%s198 + $0x31] sm:$0xff] %v138
  %204 = vst [vmem:[%s198 + $0x39] sm:$0xff] %v139
  %205 = vst [vmem:[%s198 + $0x49] sm:$0xff] %v140
  %206 = vst [vmem:[%s198 + $0x51] sm:$0xff] %v141
  %207 = vst [vmem:[%s198 + $0x61] sm:$0xff] %v142
  %208 = vst [vmem:[%s198 + $0x69] sm:$0xff] %v143
  %209 = vst [vmem:[%s198 + $0x79] sm:$0xff] %v144
  %210 = vst [vmem:[%s198 + $0x81] sm:$0xff] %v145
  %211 = vst [vmem:[%s198 + $0x91] sm:$0xff] %v146
  %212 = vst [vmem:[%s198 + $0x99] sm:$0xff] %v147
  %213 = vst [vmem:[%s198 + $0xa9] sm:$0xff] %v148
  %214 = vst [vmem:[%s198 + $0xb1] sm:$0xff] %v149
  %215 = vst [vmem:[%s198 + $0xc1] sm:$0xff] %v150
  %216 = vst [vmem:[%s198 + $0xc9] sm:$0xff] %v151
  %217 = vst [vmem:[%s198 + $0xd9] sm:$0xff] %v152
  %218 = vst [vmem:[%s198 + $0xe1] sm:$0xff] %v153
  %219 = vst [vmem:[%s198 + $0xf1] sm:$0xff] %v154
  %220 = vst [vmem:[%s198 + $0xf9] sm:$0xff] %v155
  %221 = vst [vmem:[%s198 + $0x109] sm:$0xff] %v156
  %222 = vst [vmem:[%s198 + $0x111] sm:$0xff] %v157
  %223 = vst [vmem:[%s198 + $0x121] sm:$0xff] %v158
  %224 = vst [vmem:[%s198 + $0x129] sm:$0xff] %v159
  %225 = vst [vmem:[%s198 + $0x139] sm:$0xff] %v160
  %226 = vst [vmem:[%s198 + $0x141] sm:$0xff] %v161
  %227 = vst [vmem:[%s198 + $0x151] sm:$0xff] %v162
  %228 = vst [vmem:[%s198 + $0x159] sm:$0xff] %v163
  %229 = vst [vmem:[%s198 + $0x169] sm:$0xff] %v164
  %230 = vst [vmem:[%s198 + $0x171] sm:$0xff] %v165
  %231 = vst [vmem:[%s198 + $0x1b1] sm:$0xff] %v166
  %232 = vst [vmem:[%s198 + $0x1b9] sm:$0xff] %v167
  %233 = vst [vmem:[%s198 + $0x1c9] sm:$0xff] %v168
  %234 = vst [vmem:[%s198 + $0x1d1] sm:$0xff] %v169
  %235 = vst [vmem:[%s198 + $0x1e1] sm:$0xff] %v170
  %236 = vst [vmem:[%s198 + $0x1e9] sm:$0xff] %v171
  %237 = vst [vmem:[%s198 + $0x1f9] sm:$0xff] %v172
  %238 = vst [vmem:[%s198 + $0x201] sm:$0xff] %v173
  %239 = vst [vmem:[%s198 + $0x211] sm:$0xff] %v174
  %240 = vst [vmem:[%s198 + $0x219] sm:$0xff] %v175
  %241 = vst [vmem:[%s198 + $0x229] sm:$0xff] %v176
  %242 = vst [vmem:[%s198 + $0x231] sm:$0xff] %v177
  %243 = vst [vmem:[%s198 + $0x241] sm:$0xff] %v178
  %244 = vst [vmem:[%s198 + $0x249] sm:$0xff] %v179
  %245 = vst [vmem:[%s198 + $0x259] sm:$0xff] %v180
  %246 = vst [vmem:[%s198 + $0x261] sm:$0xff] %v181
  %247 = vst [vmem:[%s198 + $0x271] sm:$0xff] %v182
  %248 = vst [vmem:[%s198 + $0x279] sm:$0xff] %v183
  %249 = vst [vmem:[%s198 + $0x289] sm:$0xff] %v184
  %250 = vst [vmem:[%s198 + $0x291] sm:$0xff] %v185
  %251 = vst [vmem:[%s198 + $0x2a1] sm:$0xff] %v186
  %252 = vst [vmem:[%s198 + $0x2a9] sm:$0xff] %v187
  %253 = vst [vmem:[%s198 + $0x2b9] sm:$0xff] %v188
  %254 = vst [vmem:[%s198 + $0x2c1] sm:$0xff] %v189
  %255 = vst [vmem:[%s198 + $0x2d1] sm:$0xff] %v190
  %256 = vst [vmem:[%s198 + $0x2d9] sm:$0xff] %v191
  %257 = vst [vmem:[%s198 + $0x2e9] sm:$0xff] %v192
  %258 = vst [vmem:[%s198 + $0x2f1] sm:$0xff] %v193
  %259 = vst [vmem:[%s198 + $0x301] sm:$0xff] %v194
  %260 = vst [vmem:[%s198 + $0x309] sm:$0xff] %v195
  %261 = vst [vmem:[%s198 + $0x319] sm:$0xff] %v196
  %262 = vst [vmem:[%s198 + $0x321] sm:$0xff] %v197
  %v263 = vld [vmem:[#allocation2] sm:$0xff]
  %v264 = vld [vmem:[#allocation2 + $0x8] sm:$0xff]
  %v265 = vld [vmem:[#allocation2 + $0x10] sm:$0x3]
  %v266 = vld [vmem:[#allocation2 + $0x18] sm:$0xff]
  %v267 = vld [vmem:[#allocation2 + $0x20] sm:$0xff]
  %v268 = vld [vmem:[#allocation2 + $0x28] sm:$0x3]
  %v269 = vld [vmem:[#allocation2 + $0x30] sm:$0xff]
  %v270 = vld [vmem:[#allocation2 + $0x38] sm:$0xff]
  %v271 = vld [vmem:[#allocation2 + $0x40] sm:$0x3]
  %v272 = vld [vmem:[#allocation2 + $0x48] sm:$0xff]
  %v273 = vld [vmem:[#allocation2 + $0x50] sm:$0xff]
  %v274 = vld [vmem:[#allocation2 + $0x58] sm:$0x3]
  %v275 = vld [vmem:[#allocation2 + $0x60] sm:$0xff]
  %v276 = vld [vmem:[#allocation2 + $0x68] sm:$0xff]
  %v277 = vld [vmem:[#allocation2 + $0x70] sm:$0x3]
  %v278 = vld [vmem:[#allocation2 + $0x78] sm:$0xff]
  %v279 = vld [vmem:[#allocation2 + $0x80] sm:$0xff]
  %v280 = vld [vmem:[#allocation2 + $0x88] sm:$0x3]
  %v281 = vld [vmem:[#allocation2 + $0x90] sm:$0xff]
  %v282 = vld [vmem:[#allocation2 + $0x98] sm:$0xff]
  %v283 = vld [vmem:[#allocation2 + $0xa0] sm:$0x3]
  %v284 = vld [vmem:[#allocation2 + $0xa8] sm:$0xff]
  %v285 = vld [vmem:[#allocation2 + $0xb0] sm:$0xff]
  %v286 = vld [vmem:[#allocation2 + $0xb8] sm:$0x3]
  %v287 = vld [vmem:[#allocation2 + $0xc0] sm:$0xff]
  %v288 = vld [vmem:[#allocation2 + $0xc8] sm:$0xff]
  %v289 = vld [vmem:[#allocation2 + $0xd0] sm:$0x3]
  %v290 = vld [vmem:[#allocation2 + $0xd8] sm:$0xff]
  %v291 = vld [vmem:[#allocation2 + $0xe0] sm:$0xff]
  %v292 = vld [vmem:[#allocation2 + $0xe8] sm:$0x3]
  %v293 = vld [vmem:[#allocation2 + $0xf0] sm:$0xff]
  %v294 = vld [vmem:[#allocation2 + $0xf8] sm:$0xff]
  %v295 = vld [vmem:[#allocation2 + $0x100] sm:$0x3]
  %v296 = vld [vmem:[#allocation2 + $0x108] sm:$0xff]
  %v297 = vld [vmem:[#allocation2 + $0x110] sm:$0xff]
  %v298 = vld [vmem:[#allocation2 + $0x118] sm:$0x3]
  %v299 = vld [vmem:[#allocation2 + $0x120] sm:$0xff]
  %v300 = vld [vmem:[#allocation2 + $0x128] sm:$0xff]
  %v301 = vld [vmem:[#allocation2 + $0x130] sm:$0x3]
  %v302 = vld [vmem:[#allocation2 + $0x138] sm:$0xff]
  %v303 = vld [vmem:[#allocation2 + $0x140] sm:$0xff]
  %v304 = vld [vmem:[#allocation2 + $0x148] sm:$0x3]
  %v305 = vld [vmem:[#allocation2 + $0x150] sm:$0xff]
  %v306 = vld [vmem:[#allocation2 + $0x158] sm:$0xff]
  %v307 = vld [vmem:[#allocation2 + $0x160] sm:$0x3]
  %v308 = vld [vmem:[#allocation2 + $0x168] sm:$0xff]
  %v309 = vld [vmem:[#allocation2 + $0x170] sm:$0xff]
  %v310 = vld [vmem:[#allocation2 + $0x178] sm:$0x3]
  %v311 = vld [vmem:[#allocation2 + $0x180] sm:$0xff]
  %v312 = vld [vmem:[#allocation2 + $0x188] sm:$0xff]
  %v313 = vld [vmem:[#allocation2 + $0x190] sm:$0x3]
  %v314 = vld [vmem:[#allocation2 + $0x198] sm:$0xff]
  %v315 = vld [vmem:[#allocation2 + $0x1a0] sm:$0xff]
  %v316 = vld [vmem:[#allocation2 + $0x1a8] sm:$0x3]
  %v317 = vld [vmem:[#allocation2 + $0x1b0] sm:$0xff]
  %v318 = vld [vmem:[#allocation2 + $0x1b8] sm:$0xff]
  %v319 = vld [vmem:[#allocation2 + $0x1c0] sm:$0x3]
  %v320 = vld [vmem:[#allocation2 + $0x1c8] sm:$0xff]
  %v321 = vld [vmem:[#allocation2 + $0x1d0] sm:$0xff]
  %v322 = vld [vmem:[#allocation2 + $0x1d8] sm:$0x3]
  %v323 = vld [vmem:[#allocation2 + $0x1e0] sm:$0xff]
  %v324 = vld [vmem:[#allocation2 + $0x1e8] sm:$0xff]
  %v325 = vld [vmem:[#allocation2 + $0x1f0] sm:$0x3]
  %v326 = vld [vmem:[#allocation2 + $0x1f8] sm:$0xff]
  %v327 = vld [vmem:[#allocation2 + $0x200] sm:$0xff]
  %v328 = vld [vmem:[#allocation2 + $0x208] sm:$0x3]
  %v329 = vld [vmem:[#allocation2 + $0x210] sm:$0xff]
  %v330 = vld [vmem:[#allocation2 + $0x218] sm:$0xff]
  %v331 = vld [vmem:[#allocation2 + $0x220] sm:$0x3]
  %v332 = vld [vmem:[#allocation2 + $0x228] sm:$0xff]
  %v333 = vld [vmem:[#allocation2 + $0x230] sm:$0xff]
  %v334 = vld [vmem:[#allocation2 + $0x238] sm:$0x3]
  %v335 = vld [vmem:[#allocation2 + $0x240] sm:$0xff]
  %v336 = vld [vmem:[#allocation2 + $0x248] sm:$0xff]
  %v337 = vld [vmem:[#allocation2 + $0x250] sm:$0x3]
  %v338 = vld [vmem:[#allocation2 + $0x258] sm:$0xff]
  %v339 = vld [vmem:[#allocation2 + $0x260] sm:$0xff]
  %v340 = vld [vmem:[#allocation2 + $0x268] sm:$0x3]
  %v341 = vld [vmem:[#allocation2 + $0x270] sm:$0xff]
  %v342 = vld [vmem:[#allocation2 + $0x278] sm:$0xff]
  %v343 = vld [vmem:[#allocation2 + $0x280] sm:$0x3]
  %v344 = vld [vmem:[#allocation2 + $0x288] sm:$0xff]
  %v345 = vld [vmem:[#allocation2 + $0x290] sm:$0xff]
  %v346 = vld [vmem:[#allocation2 + $0x298] sm:$0x3]
  %v347 = vld [vmem:[#allocation2 + $0x2a0] sm:$0xff]
  %v348 = vld [vmem:[#allocation2 + $0x2a8] sm:$0xff]
  %v349 = vld [vmem:[#allocation2 + $0x2b0] sm:$0x3]
  %v350 = vld [vmem:[#allocation2 + $0x2b8] sm:$0xff]
  %v351 = vld [vmem:[#allocation2 + $0x2c0] sm:$0xff]
  %v352 = vld [vmem:[#allocation2 + $0x2c8] sm:$0x3]
  %v353 = vld [vmem:[#allocation2 + $0x2d0] sm:$0xff]
  %v354 = vld [vmem:[#allocation2 + $0x2d8] sm:$0xff]
  %v355 = vld [vmem:[#allocation2 + $0x2e0] sm:$0x3]
  %v356 = vld [vmem:[#allocation2 + $0x2e8] sm:$0xff]
  %v357 = vld [vmem:[#allocation2 + $0x2f0] sm:$0xff]
  %v358 = vld [vmem:[#allocation2 + $0x2f8] sm:$0x3]
  %v359 = vld [vmem:[#allocation2 + $0x300] sm:$0xff]
  %v360 = vld [vmem:[#allocation2 + $0x308] sm:$0xff]
  %v361 = vld [vmem:[#allocation2 + $0x310] sm:$0x3]
  %v362 = vld [vmem:[#allocation2 + $0x318] sm:$0xff]
  %v363 = vld [vmem:[#allocation2 + $0x320] sm:$0xff]
  %v364 = vld [vmem:[#allocation2 + $0x328] sm:$0x3]
  %v365 = vld [vmem:[#allocation2 + $0x330] sm:$0xff]
  %v366 = vld [vmem:[#allocation2 + $0x338] sm:$0xff]
  %v367 = vld [vmem:[#allocation2 + $0x340] sm:$0x3]
  %v368 = vld [vmem:[#allocation2 + $0x348] sm:$0xff]
  %v369 = vld [vmem:[#allocation2 + $0x350] sm:$0xff]
  %v370 = vld [vmem:[#allocation2 + $0x358] sm:$0x3]
  %v371 = vpack.c.bf16 %v263, %v263
  %v372 = vpack.c.bf16 %v264, %v264
  %v373 = vpack.c.bf16 %v266, %v266
  %v374 = vpack.c.bf16 %v267, %v267
  %v375 = vpack.c.bf16 %v269, %v269
  %v376 = vpack.c.bf16 %v270, %v270
  %v377 = vpack.c.bf16 %v272, %v272
  %v378 = vpack.c.bf16 %v273, %v273
  %v379 = vpack.c.bf16 %v275, %v275
  %v380 = vpack.c.bf16 %v276, %v276
  %v381 = vpack.c.bf16 %v278, %v278
  %v382 = vpack.c.bf16 %v279, %v279
  %v383 = vpack.c.bf16 %v281, %v281
  %v384 = vpack.c.bf16 %v282, %v282
  %v385 = vpack.c.bf16 %v284, %v284
  %v386 = vpack.c.bf16 %v285, %v285
  %v387 = vpack.c.bf16 %v287, %v287
  %v388 = vpack.c.bf16 %v288, %v288
  %v389 = vpack.c.bf16 %v290, %v290
  %v390 = vpack.c.bf16 %v291, %v291
  %v391 = vpack.c.bf16 %v293, %v293
  %v392 = vpack.c.bf16 %v294, %v294
  %v393 = vpack.c.bf16 %v296, %v296
  %v394 = vpack.c.bf16 %v297, %v297
  %v395 = vpack.c.bf16 %v299, %v299
  %v396 = vpack.c.bf16 %v300, %v300
  %v397 = vpack.c.bf16 %v302, %v302
  %v398 = vpack.c.bf16 %v303, %v303
  %v399 = vpack.c.bf16 %v305, %v305
  %v400 = vpack.c.bf16 %v306, %v306
  %v401 = vpack.c.bf16 %v308, %v308
  %v402 = vpack.c.bf16 %v309, %v309
  %v403 = vpack.c.bf16 %v317, %v317
  %v404 = vpack.c.bf16 %v318, %v318
  %v405 = vpack.c.bf16 %v320, %v320
  %v406 = vpack.c.bf16 %v321, %v321
  %v407 = vpack.c.bf16 %v323, %v323
  %v408 = vpack.c.bf16 %v324, %v324
  %v409 = vpack.c.bf16 %v326, %v326
  %v410 = vpack.c.bf16 %v327, %v327
  %v411 = vpack.c.bf16 %v329, %v329
  %v412 = vpack.c.bf16 %v330, %v330
  %v413 = vpack.c.bf16 %v332, %v332
  %v414 = vpack.c.bf16 %v333, %v333
  %v415 = vpack.c.bf16 %v335, %v335
  %v416 = vpack.c.bf16 %v336, %v336
  %v417 = vpack.c.bf16 %v338, %v338
  %v418 = vpack.c.bf16 %v339, %v339
  %v419 = vpack.c.bf16 %v341, %v341
  %v420 = vpack.c.bf16 %v342, %v342
  %v421 = vpack.c.bf16 %v344, %v344
  %v422 = vpack.c.bf16 %v345, %v345
  %v423 = vpack.c.bf16 %v347, %v347
  %v424 = vpack.c.bf16 %v348, %v348
  %v425 = vpack.c.bf16 %v350, %v350
  %v426 = vpack.c.bf16 %v351, %v351
  %v427 = vpack.c.bf16 %v353, %v353
  %v428 = vpack.c.bf16 %v354, %v354
  %v429 = vpack.c.bf16 %v356, %v356
  %v430 = vpack.c.bf16 %v357, %v357
  %v431 = vpack.c.bf16 %v359, %v359
  %v432 = vpack.c.bf16 %v360, %v360
  %v433 = vpack.c.bf16 %v362, %v362
  %v434 = vpack.c.bf16 %v363, %v363
  %vm531 = vcmask 1046528
  %v532 = vrot.slane %v263, 1
  %v533 = vrot.slane %v264, 1
  %v534 = vsel %vm531, %v532, %v533
  %v535 = vrot.slane %v265, 1
  %v536 = vsel %vm531, %v533, %v535
  %v537 = vrot.slane %v266, 1
  %v538 = vrot.slane %v267, 1
  %v539 = vsel %vm531, %v537, %v538
  %v540 = vrot.slane %v268, 1
  %v541 = vsel %vm531, %v538, %v540
  %v542 = vrot.slane %v269, 1
  %v543 = vrot.slane %v270, 1
  %v544 = vsel %vm531, %v542, %v543
  %v545 = vrot.slane %v271, 1
  %v546 = vsel %vm531, %v543, %v545
  %v547 = vrot.slane %v272, 1
  %v548 = vrot.slane %v273, 1
  %v549 = vsel %vm531, %v547, %v548
  %v550 = vrot.slane %v274, 1
  %v551 = vsel %vm531, %v548, %v550
  %v552 = vrot.slane %v275, 1
  %v553 = vrot.slane %v276, 1
  %v554 = vsel %vm531, %v552, %v553
  %v555 = vrot.slane %v277, 1
  %v556 = vsel %vm531, %v553, %v555
  %v557 = vrot.slane %v278, 1
  %v558 = vrot.slane %v279, 1
  %v559 = vsel %vm531, %v557, %v558
  %v560 = vrot.slane %v280, 1
  %v561 = vsel %vm531, %v558, %v560
  %v562 = vrot.slane %v281, 1
  %v563 = vrot.slane %v282, 1
  %v564 = vsel %vm531, %v562, %v563
  %v565 = vrot.slane %v283, 1
  %v566 = vsel %vm531, %v563, %v565
  %v567 = vrot.slane %v284, 1
  %v568 = vrot.slane %v285, 1
  %v569 = vsel %vm531, %v567, %v568
  %v570 = vrot.slane %v286, 1
  %v571 = vsel %vm531, %v568, %v570
  %v572 = vrot.slane %v287, 1
  %v573 = vrot.slane %v288, 1
  %v574 = vsel %vm531, %v572, %v573
  %v575 = vrot.slane %v289, 1
  %v576 = vsel %vm531, %v573, %v575
  %v577 = vrot.slane %v290, 1
  %v578 = vrot.slane %v291, 1
  %v579 = vsel %vm531, %v577, %v578
  %v580 = vrot.slane %v292, 1
  %v581 = vsel %vm531, %v578, %v580
  %v582 = vrot.slane %v293, 1
  %v583 = vrot.slane %v294, 1
  %v584 = vsel %vm531, %v582, %v583
  %v585 = vrot.slane %v295, 1
  %v586 = vsel %vm531, %v583, %v585
  %v587 = vrot.slane %v296, 1
  %v588 = vrot.slane %v297, 1
  %v589 = vsel %vm531, %v587, %v588
  %v590 = vrot.slane %v298, 1
  %v591 = vsel %vm531, %v588, %v590
  %v592 = vrot.slane %v299, 1
  %v593 = vrot.slane %v300, 1
  %v594 = vsel %vm531, %v592, %v593
  %v595 = vrot.slane %v301, 1
  %v596 = vsel %vm531, %v593, %v595
  %v597 = vrot.slane %v302, 1
  %v598 = vrot.slane %v303, 1
  %v599 = vsel %vm531, %v597, %v598
  %v600 = vrot.slane %v304, 1
  %v601 = vsel %vm531, %v598, %v600
  %v602 = vrot.slane %v305, 1
  %v603 = vrot.slane %v306, 1
  %v604 = vsel %vm531, %v602, %v603
  %v605 = vrot.slane %v307, 1
  %v606 = vsel %vm531, %v603, %v605
  %v607 = vrot.slane %v308, 1
  %v608 = vrot.slane %v309, 1
  %v609 = vsel %vm531, %v607, %v608
  %v610 = vrot.slane %v310, 1
  %v611 = vsel %vm531, %v608, %v610
  %v612 = vrot.slane %v317, 1
  %v613 = vrot.slane %v318, 1
  %v614 = vsel %vm531, %v612, %v613
  %v615 = vrot.slane %v319, 1
  %v616 = vsel %vm531, %v613, %v615
  %v617 = vrot.slane %v320, 1
  %v618 = vrot.slane %v321, 1
  %v619 = vsel %vm531, %v617, %v618
  %v620 = vrot.slane %v322, 1
  %v621 = vsel %vm531, %v618, %v620
  %v622 = vrot.slane %v323, 1
  %v623 = vrot.slane %v324, 1
  %v624 = vsel %vm531, %v622, %v623
  %v625 = vrot.slane %v325, 1
  %v626 = vsel %vm531, %v623, %v625
  %v627 = vrot.slane %v326, 1
  %v628 = vrot.slane %v327, 1
  %v629 = vsel %vm531, %v627, %v628
  %v630 = vrot.slane %v328, 1
  %v631 = vsel %vm531, %v628, %v630
  %v632 = vrot.slane %v329, 1
  %v633 = vrot.slane %v330, 1
  %v634 = vsel %vm531, %v632, %v633
  %v635 = vrot.slane %v331, 1
  %v636 = vsel %vm531, %v633, %v635
  %v637 = vrot.slane %v332, 1
  %v638 = vrot.slane %v333, 1
  %v639 = vsel %vm531, %v637, %v638
  %v640 = vrot.slane %v334, 1
  %v641 = vsel %vm531, %v638, %v640
  %v642 = vrot.slane %v335, 1
  %v643 = vrot.slane %v336, 1
  %v644 = vsel %vm531, %v642, %v643
  %v645 = vrot.slane %v337, 1
  %v646 = vsel %vm531, %v643, %v645
  %v647 = vrot.slane %v338, 1
  %v648 = vrot.slane %v339, 1
  %v649 = vsel %vm531, %v647, %v648
  %v650 = vrot.slane %v340, 1
  %v651 = vsel %vm531, %v648, %v650
  %v652 = vrot.slane %v341, 1
  %v653 = vrot.slane %v342, 1
  %v654 = vsel %vm531, %v652, %v653
  %v655 = vrot.slane %v343, 1
  %v656 = vsel %vm531, %v653, %v655
  %v657 = vrot.slane %v344, 1
  %v658 = vrot.slane %v345, 1
  %v659 = vsel %vm531, %v657, %v658
  %v660 = vrot.slane %v346, 1
  %v661 = vsel %vm531, %v658, %v660
  %v662 = vrot.slane %v347, 1
  %v663 = vrot.slane %v348, 1
  %v664 = vsel %vm531, %v662, %v663
  %v665 = vrot.slane %v349, 1
  %v666 = vsel %vm531, %v663, %v665
  %v667 = vrot.slane %v350, 1
  %v668 = vrot.slane %v351, 1
  %v669 = vsel %vm531, %v667, %v668
  %v670 = vrot.slane %v352, 1
  %v671 = vsel %vm531, %v668, %v670
  %v672 = vrot.slane %v353, 1
  %v673 = vrot.slane %v354, 1
  %v674 = vsel %vm531, %v672, %v673
  %v675 = vrot.slane %v355, 1
  %v676 = vsel %vm531, %v673, %v675
  %v677 = vrot.slane %v356, 1
  %v678 = vrot.slane %v357, 1
  %v679 = vsel %vm531, %v677, %v678
  %v680 = vrot.slane %v358, 1
  %v681 = vsel %vm531, %v678, %v680
  %v682 = vrot.slane %v359, 1
  %v683 = vrot.slane %v360, 1
  %v684 = vsel %vm531, %v682, %v683
  %v685 = vrot.slane %v361, 1
  %v686 = vsel %vm531, %v683, %v685
  %v687 = vrot.slane %v362, 1
  %v688 = vrot.slane %v363, 1
  %v689 = vsel %vm531, %v687, %v688
  %v690 = vrot.slane %v364, 1
  %v691 = vsel %vm531, %v688, %v690
  %v756 = vpack.c.bf16 %v534, %v534
  %v757 = vpack.c.bf16 %v536, %v536
  %v758 = vpack.c.bf16 %v539, %v539
  %v759 = vpack.c.bf16 %v541, %v541
  %v760 = vpack.c.bf16 %v544, %v544
  %v761 = vpack.c.bf16 %v546, %v546
  %v762 = vpack.c.bf16 %v549, %v549
  %v763 = vpack.c.bf16 %v551, %v551
  %v764 = vpack.c.bf16 %v554, %v554
  %v765 = vpack.c.bf16 %v556, %v556
  %v766 = vpack.c.bf16 %v559, %v559
  %v767 = vpack.c.bf16 %v561, %v561
  %v768 = vpack.c.bf16 %v564, %v564
  %v769 = vpack.c.bf16 %v566, %v566
  %v770 = vpack.c.bf16 %v569, %v569
  %v771 = vpack.c.bf16 %v571, %v571
  %v772 = vpack.c.bf16 %v574, %v574
  %v773 = vpack.c.bf16 %v576, %v576
  %v774 = vpack.c.bf16 %v579, %v579
  %v775 = vpack.c.bf16 %v581, %v581
  %v776 = vpack.c.bf16 %v584, %v584
  %v777 = vpack.c.bf16 %v586, %v586
  %v778 = vpack.c.bf16 %v589, %v589
  %v779 = vpack.c.bf16 %v591, %v591
  %v780 = vpack.c.bf16 %v594, %v594
  %v781 = vpack.c.bf16 %v596, %v596
  %v782 = vpack.c.bf16 %v599, %v599
  %v783 = vpack.c.bf16 %v601, %v601
  %v784 = vpack.c.bf16 %v604, %v604
  %v785 = vpack.c.bf16 %v606, %v606
  %v786 = vpack.c.bf16 %v609, %v609
  %v787 = vpack.c.bf16 %v611, %v611
  %v788 = vpack.c.bf16 %v614, %v614
  %v789 = vpack.c.bf16 %v616, %v616
  %v790 = vpack.c.bf16 %v619, %v619
  %v791 = vpack.c.bf16 %v621, %v621
  %v792 = vpack.c.bf16 %v624, %v624
  %v793 = vpack.c.bf16 %v626, %v626
  %v794 = vpack.c.bf16 %v629, %v629
  %v795 = vpack.c.bf16 %v631, %v631
  %v796 = vpack.c.bf16 %v634, %v634
  %v797 = vpack.c.bf16 %v636, %v636
  %v798 = vpack.c.bf16 %v639, %v639
  %v799 = vpack.c.bf16 %v641, %v641
  %v800 = vpack.c.bf16 %v644, %v644
  %v801 = vpack.c.bf16 %v646, %v646
  %v802 = vpack.c.bf16 %v649, %v649
  %v803 = vpack.c.bf16 %v651, %v651
  %v804 = vpack.c.bf16 %v654, %v654
  %v805 = vpack.c.bf16 %v656, %v656
  %v806 = vpack.c.bf16 %v659, %v659
  %v807 = vpack.c.bf16 %v661, %v661
  %v808 = vpack.c.bf16 %v664, %v664
  %v809 = vpack.c.bf16 %v666, %v666
  %v810 = vpack.c.bf16 %v669, %v669
  %v811 = vpack.c.bf16 %v671, %v671
  %v812 = vpack.c.bf16 %v674, %v674
  %v813 = vpack.c.bf16 %v676, %v676
  %v814 = vpack.c.bf16 %v679, %v679
  %v815 = vpack.c.bf16 %v681, %v681
  %v816 = vpack.c.bf16 %v684, %v684
  %v817 = vpack.c.bf16 %v686, %v686
  %v818 = vpack.c.bf16 %v689, %v689
  %v819 = vpack.c.bf16 %v691, %v691
  %vm820 = vcmask 1045504
  %v821 = vrot.slane %v263, 2
  %v822 = vrot.slane %v264, 2
  %v823 = vsel %vm820, %v821, %v822
  %v824 = vrot.slane %v265, 2
  %v825 = vsel %vm820, %v822, %v824
  %v826 = vrot.slane %v266, 2
  %v827 = vrot.slane %v267, 2
  %v828 = vsel %vm820, %v826, %v827
  %v829 = vrot.slane %v268, 2
  %v830 = vsel %vm820, %v827, %v829
  %v831 = vrot.slane %v269, 2
  %v832 = vrot.slane %v270, 2
  %v833 = vsel %vm820, %v831, %v832
  %v834 = vrot.slane %v271, 2
  %v835 = vsel %vm820, %v832, %v834
  %v836 = vrot.slane %v272, 2
  %v837 = vrot.slane %v273, 2
  %v838 = vsel %vm820, %v836, %v837
  %v839 = vrot.slane %v274, 2
  %v840 = vsel %vm820, %v837, %v839
  %v841 = vrot.slane %v275, 2
  %v842 = vrot.slane %v276, 2
  %v843 = vsel %vm820, %v841, %v842
  %v844 = vrot.slane %v277, 2
  %v845 = vsel %vm820, %v842, %v844
  %v846 = vrot.slane %v278, 2
  %v847 = vrot.slane %v279, 2
  %v848 = vsel %vm820, %v846, %v847
  %v849 = vrot.slane %v280, 2
  %v850 = vsel %vm820, %v847, %v849
  %v851 = vrot.slane %v281, 2
  %v852 = vrot.slane %v282, 2
  %v853 = vsel %vm820, %v851, %v852
  %v854 = vrot.slane %v283, 2
  %v855 = vsel %vm820, %v852, %v854
  %v856 = vrot.slane %v284, 2
  %v857 = vrot.slane %v285, 2
  %v858 = vsel %vm820, %v856, %v857
  %v859 = vrot.slane %v286, 2
  %v860 = vsel %vm820, %v857, %v859
  %v861 = vrot.slane %v287, 2
  %v862 = vrot.slane %v288, 2
  %v863 = vsel %vm820, %v861, %v862
  %v864 = vrot.slane %v289, 2
  %v865 = vsel %vm820, %v862, %v864
  %v866 = vrot.slane %v290, 2
  %v867 = vrot.slane %v291, 2
  %v868 = vsel %vm820, %v866, %v867
  %v869 = vrot.slane %v292, 2
  %v870 = vsel %vm820, %v867, %v869
  %v871 = vrot.slane %v293, 2
  %v872 = vrot.slane %v294, 2
  %v873 = vsel %vm820, %v871, %v872
  %v874 = vrot.slane %v295, 2
  %v875 = vsel %vm820, %v872, %v874
  %v876 = vrot.slane %v296, 2
  %v877 = vrot.slane %v297, 2
  %v878 = vsel %vm820, %v876, %v877
  %v879 = vrot.slane %v298, 2
  %v880 = vsel %vm820, %v877, %v879
  %v881 = vrot.slane %v299, 2
  %v882 = vrot.slane %v300, 2
  %v883 = vsel %vm820, %v881, %v882
  %v884 = vrot.slane %v301, 2
  %v885 = vsel %vm820, %v882, %v884
  %v886 = vrot.slane %v302, 2
  %v887 = vrot.slane %v303, 2
  %v888 = vsel %vm820, %v886, %v887
  %v889 = vrot.slane %v304, 2
  %v890 = vsel %vm820, %v887, %v889
  %v891 = vrot.slane %v305, 2
  %v892 = vrot.slane %v306, 2
  %v893 = vsel %vm820, %v891, %v892
  %v894 = vrot.slane %v307, 2
  %v895 = vsel %vm820, %v892, %v894
  %v896 = vrot.slane %v308, 2
  %v897 = vrot.slane %v309, 2
  %v898 = vsel %vm820, %v896, %v897
  %v899 = vrot.slane %v310, 2
  %v900 = vsel %vm820, %v897, %v899
  %v901 = vrot.slane %v317, 2
  %v902 = vrot.slane %v318, 2
  %v903 = vsel %vm820, %v901, %v902
  %v904 = vrot.slane %v319, 2
  %v905 = vsel %vm820, %v902, %v904
  %v906 = vrot.slane %v320, 2
  %v907 = vrot.slane %v321, 2
  %v908 = vsel %vm820, %v906, %v907
  %v909 = vrot.slane %v322, 2
  %v910 = vsel %vm820, %v907, %v909
  %v911 = vrot.slane %v323, 2
  %v912 = vrot.slane %v324, 2
  %v913 = vsel %vm820, %v911, %v912
  %v914 = vrot.slane %v325, 2
  %v915 = vsel %vm820, %v912, %v914
  %v916 = vrot.slane %v326, 2
  %v917 = vrot.slane %v327, 2
  %v918 = vsel %vm820, %v916, %v917
  %v919 = vrot.slane %v328, 2
  %v920 = vsel %vm820, %v917, %v919
  %v921 = vrot.slane %v329, 2
  %v922 = vrot.slane %v330, 2
  %v923 = vsel %vm820, %v921, %v922
  %v924 = vrot.slane %v331, 2
  %v925 = vsel %vm820, %v922, %v924
  %v926 = vrot.slane %v332, 2
  %v927 = vrot.slane %v333, 2
  %v928 = vsel %vm820, %v926, %v927
  %v929 = vrot.slane %v334, 2
  %v930 = vsel %vm820, %v927, %v929
  %v931 = vrot.slane %v335, 2
  %v932 = vrot.slane %v336, 2
  %v933 = vsel %vm820, %v931, %v932
  %v934 = vrot.slane %v337, 2
  %v935 = vsel %vm820, %v932, %v934
  %v936 = vrot.slane %v338, 2
  %v937 = vrot.slane %v339, 2
  %v938 = vsel %vm820, %v936, %v937
  %v939 = vrot.slane %v340, 2
  %v940 = vsel %vm820, %v937, %v939
  %v941 = vrot.slane %v341, 2
  %v942 = vrot.slane %v342, 2
  %v943 = vsel %vm820, %v941, %v942
  %v944 = vrot.slane %v343, 2
  %v945 = vsel %vm820, %v942, %v944
  %v946 = vrot.slane %v344, 2
  %v947 = vrot.slane %v345, 2
  %v948 = vsel %vm820, %v946, %v947
  %v949 = vrot.slane %v346, 2
  %v950 = vsel %vm820, %v947, %v949
  %v951 = vrot.slane %v347, 2
  %v952 = vrot.slane %v348, 2
  %v953 = vsel %vm820, %v951, %v952
  %v954 = vrot.slane %v349, 2
  %v955 = vsel %vm820, %v952, %v954
  %v956 = vrot.slane %v350, 2
  %v957 = vrot.slane %v351, 2
  %v958 = vsel %vm820, %v956, %v957
  %v959 = vrot.slane %v352, 2
  %v960 = vsel %vm820, %v957, %v959
  %v961 = vrot.slane %v353, 2
  %v962 = vrot.slane %v354, 2
  %v963 = vsel %vm820, %v961, %v962
  %v964 = vrot.slane %v355, 2
  %v965 = vsel %vm820, %v962, %v964
  %v966 = vrot.slane %v356, 2
  %v967 = vrot.slane %v357, 2
  %v968 = vsel %vm820, %v966, %v967
  %v969 = vrot.slane %v358, 2
  %v970 = vsel %vm820, %v967, %v969
  %v971 = vrot.slane %v359, 2
  %v972 = vrot.slane %v360, 2
  %v973 = vsel %vm820, %v971, %v972
  %v974 = vrot.slane %v361, 2
  %v975 = vsel %vm820, %v972, %v974
  %v976 = vrot.slane %v362, 2
  %v977 = vrot.slane %v363, 2
  %v978 = vsel %vm820, %v976, %v977
  %v979 = vrot.slane %v364, 2
  %v980 = vsel %vm820, %v977, %v979
  %v1045 = vpack.c.bf16 %v823, %v823
  %v1046 = vpack.c.bf16 %v825, %v825
  %v1047 = vpack.c.bf16 %v828, %v828
  %v1048 = vpack.c.bf16 %v830, %v830
  %v1049 = vpack.c.bf16 %v833, %v833
  %v1050 = vpack.c.bf16 %v835, %v835
  %v1051 = vpack.c.bf16 %v838, %v838
  %v1052 = vpack.c.bf16 %v840, %v840
  %v1053 = vpack.c.bf16 %v843, %v843
  %v1054 = vpack.c.bf16 %v845, %v845
  %v1055 = vpack.c.bf16 %v848, %v848
  %v1056 = vpack.c.bf16 %v850, %v850
  %v1057 = vpack.c.bf16 %v853, %v853
  %v1058 = vpack.c.bf16 %v855, %v855
  %v1059 = vpack.c.bf16 %v858, %v858
  %v1060 = vpack.c.bf16 %v860, %v860
  %v1061 = vpack.c.bf16 %v863, %v863
  %v1062 = vpack.c.bf16 %v865, %v865
  %v1063 = vpack.c.bf16 %v868, %v868
  %v1064 = vpack.c.bf16 %v870, %v870
  %v1065 = vpack.c.bf16 %v873, %v873
  %v1066 = vpack.c.bf16 %v875, %v875
  %v1067 = vpack.c.bf16 %v878, %v878
  %v1068 = vpack.c.bf16 %v880, %v880
  %v1069 = vpack.c.bf16 %v883, %v883
  %v1070 = vpack.c.bf16 %v885, %v885
  %v1071 = vpack.c.bf16 %v888, %v888
  %v1072 = vpack.c.bf16 %v890, %v890
  %v1073 = vpack.c.bf16 %v893, %v893
  %v1074 = vpack.c.bf16 %v895, %v895
  %v1075 = vpack.c.bf16 %v898, %v898
  %v1076 = vpack.c.bf16 %v900, %v900
  %v1077 = vpack.c.bf16 %v903, %v903
  %v1078 = vpack.c.bf16 %v905, %v905
  %v1079 = vpack.c.bf16 %v908, %v908
  %v1080 = vpack.c.bf16 %v910, %v910
  %v1081 = vpack.c.bf16 %v913, %v913
  %v1082 = vpack.c.bf16 %v915, %v915
  %v1083 = vpack.c.bf16 %v918, %v918
  %v1084 = vpack.c.bf16 %v920, %v920
  %v1085 = vpack.c.bf16 %v923, %v923
  %v1086 = vpack.c.bf16 %v925, %v925
  %v1087 = vpack.c.bf16 %v928, %v928
  %v1088 = vpack.c.bf16 %v930, %v930
  %v1089 = vpack.c.bf16 %v933, %v933
  %v1090 = vpack.c.bf16 %v935, %v935
  %v1091 = vpack.c.bf16 %v938, %v938
  %v1092 = vpack.c.bf16 %v940, %v940
  %v1093 = vpack.c.bf16 %v943, %v943
  %v1094 = vpack.c.bf16 %v945, %v945
  %v1095 = vpack.c.bf16 %v948, %v948
  %v1096 = vpack.c.bf16 %v950, %v950
  %v1097 = vpack.c.bf16 %v953, %v953
  %v1098 = vpack.c.bf16 %v955, %v955
  %v1099 = vpack.c.bf16 %v958, %v958
  %v1100 = vpack.c.bf16 %v960, %v960
  %v1101 = vpack.c.bf16 %v963, %v963
  %v1102 = vpack.c.bf16 %v965, %v965
  %v1103 = vpack.c.bf16 %v968, %v968
  %v1104 = vpack.c.bf16 %v970, %v970
  %v1105 = vpack.c.bf16 %v973, %v973
  %v1106 = vpack.c.bf16 %v975, %v975
  %v1107 = vpack.c.bf16 %v978, %v978
  %v1108 = vpack.c.bf16 %v980, %v980
  %v1109 = vpack.c.bf16 %v311, %v311
  %v1110 = vpack.c.bf16 %v312, %v312
  %v1111 = vpack.c.bf16 %v365, %v365
  %v1112 = vpack.c.bf16 %v366, %v366
  %v1119 = vrot.slane %v311, 1
  %v1120 = vrot.slane %v312, 1
  %v1121 = vsel %vm531, %v1119, %v1120
  %v1122 = vrot.slane %v313, 1
  %v1123 = vsel %vm531, %v1120, %v1122
  %v1124 = vrot.slane %v365, 1
  %v1125 = vrot.slane %v366, 1
  %v1126 = vsel %vm531, %v1124, %v1125
  %v1127 = vrot.slane %v367, 1
  %v1128 = vsel %vm531, %v1125, %v1127
  %v1133 = vpack.c.bf16 %v1121, %v1121
  %v1134 = vpack.c.bf16 %v1123, %v1123
  %v1135 = vpack.c.bf16 %v1126, %v1126
  %v1136 = vpack.c.bf16 %v1128, %v1128
  %v1137 = vrot.slane %v311, 2
  %v1138 = vrot.slane %v312, 2
  %v1139 = vsel %vm820, %v1137, %v1138
  %v1140 = vrot.slane %v313, 2
  %v1141 = vsel %vm820, %v1138, %v1140
  %v1142 = vrot.slane %v365, 2
  %v1143 = vrot.slane %v366, 2
  %v1144 = vsel %vm820, %v1142, %v1143
  %v1145 = vrot.slane %v367, 2
  %v1146 = vsel %vm820, %v1143, %v1145
  %v1151 = vpack.c.bf16 %v1139, %v1139
  %v1152 = vpack.c.bf16 %v1141, %v1141
  %v1153 = vpack.c.bf16 %v1144, %v1144
  %v1154 = vpack.c.bf16 %v1146, %v1146
  %v1155 = vpack.c.bf16 %v314, %v314
  %v1156 = vpack.c.bf16 %v315, %v315
  %v1157 = vpack.c.bf16 %v368, %v368
  %v1158 = vpack.c.bf16 %v369, %v369
  %v1165 = vrot.slane %v314, 1
  %v1166 = vrot.slane %v315, 1
  %v1167 = vsel %vm531, %v1165, %v1166
  %v1168 = vrot.slane %v316, 1
  %v1169 = vsel %vm531, %v1166, %v1168
  %v1170 = vrot.slane %v368, 1
  %v1171 = vrot.slane %v369, 1
  %v1172 = vsel %vm531, %v1170, %v1171
  %v1173 = vrot.slane %v370, 1
  %v1174 = vsel %vm531, %v1171, %v1173
  %v1179 = vpack.c.bf16 %v1167, %v1167
  %v1180 = vpack.c.bf16 %v1169, %v1169
  %v1181 = vpack.c.bf16 %v1172, %v1172
  %v1182 = vpack.c.bf16 %v1174, %v1174
  %v1183 = vrot.slane %v314, 2
  %v1184 = vrot.slane %v315, 2
  %v1185 = vsel %vm820, %v1183, %v1184
  %v1186 = vrot.slane %v316, 2
  %v1187 = vsel %vm820, %v1184, %v1186
  %v1188 = vrot.slane %v368, 2
  %v1189 = vrot.slane %v369, 2
  %v1190 = vsel %vm820, %v1188, %v1189
  %v1191 = vrot.slane %v370, 2
  %v1192 = vsel %vm820, %v1189, %v1191
  %v1197 = vpack.c.bf16 %v1185, %v1185
  %v1198 = vpack.c.bf16 %v1187, %v1187
  %v1199 = vpack.c.bf16 %v1190, %v1190
  %v1200 = vpack.c.bf16 %v1192, %v1192
  %v1265 = vunpack.c.l.b16 %v371
  %v1266 = vunpack.c.l.b16 %v372
  %v1267 = vunpack.c.l.b16 %v373
  %v1268 = vunpack.c.l.b16 %v374
  %v1269 = vunpack.c.l.b16 %v375
  %v1270 = vunpack.c.l.b16 %v376
  %v1271 = vunpack.c.l.b16 %v377
  %v1272 = vunpack.c.l.b16 %v378
  %v1273 = vunpack.c.l.b16 %v379
  %v1274 = vunpack.c.l.b16 %v380
  %v1275 = vunpack.c.l.b16 %v381
  %v1276 = vunpack.c.l.b16 %v382
  %v1277 = vunpack.c.l.b16 %v383
  %v1278 = vunpack.c.l.b16 %v384
  %v1279 = vunpack.c.l.b16 %v385
  %v1280 = vunpack.c.l.b16 %v386
  %v1281 = vunpack.c.l.b16 %v387
  %v1282 = vunpack.c.l.b16 %v388
  %v1283 = vunpack.c.l.b16 %v389
  %v1284 = vunpack.c.l.b16 %v390
  %v1285 = vunpack.c.l.b16 %v391
  %v1286 = vunpack.c.l.b16 %v392
  %v1287 = vunpack.c.l.b16 %v393
  %v1288 = vunpack.c.l.b16 %v394
  %v1289 = vunpack.c.l.b16 %v395
  %v1290 = vunpack.c.l.b16 %v396
  %v1291 = vunpack.c.l.b16 %v397
  %v1292 = vunpack.c.l.b16 %v398
  %v1293 = vunpack.c.l.b16 %v399
  %v1294 = vunpack.c.l.b16 %v400
  %v1295 = vunpack.c.l.b16 %v401
  %v1296 = vunpack.c.l.b16 %v402
  %v1297 = vunpack.c.l.b16 %v403
  %v1298 = vunpack.c.l.b16 %v404
  %v1299 = vunpack.c.l.b16 %v405
  %v1300 = vunpack.c.l.b16 %v406
  %v1301 = vunpack.c.l.b16 %v407
  %v1302 = vunpack.c.l.b16 %v408
  %v1303 = vunpack.c.l.b16 %v409
  %v1304 = vunpack.c.l.b16 %v410
  %v1305 = vunpack.c.l.b16 %v411
  %v1306 = vunpack.c.l.b16 %v412
  %v1307 = vunpack.c.l.b16 %v413
  %v1308 = vunpack.c.l.b16 %v414
  %v1309 = vunpack.c.l.b16 %v415
  %v1310 = vunpack.c.l.b16 %v416
  %v1311 = vunpack.c.l.b16 %v417
  %v1312 = vunpack.c.l.b16 %v418
  %v1313 = vunpack.c.l.b16 %v419
  %v1314 = vunpack.c.l.b16 %v420
  %v1315 = vunpack.c.l.b16 %v421
  %v1316 = vunpack.c.l.b16 %v422
  %v1317 = vunpack.c.l.b16 %v423
  %v1318 = vunpack.c.l.b16 %v424
  %v1319 = vunpack.c.l.b16 %v425
  %v1320 = vunpack.c.l.b16 %v426
  %v1321 = vunpack.c.l.b16 %v427
  %v1322 = vunpack.c.l.b16 %v428
  %v1323 = vunpack.c.l.b16 %v429
  %v1324 = vunpack.c.l.b16 %v430
  %v1325 = vunpack.c.l.b16 %v431
  %v1326 = vunpack.c.l.b16 %v432
  %v1327 = vunpack.c.l.b16 %v433
  %v1328 = vunpack.c.l.b16 %v434
  %v1329 = vpack.c.b16 %v1266, %v1265
  %v1330 = vpack.c.b16 %v1268, %v1267
  %v1331 = vpack.c.b16 %v1270, %v1269
  %v1332 = vpack.c.b16 %v1272, %v1271
  %v1333 = vpack.c.b16 %v1274, %v1273
  %v1334 = vpack.c.b16 %v1276, %v1275
  %v1335 = vpack.c.b16 %v1278, %v1277
  %v1336 = vpack.c.b16 %v1280, %v1279
  %v1337 = vpack.c.b16 %v1282, %v1281
  %v1338 = vpack.c.b16 %v1284, %v1283
  %v1339 = vpack.c.b16 %v1286, %v1285
  %v1340 = vpack.c.b16 %v1288, %v1287
  %v1341 = vpack.c.b16 %v1290, %v1289
  %v1342 = vpack.c.b16 %v1292, %v1291
  %v1343 = vpack.c.b16 %v1294, %v1293
  %v1344 = vpack.c.b16 %v1296, %v1295
  %v1345 = vpack.c.b16 %v1298, %v1297
  %v1346 = vpack.c.b16 %v1300, %v1299
  %v1347 = vpack.c.b16 %v1302, %v1301
  %v1348 = vpack.c.b16 %v1304, %v1303
  %v1349 = vpack.c.b16 %v1306, %v1305
  %v1350 = vpack.c.b16 %v1308, %v1307
  %v1351 = vpack.c.b16 %v1310, %v1309
  %v1352 = vpack.c.b16 %v1312, %v1311
  %v1353 = vpack.c.b16 %v1314, %v1313
  %v1354 = vpack.c.b16 %v1316, %v1315
  %v1355 = vpack.c.b16 %v1318, %v1317
  %v1356 = vpack.c.b16 %v1320, %v1319
  %v1357 = vpack.c.b16 %v1322, %v1321
  %v1358 = vpack.c.b16 %v1324, %v1323
  %v1359 = vpack.c.b16 %v1326, %v1325
  %v1360 = vpack.c.b16 %v1328, %v1327
  %v1457 = vunpack.c.l.b16 %v756
  %v1458 = vunpack.c.l.b16 %v757
  %v1459 = vunpack.c.l.b16 %v758
  %v1460 = vunpack.c.l.b16 %v759
  %v1461 = vunpack.c.l.b16 %v760
  %v1462 = vunpack.c.l.b16 %v761
  %v1463 = vunpack.c.l.b16 %v762
  %v1464 = vunpack.c.l.b16 %v763
  %v1465 = vunpack.c.l.b16 %v764
  %v1466 = vunpack.c.l.b16 %v765
  %v1467 = vunpack.c.l.b16 %v766
  %v1468 = vunpack.c.l.b16 %v767
  %v1469 = vunpack.c.l.b16 %v768
  %v1470 = vunpack.c.l.b16 %v769
  %v1471 = vunpack.c.l.b16 %v770
  %v1472 = vunpack.c.l.b16 %v771
  %v1473 = vunpack.c.l.b16 %v772
  %v1474 = vunpack.c.l.b16 %v773
  %v1475 = vunpack.c.l.b16 %v774
  %v1476 = vunpack.c.l.b16 %v775
  %v1477 = vunpack.c.l.b16 %v776
  %v1478 = vunpack.c.l.b16 %v777
  %v1479 = vunpack.c.l.b16 %v778
  %v1480 = vunpack.c.l.b16 %v779
  %v1481 = vunpack.c.l.b16 %v780
  %v1482 = vunpack.c.l.b16 %v781
  %v1483 = vunpack.c.l.b16 %v782
  %v1484 = vunpack.c.l.b16 %v783
  %v1485 = vunpack.c.l.b16 %v784
  %v1486 = vunpack.c.l.b16 %v785
  %v1487 = vunpack.c.l.b16 %v786
  %v1488 = vunpack.c.l.b16 %v787
  %v1489 = vunpack.c.l.b16 %v788
  %v1490 = vunpack.c.l.b16 %v789
  %v1491 = vunpack.c.l.b16 %v790
  %v1492 = vunpack.c.l.b16 %v791
  %v1493 = vunpack.c.l.b16 %v792
  %v1494 = vunpack.c.l.b16 %v793
  %v1495 = vunpack.c.l.b16 %v794
  %v1496 = vunpack.c.l.b16 %v795
  %v1497 = vunpack.c.l.b16 %v796
  %v1498 = vunpack.c.l.b16 %v797
  %v1499 = vunpack.c.l.b16 %v798
  %v1500 = vunpack.c.l.b16 %v799
  %v1501 = vunpack.c.l.b16 %v800
  %v1502 = vunpack.c.l.b16 %v801
  %v1503 = vunpack.c.l.b16 %v802
  %v1504 = vunpack.c.l.b16 %v803
  %v1505 = vunpack.c.l.b16 %v804
  %v1506 = vunpack.c.l.b16 %v805
  %v1507 = vunpack.c.l.b16 %v806
  %v1508 = vunpack.c.l.b16 %v807
  %v1509 = vunpack.c.l.b16 %v808
  %v1510 = vunpack.c.l.b16 %v809
  %v1511 = vunpack.c.l.b16 %v810
  %v1512 = vunpack.c.l.b16 %v811
  %v1513 = vunpack.c.l.b16 %v812
  %v1514 = vunpack.c.l.b16 %v813
  %v1515 = vunpack.c.l.b16 %v814
  %v1516 = vunpack.c.l.b16 %v815
  %v1517 = vunpack.c.l.b16 %v816
  %v1518 = vunpack.c.l.b16 %v817
  %v1519 = vunpack.c.l.b16 %v818
  %v1520 = vunpack.c.l.b16 %v819
  %v1521 = vpack.c.b16 %v1458, %v1457
  %v1522 = vpack.c.b16 %v1460, %v1459
  %v1523 = vpack.c.b16 %v1462, %v1461
  %v1524 = vpack.c.b16 %v1464, %v1463
  %v1525 = vpack.c.b16 %v1466, %v1465
  %v1526 = vpack.c.b16 %v1468, %v1467
  %v1527 = vpack.c.b16 %v1470, %v1469
  %v1528 = vpack.c.b16 %v1472, %v1471
  %v1529 = vpack.c.b16 %v1474, %v1473
  %v1530 = vpack.c.b16 %v1476, %v1475
  %v1531 = vpack.c.b16 %v1478, %v1477
  %v1532 = vpack.c.b16 %v1480, %v1479
  %v1533 = vpack.c.b16 %v1482, %v1481
  %v1534 = vpack.c.b16 %v1484, %v1483
  %v1535 = vpack.c.b16 %v1486, %v1485
  %v1536 = vpack.c.b16 %v1488, %v1487
  %v1537 = vpack.c.b16 %v1490, %v1489
  %v1538 = vpack.c.b16 %v1492, %v1491
  %v1539 = vpack.c.b16 %v1494, %v1493
  %v1540 = vpack.c.b16 %v1496, %v1495
  %v1541 = vpack.c.b16 %v1498, %v1497
  %v1542 = vpack.c.b16 %v1500, %v1499
  %v1543 = vpack.c.b16 %v1502, %v1501
  %v1544 = vpack.c.b16 %v1504, %v1503
  %v1545 = vpack.c.b16 %v1506, %v1505
  %v1546 = vpack.c.b16 %v1508, %v1507
  %v1547 = vpack.c.b16 %v1510, %v1509
  %v1548 = vpack.c.b16 %v1512, %v1511
  %v1549 = vpack.c.b16 %v1514, %v1513
  %v1550 = vpack.c.b16 %v1516, %v1515
  %v1551 = vpack.c.b16 %v1518, %v1517
  %v1552 = vpack.c.b16 %v1520, %v1519
  %v1649 = vunpack.c.l.b16 %v1045
  %v1650 = vunpack.c.l.b16 %v1046
  %v1651 = vunpack.c.l.b16 %v1047
  %v1652 = vunpack.c.l.b16 %v1048
  %v1653 = vunpack.c.l.b16 %v1049
  %v1654 = vunpack.c.l.b16 %v1050
  %v1655 = vunpack.c.l.b16 %v1051
  %v1656 = vunpack.c.l.b16 %v1052
  %v1657 = vunpack.c.l.b16 %v1053
  %v1658 = vunpack.c.l.b16 %v1054
  %v1659 = vunpack.c.l.b16 %v1055
  %v1660 = vunpack.c.l.b16 %v1056
  %v1661 = vunpack.c.l.b16 %v1057
  %v1662 = vunpack.c.l.b16 %v1058
  %v1663 = vunpack.c.l.b16 %v1059
  %v1664 = vunpack.c.l.b16 %v1060
  %v1665 = vunpack.c.l.b16 %v1061
  %v1666 = vunpack.c.l.b16 %v1062
  %v1667 = vunpack.c.l.b16 %v1063
  %v1668 = vunpack.c.l.b16 %v1064
  %v1669 = vunpack.c.l.b16 %v1065
  %v1670 = vunpack.c.l.b16 %v1066
  %v1671 = vunpack.c.l.b16 %v1067
  %v1672 = vunpack.c.l.b16 %v1068
  %v1673 = vunpack.c.l.b16 %v1069
  %v1674 = vunpack.c.l.b16 %v1070
  %v1675 = vunpack.c.l.b16 %v1071
  %v1676 = vunpack.c.l.b16 %v1072
  %v1677 = vunpack.c.l.b16 %v1073
  %v1678 = vunpack.c.l.b16 %v1074
  %v1679 = vunpack.c.l.b16 %v1075
  %v1680 = vunpack.c.l.b16 %v1076
  %v1681 = vunpack.c.l.b16 %v1077
  %v1682 = vunpack.c.l.b16 %v1078
  %v1683 = vunpack.c.l.b16 %v1079
  %v1684 = vunpack.c.l.b16 %v1080
  %v1685 = vunpack.c.l.b16 %v1081
  %v1686 = vunpack.c.l.b16 %v1082
  %v1687 = vunpack.c.l.b16 %v1083
  %v1688 = vunpack.c.l.b16 %v1084
  %v1689 = vunpack.c.l.b16 %v1085
  %v1690 = vunpack.c.l.b16 %v1086
  %v1691 = vunpack.c.l.b16 %v1087
  %v1692 = vunpack.c.l.b16 %v1088
  %v1693 = vunpack.c.l.b16 %v1089
  %v1694 = vunpack.c.l.b16 %v1090
  %v1695 = vunpack.c.l.b16 %v1091
  %v1696 = vunpack.c.l.b16 %v1092
  %v1697 = vunpack.c.l.b16 %v1093
  %v1698 = vunpack.c.l.b16 %v1094
  %v1699 = vunpack.c.l.b16 %v1095
  %v1700 = vunpack.c.l.b16 %v1096
  %v1701 = vunpack.c.l.b16 %v1097
  %v1702 = vunpack.c.l.b16 %v1098
  %v1703 = vunpack.c.l.b16 %v1099
  %v1704 = vunpack.c.l.b16 %v1100
  %v1705 = vunpack.c.l.b16 %v1101
  %v1706 = vunpack.c.l.b16 %v1102
  %v1707 = vunpack.c.l.b16 %v1103
  %v1708 = vunpack.c.l.b16 %v1104
  %v1709 = vunpack.c.l.b16 %v1105
  %v1710 = vunpack.c.l.b16 %v1106
  %v1711 = vunpack.c.l.b16 %v1107
  %v1712 = vunpack.c.l.b16 %v1108
  %v1713 = vpack.c.b16 %v1650, %v1649
  %v1714 = vpack.c.b16 %v1652, %v1651
  %v1715 = vpack.c.b16 %v1654, %v1653
  %v1716 = vpack.c.b16 %v1656, %v1655
  %v1717 = vpack.c.b16 %v1658, %v1657
  %v1718 = vpack.c.b16 %v1660, %v1659
  %v1719 = vpack.c.b16 %v1662, %v1661
  %v1720 = vpack.c.b16 %v1664, %v1663
  %v1721 = vpack.c.b16 %v1666, %v1665
  %v1722 = vpack.c.b16 %v1668, %v1667
  %v1723 = vpack.c.b16 %v1670, %v1669
  %v1724 = vpack.c.b16 %v1672, %v1671
  %v1725 = vpack.c.b16 %v1674, %v1673
  %v1726 = vpack.c.b16 %v1676, %v1675
  %v1727 = vpack.c.b16 %v1678, %v1677
  %v1728 = vpack.c.b16 %v1680, %v1679
  %v1729 = vpack.c.b16 %v1682, %v1681
  %v1730 = vpack.c.b16 %v1684, %v1683
  %v1731 = vpack.c.b16 %v1686, %v1685
  %v1732 = vpack.c.b16 %v1688, %v1687
  %v1733 = vpack.c.b16 %v1690, %v1689
  %v1734 = vpack.c.b16 %v1692, %v1691
  %v1735 = vpack.c.b16 %v1694, %v1693
  %v1736 = vpack.c.b16 %v1696, %v1695
  %v1737 = vpack.c.b16 %v1698, %v1697
  %v1738 = vpack.c.b16 %v1700, %v1699
  %v1739 = vpack.c.b16 %v1702, %v1701
  %v1740 = vpack.c.b16 %v1704, %v1703
  %v1741 = vpack.c.b16 %v1706, %v1705
  %v1742 = vpack.c.b16 %v1708, %v1707
  %v1743 = vpack.c.b16 %v1710, %v1709
  %v1744 = vpack.c.b16 %v1712, %v1711
  %v1781 = vunpack.c.l.b16 %v1109
  %v1782 = vunpack.c.l.b16 %v1110
  %v1783 = vunpack.c.l.b16 %v1111
  %v1784 = vunpack.c.l.b16 %v1112
  %v1785 = vpack.c.b16 %v1782, %v1781
  %v1786 = vpack.c.b16 %v1784, %v1783
  %v1793 = vunpack.c.l.b16 %v1133
  %v1794 = vunpack.c.l.b16 %v1134
  %v1795 = vunpack.c.l.b16 %v1135
  %v1796 = vunpack.c.l.b16 %v1136
  %v1797 = vpack.c.b16 %v1794, %v1793
  %v1798 = vpack.c.b16 %v1796, %v1795
  %v1805 = vunpack.c.l.b16 %v1151
  %v1806 = vunpack.c.l.b16 %v1152
  %v1807 = vunpack.c.l.b16 %v1153
  %v1808 = vunpack.c.l.b16 %v1154
  %v1809 = vpack.c.b16 %v1806, %v1805
  %v1810 = vpack.c.b16 %v1808, %v1807
  %v1817 = vunpack.c.l.b16 %v1155
  %v1818 = vunpack.c.l.b16 %v1156
  %v1819 = vunpack.c.l.b16 %v1157
  %v1820 = vunpack.c.l.b16 %v1158
  %v1821 = vpack.c.b16 %v1818, %v1817
  %v1822 = vpack.c.b16 %v1820, %v1819
  %v1829 = vunpack.c.l.b16 %v1179
  %v1830 = vunpack.c.l.b16 %v1180
  %v1831 = vunpack.c.l.b16 %v1181
  %v1832 = vunpack.c.l.b16 %v1182
  %v1833 = vpack.c.b16 %v1830, %v1829
  %v1834 = vpack.c.b16 %v1832, %v1831
  %v1841 = vunpack.c.l.b16 %v1197
  %v1842 = vunpack.c.l.b16 %v1198
  %v1843 = vunpack.c.l.b16 %v1199
  %v1844 = vunpack.c.l.b16 %v1200
  %v1845 = vpack.c.b16 %v1842, %v1841
  %v1846 = vpack.c.b16 %v1844, %v1843
  %v1849 = vld [vmem:[%s1] sm:$0xf]
  %v1850 = vld [vmem:[%s1 + $0x4] sm:$0xf]
  %v1851 = vld [vmem:[%s1 + $0x8] sm:$0xf]
  %v1852 = vld [vmem:[%s1 + $0xc] sm:$0xf]
  %v1853 = vld [vmem:[%s1 + $0x10] sm:$0xf]
  %v1854 = vld [vmem:[%s1 + $0x14] sm:$0xf]
  %v1855 = vld [vmem:[%s1 + $0x18] sm:$0xf]
  %v1856 = vld [vmem:[%s1 + $0x1c] sm:$0xf]
  %v1857 = vld [vmem:[%s1 + $0x20] sm:$0xf]
  %v1858 = vld [vmem:[%s1 + $0x24] sm:$0xf]
  %v1859 = vld [vmem:[%s1 + $0x28] sm:$0xf]
  %v1860 = vld [vmem:[%s1 + $0x2c] sm:$0xf]
  %v1861 = vld [vmem:[%s1 + $0x30] sm:$0xf]
  %v1862 = vld [vmem:[%s1 + $0x34] sm:$0xf]
  %v1863 = vld [vmem:[%s1 + $0x38] sm:$0xf]
  %v1864 = vld [vmem:[%s1 + $0x3c] sm:$0xf]
  %v1865 = vld [vmem:[%s1 + $0x40] sm:$0xf]
  %v1866 = vld [vmem:[%s1 + $0x44] sm:$0xf]
  %v1867 = vld [vmem:[%s1 + $0x48] sm:$0xf]
  %v1868 = vld [vmem:[%s1 + $0x4c] sm:$0xf]
  %v1869 = vld [vmem:[%s1 + $0x50] sm:$0xf]
  %v1870 = vld [vmem:[%s1 + $0x54] sm:$0xf]
  %v1871 = vld [vmem:[%s1 + $0x58] sm:$0xf]
  %v1872 = vld [vmem:[%s1 + $0x5c] sm:$0xf]
  %v1873 = vld [vmem:[%s1 + $0x60] sm:$0xf]
  %v1874 = vld [vmem:[%s1 + $0x64] sm:$0xf]
  %v1875 = vld [vmem:[%s1 + $0x68] sm:$0xf]
  %v1876 = vld [vmem:[%s1 + $0x6c] sm:$0xf]
  %v1877 = vld [vmem:[%s1 + $0x70] sm:$0xf]
  %v1878 = vld [vmem:[%s1 + $0x74] sm:$0xf]
  %v1879 = vld [vmem:[%s1 + $0x78] sm:$0xf]
  %v1880 = vld [vmem:[%s1 + $0x7c] sm:$0xf]
  %v1881 = vld [vmem:[%s1 + $0x80] sm:$0xf]
  %v1882 = vld [vmem:[%s1 + $0x84] sm:$0xf]
  %v1883 = vld [vmem:[%s1 + $0x88] sm:$0xf]
  %v1884 = vld [vmem:[%s1 + $0x8c] sm:$0xf]
  %v1885 = vld [vmem:[%s1 + $0x90] sm:$0xf]
  %v1886 = vld [vmem:[%s1 + $0x94] sm:$0xf]
  %v1887 = vld [vmem:[%s1 + $0x98] sm:$0xf]
  %v1888 = vld [vmem:[%s1 + $0x9c] sm:$0xf]
  %v1889 = vld [vmem:[%s1 + $0xa0] sm:$0xf]
  %v1890 = vld [vmem:[%s1 + $0xa4] sm:$0xf]
  %v1891 = vld [vmem:[%s1 + $0xa8] sm:$0xf]
  %v1892 = vld [vmem:[%s1 + $0xac] sm:$0xf]
  %v1893 = vld [vmem:[%s1 + $0xb0] sm:$0xf]
  %v1894 = vld [vmem:[%s1 + $0xb4] sm:$0xf]
  %v1895 = vld [vmem:[%s1 + $0xb8] sm:$0xf]
  %v1896 = vld [vmem:[%s1 + $0xbc] sm:$0xf]
  %v1897 = vld [vmem:[%s1 + $0xc0] sm:$0xf]
  %v1898 = vld [vmem:[%s1 + $0xc4] sm:$0xf]
  %v1899 = vld [vmem:[%s1 + $0xc8] sm:$0xf]
  %v1900 = vld [vmem:[%s1 + $0xcc] sm:$0xf]
  %v1901 = vld [vmem:[%s1 + $0xd0] sm:$0xf]
  %v1902 = vld [vmem:[%s1 + $0xd4] sm:$0xf]
  %v1903 = vld [vmem:[%s1 + $0xd8] sm:$0xf]
  %v1904 = vld [vmem:[%s1 + $0xdc] sm:$0xf]
  %v1905 = vld [vmem:[%s1 + $0xe0] sm:$0xf]
  %v1906 = vld [vmem:[%s1 + $0xe4] sm:$0xf]
  %v1907 = vld [vmem:[%s1 + $0xe8] sm:$0xf]
  %v1908 = vld [vmem:[%s1 + $0xec] sm:$0xf]
  %v1909 = vld [vmem:[%s1 + $0xf0] sm:$0xf]
  %v1910 = vld [vmem:[%s1 + $0xf4] sm:$0xf]
  %v1911 = vld [vmem:[%s1 + $0xf8] sm:$0xf]
  %v1912 = vld [vmem:[%s1 + $0xfc] sm:$0xf]
  %v1913 = vld [vmem:[%s1 + $0x100] sm:$0xf]
  %v1914 = vld [vmem:[%s1 + $0x104] sm:$0xf]
  %v1915 = vld [vmem:[%s1 + $0x108] sm:$0xf]
  %v1916 = vld [vmem:[%s1 + $0x10c] sm:$0xf]
  %v1917 = vld [vmem:[%s1 + $0x110] sm:$0xf]
  %v1918 = vld [vmem:[%s1 + $0x114] sm:$0xf]
  %v1919 = vld [vmem:[%s1 + $0x118] sm:$0xf]
  %v1920 = vld [vmem:[%s1 + $0x11c] sm:$0xf]
  %v1921 = vld [vmem:[%s1 + $0x120] sm:$0xf]
  %v1922 = vld [vmem:[%s1 + $0x124] sm:$0xf]
  %v1923 = vld [vmem:[%s1 + $0x128] sm:$0xf]
  %v1924 = vld [vmem:[%s1 + $0x12c] sm:$0xf]
  %v1925 = vld [vmem:[%s1 + $0x130] sm:$0xf]
  %v1926 = vld [vmem:[%s1 + $0x134] sm:$0xf]
  %v1927 = vld [vmem:[%s1 + $0x138] sm:$0xf]
  %v1928 = vld [vmem:[%s1 + $0x13c] sm:$0xf]
  %v1929 = vld [vmem:[%s1 + $0x140] sm:$0xf]
  %v1930 = vld [vmem:[%s1 + $0x144] sm:$0xf]
  %v1931 = vld [vmem:[%s1 + $0x148] sm:$0xf]
  %v1932 = vld [vmem:[%s1 + $0x14c] sm:$0xf]
  %v1933 = vld [vmem:[%s1 + $0x150] sm:$0xf]
  %v1934 = vld [vmem:[%s1 + $0x154] sm:$0xf]
  %v1935 = vld [vmem:[%s1 + $0x158] sm:$0xf]
  %v1936 = vld [vmem:[%s1 + $0x15c] sm:$0xf]
  %v1937 = vld [vmem:[%s1 + $0x160] sm:$0xf]
  %v1938 = vld [vmem:[%s1 + $0x164] sm:$0xf]
  %v1939 = vld [vmem:[%s1 + $0x168] sm:$0xf]
  %v1940 = vld [vmem:[%s1 + $0x16c] sm:$0xf]
  %v1941 = vld [vmem:[%s1 + $0x170] sm:$0xf]
  %v1942 = vld [vmem:[%s1 + $0x174] sm:$0xf]
  %v1943 = vld [vmem:[%s1 + $0x178] sm:$0xf]
  %v1944 = vld [vmem:[%s1 + $0x17c] sm:$0xf]
  %v1945 = vld [vmem:[%s1 + $0x180] sm:$0xf]
  %v1946 = vld [vmem:[%s1 + $0x184] sm:$0xf]
  %v1947 = vld [vmem:[%s1 + $0x188] sm:$0xf]
  %v1948 = vld [vmem:[%s1 + $0x18c] sm:$0xf]
  %v1949 = vld [vmem:[%s1 + $0x190] sm:$0xf]
  %v1950 = vld [vmem:[%s1 + $0x194] sm:$0xf]
  %v1951 = vld [vmem:[%s1 + $0x198] sm:$0xf]
  %v1952 = vld [vmem:[%s1 + $0x19c] sm:$0xf]
  %v1953 = vld [vmem:[%s1 + $0x1a0] sm:$0xf]
  %v1954 = vld [vmem:[%s1 + $0x1a4] sm:$0xf]
  %v1955 = vld [vmem:[%s1 + $0x1a8] sm:$0xf]
  %v1956 = vld [vmem:[%s1 + $0x1ac] sm:$0xf]
  %v1957 = vld [vmem:[%s1 + $0x1b0] sm:$0xf]
  %v1958 = vld [vmem:[%s1 + $0x1b4] sm:$0xf]
  %v1959 = vld [vmem:[%s1 + $0x1b8] sm:$0xf]
  %v1960 = vld [vmem:[%s1 + $0x1bc] sm:$0xf]
  %v1961 = vld [vmem:[%s1 + $0x1c0] sm:$0xf]
  %v1962 = vld [vmem:[%s1 + $0x1c4] sm:$0xf]
  %v1963 = vld [vmem:[%s1 + $0x1c8] sm:$0xf]
  %v1964 = vld [vmem:[%s1 + $0x1cc] sm:$0xf]
  %v1965 = vld [vmem:[%s1 + $0x1d0] sm:$0xf]
  %v1966 = vld [vmem:[%s1 + $0x1d4] sm:$0xf]
  %v1967 = vld [vmem:[%s1 + $0x1d8] sm:$0xf]
  %v1968 = vld [vmem:[%s1 + $0x1dc] sm:$0xf]
  %v1969 = vld [vmem:[%s1 + $0x1e0] sm:$0xf]
  %v1970 = vld [vmem:[%s1 + $0x1e4] sm:$0xf]
  %v1971 = vld [vmem:[%s1 + $0x1e8] sm:$0xf]
  %v1972 = vld [vmem:[%s1 + $0x1ec] sm:$0xf]
  %v1973 = vld [vmem:[%s1 + $0x1f0] sm:$0xf]
  %v1974 = vld [vmem:[%s1 + $0x1f4] sm:$0xf]
  %v1975 = vld [vmem:[%s1 + $0x1f8] sm:$0xf]
  %v1976 = vld [vmem:[%s1 + $0x1fc] sm:$0xf]
  %v1977 = vld [vmem:[%s1 + $0x200] sm:$0xf]
  %v1978 = vld [vmem:[%s1 + $0x204] sm:$0xf]
  %v1979 = vld [vmem:[%s1 + $0x208] sm:$0xf]
  %v1980 = vld [vmem:[%s1 + $0x20c] sm:$0xf]
  %v1981 = vld [vmem:[%s1 + $0x210] sm:$0xf]
  %v1982 = vld [vmem:[%s1 + $0x214] sm:$0xf]
  %v1983 = vld [vmem:[%s1 + $0x218] sm:$0xf]
  %v1984 = vld [vmem:[%s1 + $0x21c] sm:$0xf]
  %v1985 = vld [vmem:[%s1 + $0x220] sm:$0xf]
  %v1986 = vld [vmem:[%s1 + $0x224] sm:$0xf]
  %v1987 = vld [vmem:[%s1 + $0x228] sm:$0xf]
  %v1988 = vld [vmem:[%s1 + $0x22c] sm:$0xf]
  %v1989 = vld [vmem:[%s1 + $0x230] sm:$0xf]
  %v1990 = vld [vmem:[%s1 + $0x234] sm:$0xf]
  %v1991 = vld [vmem:[%s1 + $0x238] sm:$0xf]
  %v1992 = vld [vmem:[%s1 + $0x23c] sm:$0xf]
  %v2137 = vunpack.c.l.b16 %v1849
  %v2138 = vunpack.c.l.b16 %v1850
  %v2139 = vunpack.c.l.b16 %v1851
  %v2140 = vunpack.c.l.b16 %v1852
  %v2141 = vunpack.c.l.b16 %v1853
  %v2142 = vunpack.c.l.b16 %v1854
  %v2143 = vunpack.c.l.b16 %v1855
  %v2144 = vunpack.c.l.b16 %v1856
  %v2145 = vunpack.c.l.b16 %v1857
  %v2146 = vunpack.c.l.b16 %v1858
  %v2147 = vunpack.c.l.b16 %v1859
  %v2148 = vunpack.c.l.b16 %v1860
  %v2149 = vunpack.c.l.b16 %v1861
  %v2150 = vunpack.c.l.b16 %v1862
  %v2151 = vunpack.c.l.b16 %v1863
  %v2152 = vunpack.c.l.b16 %v1864
  %v2153 = vunpack.c.l.b16 %v1865
  %v2154 = vunpack.c.l.b16 %v1866
  %v2155 = vunpack.c.l.b16 %v1867
  %v2156 = vunpack.c.l.b16 %v1868
  %v2157 = vunpack.c.l.b16 %v1869
  %v2158 = vunpack.c.l.b16 %v1870
  %v2159 = vunpack.c.l.b16 %v1871
  %v2160 = vunpack.c.l.b16 %v1872
  %v2161 = vunpack.c.l.b16 %v1873
  %v2162 = vunpack.c.l.b16 %v1874
  %v2163 = vunpack.c.l.b16 %v1875
  %v2164 = vunpack.c.l.b16 %v1876
  %v2165 = vunpack.c.l.b16 %v1877
  %v2166 = vunpack.c.l.b16 %v1878
  %v2167 = vunpack.c.l.b16 %v1879
  %v2168 = vunpack.c.l.b16 %v1880
  %v2169 = vunpack.c.l.b16 %v1881
  %v2170 = vunpack.c.l.b16 %v1882
  %v2171 = vunpack.c.l.b16 %v1883
  %v2172 = vunpack.c.l.b16 %v1884
  %v2173 = vunpack.c.l.b16 %v1885
  %v2174 = vunpack.c.l.b16 %v1886
  %v2175 = vunpack.c.l.b16 %v1887
  %v2176 = vunpack.c.l.b16 %v1888
  %v2177 = vunpack.c.l.b16 %v1889
  %v2178 = vunpack.c.l.b16 %v1890
  %v2179 = vunpack.c.l.b16 %v1891
  %v2180 = vunpack.c.l.b16 %v1892
  %v2181 = vunpack.c.l.b16 %v1893
  %v2182 = vunpack.c.l.b16 %v1894
  %v2183 = vunpack.c.l.b16 %v1895
  %v2184 = vunpack.c.l.b16 %v1896
  %v2185 = vunpack.c.l.b16 %v1897
  %v2186 = vunpack.c.l.b16 %v1898
  %v2187 = vunpack.c.l.b16 %v1899
  %v2188 = vunpack.c.l.b16 %v1900
  %v2189 = vunpack.c.l.b16 %v1901
  %v2190 = vunpack.c.l.b16 %v1902
  %v2191 = vunpack.c.l.b16 %v1903
  %v2192 = vunpack.c.l.b16 %v1904
  %v2193 = vunpack.c.l.b16 %v1905
  %v2194 = vunpack.c.l.b16 %v1906
  %v2195 = vunpack.c.l.b16 %v1907
  %v2196 = vunpack.c.l.b16 %v1908
  %v2197 = vunpack.c.l.b16 %v1909
  %v2198 = vunpack.c.l.b16 %v1910
  %v2199 = vunpack.c.l.b16 %v1911
  %v2200 = vunpack.c.l.b16 %v1912
  %v2201 = vunpack.c.l.b16 %v1913
  %v2202 = vunpack.c.l.b16 %v1914
  %v2203 = vunpack.c.l.b16 %v1915
  %v2204 = vunpack.c.l.b16 %v1916
  %v2205 = vunpack.c.l.b16 %v1917
  %v2206 = vunpack.c.l.b16 %v1918
  %v2207 = vunpack.c.l.b16 %v1919
  %v2208 = vunpack.c.l.b16 %v1920
  %v2209 = vunpack.c.l.b16 %v1921
  %v2210 = vunpack.c.l.b16 %v1922
  %v2211 = vunpack.c.l.b16 %v1923
  %v2212 = vunpack.c.l.b16 %v1924
  %v2213 = vunpack.c.l.b16 %v1925
  %v2214 = vunpack.c.l.b16 %v1926
  %v2215 = vunpack.c.l.b16 %v1927
  %v2216 = vunpack.c.l.b16 %v1928
  %v2217 = vunpack.c.l.b16 %v1929
  %v2218 = vunpack.c.l.b16 %v1930
  %v2219 = vunpack.c.l.b16 %v1931
  %v2220 = vunpack.c.l.b16 %v1932
  %v2221 = vunpack.c.l.b16 %v1933
  %v2222 = vunpack.c.l.b16 %v1934
  %v2223 = vunpack.c.l.b16 %v1935
  %v2224 = vunpack.c.l.b16 %v1936
  %v2225 = vunpack.c.l.b16 %v1937
  %v2226 = vunpack.c.l.b16 %v1938
  %v2227 = vunpack.c.l.b16 %v1939
  %v2228 = vunpack.c.l.b16 %v1940
  %v2229 = vunpack.c.l.b16 %v1941
  %v2230 = vunpack.c.l.b16 %v1942
  %v2231 = vunpack.c.l.b16 %v1943
  %v2232 = vunpack.c.l.b16 %v1944
  %v2233 = vunpack.c.l.b16 %v1945
  %v2234 = vunpack.c.l.b16 %v1946
  %v2235 = vunpack.c.l.b16 %v1947
  %v2236 = vunpack.c.l.b16 %v1948
  %v2237 = vunpack.c.l.b16 %v1949
  %v2238 = vunpack.c.l.b16 %v1950
  %v2239 = vunpack.c.l.b16 %v1951
  %v2240 = vunpack.c.l.b16 %v1952
  %v2241 = vunpack.c.l.b16 %v1953
  %v2242 = vunpack.c.l.b16 %v1954
  %v2243 = vunpack.c.l.b16 %v1955
  %v2244 = vunpack.c.l.b16 %v1956
  %v2245 = vunpack.c.l.b16 %v1957
  %v2246 = vunpack.c.l.b16 %v1958
  %v2247 = vunpack.c.l.b16 %v1959
  %v2248 = vunpack.c.l.b16 %v1960
  %v2249 = vunpack.c.l.b16 %v1961
  %v2250 = vunpack.c.l.b16 %v1962
  %v2251 = vunpack.c.l.b16 %v1963
  %v2252 = vunpack.c.l.b16 %v1964
  %v2253 = vunpack.c.l.b16 %v1965
  %v2254 = vunpack.c.l.b16 %v1966
  %v2255 = vunpack.c.l.b16 %v1967
  %v2256 = vunpack.c.l.b16 %v1968
  %v2257 = vunpack.c.l.b16 %v1969
  %v2258 = vunpack.c.l.b16 %v1970
  %v2259 = vunpack.c.l.b16 %v1971
  %v2260 = vunpack.c.l.b16 %v1972
  %v2261 = vunpack.c.l.b16 %v1973
  %v2262 = vunpack.c.l.b16 %v1974
  %v2263 = vunpack.c.l.b16 %v1975
  %v2264 = vunpack.c.l.b16 %v1976
  %v2265 = vunpack.c.l.b16 %v1977
  %v2266 = vunpack.c.l.b16 %v1978
  %v2267 = vunpack.c.l.b16 %v1979
  %v2268 = vunpack.c.l.b16 %v1980
  %v2269 = vunpack.c.l.b16 %v1981
  %v2270 = vunpack.c.l.b16 %v1982
  %v2271 = vunpack.c.l.b16 %v1983
  %v2272 = vunpack.c.l.b16 %v1984
  %v2273 = vunpack.c.l.b16 %v1985
  %v2274 = vunpack.c.l.b16 %v1986
  %v2275 = vunpack.c.l.b16 %v1987
  %v2276 = vunpack.c.l.b16 %v1988
  %v2277 = vunpack.c.l.b16 %v1989
  %v2278 = vunpack.c.l.b16 %v1990
  %v2279 = vunpack.c.l.b16 %v1991
  %v2280 = vunpack.c.l.b16 %v1992
  %v2281 = vpack.c.b16 %v2138, %v2137
  %v2282 = vpack.c.b16 %v2140, %v2139
  %v2283 = vpack.c.b16 %v2142, %v2141
  %v2284 = vpack.c.b16 %v2144, %v2143
  %v2285 = vpack.c.b16 %v2146, %v2145
  %v2286 = vpack.c.b16 %v2148, %v2147
  %v2287 = vpack.c.b16 %v2150, %v2149
  %v2288 = vpack.c.b16 %v2152, %v2151
  %v2289 = vpack.c.b16 %v2154, %v2153
  %v2290 = vpack.c.b16 %v2156, %v2155
  %v2291 = vpack.c.b16 %v2158, %v2157
  %v2292 = vpack.c.b16 %v2160, %v2159
  %v2293 = vpack.c.b16 %v2162, %v2161
  %v2294 = vpack.c.b16 %v2164, %v2163
  %v2295 = vpack.c.b16 %v2166, %v2165
  %v2296 = vpack.c.b16 %v2168, %v2167
  %v2297 = vpack.c.b16 %v2170, %v2169
  %v2298 = vpack.c.b16 %v2172, %v2171
  %v2299 = vpack.c.b16 %v2174, %v2173
  %v2300 = vpack.c.b16 %v2176, %v2175
  %v2301 = vpack.c.b16 %v2178, %v2177
  %v2302 = vpack.c.b16 %v2180, %v2179
  %v2303 = vpack.c.b16 %v2182, %v2181
  %v2304 = vpack.c.b16 %v2184, %v2183
  %v2305 = vpack.c.b16 %v2186, %v2185
  %v2306 = vpack.c.b16 %v2188, %v2187
  %v2307 = vpack.c.b16 %v2190, %v2189
  %v2308 = vpack.c.b16 %v2192, %v2191
  %v2309 = vpack.c.b16 %v2194, %v2193
  %v2310 = vpack.c.b16 %v2196, %v2195
  %v2311 = vpack.c.b16 %v2198, %v2197
  %v2312 = vpack.c.b16 %v2200, %v2199
  %v2313 = vpack.c.b16 %v2202, %v2201
  %v2314 = vpack.c.b16 %v2204, %v2203
  %v2315 = vpack.c.b16 %v2206, %v2205
  %v2316 = vpack.c.b16 %v2208, %v2207
  %v2317 = vpack.c.b16 %v2210, %v2209
  %v2318 = vpack.c.b16 %v2212, %v2211
  %v2319 = vpack.c.b16 %v2214, %v2213
  %v2320 = vpack.c.b16 %v2216, %v2215
  %v2321 = vpack.c.b16 %v2218, %v2217
  %v2322 = vpack.c.b16 %v2220, %v2219
  %v2323 = vpack.c.b16 %v2222, %v2221
  %v2324 = vpack.c.b16 %v2224, %v2223
  %v2325 = vpack.c.b16 %v2226, %v2225
  %v2326 = vpack.c.b16 %v2228, %v2227
  %v2327 = vpack.c.b16 %v2230, %v2229
  %v2328 = vpack.c.b16 %v2232, %v2231
  %v2329 = vpack.c.b16 %v2234, %v2233
  %v2330 = vpack.c.b16 %v2236, %v2235
  %v2331 = vpack.c.b16 %v2238, %v2237
  %v2332 = vpack.c.b16 %v2240, %v2239
  %v2333 = vpack.c.b16 %v2242, %v2241
  %v2334 = vpack.c.b16 %v2244, %v2243
  %v2335 = vpack.c.b16 %v2246, %v2245
  %v2336 = vpack.c.b16 %v2248, %v2247
  %v2337 = vpack.c.b16 %v2250, %v2249
  %v2338 = vpack.c.b16 %v2252, %v2251
  %v2339 = vpack.c.b16 %v2254, %v2253
  %v2340 = vpack.c.b16 %v2256, %v2255
  %v2341 = vpack.c.b16 %v2258, %v2257
  %v2342 = vpack.c.b16 %v2260, %v2259
  %v2343 = vpack.c.b16 %v2262, %v2261
  %v2344 = vpack.c.b16 %v2264, %v2263
  %v2345 = vpack.c.b16 %v2266, %v2265
  %v2346 = vpack.c.b16 %v2268, %v2267
  %v2347 = vpack.c.b16 %v2270, %v2269
  %v2348 = vpack.c.b16 %v2272, %v2271
  %v2349 = vpack.c.b16 %v2274, %v2273
  %v2350 = vpack.c.b16 %v2276, %v2275
  %v2351 = vpack.c.b16 %v2278, %v2277
  %v2352 = vpack.c.b16 %v2280, %v2279
  %2425 = vmatpush.bf16.msra.mxu0 %v2288
  %2426 = vmatpush.bf16.msra.mxu0 %v2287
  %2427 = vmatpush.bf16.msra.mxu0 %v2286
  %2428 = vmatpush.bf16.msra.mxu0 %v2285
  %2429 = vmatpush.bf16.msra.mxu0 %v2284
  %2430 = vmatpush.bf16.msra.mxu0 %v2283
  %2431 = vmatpush.bf16.msra.mxu0 %v2282
  %2432 = vmatpush.bf16.msra.mxu0 %v2281
  %2433 = vmatmul.bf16.gmra.mxu0 %v1329
  %v2434 = vpop.f32.mrf.mxu0
  %v2435 = vadd.f32 0.0, %v2434
  %v2436 = vpop.f32.mrf.mxu0
  %v2437 = vadd.f32 0.0, %v2436
  %2438 = vmatmul.bf16.gmra.mxu0 %v1330
  %v2439 = vpop.f32.mrf.mxu0
  %v2440 = vadd.f32 0.0, %v2439
  %v2441 = vpop.f32.mrf.mxu0
  %v2442 = vadd.f32 0.0, %v2441
  %2443 = vmatmul.bf16.gmra.mxu0 %v1331
  %v2444 = vpop.f32.mrf.mxu0
  %v2445 = vadd.f32 0.0, %v2444
  %v2446 = vpop.f32.mrf.mxu0
  %v2447 = vadd.f32 0.0, %v2446
  %2448 = vmatmul.bf16.gmra.mxu0 %v1332
  %v2449 = vpop.f32.mrf.mxu0
  %v2450 = vadd.f32 0.0, %v2449
  %v2451 = vpop.f32.mrf.mxu0
  %v2452 = vadd.f32 0.0, %v2451
  %2453 = vmatmul.bf16.gmra.mxu0 %v1333
  %v2454 = vpop.f32.mrf.mxu0
  %v2455 = vadd.f32 0.0, %v2454
  %v2456 = vpop.f32.mrf.mxu0
  %v2457 = vadd.f32 0.0, %v2456
  %2458 = vmatmul.bf16.gmra.mxu0 %v1334
  %v2459 = vpop.f32.mrf.mxu0
  %v2460 = vadd.f32 0.0, %v2459
  %v2461 = vpop.f32.mrf.mxu0
  %v2462 = vadd.f32 0.0, %v2461
  %2463 = vmatmul.bf16.gmra.mxu0 %v1335
  %v2464 = vpop.f32.mrf.mxu0
  %v2465 = vadd.f32 0.0, %v2464
  %v2466 = vpop.f32.mrf.mxu0
  %v2467 = vadd.f32 0.0, %v2466
  %2468 = vmatmul.bf16.gmra.mxu0 %v1336
  %v2469 = vpop.f32.mrf.mxu0
  %v2470 = vadd.f32 0.0, %v2469
  %v2471 = vpop.f32.mrf.mxu0
  %v2472 = vadd.f32 0.0, %v2471
  %2473 = vmatmul.bf16.gmra.mxu0 %v1337
  %v2474 = vpop.f32.mrf.mxu0
  %v2475 = vadd.f32 0.0, %v2474
  %v2476 = vpop.f32.mrf.mxu0
  %v2477 = vadd.f32 0.0, %v2476
  %2478 = vmatmul.bf16.gmra.mxu0 %v1338
  %v2479 = vpop.f32.mrf.mxu0
  %v2480 = vadd.f32 0.0, %v2479
  %v2481 = vpop.f32.mrf.mxu0
  %v2482 = vadd.f32 0.0, %v2481
  %2483 = vmatmul.bf16.gmra.mxu0 %v1339
  %v2484 = vpop.f32.mrf.mxu0
  %v2485 = vadd.f32 0.0, %v2484
  %v2486 = vpop.f32.mrf.mxu0
  %v2487 = vadd.f32 0.0, %v2486
  %2488 = vmatmul.bf16.gmra.mxu0 %v1340
  %v2489 = vpop.f32.mrf.mxu0
  %v2490 = vadd.f32 0.0, %v2489
  %v2491 = vpop.f32.mrf.mxu0
  %v2492 = vadd.f32 0.0, %v2491
  %2493 = vmatmul.bf16.gmra.mxu0 %v1341
  %v2494 = vpop.f32.mrf.mxu0
  %v2495 = vadd.f32 0.0, %v2494
  %v2496 = vpop.f32.mrf.mxu0
  %v2497 = vadd.f32 0.0, %v2496
  %2498 = vmatmul.bf16.gmra.mxu0 %v1342
  %v2499 = vpop.f32.mrf.mxu0
  %v2500 = vadd.f32 0.0, %v2499
  %v2501 = vpop.f32.mrf.mxu0
  %v2502 = vadd.f32 0.0, %v2501
  %2503 = vmatmul.bf16.gmra.mxu0 %v1343
  %v2504 = vpop.f32.mrf.mxu0
  %v2505 = vadd.f32 0.0, %v2504
  %v2506 = vpop.f32.mrf.mxu0
  %v2507 = vadd.f32 0.0, %v2506
  %2508 = vmatmul.bf16.gmra.mxu0 %v1344
  %v2509 = vpop.f32.mrf.mxu0
  %v2510 = vadd.f32 0.0, %v2509
  %v2511 = vpop.f32.mrf.mxu0
  %v2512 = vadd.f32 0.0, %v2511
  %2513 = vmatmul.bf16.gmra.mxu0 %v1345
  %v2514 = vpop.f32.mrf.mxu0
  %v2515 = vadd.f32 0.0, %v2514
  %v2516 = vpop.f32.mrf.mxu0
  %v2517 = vadd.f32 0.0, %v2516
  %2518 = vmatmul.bf16.gmra.mxu0 %v1346
  %v2519 = vpop.f32.mrf.mxu0
  %v2520 = vadd.f32 0.0, %v2519
  %v2521 = vpop.f32.mrf.mxu0
  %v2522 = vadd.f32 0.0, %v2521
  %2523 = vmatmul.bf16.gmra.mxu0 %v1347
  %v2524 = vpop.f32.mrf.mxu0
  %v2525 = vadd.f32 0.0, %v2524
  %v2526 = vpop.f32.mrf.mxu0
  %v2527 = vadd.f32 0.0, %v2526
  %2528 = vmatmul.bf16.gmra.mxu0 %v1348
  %v2529 = vpop.f32.mrf.mxu0
  %v2530 = vadd.f32 0.0, %v2529
  %v2531 = vpop.f32.mrf.mxu0
  %v2532 = vadd.f32 0.0, %v2531
  %2533 = vmatmul.bf16.gmra.mxu0 %v1349
  %v2534 = vpop.f32.mrf.mxu0
  %v2535 = vadd.f32 0.0, %v2534
  %v2536 = vpop.f32.mrf.mxu0
  %v2537 = vadd.f32 0.0, %v2536
  %2538 = vmatmul.bf16.gmra.mxu0 %v1350
  %v2539 = vpop.f32.mrf.mxu0
  %v2540 = vadd.f32 0.0, %v2539
  %v2541 = vpop.f32.mrf.mxu0
  %v2542 = vadd.f32 0.0, %v2541
  %2543 = vmatmul.bf16.gmra.mxu0 %v1351
  %v2544 = vpop.f32.mrf.mxu0
  %v2545 = vadd.f32 0.0, %v2544
  %v2546 = vpop.f32.mrf.mxu0
  %v2547 = vadd.f32 0.0, %v2546
  %2548 = vmatmul.bf16.gmra.mxu0 %v1352
  %v2549 = vpop.f32.mrf.mxu0
  %v2550 = vadd.f32 0.0, %v2549
  %v2551 = vpop.f32.mrf.mxu0
  %v2552 = vadd.f32 0.0, %v2551
  %2553 = vmatmul.bf16.gmra.mxu0 %v1353
  %v2554 = vpop.f32.mrf.mxu0
  %v2555 = vadd.f32 0.0, %v2554
  %v2556 = vpop.f32.mrf.mxu0
  %v2557 = vadd.f32 0.0, %v2556
  %2558 = vmatmul.bf16.gmra.mxu0 %v1354
  %v2559 = vpop.f32.mrf.mxu0
  %v2560 = vadd.f32 0.0, %v2559
  %v2561 = vpop.f32.mrf.mxu0
  %v2562 = vadd.f32 0.0, %v2561
  %2563 = vmatmul.bf16.gmra.mxu0 %v1355
  %v2564 = vpop.f32.mrf.mxu0
  %v2565 = vadd.f32 0.0, %v2564
  %v2566 = vpop.f32.mrf.mxu0
  %v2567 = vadd.f32 0.0, %v2566
  %2568 = vmatmul.bf16.gmra.mxu0 %v1356
  %v2569 = vpop.f32.mrf.mxu0
  %v2570 = vadd.f32 0.0, %v2569
  %v2571 = vpop.f32.mrf.mxu0
  %v2572 = vadd.f32 0.0, %v2571
  %2573 = vmatmul.bf16.gmra.mxu0 %v1357
  %v2574 = vpop.f32.mrf.mxu0
  %v2575 = vadd.f32 0.0, %v2574
  %v2576 = vpop.f32.mrf.mxu0
  %v2577 = vadd.f32 0.0, %v2576
  %2578 = vmatmul.bf16.gmra.mxu0 %v1358
  %v2579 = vpop.f32.mrf.mxu0
  %v2580 = vadd.f32 0.0, %v2579
  %v2581 = vpop.f32.mrf.mxu0
  %v2582 = vadd.f32 0.0, %v2581
  %2583 = vmatmul.bf16.gmra.mxu0 %v1359
  %v2584 = vpop.f32.mrf.mxu0
  %v2585 = vadd.f32 0.0, %v2584
  %v2586 = vpop.f32.mrf.mxu0
  %v2587 = vadd.f32 0.0, %v2586
  %2588 = vmatmul.bf16.gmra.mxu0 %v1360
  %v2589 = vpop.f32.mrf.mxu0
  %v2590 = vadd.f32 0.0, %v2589
  %v2591 = vpop.f32.mrf.mxu0
  %v2592 = vadd.f32 0.0, %v2591
  %2593 = vdwg.mxu0
  %2594 = vmatpush.bf16.msra.mxu0 %v2296
  %2595 = vmatpush.bf16.msra.mxu0 %v2295
  %2596 = vmatpush.bf16.msra.mxu0 %v2294
  %2597 = vmatpush.bf16.msra.mxu0 %v2293
  %2598 = vmatpush.bf16.msra.mxu0 %v2292
  %2599 = vmatpush.bf16.msra.mxu0 %v2291
  %2600 = vmatpush.bf16.msra.mxu0 %v2290
  %2601 = vmatpush.bf16.msra.mxu0 %v2289
  %2602 = vmatmul.bf16.gmra.mxu0 %v1521
  %v2603 = vpop.f32.mrf.mxu0
  %v2604 = vadd.f32 %v2435, %v2603
  %v2605 = vpop.f32.mrf.mxu0
  %v2606 = vadd.f32 %v2437, %v2605
  %2607 = vmatmul.bf16.gmra.mxu0 %v1522
  %v2608 = vpop.f32.mrf.mxu0
  %v2609 = vadd.f32 %v2440, %v2608
  %v2610 = vpop.f32.mrf.mxu0
  %v2611 = vadd.f32 %v2442, %v2610
  %2612 = vmatmul.bf16.gmra.mxu0 %v1523
  %v2613 = vpop.f32.mrf.mxu0
  %v2614 = vadd.f32 %v2445, %v2613
  %v2615 = vpop.f32.mrf.mxu0
  %v2616 = vadd.f32 %v2447, %v2615
  %2617 = vmatmul.bf16.gmra.mxu0 %v1524
  %v2618 = vpop.f32.mrf.mxu0
  %v2619 = vadd.f32 %v2450, %v2618
  %v2620 = vpop.f32.mrf.mxu0
  %v2621 = vadd.f32 %v2452, %v2620
  %2622 = vmatmul.bf16.gmra.mxu0 %v1525
  %v2623 = vpop.f32.mrf.mxu0
  %v2624 = vadd.f32 %v2455, %v2623
  %v2625 = vpop.f32.mrf.mxu0
  %v2626 = vadd.f32 %v2457, %v2625
  %2627 = vmatmul.bf16.gmra.mxu0 %v1526
  %v2628 = vpop.f32.mrf.mxu0
  %v2629 = vadd.f32 %v2460, %v2628
  %v2630 = vpop.f32.mrf.mxu0
  %v2631 = vadd.f32 %v2462, %v2630
  %2632 = vmatmul.bf16.gmra.mxu0 %v1527
  %v2633 = vpop.f32.mrf.mxu0
  %v2634 = vadd.f32 %v2465, %v2633
  %v2635 = vpop.f32.mrf.mxu0
  %v2636 = vadd.f32 %v2467, %v2635
  %2637 = vmatmul.bf16.gmra.mxu0 %v1528
  %v2638 = vpop.f32.mrf.mxu0
  %v2639 = vadd.f32 %v2470, %v2638
  %v2640 = vpop.f32.mrf.mxu0
  %v2641 = vadd.f32 %v2472, %v2640
  %2642 = vmatmul.bf16.gmra.mxu0 %v1529
  %v2643 = vpop.f32.mrf.mxu0
  %v2644 = vadd.f32 %v2475, %v2643
  %v2645 = vpop.f32.mrf.mxu0
  %v2646 = vadd.f32 %v2477, %v2645
  %2647 = vmatmul.bf16.gmra.mxu0 %v1530
  %v2648 = vpop.f32.mrf.mxu0
  %v2649 = vadd.f32 %v2480, %v2648
  %v2650 = vpop.f32.mrf.mxu0
  %v2651 = vadd.f32 %v2482, %v2650
  %2652 = vmatmul.bf16.gmra.mxu0 %v1531
  %v2653 = vpop.f32.mrf.mxu0
  %v2654 = vadd.f32 %v2485, %v2653
  %v2655 = vpop.f32.mrf.mxu0
  %v2656 = vadd.f32 %v2487, %v2655
  %2657 = vmatmul.bf16.gmra.mxu0 %v1532
  %v2658 = vpop.f32.mrf.mxu0
  %v2659 = vadd.f32 %v2490, %v2658
  %v2660 = vpop.f32.mrf.mxu0
  %v2661 = vadd.f32 %v2492, %v2660
  %2662 = vmatmul.bf16.gmra.mxu0 %v1533
  %v2663 = vpop.f32.mrf.mxu0
  %v2664 = vadd.f32 %v2495, %v2663
  %v2665 = vpop.f32.mrf.mxu0
  %v2666 = vadd.f32 %v2497, %v2665
  %2667 = vmatmul.bf16.gmra.mxu0 %v1534
  %v2668 = vpop.f32.mrf.mxu0
  %v2669 = vadd.f32 %v2500, %v2668
  %v2670 = vpop.f32.mrf.mxu0
  %v2671 = vadd.f32 %v2502, %v2670
  %2672 = vmatmul.bf16.gmra.mxu0 %v1535
  %v2673 = vpop.f32.mrf.mxu0
  %v2674 = vadd.f32 %v2505, %v2673
  %v2675 = vpop.f32.mrf.mxu0
  %v2676 = vadd.f32 %v2507, %v2675
  %2677 = vmatmul.bf16.gmra.mxu0 %v1536
  %v2678 = vpop.f32.mrf.mxu0
  %v2679 = vadd.f32 %v2510, %v2678
  %v2680 = vpop.f32.mrf.mxu0
  %v2681 = vadd.f32 %v2512, %v2680
  %2682 = vmatmul.bf16.gmra.mxu0 %v1537
  %v2683 = vpop.f32.mrf.mxu0
  %v2684 = vadd.f32 %v2515, %v2683
  %v2685 = vpop.f32.mrf.mxu0
  %v2686 = vadd.f32 %v2517, %v2685
  %2687 = vmatmul.bf16.gmra.mxu0 %v1538
  %v2688 = vpop.f32.mrf.mxu0
  %v2689 = vadd.f32 %v2520, %v2688
  %v2690 = vpop.f32.mrf.mxu0
  %v2691 = vadd.f32 %v2522, %v2690
  %2692 = vmatmul.bf16.gmra.mxu0 %v1539
  %v2693 = vpop.f32.mrf.mxu0
  %v2694 = vadd.f32 %v2525, %v2693
  %v2695 = vpop.f32.mrf.mxu0
  %v2696 = vadd.f32 %v2527, %v2695
  %2697 = vmatmul.bf16.gmra.mxu0 %v1540
  %v2698 = vpop.f32.mrf.mxu0
  %v2699 = vadd.f32 %v2530, %v2698
  %v2700 = vpop.f32.mrf.mxu0
  %v2701 = vadd.f32 %v2532, %v2700
  %2702 = vmatmul.bf16.gmra.mxu0 %v1541
  %v2703 = vpop.f32.mrf.mxu0
  %v2704 = vadd.f32 %v2535, %v2703
  %v2705 = vpop.f32.mrf.mxu0
  %v2706 = vadd.f32 %v2537, %v2705
  %2707 = vmatmul.bf16.gmra.mxu0 %v1542
  %v2708 = vpop.f32.mrf.mxu0
  %v2709 = vadd.f32 %v2540, %v2708
  %v2710 = vpop.f32.mrf.mxu0
  %v2711 = vadd.f32 %v2542, %v2710
  %2712 = vmatmul.bf16.gmra.mxu0 %v1543
  %v2713 = vpop.f32.mrf.mxu0
  %v2714 = vadd.f32 %v2545, %v2713
  %v2715 = vpop.f32.mrf.mxu0
  %v2716 = vadd.f32 %v2547, %v2715
  %2717 = vmatmul.bf16.gmra.mxu0 %v1544
  %v2718 = vpop.f32.mrf.mxu0
  %v2719 = vadd.f32 %v2550, %v2718
  %v2720 = vpop.f32.mrf.mxu0
  %v2721 = vadd.f32 %v2552, %v2720
  %2722 = vmatmul.bf16.gmra.mxu0 %v1545
  %v2723 = vpop.f32.mrf.mxu0
  %v2724 = vadd.f32 %v2555, %v2723
  %v2725 = vpop.f32.mrf.mxu0
  %v2726 = vadd.f32 %v2557, %v2725
  %2727 = vmatmul.bf16.gmra.mxu0 %v1546
  %v2728 = vpop.f32.mrf.mxu0
  %v2729 = vadd.f32 %v2560, %v2728
  %v2730 = vpop.f32.mrf.mxu0
  %v2731 = vadd.f32 %v2562, %v2730
  %2732 = vmatmul.bf16.gmra.mxu0 %v1547
  %v2733 = vpop.f32.mrf.mxu0
  %v2734 = vadd.f32 %v2565, %v2733
  %v2735 = vpop.f32.mrf.mxu0
  %v2736 = vadd.f32 %v2567, %v2735
  %2737 = vmatmul.bf16.gmra.mxu0 %v1548
  %v2738 = vpop.f32.mrf.mxu0
  %v2739 = vadd.f32 %v2570, %v2738
  %v2740 = vpop.f32.mrf.mxu0
  %v2741 = vadd.f32 %v2572, %v2740
  %2742 = vmatmul.bf16.gmra.mxu0 %v1549
  %v2743 = vpop.f32.mrf.mxu0
  %v2744 = vadd.f32 %v2575, %v2743
  %v2745 = vpop.f32.mrf.mxu0
  %v2746 = vadd.f32 %v2577, %v2745
  %2747 = vmatmul.bf16.gmra.mxu0 %v1550
  %v2748 = vpop.f32.mrf.mxu0
  %v2749 = vadd.f32 %v2580, %v2748
  %v2750 = vpop.f32.mrf.mxu0
  %v2751 = vadd.f32 %v2582, %v2750
  %2752 = vmatmul.bf16.gmra.mxu0 %v1551
  %v2753 = vpop.f32.mrf.mxu0
  %v2754 = vadd.f32 %v2585, %v2753
  %v2755 = vpop.f32.mrf.mxu0
  %v2756 = vadd.f32 %v2587, %v2755
  %2757 = vmatmul.bf16.gmra.mxu0 %v1552
  %v2758 = vpop.f32.mrf.mxu0
  %v2759 = vadd.f32 %v2590, %v2758
  %v2760 = vpop.f32.mrf.mxu0
  %v2761 = vadd.f32 %v2592, %v2760
  %2762 = vdwg.mxu0
  %2763 = vmatpush.bf16.msra.mxu0 %v2304
  %2764 = vmatpush.bf16.msra.mxu0 %v2303
  %2765 = vmatpush.bf16.msra.mxu0 %v2302
  %2766 = vmatpush.bf16.msra.mxu0 %v2301
  %2767 = vmatpush.bf16.msra.mxu0 %v2300
  %2768 = vmatpush.bf16.msra.mxu0 %v2299
  %2769 = vmatpush.bf16.msra.mxu0 %v2298
  %2770 = vmatpush.bf16.msra.mxu0 %v2297
  %2771 = vmatmul.bf16.gmra.mxu0 %v1713
  %v2772 = vpop.f32.mrf.mxu0
  %v2773 = vadd.f32 %v2604, %v2772
  %v2774 = vpop.f32.mrf.mxu0
  %v2775 = vadd.f32 %v2606, %v2774
  %2776 = vmatmul.bf16.gmra.mxu0 %v1714
  %v2777 = vpop.f32.mrf.mxu0
  %v2778 = vadd.f32 %v2609, %v2777
  %v2779 = vpop.f32.mrf.mxu0
  %v2780 = vadd.f32 %v2611, %v2779
  %2781 = vmatmul.bf16.gmra.mxu0 %v1715
  %v2782 = vpop.f32.mrf.mxu0
  %v2783 = vadd.f32 %v2614, %v2782
  %v2784 = vpop.f32.mrf.mxu0
  %v2785 = vadd.f32 %v2616, %v2784
  %2786 = vmatmul.bf16.gmra.mxu0 %v1716
  %v2787 = vpop.f32.mrf.mxu0
  %v2788 = vadd.f32 %v2619, %v2787
  %v2789 = vpop.f32.mrf.mxu0
  %v2790 = vadd.f32 %v2621, %v2789
  %2791 = vmatmul.bf16.gmra.mxu0 %v1717
  %v2792 = vpop.f32.mrf.mxu0
  %v2793 = vadd.f32 %v2624, %v2792
  %v2794 = vpop.f32.mrf.mxu0
  %v2795 = vadd.f32 %v2626, %v2794
  %2796 = vmatmul.bf16.gmra.mxu0 %v1718
  %v2797 = vpop.f32.mrf.mxu0
  %v2798 = vadd.f32 %v2629, %v2797
  %v2799 = vpop.f32.mrf.mxu0
  %v2800 = vadd.f32 %v2631, %v2799
  %2801 = vmatmul.bf16.gmra.mxu0 %v1719
  %v2802 = vpop.f32.mrf.mxu0
  %v2803 = vadd.f32 %v2634, %v2802
  %v2804 = vpop.f32.mrf.mxu0
  %v2805 = vadd.f32 %v2636, %v2804
  %2806 = vmatmul.bf16.gmra.mxu0 %v1720
  %v2807 = vpop.f32.mrf.mxu0
  %v2808 = vadd.f32 %v2639, %v2807
  %v2809 = vpop.f32.mrf.mxu0
  %v2810 = vadd.f32 %v2641, %v2809
  %2811 = vmatmul.bf16.gmra.mxu0 %v1721
  %v2812 = vpop.f32.mrf.mxu0
  %v2813 = vadd.f32 %v2644, %v2812
  %v2814 = vpop.f32.mrf.mxu0
  %v2815 = vadd.f32 %v2646, %v2814
  %2816 = vmatmul.bf16.gmra.mxu0 %v1722
  %v2817 = vpop.f32.mrf.mxu0
  %v2818 = vadd.f32 %v2649, %v2817
  %v2819 = vpop.f32.mrf.mxu0
  %v2820 = vadd.f32 %v2651, %v2819
  %2821 = vmatmul.bf16.gmra.mxu0 %v1723
  %v2822 = vpop.f32.mrf.mxu0
  %v2823 = vadd.f32 %v2654, %v2822
  %v2824 = vpop.f32.mrf.mxu0
  %v2825 = vadd.f32 %v2656, %v2824
  %2826 = vmatmul.bf16.gmra.mxu0 %v1724
  %v2827 = vpop.f32.mrf.mxu0
  %v2828 = vadd.f32 %v2659, %v2827
  %v2829 = vpop.f32.mrf.mxu0
  %v2830 = vadd.f32 %v2661, %v2829
  %2831 = vmatmul.bf16.gmra.mxu0 %v1725
  %v2832 = vpop.f32.mrf.mxu0
  %v2833 = vadd.f32 %v2664, %v2832
  %v2834 = vpop.f32.mrf.mxu0
  %v2835 = vadd.f32 %v2666, %v2834
  %2836 = vmatmul.bf16.gmra.mxu0 %v1726
  %v2837 = vpop.f32.mrf.mxu0
  %v2838 = vadd.f32 %v2669, %v2837
  %v2839 = vpop.f32.mrf.mxu0
  %v2840 = vadd.f32 %v2671, %v2839
  %2841 = vmatmul.bf16.gmra.mxu0 %v1727
  %v2842 = vpop.f32.mrf.mxu0
  %v2843 = vadd.f32 %v2674, %v2842
  %v2844 = vpop.f32.mrf.mxu0
  %v2845 = vadd.f32 %v2676, %v2844
  %2846 = vmatmul.bf16.gmra.mxu0 %v1728
  %v2847 = vpop.f32.mrf.mxu0
  %v2848 = vadd.f32 %v2679, %v2847
  %v2849 = vpop.f32.mrf.mxu0
  %v2850 = vadd.f32 %v2681, %v2849
  %2851 = vmatmul.bf16.gmra.mxu0 %v1729
  %v2852 = vpop.f32.mrf.mxu0
  %v2853 = vadd.f32 %v2684, %v2852
  %v2854 = vpop.f32.mrf.mxu0
  %v2855 = vadd.f32 %v2686, %v2854
  %2856 = vmatmul.bf16.gmra.mxu0 %v1730
  %v2857 = vpop.f32.mrf.mxu0
  %v2858 = vadd.f32 %v2689, %v2857
  %v2859 = vpop.f32.mrf.mxu0
  %v2860 = vadd.f32 %v2691, %v2859
  %2861 = vmatmul.bf16.gmra.mxu0 %v1731
  %v2862 = vpop.f32.mrf.mxu0
  %v2863 = vadd.f32 %v2694, %v2862
  %v2864 = vpop.f32.mrf.mxu0
  %v2865 = vadd.f32 %v2696, %v2864
  %2866 = vmatmul.bf16.gmra.mxu0 %v1732
  %v2867 = vpop.f32.mrf.mxu0
  %v2868 = vadd.f32 %v2699, %v2867
  %v2869 = vpop.f32.mrf.mxu0
  %v2870 = vadd.f32 %v2701, %v2869
  %2871 = vmatmul.bf16.gmra.mxu0 %v1733
  %v2872 = vpop.f32.mrf.mxu0
  %v2873 = vadd.f32 %v2704, %v2872
  %v2874 = vpop.f32.mrf.mxu0
  %v2875 = vadd.f32 %v2706, %v2874
  %2876 = vmatmul.bf16.gmra.mxu0 %v1734
  %v2877 = vpop.f32.mrf.mxu0
  %v2878 = vadd.f32 %v2709, %v2877
  %v2879 = vpop.f32.mrf.mxu0
  %v2880 = vadd.f32 %v2711, %v2879
  %2881 = vmatmul.bf16.gmra.mxu0 %v1735
  %v2882 = vpop.f32.mrf.mxu0
  %v2883 = vadd.f32 %v2714, %v2882
  %v2884 = vpop.f32.mrf.mxu0
  %v2885 = vadd.f32 %v2716, %v2884
  %2886 = vmatmul.bf16.gmra.mxu0 %v1736
  %v2887 = vpop.f32.mrf.mxu0
  %v2888 = vadd.f32 %v2719, %v2887
  %v2889 = vpop.f32.mrf.mxu0
  %v2890 = vadd.f32 %v2721, %v2889
  %2891 = vmatmul.bf16.gmra.mxu0 %v1737
  %v2892 = vpop.f32.mrf.mxu0
  %v2893 = vadd.f32 %v2724, %v2892
  %v2894 = vpop.f32.mrf.mxu0
  %v2895 = vadd.f32 %v2726, %v2894
  %2896 = vmatmul.bf16.gmra.mxu0 %v1738
  %v2897 = vpop.f32.mrf.mxu0
  %v2898 = vadd.f32 %v2729, %v2897
  %v2899 = vpop.f32.mrf.mxu0
  %v2900 = vadd.f32 %v2731, %v2899
  %2901 = vmatmul.bf16.gmra.mxu0 %v1739
  %v2902 = vpop.f32.mrf.mxu0
  %v2903 = vadd.f32 %v2734, %v2902
  %v2904 = vpop.f32.mrf.mxu0
  %v2905 = vadd.f32 %v2736, %v2904
  %2906 = vmatmul.bf16.gmra.mxu0 %v1740
  %v2907 = vpop.f32.mrf.mxu0
  %v2908 = vadd.f32 %v2739, %v2907
  %v2909 = vpop.f32.mrf.mxu0
  %v2910 = vadd.f32 %v2741, %v2909
  %2911 = vmatmul.bf16.gmra.mxu0 %v1741
  %v2912 = vpop.f32.mrf.mxu0
  %v2913 = vadd.f32 %v2744, %v2912
  %v2914 = vpop.f32.mrf.mxu0
  %v2915 = vadd.f32 %v2746, %v2914
  %2916 = vmatmul.bf16.gmra.mxu0 %v1742
  %v2917 = vpop.f32.mrf.mxu0
  %v2918 = vadd.f32 %v2749, %v2917
  %v2919 = vpop.f32.mrf.mxu0
  %v2920 = vadd.f32 %v2751, %v2919
  %2921 = vmatmul.bf16.gmra.mxu0 %v1743
  %v2922 = vpop.f32.mrf.mxu0
  %v2923 = vadd.f32 %v2754, %v2922
  %v2924 = vpop.f32.mrf.mxu0
  %v2925 = vadd.f32 %v2756, %v2924
  %2926 = vmatmul.bf16.gmra.mxu0 %v1744
  %v2927 = vpop.f32.mrf.mxu0
  %v2928 = vadd.f32 %v2759, %v2927
  %v2929 = vpop.f32.mrf.mxu0
  %v2930 = vadd.f32 %v2761, %v2929
  %2931 = vdwg.mxu0
  %2932 = vmatpush.bf16.msra.mxu0 %v2312
  %2933 = vmatpush.bf16.msra.mxu0 %v2311
  %2934 = vmatpush.bf16.msra.mxu0 %v2310
  %2935 = vmatpush.bf16.msra.mxu0 %v2309
  %2936 = vmatpush.bf16.msra.mxu0 %v2308
  %2937 = vmatpush.bf16.msra.mxu0 %v2307
  %2938 = vmatpush.bf16.msra.mxu0 %v2306
  %2939 = vmatpush.bf16.msra.mxu0 %v2305
  %2940 = vmatmul.bf16.gmra.mxu0 %v1330
  %v2941 = vpop.f32.mrf.mxu0
  %v2942 = vadd.f32 %v2773, %v2941
  %v2943 = vpop.f32.mrf.mxu0
  %v2944 = vadd.f32 %v2775, %v2943
  %2945 = vmatmul.bf16.gmra.mxu0 %v1331
  %v2946 = vpop.f32.mrf.mxu0
  %v2947 = vadd.f32 %v2778, %v2946
  %v2948 = vpop.f32.mrf.mxu0
  %v2949 = vadd.f32 %v2780, %v2948
  %2950 = vmatmul.bf16.gmra.mxu0 %v1332
  %v2951 = vpop.f32.mrf.mxu0
  %v2952 = vadd.f32 %v2783, %v2951
  %v2953 = vpop.f32.mrf.mxu0
  %v2954 = vadd.f32 %v2785, %v2953
  %2955 = vmatmul.bf16.gmra.mxu0 %v1333
  %v2956 = vpop.f32.mrf.mxu0
  %v2957 = vadd.f32 %v2788, %v2956
  %v2958 = vpop.f32.mrf.mxu0
  %v2959 = vadd.f32 %v2790, %v2958
  %2960 = vmatmul.bf16.gmra.mxu0 %v1334
  %v2961 = vpop.f32.mrf.mxu0
  %v2962 = vadd.f32 %v2793, %v2961
  %v2963 = vpop.f32.mrf.mxu0
  %v2964 = vadd.f32 %v2795, %v2963
  %2965 = vmatmul.bf16.gmra.mxu0 %v1335
  %v2966 = vpop.f32.mrf.mxu0
  %v2967 = vadd.f32 %v2798, %v2966
  %v2968 = vpop.f32.mrf.mxu0
  %v2969 = vadd.f32 %v2800, %v2968
  %2970 = vmatmul.bf16.gmra.mxu0 %v1336
  %v2971 = vpop.f32.mrf.mxu0
  %v2972 = vadd.f32 %v2803, %v2971
  %v2973 = vpop.f32.mrf.mxu0
  %v2974 = vadd.f32 %v2805, %v2973
  %2975 = vmatmul.bf16.gmra.mxu0 %v1337
  %v2976 = vpop.f32.mrf.mxu0
  %v2977 = vadd.f32 %v2808, %v2976
  %v2978 = vpop.f32.mrf.mxu0
  %v2979 = vadd.f32 %v2810, %v2978
  %2980 = vmatmul.bf16.gmra.mxu0 %v1338
  %v2981 = vpop.f32.mrf.mxu0
  %v2982 = vadd.f32 %v2813, %v2981
  %v2983 = vpop.f32.mrf.mxu0
  %v2984 = vadd.f32 %v2815, %v2983
  %2985 = vmatmul.bf16.gmra.mxu0 %v1339
  %v2986 = vpop.f32.mrf.mxu0
  %v2987 = vadd.f32 %v2818, %v2986
  %v2988 = vpop.f32.mrf.mxu0
  %v2989 = vadd.f32 %v2820, %v2988
  %2990 = vmatmul.bf16.gmra.mxu0 %v1340
  %v2991 = vpop.f32.mrf.mxu0
  %v2992 = vadd.f32 %v2823, %v2991
  %v2993 = vpop.f32.mrf.mxu0
  %v2994 = vadd.f32 %v2825, %v2993
  %2995 = vmatmul.bf16.gmra.mxu0 %v1341
  %v2996 = vpop.f32.mrf.mxu0
  %v2997 = vadd.f32 %v2828, %v2996
  %v2998 = vpop.f32.mrf.mxu0
  %v2999 = vadd.f32 %v2830, %v2998
  %3000 = vmatmul.bf16.gmra.mxu0 %v1342
  %v3001 = vpop.f32.mrf.mxu0
  %v3002 = vadd.f32 %v2833, %v3001
  %v3003 = vpop.f32.mrf.mxu0
  %v3004 = vadd.f32 %v2835, %v3003
  %3005 = vmatmul.bf16.gmra.mxu0 %v1343
  %v3006 = vpop.f32.mrf.mxu0
  %v3007 = vadd.f32 %v2838, %v3006
  %v3008 = vpop.f32.mrf.mxu0
  %v3009 = vadd.f32 %v2840, %v3008
  %3010 = vmatmul.bf16.gmra.mxu0 %v1344
  %v3011 = vpop.f32.mrf.mxu0
  %v3012 = vadd.f32 %v2843, %v3011
  %v3013 = vpop.f32.mrf.mxu0
  %v3014 = vadd.f32 %v2845, %v3013
  %3015 = vmatmul.bf16.gmra.mxu0 %v1785
  %v3016 = vpop.f32.mrf.mxu0
  %v3017 = vadd.f32 %v2848, %v3016
  %v3018 = vpop.f32.mrf.mxu0
  %v3019 = vadd.f32 %v2850, %v3018
  %3020 = vmatmul.bf16.gmra.mxu0 %v1346
  %v3021 = vpop.f32.mrf.mxu0
  %v3022 = vadd.f32 %v2853, %v3021
  %v3023 = vpop.f32.mrf.mxu0
  %v3024 = vadd.f32 %v2855, %v3023
  %3025 = vmatmul.bf16.gmra.mxu0 %v1347
  %v3026 = vpop.f32.mrf.mxu0
  %v3027 = vadd.f32 %v2858, %v3026
  %v3028 = vpop.f32.mrf.mxu0
  %v3029 = vadd.f32 %v2860, %v3028
  %3030 = vmatmul.bf16.gmra.mxu0 %v1348
  %v3031 = vpop.f32.mrf.mxu0
  %v3032 = vadd.f32 %v2863, %v3031
  %v3033 = vpop.f32.mrf.mxu0
  %v3034 = vadd.f32 %v2865, %v3033
  %3035 = vmatmul.bf16.gmra.mxu0 %v1349
  %v3036 = vpop.f32.mrf.mxu0
  %v3037 = vadd.f32 %v2868, %v3036
  %v3038 = vpop.f32.mrf.mxu0
  %v3039 = vadd.f32 %v2870, %v3038
  %3040 = vmatmul.bf16.gmra.mxu0 %v1350
  %v3041 = vpop.f32.mrf.mxu0
  %v3042 = vadd.f32 %v2873, %v3041
  %v3043 = vpop.f32.mrf.mxu0
  %v3044 = vadd.f32 %v2875, %v3043
  %3045 = vmatmul.bf16.gmra.mxu0 %v1351
  %v3046 = vpop.f32.mrf.mxu0
  %v3047 = vadd.f32 %v2878, %v3046
  %v3048 = vpop.f32.mrf.mxu0
  %v3049 = vadd.f32 %v2880, %v3048
  %3050 = vmatmul.bf16.gmra.mxu0 %v1352
  %v3051 = vpop.f32.mrf.mxu0
  %v3052 = vadd.f32 %v2883, %v3051
  %v3053 = vpop.f32.mrf.mxu0
  %v3054 = vadd.f32 %v2885, %v3053
  %3055 = vmatmul.bf16.gmra.mxu0 %v1353
  %v3056 = vpop.f32.mrf.mxu0
  %v3057 = vadd.f32 %v2888, %v3056
  %v3058 = vpop.f32.mrf.mxu0
  %v3059 = vadd.f32 %v2890, %v3058
  %3060 = vmatmul.bf16.gmra.mxu0 %v1354
  %v3061 = vpop.f32.mrf.mxu0
  %v3062 = vadd.f32 %v2893, %v3061
  %v3063 = vpop.f32.mrf.mxu0
  %v3064 = vadd.f32 %v2895, %v3063
  %3065 = vmatmul.bf16.gmra.mxu0 %v1355
  %v3066 = vpop.f32.mrf.mxu0
  %v3067 = vadd.f32 %v2898, %v3066
  %v3068 = vpop.f32.mrf.mxu0
  %v3069 = vadd.f32 %v2900, %v3068
  %3070 = vmatmul.bf16.gmra.mxu0 %v1356
  %v3071 = vpop.f32.mrf.mxu0
  %v3072 = vadd.f32 %v2903, %v3071
  %v3073 = vpop.f32.mrf.mxu0
  %v3074 = vadd.f32 %v2905, %v3073
  %3075 = vmatmul.bf16.gmra.mxu0 %v1357
  %v3076 = vpop.f32.mrf.mxu0
  %v3077 = vadd.f32 %v2908, %v3076
  %v3078 = vpop.f32.mrf.mxu0
  %v3079 = vadd.f32 %v2910, %v3078
  %3080 = vmatmul.bf16.gmra.mxu0 %v1358
  %v3081 = vpop.f32.mrf.mxu0
  %v3082 = vadd.f32 %v2913, %v3081
  %v3083 = vpop.f32.mrf.mxu0
  %v3084 = vadd.f32 %v2915, %v3083
  %3085 = vmatmul.bf16.gmra.mxu0 %v1359
  %v3086 = vpop.f32.mrf.mxu0
  %v3087 = vadd.f32 %v2918, %v3086
  %v3088 = vpop.f32.mrf.mxu0
  %v3089 = vadd.f32 %v2920, %v3088
  %3090 = vmatmul.bf16.gmra.mxu0 %v1360
  %v3091 = vpop.f32.mrf.mxu0
  %v3092 = vadd.f32 %v2923, %v3091
  %v3093 = vpop.f32.mrf.mxu0
  %v3094 = vadd.f32 %v2925, %v3093
  %3095 = vmatmul.bf16.gmra.mxu0 %v1786
  %v3096 = vpop.f32.mrf.mxu0
  %v3097 = vadd.f32 %v2928, %v3096
  %v3098 = vpop.f32.mrf.mxu0
  %v3099 = vadd.f32 %v2930, %v3098
  %3100 = vdwg.mxu0
  %3101 = vmatpush.bf16.msra.mxu0 %v2320
  %3102 = vmatpush.bf16.msra.mxu0 %v2319
  %3103 = vmatpush.bf16.msra.mxu0 %v2318
  %3104 = vmatpush.bf16.msra.mxu0 %v2317
  %3105 = vmatpush.bf16.msra.mxu0 %v2316
  %3106 = vmatpush.bf16.msra.mxu0 %v2315
  %3107 = vmatpush.bf16.msra.mxu0 %v2314
  %3108 = vmatpush.bf16.msra.mxu0 %v2313
  %3109 = vmatmul.bf16.gmra.mxu0 %v1522
  %v3110 = vpop.f32.mrf.mxu0
  %v3111 = vadd.f32 %v2942, %v3110
  %v3112 = vpop.f32.mrf.mxu0
  %v3113 = vadd.f32 %v2944, %v3112
  %3114 = vmatmul.bf16.gmra.mxu0 %v1523
  %v3115 = vpop.f32.mrf.mxu0
  %v3116 = vadd.f32 %v2947, %v3115
  %v3117 = vpop.f32.mrf.mxu0
  %v3118 = vadd.f32 %v2949, %v3117
  %3119 = vmatmul.bf16.gmra.mxu0 %v1524
  %v3120 = vpop.f32.mrf.mxu0
  %v3121 = vadd.f32 %v2952, %v3120
  %v3122 = vpop.f32.mrf.mxu0
  %v3123 = vadd.f32 %v2954, %v3122
  %3124 = vmatmul.bf16.gmra.mxu0 %v1525
  %v3125 = vpop.f32.mrf.mxu0
  %v3126 = vadd.f32 %v2957, %v3125
  %v3127 = vpop.f32.mrf.mxu0
  %v3128 = vadd.f32 %v2959, %v3127
  %3129 = vmatmul.bf16.gmra.mxu0 %v1526
  %v3130 = vpop.f32.mrf.mxu0
  %v3131 = vadd.f32 %v2962, %v3130
  %v3132 = vpop.f32.mrf.mxu0
  %v3133 = vadd.f32 %v2964, %v3132
  %3134 = vmatmul.bf16.gmra.mxu0 %v1527
  %v3135 = vpop.f32.mrf.mxu0
  %v3136 = vadd.f32 %v2967, %v3135
  %v3137 = vpop.f32.mrf.mxu0
  %v3138 = vadd.f32 %v2969, %v3137
  %3139 = vmatmul.bf16.gmra.mxu0 %v1528
  %v3140 = vpop.f32.mrf.mxu0
  %v3141 = vadd.f32 %v2972, %v3140
  %v3142 = vpop.f32.mrf.mxu0
  %v3143 = vadd.f32 %v2974, %v3142
  %3144 = vmatmul.bf16.gmra.mxu0 %v1529
  %v3145 = vpop.f32.mrf.mxu0
  %v3146 = vadd.f32 %v2977, %v3145
  %v3147 = vpop.f32.mrf.mxu0
  %v3148 = vadd.f32 %v2979, %v3147
  %3149 = vmatmul.bf16.gmra.mxu0 %v1530
  %v3150 = vpop.f32.mrf.mxu0
  %v3151 = vadd.f32 %v2982, %v3150
  %v3152 = vpop.f32.mrf.mxu0
  %v3153 = vadd.f32 %v2984, %v3152
  %3154 = vmatmul.bf16.gmra.mxu0 %v1531
  %v3155 = vpop.f32.mrf.mxu0
  %v3156 = vadd.f32 %v2987, %v3155
  %v3157 = vpop.f32.mrf.mxu0
  %v3158 = vadd.f32 %v2989, %v3157
  %3159 = vmatmul.bf16.gmra.mxu0 %v1532
  %v3160 = vpop.f32.mrf.mxu0
  %v3161 = vadd.f32 %v2992, %v3160
  %v3162 = vpop.f32.mrf.mxu0
  %v3163 = vadd.f32 %v2994, %v3162
  %3164 = vmatmul.bf16.gmra.mxu0 %v1533
  %v3165 = vpop.f32.mrf.mxu0
  %v3166 = vadd.f32 %v2997, %v3165
  %v3167 = vpop.f32.mrf.mxu0
  %v3168 = vadd.f32 %v2999, %v3167
  %3169 = vmatmul.bf16.gmra.mxu0 %v1534
  %v3170 = vpop.f32.mrf.mxu0
  %v3171 = vadd.f32 %v3002, %v3170
  %v3172 = vpop.f32.mrf.mxu0
  %v3173 = vadd.f32 %v3004, %v3172
  %3174 = vmatmul.bf16.gmra.mxu0 %v1535
  %v3175 = vpop.f32.mrf.mxu0
  %v3176 = vadd.f32 %v3007, %v3175
  %v3177 = vpop.f32.mrf.mxu0
  %v3178 = vadd.f32 %v3009, %v3177
  %3179 = vmatmul.bf16.gmra.mxu0 %v1536
  %v3180 = vpop.f32.mrf.mxu0
  %v3181 = vadd.f32 %v3012, %v3180
  %v3182 = vpop.f32.mrf.mxu0
  %v3183 = vadd.f32 %v3014, %v3182
  %3184 = vmatmul.bf16.gmra.mxu0 %v1797
  %v3185 = vpop.f32.mrf.mxu0
  %v3186 = vadd.f32 %v3017, %v3185
  %v3187 = vpop.f32.mrf.mxu0
  %v3188 = vadd.f32 %v3019, %v3187
  %3189 = vmatmul.bf16.gmra.mxu0 %v1538
  %v3190 = vpop.f32.mrf.mxu0
  %v3191 = vadd.f32 %v3022, %v3190
  %v3192 = vpop.f32.mrf.mxu0
  %v3193 = vadd.f32 %v3024, %v3192
  %3194 = vmatmul.bf16.gmra.mxu0 %v1539
  %v3195 = vpop.f32.mrf.mxu0
  %v3196 = vadd.f32 %v3027, %v3195
  %v3197 = vpop.f32.mrf.mxu0
  %v3198 = vadd.f32 %v3029, %v3197
  %3199 = vmatmul.bf16.gmra.mxu0 %v1540
  %v3200 = vpop.f32.mrf.mxu0
  %v3201 = vadd.f32 %v3032, %v3200
  %v3202 = vpop.f32.mrf.mxu0
  %v3203 = vadd.f32 %v3034, %v3202
  %3204 = vmatmul.bf16.gmra.mxu0 %v1541
  %v3205 = vpop.f32.mrf.mxu0
  %v3206 = vadd.f32 %v3037, %v3205
  %v3207 = vpop.f32.mrf.mxu0
  %v3208 = vadd.f32 %v3039, %v3207
  %3209 = vmatmul.bf16.gmra.mxu0 %v1542
  %v3210 = vpop.f32.mrf.mxu0
  %v3211 = vadd.f32 %v3042, %v3210
  %v3212 = vpop.f32.mrf.mxu0
  %v3213 = vadd.f32 %v3044, %v3212
  %3214 = vmatmul.bf16.gmra.mxu0 %v1543
  %v3215 = vpop.f32.mrf.mxu0
  %v3216 = vadd.f32 %v3047, %v3215
  %v3217 = vpop.f32.mrf.mxu0
  %v3218 = vadd.f32 %v3049, %v3217
  %3219 = vmatmul.bf16.gmra.mxu0 %v1544
  %v3220 = vpop.f32.mrf.mxu0
  %v3221 = vadd.f32 %v3052, %v3220
  %v3222 = vpop.f32.mrf.mxu0
  %v3223 = vadd.f32 %v3054, %v3222
  %3224 = vmatmul.bf16.gmra.mxu0 %v1545
  %v3225 = vpop.f32.mrf.mxu0
  %v3226 = vadd.f32 %v3057, %v3225
  %v3227 = vpop.f32.mrf.mxu0
  %v3228 = vadd.f32 %v3059, %v3227
  %3229 = vmatmul.bf16.gmra.mxu0 %v1546
  %v3230 = vpop.f32.mrf.mxu0
  %v3231 = vadd.f32 %v3062, %v3230
  %v3232 = vpop.f32.mrf.mxu0
  %v3233 = vadd.f32 %v3064, %v3232
  %3234 = vmatmul.bf16.gmra.mxu0 %v1547
  %v3235 = vpop.f32.mrf.mxu0
  %v3236 = vadd.f32 %v3067, %v3235
  %v3237 = vpop.f32.mrf.mxu0
  %v3238 = vadd.f32 %v3069, %v3237
  %3239 = vmatmul.bf16.gmra.mxu0 %v1548
  %v3240 = vpop.f32.mrf.mxu0
  %v3241 = vadd.f32 %v3072, %v3240
  %v3242 = vpop.f32.mrf.mxu0
  %v3243 = vadd.f32 %v3074, %v3242
  %3244 = vmatmul.bf16.gmra.mxu0 %v1549
  %v3245 = vpop.f32.mrf.mxu0
  %v3246 = vadd.f32 %v3077, %v3245
  %v3247 = vpop.f32.mrf.mxu0
  %v3248 = vadd.f32 %v3079, %v3247
  %3249 = vmatmul.bf16.gmra.mxu0 %v1550
  %v3250 = vpop.f32.mrf.mxu0
  %v3251 = vadd.f32 %v3082, %v3250
  %v3252 = vpop.f32.mrf.mxu0
  %v3253 = vadd.f32 %v3084, %v3252
  %3254 = vmatmul.bf16.gmra.mxu0 %v1551
  %v3255 = vpop.f32.mrf.mxu0
  %v3256 = vadd.f32 %v3087, %v3255
  %v3257 = vpop.f32.mrf.mxu0
  %v3258 = vadd.f32 %v3089, %v3257
  %3259 = vmatmul.bf16.gmra.mxu0 %v1552
  %v3260 = vpop.f32.mrf.mxu0
  %v3261 = vadd.f32 %v3092, %v3260
  %v3262 = vpop.f32.mrf.mxu0
  %v3263 = vadd.f32 %v3094, %v3262
  %3264 = vmatmul.bf16.gmra.mxu0 %v1798
  %v3265 = vpop.f32.mrf.mxu0
  %v3266 = vadd.f32 %v3097, %v3265
  %v3267 = vpop.f32.mrf.mxu0
  %v3268 = vadd.f32 %v3099, %v3267
  %3269 = vdwg.mxu0
  %3270 = vmatpush.bf16.msra.mxu0 %v2328
  %3271 = vmatpush.bf16.msra.mxu0 %v2327
  %3272 = vmatpush.bf16.msra.mxu0 %v2326
  %3273 = vmatpush.bf16.msra.mxu0 %v2325
  %3274 = vmatpush.bf16.msra.mxu0 %v2324
  %3275 = vmatpush.bf16.msra.mxu0 %v2323
  %3276 = vmatpush.bf16.msra.mxu0 %v2322
  %3277 = vmatpush.bf16.msra.mxu0 %v2321
  %3278 = vmatmul.bf16.gmra.mxu0 %v1714
  %v3279 = vpop.f32.mrf.mxu0
  %v3280 = vadd.f32 %v3111, %v3279
  %v3281 = vpop.f32.mrf.mxu0
  %v3282 = vadd.f32 %v3113, %v3281
  %3283 = vmatmul.bf16.gmra.mxu0 %v1715
  %v3284 = vpop.f32.mrf.mxu0
  %v3285 = vadd.f32 %v3116, %v3284
  %v3286 = vpop.f32.mrf.mxu0
  %v3287 = vadd.f32 %v3118, %v3286
  %3288 = vmatmul.bf16.gmra.mxu0 %v1716
  %v3289 = vpop.f32.mrf.mxu0
  %v3290 = vadd.f32 %v3121, %v3289
  %v3291 = vpop.f32.mrf.mxu0
  %v3292 = vadd.f32 %v3123, %v3291
  %3293 = vmatmul.bf16.gmra.mxu0 %v1717
  %v3294 = vpop.f32.mrf.mxu0
  %v3295 = vadd.f32 %v3126, %v3294
  %v3296 = vpop.f32.mrf.mxu0
  %v3297 = vadd.f32 %v3128, %v3296
  %3298 = vmatmul.bf16.gmra.mxu0 %v1718
  %v3299 = vpop.f32.mrf.mxu0
  %v3300 = vadd.f32 %v3131, %v3299
  %v3301 = vpop.f32.mrf.mxu0
  %v3302 = vadd.f32 %v3133, %v3301
  %3303 = vmatmul.bf16.gmra.mxu0 %v1719
  %v3304 = vpop.f32.mrf.mxu0
  %v3305 = vadd.f32 %v3136, %v3304
  %v3306 = vpop.f32.mrf.mxu0
  %v3307 = vadd.f32 %v3138, %v3306
  %3308 = vmatmul.bf16.gmra.mxu0 %v1720
  %v3309 = vpop.f32.mrf.mxu0
  %v3310 = vadd.f32 %v3141, %v3309
  %v3311 = vpop.f32.mrf.mxu0
  %v3312 = vadd.f32 %v3143, %v3311
  %3313 = vmatmul.bf16.gmra.mxu0 %v1721
  %v3314 = vpop.f32.mrf.mxu0
  %v3315 = vadd.f32 %v3146, %v3314
  %v3316 = vpop.f32.mrf.mxu0
  %v3317 = vadd.f32 %v3148, %v3316
  %3318 = vmatmul.bf16.gmra.mxu0 %v1722
  %v3319 = vpop.f32.mrf.mxu0
  %v3320 = vadd.f32 %v3151, %v3319
  %v3321 = vpop.f32.mrf.mxu0
  %v3322 = vadd.f32 %v3153, %v3321
  %3323 = vmatmul.bf16.gmra.mxu0 %v1723
  %v3324 = vpop.f32.mrf.mxu0
  %v3325 = vadd.f32 %v3156, %v3324
  %v3326 = vpop.f32.mrf.mxu0
  %v3327 = vadd.f32 %v3158, %v3326
  %3328 = vmatmul.bf16.gmra.mxu0 %v1724
  %v3329 = vpop.f32.mrf.mxu0
  %v3330 = vadd.f32 %v3161, %v3329
  %v3331 = vpop.f32.mrf.mxu0
  %v3332 = vadd.f32 %v3163, %v3331
  %3333 = vmatmul.bf16.gmra.mxu0 %v1725
  %v3334 = vpop.f32.mrf.mxu0
  %v3335 = vadd.f32 %v3166, %v3334
  %v3336 = vpop.f32.mrf.mxu0
  %v3337 = vadd.f32 %v3168, %v3336
  %3338 = vmatmul.bf16.gmra.mxu0 %v1726
  %v3339 = vpop.f32.mrf.mxu0
  %v3340 = vadd.f32 %v3171, %v3339
  %v3341 = vpop.f32.mrf.mxu0
  %v3342 = vadd.f32 %v3173, %v3341
  %3343 = vmatmul.bf16.gmra.mxu0 %v1727
  %v3344 = vpop.f32.mrf.mxu0
  %v3345 = vadd.f32 %v3176, %v3344
  %v3346 = vpop.f32.mrf.mxu0
  %v3347 = vadd.f32 %v3178, %v3346
  %3348 = vmatmul.bf16.gmra.mxu0 %v1728
  %v3349 = vpop.f32.mrf.mxu0
  %v3350 = vadd.f32 %v3181, %v3349
  %v3351 = vpop.f32.mrf.mxu0
  %v3352 = vadd.f32 %v3183, %v3351
  %3353 = vmatmul.bf16.gmra.mxu0 %v1809
  %v3354 = vpop.f32.mrf.mxu0
  %v3355 = vadd.f32 %v3186, %v3354
  %v3356 = vpop.f32.mrf.mxu0
  %v3357 = vadd.f32 %v3188, %v3356
  %3358 = vmatmul.bf16.gmra.mxu0 %v1730
  %v3359 = vpop.f32.mrf.mxu0
  %v3360 = vadd.f32 %v3191, %v3359
  %v3361 = vpop.f32.mrf.mxu0
  %v3362 = vadd.f32 %v3193, %v3361
  %3363 = vmatmul.bf16.gmra.mxu0 %v1731
  %v3364 = vpop.f32.mrf.mxu0
  %v3365 = vadd.f32 %v3196, %v3364
  %v3366 = vpop.f32.mrf.mxu0
  %v3367 = vadd.f32 %v3198, %v3366
  %3368 = vmatmul.bf16.gmra.mxu0 %v1732
  %v3369 = vpop.f32.mrf.mxu0
  %v3370 = vadd.f32 %v3201, %v3369
  %v3371 = vpop.f32.mrf.mxu0
  %v3372 = vadd.f32 %v3203, %v3371
  %3373 = vmatmul.bf16.gmra.mxu0 %v1733
  %v3374 = vpop.f32.mrf.mxu0
  %v3375 = vadd.f32 %v3206, %v3374
  %v3376 = vpop.f32.mrf.mxu0
  %v3377 = vadd.f32 %v3208, %v3376
  %3378 = vmatmul.bf16.gmra.mxu0 %v1734
  %v3379 = vpop.f32.mrf.mxu0
  %v3380 = vadd.f32 %v3211, %v3379
  %v3381 = vpop.f32.mrf.mxu0
  %v3382 = vadd.f32 %v3213, %v3381
  %3383 = vmatmul.bf16.gmra.mxu0 %v1735
  %v3384 = vpop.f32.mrf.mxu0
  %v3385 = vadd.f32 %v3216, %v3384
  %v3386 = vpop.f32.mrf.mxu0
  %v3387 = vadd.f32 %v3218, %v3386
  %3388 = vmatmul.bf16.gmra.mxu0 %v1736
  %v3389 = vpop.f32.mrf.mxu0
  %v3390 = vadd.f32 %v3221, %v3389
  %v3391 = vpop.f32.mrf.mxu0
  %v3392 = vadd.f32 %v3223, %v3391
  %3393 = vmatmul.bf16.gmra.mxu0 %v1737
  %v3394 = vpop.f32.mrf.mxu0
  %v3395 = vadd.f32 %v3226, %v3394
  %v3396 = vpop.f32.mrf.mxu0
  %v3397 = vadd.f32 %v3228, %v3396
  %3398 = vmatmul.bf16.gmra.mxu0 %v1738
  %v3399 = vpop.f32.mrf.mxu0
  %v3400 = vadd.f32 %v3231, %v3399
  %v3401 = vpop.f32.mrf.mxu0
  %v3402 = vadd.f32 %v3233, %v3401
  %3403 = vmatmul.bf16.gmra.mxu0 %v1739
  %v3404 = vpop.f32.mrf.mxu0
  %v3405 = vadd.f32 %v3236, %v3404
  %v3406 = vpop.f32.mrf.mxu0
  %v3407 = vadd.f32 %v3238, %v3406
  %3408 = vmatmul.bf16.gmra.mxu0 %v1740
  %v3409 = vpop.f32.mrf.mxu0
  %v3410 = vadd.f32 %v3241, %v3409
  %v3411 = vpop.f32.mrf.mxu0
  %v3412 = vadd.f32 %v3243, %v3411
  %3413 = vmatmul.bf16.gmra.mxu0 %v1741
  %v3414 = vpop.f32.mrf.mxu0
  %v3415 = vadd.f32 %v3246, %v3414
  %v3416 = vpop.f32.mrf.mxu0
  %v3417 = vadd.f32 %v3248, %v3416
  %3418 = vmatmul.bf16.gmra.mxu0 %v1742
  %v3419 = vpop.f32.mrf.mxu0
  %v3420 = vadd.f32 %v3251, %v3419
  %v3421 = vpop.f32.mrf.mxu0
  %v3422 = vadd.f32 %v3253, %v3421
  %3423 = vmatmul.bf16.gmra.mxu0 %v1743
  %v3424 = vpop.f32.mrf.mxu0
  %v3425 = vadd.f32 %v3256, %v3424
  %v3426 = vpop.f32.mrf.mxu0
  %v3427 = vadd.f32 %v3258, %v3426
  %3428 = vmatmul.bf16.gmra.mxu0 %v1744
  %v3429 = vpop.f32.mrf.mxu0
  %v3430 = vadd.f32 %v3261, %v3429
  %v3431 = vpop.f32.mrf.mxu0
  %v3432 = vadd.f32 %v3263, %v3431
  %3433 = vmatmul.bf16.gmra.mxu0 %v1810
  %v3434 = vpop.f32.mrf.mxu0
  %v3435 = vadd.f32 %v3266, %v3434
  %v3436 = vpop.f32.mrf.mxu0
  %v3437 = vadd.f32 %v3268, %v3436
  %3438 = vdwg.mxu0
  %3439 = vmatpush.bf16.msra.mxu0 %v2336
  %3440 = vmatpush.bf16.msra.mxu0 %v2335
  %3441 = vmatpush.bf16.msra.mxu0 %v2334
  %3442 = vmatpush.bf16.msra.mxu0 %v2333
  %3443 = vmatpush.bf16.msra.mxu0 %v2332
  %3444 = vmatpush.bf16.msra.mxu0 %v2331
  %3445 = vmatpush.bf16.msra.mxu0 %v2330
  %3446 = vmatpush.bf16.msra.mxu0 %v2329
  %3447 = vmatmul.bf16.gmra.mxu0 %v1331
  %v3448 = vpop.f32.mrf.mxu0
  %v3449 = vadd.f32 %v3280, %v3448
  %v3450 = vpop.f32.mrf.mxu0
  %v3451 = vadd.f32 %v3282, %v3450
  %3452 = vmatmul.bf16.gmra.mxu0 %v1332
  %v3453 = vpop.f32.mrf.mxu0
  %v3454 = vadd.f32 %v3285, %v3453
  %v3455 = vpop.f32.mrf.mxu0
  %v3456 = vadd.f32 %v3287, %v3455
  %3457 = vmatmul.bf16.gmra.mxu0 %v1333
  %v3458 = vpop.f32.mrf.mxu0
  %v3459 = vadd.f32 %v3290, %v3458
  %v3460 = vpop.f32.mrf.mxu0
  %v3461 = vadd.f32 %v3292, %v3460
  %3462 = vmatmul.bf16.gmra.mxu0 %v1334
  %v3463 = vpop.f32.mrf.mxu0
  %v3464 = vadd.f32 %v3295, %v3463
  %v3465 = vpop.f32.mrf.mxu0
  %v3466 = vadd.f32 %v3297, %v3465
  %3467 = vmatmul.bf16.gmra.mxu0 %v1335
  %v3468 = vpop.f32.mrf.mxu0
  %v3469 = vadd.f32 %v3300, %v3468
  %v3470 = vpop.f32.mrf.mxu0
  %v3471 = vadd.f32 %v3302, %v3470
  %3472 = vmatmul.bf16.gmra.mxu0 %v1336
  %v3473 = vpop.f32.mrf.mxu0
  %v3474 = vadd.f32 %v3305, %v3473
  %v3475 = vpop.f32.mrf.mxu0
  %v3476 = vadd.f32 %v3307, %v3475
  %3477 = vmatmul.bf16.gmra.mxu0 %v1337
  %v3478 = vpop.f32.mrf.mxu0
  %v3479 = vadd.f32 %v3310, %v3478
  %v3480 = vpop.f32.mrf.mxu0
  %v3481 = vadd.f32 %v3312, %v3480
  %3482 = vmatmul.bf16.gmra.mxu0 %v1338
  %v3483 = vpop.f32.mrf.mxu0
  %v3484 = vadd.f32 %v3315, %v3483
  %v3485 = vpop.f32.mrf.mxu0
  %v3486 = vadd.f32 %v3317, %v3485
  %3487 = vmatmul.bf16.gmra.mxu0 %v1339
  %v3488 = vpop.f32.mrf.mxu0
  %v3489 = vadd.f32 %v3320, %v3488
  %v3490 = vpop.f32.mrf.mxu0
  %v3491 = vadd.f32 %v3322, %v3490
  %3492 = vmatmul.bf16.gmra.mxu0 %v1340
  %v3493 = vpop.f32.mrf.mxu0
  %v3494 = vadd.f32 %v3325, %v3493
  %v3495 = vpop.f32.mrf.mxu0
  %v3496 = vadd.f32 %v3327, %v3495
  %3497 = vmatmul.bf16.gmra.mxu0 %v1341
  %v3498 = vpop.f32.mrf.mxu0
  %v3499 = vadd.f32 %v3330, %v3498
  %v3500 = vpop.f32.mrf.mxu0
  %v3501 = vadd.f32 %v3332, %v3500
  %3502 = vmatmul.bf16.gmra.mxu0 %v1342
  %v3503 = vpop.f32.mrf.mxu0
  %v3504 = vadd.f32 %v3335, %v3503
  %v3505 = vpop.f32.mrf.mxu0
  %v3506 = vadd.f32 %v3337, %v3505
  %3507 = vmatmul.bf16.gmra.mxu0 %v1343
  %v3508 = vpop.f32.mrf.mxu0
  %v3509 = vadd.f32 %v3340, %v3508
  %v3510 = vpop.f32.mrf.mxu0
  %v3511 = vadd.f32 %v3342, %v3510
  %3512 = vmatmul.bf16.gmra.mxu0 %v1344
  %v3513 = vpop.f32.mrf.mxu0
  %v3514 = vadd.f32 %v3345, %v3513
  %v3515 = vpop.f32.mrf.mxu0
  %v3516 = vadd.f32 %v3347, %v3515
  %3517 = vmatmul.bf16.gmra.mxu0 %v1785
  %v3518 = vpop.f32.mrf.mxu0
  %v3519 = vadd.f32 %v3350, %v3518
  %v3520 = vpop.f32.mrf.mxu0
  %v3521 = vadd.f32 %v3352, %v3520
  %3522 = vmatmul.bf16.gmra.mxu0 %v1821
  %v3523 = vpop.f32.mrf.mxu0
  %v3524 = vadd.f32 %v3355, %v3523
  %v3525 = vpop.f32.mrf.mxu0
  %v3526 = vadd.f32 %v3357, %v3525
  %3527 = vmatmul.bf16.gmra.mxu0 %v1347
  %v3528 = vpop.f32.mrf.mxu0
  %v3529 = vadd.f32 %v3360, %v3528
  %v3530 = vpop.f32.mrf.mxu0
  %v3531 = vadd.f32 %v3362, %v3530
  %3532 = vmatmul.bf16.gmra.mxu0 %v1348
  %v3533 = vpop.f32.mrf.mxu0
  %v3534 = vadd.f32 %v3365, %v3533
  %v3535 = vpop.f32.mrf.mxu0
  %v3536 = vadd.f32 %v3367, %v3535
  %3537 = vmatmul.bf16.gmra.mxu0 %v1349
  %v3538 = vpop.f32.mrf.mxu0
  %v3539 = vadd.f32 %v3370, %v3538
  %v3540 = vpop.f32.mrf.mxu0
  %v3541 = vadd.f32 %v3372, %v3540
  %3542 = vmatmul.bf16.gmra.mxu0 %v1350
  %v3543 = vpop.f32.mrf.mxu0
  %v3544 = vadd.f32 %v3375, %v3543
  %v3545 = vpop.f32.mrf.mxu0
  %v3546 = vadd.f32 %v3377, %v3545
  %3547 = vmatmul.bf16.gmra.mxu0 %v1351
  %v3548 = vpop.f32.mrf.mxu0
  %v3549 = vadd.f32 %v3380, %v3548
  %v3550 = vpop.f32.mrf.mxu0
  %v3551 = vadd.f32 %v3382, %v3550
  %3552 = vmatmul.bf16.gmra.mxu0 %v1352
  %v3553 = vpop.f32.mrf.mxu0
  %v3554 = vadd.f32 %v3385, %v3553
  %v3555 = vpop.f32.mrf.mxu0
  %v3556 = vadd.f32 %v3387, %v3555
  %3557 = vmatmul.bf16.gmra.mxu0 %v1353
  %v3558 = vpop.f32.mrf.mxu0
  %v3559 = vadd.f32 %v3390, %v3558
  %v3560 = vpop.f32.mrf.mxu0
  %v3561 = vadd.f32 %v3392, %v3560
  %3562 = vmatmul.bf16.gmra.mxu0 %v1354
  %v3563 = vpop.f32.mrf.mxu0
  %v3564 = vadd.f32 %v3395, %v3563
  %v3565 = vpop.f32.mrf.mxu0
  %v3566 = vadd.f32 %v3397, %v3565
  %3567 = vmatmul.bf16.gmra.mxu0 %v1355
  %v3568 = vpop.f32.mrf.mxu0
  %v3569 = vadd.f32 %v3400, %v3568
  %v3570 = vpop.f32.mrf.mxu0
  %v3571 = vadd.f32 %v3402, %v3570
  %3572 = vmatmul.bf16.gmra.mxu0 %v1356
  %v3573 = vpop.f32.mrf.mxu0
  %v3574 = vadd.f32 %v3405, %v3573
  %v3575 = vpop.f32.mrf.mxu0
  %v3576 = vadd.f32 %v3407, %v3575
  %3577 = vmatmul.bf16.gmra.mxu0 %v1357
  %v3578 = vpop.f32.mrf.mxu0
  %v3579 = vadd.f32 %v3410, %v3578
  %v3580 = vpop.f32.mrf.mxu0
  %v3581 = vadd.f32 %v3412, %v3580
  %3582 = vmatmul.bf16.gmra.mxu0 %v1358
  %v3583 = vpop.f32.mrf.mxu0
  %v3584 = vadd.f32 %v3415, %v3583
  %v3585 = vpop.f32.mrf.mxu0
  %v3586 = vadd.f32 %v3417, %v3585
  %3587 = vmatmul.bf16.gmra.mxu0 %v1359
  %v3588 = vpop.f32.mrf.mxu0
  %v3589 = vadd.f32 %v3420, %v3588
  %v3590 = vpop.f32.mrf.mxu0
  %v3591 = vadd.f32 %v3422, %v3590
  %3592 = vmatmul.bf16.gmra.mxu0 %v1360
  %v3593 = vpop.f32.mrf.mxu0
  %v3594 = vadd.f32 %v3425, %v3593
  %v3595 = vpop.f32.mrf.mxu0
  %v3596 = vadd.f32 %v3427, %v3595
  %3597 = vmatmul.bf16.gmra.mxu0 %v1786
  %v3598 = vpop.f32.mrf.mxu0
  %v3599 = vadd.f32 %v3430, %v3598
  %v3600 = vpop.f32.mrf.mxu0
  %v3601 = vadd.f32 %v3432, %v3600
  %3602 = vmatmul.bf16.gmra.mxu0 %v1822
  %v3603 = vpop.f32.mrf.mxu0
  %v3604 = vadd.f32 %v3435, %v3603
  %v3605 = vpop.f32.mrf.mxu0
  %v3606 = vadd.f32 %v3437, %v3605
  %3607 = vdwg.mxu0
  %3608 = vmatpush.bf16.msra.mxu0 %v2344
  %3609 = vmatpush.bf16.msra.mxu0 %v2343
  %3610 = vmatpush.bf16.msra.mxu0 %v2342
  %3611 = vmatpush.bf16.msra.mxu0 %v2341
  %3612 = vmatpush.bf16.msra.mxu0 %v2340
  %3613 = vmatpush.bf16.msra.mxu0 %v2339
  %3614 = vmatpush.bf16.msra.mxu0 %v2338
  %3615 = vmatpush.bf16.msra.mxu0 %v2337
  %3616 = vmatmul.bf16.gmra.mxu0 %v1523
  %v3617 = vpop.f32.mrf.mxu0
  %v3618 = vadd.f32 %v3449, %v3617
  %v3619 = vpop.f32.mrf.mxu0
  %v3620 = vadd.f32 %v3451, %v3619
  %3621 = vmatmul.bf16.gmra.mxu0 %v1524
  %v3622 = vpop.f32.mrf.mxu0
  %v3623 = vadd.f32 %v3454, %v3622
  %v3624 = vpop.f32.mrf.mxu0
  %v3625 = vadd.f32 %v3456, %v3624
  %3626 = vmatmul.bf16.gmra.mxu0 %v1525
  %v3627 = vpop.f32.mrf.mxu0
  %v3628 = vadd.f32 %v3459, %v3627
  %v3629 = vpop.f32.mrf.mxu0
  %v3630 = vadd.f32 %v3461, %v3629
  %3631 = vmatmul.bf16.gmra.mxu0 %v1526
  %v3632 = vpop.f32.mrf.mxu0
  %v3633 = vadd.f32 %v3464, %v3632
  %v3634 = vpop.f32.mrf.mxu0
  %v3635 = vadd.f32 %v3466, %v3634
  %3636 = vmatmul.bf16.gmra.mxu0 %v1527
  %v3637 = vpop.f32.mrf.mxu0
  %v3638 = vadd.f32 %v3469, %v3637
  %v3639 = vpop.f32.mrf.mxu0
  %v3640 = vadd.f32 %v3471, %v3639
  %3641 = vmatmul.bf16.gmra.mxu0 %v1528
  %v3642 = vpop.f32.mrf.mxu0
  %v3643 = vadd.f32 %v3474, %v3642
  %v3644 = vpop.f32.mrf.mxu0
  %v3645 = vadd.f32 %v3476, %v3644
  %3646 = vmatmul.bf16.gmra.mxu0 %v1529
  %v3647 = vpop.f32.mrf.mxu0
  %v3648 = vadd.f32 %v3479, %v3647
  %v3649 = vpop.f32.mrf.mxu0
  %v3650 = vadd.f32 %v3481, %v3649
  %3651 = vmatmul.bf16.gmra.mxu0 %v1530
  %v3652 = vpop.f32.mrf.mxu0
  %v3653 = vadd.f32 %v3484, %v3652
  %v3654 = vpop.f32.mrf.mxu0
  %v3655 = vadd.f32 %v3486, %v3654
  %3656 = vmatmul.bf16.gmra.mxu0 %v1531
  %v3657 = vpop.f32.mrf.mxu0
  %v3658 = vadd.f32 %v3489, %v3657
  %v3659 = vpop.f32.mrf.mxu0
  %v3660 = vadd.f32 %v3491, %v3659
  %3661 = vmatmul.bf16.gmra.mxu0 %v1532
  %v3662 = vpop.f32.mrf.mxu0
  %v3663 = vadd.f32 %v3494, %v3662
  %v3664 = vpop.f32.mrf.mxu0
  %v3665 = vadd.f32 %v3496, %v3664
  %3666 = vmatmul.bf16.gmra.mxu0 %v1533
  %v3667 = vpop.f32.mrf.mxu0
  %v3668 = vadd.f32 %v3499, %v3667
  %v3669 = vpop.f32.mrf.mxu0
  %v3670 = vadd.f32 %v3501, %v3669
  %3671 = vmatmul.bf16.gmra.mxu0 %v1534
  %v3672 = vpop.f32.mrf.mxu0
  %v3673 = vadd.f32 %v3504, %v3672
  %v3674 = vpop.f32.mrf.mxu0
  %v3675 = vadd.f32 %v3506, %v3674
  %3676 = vmatmul.bf16.gmra.mxu0 %v1535
  %v3677 = vpop.f32.mrf.mxu0
  %v3678 = vadd.f32 %v3509, %v3677
  %v3679 = vpop.f32.mrf.mxu0
  %v3680 = vadd.f32 %v3511, %v3679
  %3681 = vmatmul.bf16.gmra.mxu0 %v1536
  %v3682 = vpop.f32.mrf.mxu0
  %v3683 = vadd.f32 %v3514, %v3682
  %v3684 = vpop.f32.mrf.mxu0
  %v3685 = vadd.f32 %v3516, %v3684
  %3686 = vmatmul.bf16.gmra.mxu0 %v1797
  %v3687 = vpop.f32.mrf.mxu0
  %v3688 = vadd.f32 %v3519, %v3687
  %v3689 = vpop.f32.mrf.mxu0
  %v3690 = vadd.f32 %v3521, %v3689
  %3691 = vmatmul.bf16.gmra.mxu0 %v1833
  %v3692 = vpop.f32.mrf.mxu0
  %v3693 = vadd.f32 %v3524, %v3692
  %v3694 = vpop.f32.mrf.mxu0
  %v3695 = vadd.f32 %v3526, %v3694
  %3696 = vmatmul.bf16.gmra.mxu0 %v1539
  %v3697 = vpop.f32.mrf.mxu0
  %v3698 = vadd.f32 %v3529, %v3697
  %v3699 = vpop.f32.mrf.mxu0
  %v3700 = vadd.f32 %v3531, %v3699
  %3701 = vmatmul.bf16.gmra.mxu0 %v1540
  %v3702 = vpop.f32.mrf.mxu0
  %v3703 = vadd.f32 %v3534, %v3702
  %v3704 = vpop.f32.mrf.mxu0
  %v3705 = vadd.f32 %v3536, %v3704
  %3706 = vmatmul.bf16.gmra.mxu0 %v1541
  %v3707 = vpop.f32.mrf.mxu0
  %v3708 = vadd.f32 %v3539, %v3707
  %v3709 = vpop.f32.mrf.mxu0
  %v3710 = vadd.f32 %v3541, %v3709
  %3711 = vmatmul.bf16.gmra.mxu0 %v1542
  %v3712 = vpop.f32.mrf.mxu0
  %v3713 = vadd.f32 %v3544, %v3712
  %v3714 = vpop.f32.mrf.mxu0
  %v3715 = vadd.f32 %v3546, %v3714
  %3716 = vmatmul.bf16.gmra.mxu0 %v1543
  %v3717 = vpop.f32.mrf.mxu0
  %v3718 = vadd.f32 %v3549, %v3717
  %v3719 = vpop.f32.mrf.mxu0
  %v3720 = vadd.f32 %v3551, %v3719
  %3721 = vmatmul.bf16.gmra.mxu0 %v1544
  %v3722 = vpop.f32.mrf.mxu0
  %v3723 = vadd.f32 %v3554, %v3722
  %v3724 = vpop.f32.mrf.mxu0
  %v3725 = vadd.f32 %v3556, %v3724
  %3726 = vmatmul.bf16.gmra.mxu0 %v1545
  %v3727 = vpop.f32.mrf.mxu0
  %v3728 = vadd.f32 %v3559, %v3727
  %v3729 = vpop.f32.mrf.mxu0
  %v3730 = vadd.f32 %v3561, %v3729
  %3731 = vmatmul.bf16.gmra.mxu0 %v1546
  %v3732 = vpop.f32.mrf.mxu0
  %v3733 = vadd.f32 %v3564, %v3732
  %v3734 = vpop.f32.mrf.mxu0
  %v3735 = vadd.f32 %v3566, %v3734
  %3736 = vmatmul.bf16.gmra.mxu0 %v1547
  %v3737 = vpop.f32.mrf.mxu0
  %v3738 = vadd.f32 %v3569, %v3737
  %v3739 = vpop.f32.mrf.mxu0
  %v3740 = vadd.f32 %v3571, %v3739
  %3741 = vmatmul.bf16.gmra.mxu0 %v1548
  %v3742 = vpop.f32.mrf.mxu0
  %v3743 = vadd.f32 %v3574, %v3742
  %v3744 = vpop.f32.mrf.mxu0
  %v3745 = vadd.f32 %v3576, %v3744
  %3746 = vmatmul.bf16.gmra.mxu0 %v1549
  %v3747 = vpop.f32.mrf.mxu0
  %v3748 = vadd.f32 %v3579, %v3747
  %v3749 = vpop.f32.mrf.mxu0
  %v3750 = vadd.f32 %v3581, %v3749
  %3751 = vmatmul.bf16.gmra.mxu0 %v1550
  %v3752 = vpop.f32.mrf.mxu0
  %v3753 = vadd.f32 %v3584, %v3752
  %v3754 = vpop.f32.mrf.mxu0
  %v3755 = vadd.f32 %v3586, %v3754
  %3756 = vmatmul.bf16.gmra.mxu0 %v1551
  %v3757 = vpop.f32.mrf.mxu0
  %v3758 = vadd.f32 %v3589, %v3757
  %v3759 = vpop.f32.mrf.mxu0
  %v3760 = vadd.f32 %v3591, %v3759
  %3761 = vmatmul.bf16.gmra.mxu0 %v1552
  %v3762 = vpop.f32.mrf.mxu0
  %v3763 = vadd.f32 %v3594, %v3762
  %v3764 = vpop.f32.mrf.mxu0
  %v3765 = vadd.f32 %v3596, %v3764
  %3766 = vmatmul.bf16.gmra.mxu0 %v1798
  %v3767 = vpop.f32.mrf.mxu0
  %v3768 = vadd.f32 %v3599, %v3767
  %v3769 = vpop.f32.mrf.mxu0
  %v3770 = vadd.f32 %v3601, %v3769
  %3771 = vmatmul.bf16.gmra.mxu0 %v1834
  %v3772 = vpop.f32.mrf.mxu0
  %v3773 = vadd.f32 %v3604, %v3772
  %v3774 = vpop.f32.mrf.mxu0
  %v3775 = vadd.f32 %v3606, %v3774
  %3776 = vdwg.mxu0
  %3777 = vmatpush.bf16.msra.mxu0 %v2352
  %3778 = vmatpush.bf16.msra.mxu0 %v2351
  %3779 = vmatpush.bf16.msra.mxu0 %v2350
  %3780 = vmatpush.bf16.msra.mxu0 %v2349
  %3781 = vmatpush.bf16.msra.mxu0 %v2348
  %3782 = vmatpush.bf16.msra.mxu0 %v2347
  %3783 = vmatpush.bf16.msra.mxu0 %v2346
  %3784 = vmatpush.bf16.msra.mxu0 %v2345
  %3785 = vmatmul.bf16.gmra.mxu0 %v1715
  %v3786 = vpop.f32.mrf.mxu0
  %v3787 = vadd.f32 %v3618, %v3786
  %v3788 = vpop.f32.mrf.mxu0
  %v3789 = vadd.f32 %v3620, %v3788
  %3790 = vmatmul.bf16.gmra.mxu0 %v1716
  %v3791 = vpop.f32.mrf.mxu0
  %v3792 = vadd.f32 %v3623, %v3791
  %v3793 = vpop.f32.mrf.mxu0
  %v3794 = vadd.f32 %v3625, %v3793
  %3795 = vmatmul.bf16.gmra.mxu0 %v1717
  %v3796 = vpop.f32.mrf.mxu0
  %v3797 = vadd.f32 %v3628, %v3796
  %v3798 = vpop.f32.mrf.mxu0
  %v3799 = vadd.f32 %v3630, %v3798
  %3800 = vmatmul.bf16.gmra.mxu0 %v1718
  %v3801 = vpop.f32.mrf.mxu0
  %v3802 = vadd.f32 %v3633, %v3801
  %v3803 = vpop.f32.mrf.mxu0
  %v3804 = vadd.f32 %v3635, %v3803
  %3805 = vmatmul.bf16.gmra.mxu0 %v1719
  %v3806 = vpop.f32.mrf.mxu0
  %v3807 = vadd.f32 %v3638, %v3806
  %v3808 = vpop.f32.mrf.mxu0
  %v3809 = vadd.f32 %v3640, %v3808
  %3810 = vmatmul.bf16.gmra.mxu0 %v1720
  %v3811 = vpop.f32.mrf.mxu0
  %v3812 = vadd.f32 %v3643, %v3811
  %v3813 = vpop.f32.mrf.mxu0
  %v3814 = vadd.f32 %v3645, %v3813
  %3815 = vmatmul.bf16.gmra.mxu0 %v1721
  %v3816 = vpop.f32.mrf.mxu0
  %v3817 = vadd.f32 %v3648, %v3816
  %v3818 = vpop.f32.mrf.mxu0
  %v3819 = vadd.f32 %v3650, %v3818
  %3820 = vmatmul.bf16.gmra.mxu0 %v1722
  %v3821 = vpop.f32.mrf.mxu0
  %v3822 = vadd.f32 %v3653, %v3821
  %v3823 = vpop.f32.mrf.mxu0
  %v3824 = vadd.f32 %v3655, %v3823
  %3825 = vmatmul.bf16.gmra.mxu0 %v1723
  %v3826 = vpop.f32.mrf.mxu0
  %v3827 = vadd.f32 %v3658, %v3826
  %v3828 = vpop.f32.mrf.mxu0
  %v3829 = vadd.f32 %v3660, %v3828
  %3830 = vmatmul.bf16.gmra.mxu0 %v1724
  %v3831 = vpop.f32.mrf.mxu0
  %v3832 = vadd.f32 %v3663, %v3831
  %v3833 = vpop.f32.mrf.mxu0
  %v3834 = vadd.f32 %v3665, %v3833
  %3835 = vmatmul.bf16.gmra.mxu0 %v1725
  %v3836 = vpop.f32.mrf.mxu0
  %v3837 = vadd.f32 %v3668, %v3836
  %v3838 = vpop.f32.mrf.mxu0
  %v3839 = vadd.f32 %v3670, %v3838
  %3840 = vmatmul.bf16.gmra.mxu0 %v1726
  %v3841 = vpop.f32.mrf.mxu0
  %v3842 = vadd.f32 %v3673, %v3841
  %v3843 = vpop.f32.mrf.mxu0
  %v3844 = vadd.f32 %v3675, %v3843
  %3845 = vmatmul.bf16.gmra.mxu0 %v1727
  %v3846 = vpop.f32.mrf.mxu0
  %v3847 = vadd.f32 %v3678, %v3846
  %v3848 = vpop.f32.mrf.mxu0
  %v3849 = vadd.f32 %v3680, %v3848
  %3850 = vmatmul.bf16.gmra.mxu0 %v1728
  %v3851 = vpop.f32.mrf.mxu0
  %v3852 = vadd.f32 %v3683, %v3851
  %v3853 = vpop.f32.mrf.mxu0
  %v3854 = vadd.f32 %v3685, %v3853
  %3855 = vmatmul.bf16.gmra.mxu0 %v1809
  %v3856 = vpop.f32.mrf.mxu0
  %v3857 = vadd.f32 %v3688, %v3856
  %v3858 = vpop.f32.mrf.mxu0
  %v3859 = vadd.f32 %v3690, %v3858
  %3860 = vmatmul.bf16.gmra.mxu0 %v1845
  %v3861 = vpop.f32.mrf.mxu0
  %v3862 = vadd.f32 %v3693, %v3861
  %v3863 = vpop.f32.mrf.mxu0
  %v3864 = vadd.f32 %v3695, %v3863
  %3865 = vmatmul.bf16.gmra.mxu0 %v1731
  %v3866 = vpop.f32.mrf.mxu0
  %v3867 = vadd.f32 %v3698, %v3866
  %v3868 = vpop.f32.mrf.mxu0
  %v3869 = vadd.f32 %v3700, %v3868
  %3870 = vmatmul.bf16.gmra.mxu0 %v1732
  %v3871 = vpop.f32.mrf.mxu0
  %v3872 = vadd.f32 %v3703, %v3871
  %v3873 = vpop.f32.mrf.mxu0
  %v3874 = vadd.f32 %v3705, %v3873
  %3875 = vmatmul.bf16.gmra.mxu0 %v1733
  %v3876 = vpop.f32.mrf.mxu0
  %v3877 = vadd.f32 %v3708, %v3876
  %v3878 = vpop.f32.mrf.mxu0
  %v3879 = vadd.f32 %v3710, %v3878
  %3880 = vmatmul.bf16.gmra.mxu0 %v1734
  %v3881 = vpop.f32.mrf.mxu0
  %v3882 = vadd.f32 %v3713, %v3881
  %v3883 = vpop.f32.mrf.mxu0
  %v3884 = vadd.f32 %v3715, %v3883
  %3885 = vmatmul.bf16.gmra.mxu0 %v1735
  %v3886 = vpop.f32.mrf.mxu0
  %v3887 = vadd.f32 %v3718, %v3886
  %v3888 = vpop.f32.mrf.mxu0
  %v3889 = vadd.f32 %v3720, %v3888
  %3890 = vmatmul.bf16.gmra.mxu0 %v1736
  %v3891 = vpop.f32.mrf.mxu0
  %v3892 = vadd.f32 %v3723, %v3891
  %v3893 = vpop.f32.mrf.mxu0
  %v3894 = vadd.f32 %v3725, %v3893
  %3895 = vmatmul.bf16.gmra.mxu0 %v1737
  %v3896 = vpop.f32.mrf.mxu0
  %v3897 = vadd.f32 %v3728, %v3896
  %v3898 = vpop.f32.mrf.mxu0
  %v3899 = vadd.f32 %v3730, %v3898
  %3900 = vmatmul.bf16.gmra.mxu0 %v1738
  %v3901 = vpop.f32.mrf.mxu0
  %v3902 = vadd.f32 %v3733, %v3901
  %v3903 = vpop.f32.mrf.mxu0
  %v3904 = vadd.f32 %v3735, %v3903
  %3905 = vmatmul.bf16.gmra.mxu0 %v1739
  %v3906 = vpop.f32.mrf.mxu0
  %v3907 = vadd.f32 %v3738, %v3906
  %v3908 = vpop.f32.mrf.mxu0
  %v3909 = vadd.f32 %v3740, %v3908
  %3910 = vmatmul.bf16.gmra.mxu0 %v1740
  %v3911 = vpop.f32.mrf.mxu0
  %v3912 = vadd.f32 %v3743, %v3911
  %v3913 = vpop.f32.mrf.mxu0
  %v3914 = vadd.f32 %v3745, %v3913
  %3915 = vmatmul.bf16.gmra.mxu0 %v1741
  %v3916 = vpop.f32.mrf.mxu0
  %v3917 = vadd.f32 %v3748, %v3916
  %v3918 = vpop.f32.mrf.mxu0
  %v3919 = vadd.f32 %v3750, %v3918
  %3920 = vmatmul.bf16.gmra.mxu0 %v1742
  %v3921 = vpop.f32.mrf.mxu0
  %v3922 = vadd.f32 %v3753, %v3921
  %v3923 = vpop.f32.mrf.mxu0
  %v3924 = vadd.f32 %v3755, %v3923
  %3925 = vmatmul.bf16.gmra.mxu0 %v1743
  %v3926 = vpop.f32.mrf.mxu0
  %v3927 = vadd.f32 %v3758, %v3926
  %v3928 = vpop.f32.mrf.mxu0
  %v3929 = vadd.f32 %v3760, %v3928
  %3930 = vmatmul.bf16.gmra.mxu0 %v1744
  %v3931 = vpop.f32.mrf.mxu0
  %v3932 = vadd.f32 %v3763, %v3931
  %v3933 = vpop.f32.mrf.mxu0
  %v3934 = vadd.f32 %v3765, %v3933
  %3935 = vmatmul.bf16.gmra.mxu0 %v1810
  %v3936 = vpop.f32.mrf.mxu0
  %v3937 = vadd.f32 %v3768, %v3936
  %v3938 = vpop.f32.mrf.mxu0
  %v3939 = vadd.f32 %v3770, %v3938
  %3940 = vmatmul.bf16.gmra.mxu0 %v1846
  %v3941 = vpop.f32.mrf.mxu0
  %v3942 = vadd.f32 %v3773, %v3941
  %v3943 = vpop.f32.mrf.mxu0
  %v3944 = vadd.f32 %v3775, %v3943
  %3945 = vdwg.mxu0
  %v3946 = vadd.f32 %v3787, %v3789
  %v3947 = vadd.f32 %v3946, %v3792
  %v3948 = vadd.f32 %v3947, %v3794
  %v3949 = vadd.f32 %v3948, %v3797
  %v3950 = vadd.f32 %v3949, %v3799
  %v3951 = vadd.f32 %v3950, %v3802
  %v3952 = vadd.f32 %v3951, %v3804
  %v3953 = vadd.f32 %v3952, %v3807
  %v3954 = vadd.f32 %v3953, %v3809
  %v3955 = vadd.f32 %v3954, %v3812
  %v3956 = vadd.f32 %v3955, %v3814
  %v3957 = vadd.f32 %v3956, %v3817
  %v3958 = vadd.f32 %v3957, %v3819
  %v3959 = vadd.f32 %v3958, %v3822
  %v3960 = vadd.f32 %v3959, %v3824
  %v3961 = vadd.f32 %v3960, %v3827
  %v3962 = vadd.f32 %v3961, %v3829
  %v3963 = vadd.f32 %v3962, %v3832
  %v3964 = vadd.f32 %v3963, %v3834
  %v3965 = vadd.f32 %v3964, %v3837
  %v3966 = vadd.f32 %v3965, %v3839
  %v3967 = vadd.f32 %v3966, %v3842
  %v3968 = vadd.f32 %v3967, %v3844
  %v3969 = vadd.f32 %v3968, %v3847
  %v3970 = vadd.f32 %v3969, %v3849
  %v3971 = vadd.f32 %v3970, %v3852
  %v3972 = vadd.f32 %v3971, %v3854
  %v3973 = vadd.f32 %v3972, %v3857
  %v3974 = vadd.f32 %v3973, %v3859
  %v3975 = vadd.f32 %v3974, %v3862
  %v3976 = vadd.f32 %v3975, %v3864
  %v3977 = vadd.f32 %v3976, %v3867
  %v3978 = vadd.f32 %v3977, %v3869
  %v3979 = vadd.f32 %v3978, %v3872
  %v3980 = vadd.f32 %v3979, %v3874
  %v3981 = vadd.f32 %v3980, %v3877
  %v3982 = vadd.f32 %v3981, %v3879
  %v3983 = vadd.f32 %v3982, %v3882
  %v3984 = vadd.f32 %v3983, %v3884
  %v3985 = vadd.f32 %v3984, %v3887
  %v3986 = vadd.f32 %v3985, %v3889
  %v3987 = vadd.f32 %v3986, %v3892
  %v3988 = vadd.f32 %v3987, %v3894
  %v3989 = vadd.f32 %v3988, %v3897
  %v3990 = vadd.f32 %v3989, %v3899
  %v3991 = vadd.f32 %v3990, %v3902
  %v3992 = vadd.f32 %v3991, %v3904
  %v3993 = vadd.f32 %v3992, %v3907
  %v3994 = vadd.f32 %v3993, %v3909
  %v3995 = vadd.f32 %v3994, %v3912
  %v3996 = vadd.f32 %v3995, %v3914
  %v3997 = vadd.f32 %v3996, %v3917
  %v3998 = vadd.f32 %v3997, %v3919
  %v3999 = vadd.f32 %v3998, %v3922
  %v4000 = vadd.f32 %v3999, %v3924
  %v4001 = vadd.f32 %v4000, %v3927
  %v4002 = vadd.f32 %v4001, %v3929
  %v4003 = vadd.f32 %v4002, %v3932
  %v4004 = vadd.f32 %v4003, %v3934
  %v4005 = vadd.f32 %v4004, %v3937
  %v4006 = vadd.f32 %v4005, %v3939
  %v4007 = vadd.f32 %v4006, %v3942
  %v4008 = vadd.f32 %v4007, %v3944
  %v4009 = vrot.slane %v4008, 4
  %v4010 = vadd.f32 %v4008, %v4009
  %v4011 = vrot.slane %v4010, 2
  %v4012 = vadd.f32 %v4010, %v4011
  %v4013 = vrot.slane %v4012, 1
  %v4014 = vadd.f32 %v4012, %v4013
  %v4015 = vmul.f32 %v4014, 0.001953125
  %v4016 = vmul.f32 %v3787, %v3787
  %v4017 = vmul.f32 %v3789, %v3789
  %v4018 = vmul.f32 %v3792, %v3792
  %v4019 = vmul.f32 %v3794, %v3794
  %v4020 = vmul.f32 %v3797, %v3797
  %v4021 = vmul.f32 %v3799, %v3799
  %v4022 = vmul.f32 %v3802, %v3802
  %v4023 = vmul.f32 %v3804, %v3804
  %v4024 = vmul.f32 %v3807, %v3807
  %v4025 = vmul.f32 %v3809, %v3809
  %v4026 = vmul.f32 %v3812, %v3812
  %v4027 = vmul.f32 %v3814, %v3814
  %v4028 = vmul.f32 %v3817, %v3817
  %v4029 = vmul.f32 %v3819, %v3819
  %v4030 = vmul.f32 %v3822, %v3822
  %v4031 = vmul.f32 %v3824, %v3824
  %v4032 = vmul.f32 %v3827, %v3827
  %v4033 = vmul.f32 %v3829, %v3829
  %v4034 = vmul.f32 %v3832, %v3832
  %v4035 = vmul.f32 %v3834, %v3834
  %v4036 = vmul.f32 %v3837, %v3837
  %v4037 = vmul.f32 %v3839, %v3839
  %v4038 = vmul.f32 %v3842, %v3842
  %v4039 = vmul.f32 %v3844, %v3844
  %v4040 = vmul.f32 %v3847, %v3847
  %v4041 = vmul.f32 %v3849, %v3849
  %v4042 = vmul.f32 %v3852, %v3852
  %v4043 = vmul.f32 %v3854, %v3854
  %v4044 = vmul.f32 %v3857, %v3857
  %v4045 = vmul.f32 %v3859, %v3859
  %v4046 = vmul.f32 %v3862, %v3862
  %v4047 = vmul.f32 %v3864, %v3864
  %v4048 = vmul.f32 %v3867, %v3867
  %v4049 = vmul.f32 %v3869, %v3869
  %v4050 = vmul.f32 %v3872, %v3872
  %v4051 = vmul.f32 %v3874, %v3874
  %v4052 = vmul.f32 %v3877, %v3877
  %v4053 = vmul.f32 %v3879, %v3879
  %v4054 = vmul.f32 %v3882, %v3882
  %v4055 = vmul.f32 %v3884, %v3884
  %v4056 = vmul.f32 %v3887, %v3887
  %v4057 = vmul.f32 %v3889, %v3889
  %v4058 = vmul.f32 %v3892, %v3892
  %v4059 = vmul.f32 %v3894, %v3894
  %v4060 = vmul.f32 %v3897, %v3897
  %v4061 = vmul.f32 %v3899, %v3899
  %v4062 = vmul.f32 %v3902, %v3902
  %v4063 = vmul.f32 %v3904, %v3904
  %v4064 = vmul.f32 %v3907, %v3907
  %v4065 = vmul.f32 %v3909, %v3909
  %v4066 = vmul.f32 %v3912, %v3912
  %v4067 = vmul.f32 %v3914, %v3914
  %v4068 = vmul.f32 %v3917, %v3917
  %v4069 = vmul.f32 %v3919, %v3919
  %v4070 = vmul.f32 %v3922, %v3922
  %v4071 = vmul.f32 %v3924, %v3924
  %v4072 = vmul.f32 %v3927, %v3927
  %v4073 = vmul.f32 %v3929, %v3929
  %v4074 = vmul.f32 %v3932, %v3932
  %v4075 = vmul.f32 %v3934, %v3934
  %v4076 = vmul.f32 %v3937, %v3937
  %v4077 = vmul.f32 %v3939, %v3939
  %v4078 = vmul.f32 %v3942, %v3942
  %v4079 = vmul.f32 %v3944, %v3944
  %v4080 = vadd.f32 %v4016, %v4017
  %v4081 = vadd.f32 %v4080, %v4018
  %v4082 = vadd.f32 %v4081, %v4019
  %v4083 = vadd.f32 %v4082, %v4020
  %v4084 = vadd.f32 %v4083, %v4021
  %v4085 = vadd.f32 %v4084, %v4022
  %v4086 = vadd.f32 %v4085, %v4023
  %v4087 = vadd.f32 %v4086, %v4024
  %v4088 = vadd.f32 %v4087, %v4025
  %v4089 = vadd.f32 %v4088, %v4026
  %v4090 = vadd.f32 %v4089, %v4027
  %v4091 = vadd.f32 %v4090, %v4028
  %v4092 = vadd.f32 %v4091, %v4029
  %v4093 = vadd.f32 %v4092, %v4030
  %v4094 = vadd.f32 %v4093, %v4031
  %v4095 = vadd.f32 %v4094, %v4032
  %v4096 = vadd.f32 %v4095, %v4033
  %v4097 = vadd.f32 %v4096, %v4034
  %v4098 = vadd.f32 %v4097, %v4035
  %v4099 = vadd.f32 %v4098, %v4036
  %v4100 = vadd.f32 %v4099, %v4037
  %v4101 = vadd.f32 %v4100, %v4038
  %v4102 = vadd.f32 %v4101, %v4039
  %v4103 = vadd.f32 %v4102, %v4040
  %v4104 = vadd.f32 %v4103, %v4041
  %v4105 = vadd.f32 %v4104, %v4042
  %v4106 = vadd.f32 %v4105, %v4043
  %v4107 = vadd.f32 %v4106, %v4044
  %v4108 = vadd.f32 %v4107, %v4045
  %v4109 = vadd.f32 %v4108, %v4046
  %v4110 = vadd.f32 %v4109, %v4047
  %v4111 = vadd.f32 %v4110, %v4048
  %v4112 = vadd.f32 %v4111, %v4049
  %v4113 = vadd.f32 %v4112, %v4050
  %v4114 = vadd.f32 %v4113, %v4051
  %v4115 = vadd.f32 %v4114, %v4052
  %v4116 = vadd.f32 %v4115, %v4053
  %v4117 = vadd.f32 %v4116, %v4054
  %v4118 = vadd.f32 %v4117, %v4055
  %v4119 = vadd.f32 %v4118, %v4056
  %v4120 = vadd.f32 %v4119, %v4057
  %v4121 = vadd.f32 %v4120, %v4058
  %v4122 = vadd.f32 %v4121, %v4059
  %v4123 = vadd.f32 %v4122, %v4060
  %v4124 = vadd.f32 %v4123, %v4061
  %v4125 = vadd.f32 %v4124, %v4062
  %v4126 = vadd.f32 %v4125, %v4063
  %v4127 = vadd.f32 %v4126, %v4064
  %v4128 = vadd.f32 %v4127, %v4065
  %v4129 = vadd.f32 %v4128, %v4066
  %v4130 = vadd.f32 %v4129, %v4067
  %v4131 = vadd.f32 %v4130, %v4068
  %v4132 = vadd.f32 %v4131, %v4069
  %v4133 = vadd.f32 %v4132, %v4070
  %v4134 = vadd.f32 %v4133, %v4071
  %v4135 = vadd.f32 %v4134, %v4072
  %v4136 = vadd.f32 %v4135, %v4073
  %v4137 = vadd.f32 %v4136, %v4074
  %v4138 = vadd.f32 %v4137, %v4075
  %v4139 = vadd.f32 %v4138, %v4076
  %v4140 = vadd.f32 %v4139, %v4077
  %v4141 = vadd.f32 %v4140, %v4078
  %v4142 = vadd.f32 %v4141, %v4079
  %v4143 = vrot.slane %v4142, 4
  %v4144 = vadd.f32 %v4142, %v4143
  %v4145 = vrot.slane %v4144, 2
  %v4146 = vadd.f32 %v4144, %v4145
  %v4147 = vrot.slane %v4146, 1
  %v4148 = vadd.f32 %v4146, %v4147
  %v4149 = vmul.f32 %v4148, 0.001953125
  %v4150 = vmul.f32 %v4015, %v4015
  %v4151 = vsub.f32 %v4149, %v4150
  %v4152 = vsub.f32 %v3787, %v4015
  %v4153 = vsub.f32 %v3789, %v4015
  %v4154 = vsub.f32 %v3792, %v4015
  %v4155 = vsub.f32 %v3794, %v4015
  %v4156 = vsub.f32 %v3797, %v4015
  %v4157 = vsub.f32 %v3799, %v4015
  %v4158 = vsub.f32 %v3802, %v4015
  %v4159 = vsub.f32 %v3804, %v4015
  %v4160 = vsub.f32 %v3807, %v4015
  %v4161 = vsub.f32 %v3809, %v4015
  %v4162 = vsub.f32 %v3812, %v4015
  %v4163 = vsub.f32 %v3814, %v4015
  %v4164 = vsub.f32 %v3817, %v4015
  %v4165 = vsub.f32 %v3819, %v4015
  %v4166 = vsub.f32 %v3822, %v4015
  %v4167 = vsub.f32 %v3824, %v4015
  %v4168 = vsub.f32 %v3827, %v4015
  %v4169 = vsub.f32 %v3829, %v4015
  %v4170 = vsub.f32 %v3832, %v4015
  %v4171 = vsub.f32 %v3834, %v4015
  %v4172 = vsub.f32 %v3837, %v4015
  %v4173 = vsub.f32 %v3839, %v4015
  %v4174 = vsub.f32 %v3842, %v4015
  %v4175 = vsub.f32 %v3844, %v4015
  %v4176 = vsub.f32 %v3847, %v4015
  %v4177 = vsub.f32 %v3849, %v4015
  %v4178 = vsub.f32 %v3852, %v4015
  %v4179 = vsub.f32 %v3854, %v4015
  %v4180 = vsub.f32 %v3857, %v4015
  %v4181 = vsub.f32 %v3859, %v4015
  %v4182 = vsub.f32 %v3862, %v4015
  %v4183 = vsub.f32 %v3864, %v4015
  %v4184 = vsub.f32 %v3867, %v4015
  %v4185 = vsub.f32 %v3869, %v4015
  %v4186 = vsub.f32 %v3872, %v4015
  %v4187 = vsub.f32 %v3874, %v4015
  %v4188 = vsub.f32 %v3877, %v4015
  %v4189 = vsub.f32 %v3879, %v4015
  %v4190 = vsub.f32 %v3882, %v4015
  %v4191 = vsub.f32 %v3884, %v4015
  %v4192 = vsub.f32 %v3887, %v4015
  %v4193 = vsub.f32 %v3889, %v4015
  %v4194 = vsub.f32 %v3892, %v4015
  %v4195 = vsub.f32 %v3894, %v4015
  %v4196 = vsub.f32 %v3897, %v4015
  %v4197 = vsub.f32 %v3899, %v4015
  %v4198 = vsub.f32 %v3902, %v4015
  %v4199 = vsub.f32 %v3904, %v4015
  %v4200 = vsub.f32 %v3907, %v4015
  %v4201 = vsub.f32 %v3909, %v4015
  %v4202 = vsub.f32 %v3912, %v4015
  %v4203 = vsub.f32 %v3914, %v4015
  %v4204 = vsub.f32 %v3917, %v4015
  %v4205 = vsub.f32 %v3919, %v4015
  %v4206 = vsub.f32 %v3922, %v4015
  %v4207 = vsub.f32 %v3924, %v4015
  %v4208 = vsub.f32 %v3927, %v4015
  %v4209 = vsub.f32 %v3929, %v4015
  %v4210 = vsub.f32 %v3932, %v4015
  %v4211 = vsub.f32 %v3934, %v4015
  %v4212 = vsub.f32 %v3937, %v4015
  %v4213 = vsub.f32 %v3939, %v4015
  %v4214 = vsub.f32 %v3942, %v4015
  %v4215 = vsub.f32 %v3944, %v4015
  %v4216 = vadd.f32 %v4151, 1e-05
  %v4217 = vrsqrt.pop %v4216
  %v4218 = vmul.f32 %v4217, %v4216
  %v4219 = vmul.f32 %v4218, %v4217
  %v4220 = vmul.f32 0.5, %v4219
  %v4221 = vsub.f32 1.5, %v4220
  %v4222 = vmul.f32 %v4217, %v4221
  %vm4223 = vweird.f32 %v4216
  %vm4224 = vweird.f32 %v4217
  %vm4225 = vmor %vm4223, %vm4224
  %v4226 = vsel %vm4225, %v4217, %v4222
  %v4227 = vmul.f32 %v4152, %v4226
  %v4228 = vmul.f32 %v4153, %v4226
  %v4229 = vmul.f32 %v4154, %v4226
  %v4230 = vmul.f32 %v4155, %v4226
  %v4231 = vmul.f32 %v4156, %v4226
  %v4232 = vmul.f32 %v4157, %v4226
  %v4233 = vmul.f32 %v4158, %v4226
  %v4234 = vmul.f32 %v4159, %v4226
  %v4235 = vmul.f32 %v4160, %v4226
  %v4236 = vmul.f32 %v4161, %v4226
  %v4237 = vmul.f32 %v4162, %v4226
  %v4238 = vmul.f32 %v4163, %v4226
  %v4239 = vmul.f32 %v4164, %v4226
  %v4240 = vmul.f32 %v4165, %v4226
  %v4241 = vmul.f32 %v4166, %v4226
  %v4242 = vmul.f32 %v4167, %v4226
  %v4243 = vmul.f32 %v4168, %v4226
  %v4244 = vmul.f32 %v4169, %v4226
  %v4245 = vmul.f32 %v4170, %v4226
  %v4246 = vmul.f32 %v4171, %v4226
  %v4247 = vmul.f32 %v4172, %v4226
  %v4248 = vmul.f32 %v4173, %v4226
  %v4249 = vmul.f32 %v4174, %v4226
  %v4250 = vmul.f32 %v4175, %v4226
  %v4251 = vmul.f32 %v4176, %v4226
  %v4252 = vmul.f32 %v4177, %v4226
  %v4253 = vmul.f32 %v4178, %v4226
  %v4254 = vmul.f32 %v4179, %v4226
  %v4255 = vmul.f32 %v4180, %v4226
  %v4256 = vmul.f32 %v4181, %v4226
  %v4257 = vmul.f32 %v4182, %v4226
  %v4258 = vmul.f32 %v4183, %v4226
  %v4259 = vmul.f32 %v4184, %v4226
  %v4260 = vmul.f32 %v4185, %v4226
  %v4261 = vmul.f32 %v4186, %v4226
  %v4262 = vmul.f32 %v4187, %v4226
  %v4263 = vmul.f32 %v4188, %v4226
  %v4264 = vmul.f32 %v4189, %v4226
  %v4265 = vmul.f32 %v4190, %v4226
  %v4266 = vmul.f32 %v4191, %v4226
  %v4267 = vmul.f32 %v4192, %v4226
  %v4268 = vmul.f32 %v4193, %v4226
  %v4269 = vmul.f32 %v4194, %v4226
  %v4270 = vmul.f32 %v4195, %v4226
  %v4271 = vmul.f32 %v4196, %v4226
  %v4272 = vmul.f32 %v4197, %v4226
  %v4273 = vmul.f32 %v4198, %v4226
  %v4274 = vmul.f32 %v4199, %v4226
  %v4275 = vmul.f32 %v4200, %v4226
  %v4276 = vmul.f32 %v4201, %v4226
  %v4277 = vmul.f32 %v4202, %v4226
  %v4278 = vmul.f32 %v4203, %v4226
  %v4279 = vmul.f32 %v4204, %v4226
  %v4280 = vmul.f32 %v4205, %v4226
  %v4281 = vmul.f32 %v4206, %v4226
  %v4282 = vmul.f32 %v4207, %v4226
  %v4283 = vmul.f32 %v4208, %v4226
  %v4284 = vmul.f32 %v4209, %v4226
  %v4285 = vmul.f32 %v4210, %v4226
  %v4286 = vmul.f32 %v4211, %v4226
  %v4287 = vmul.f32 %v4212, %v4226
  %v4288 = vmul.f32 %v4213, %v4226
  %v4289 = vmul.f32 %v4214, %v4226
  %v4290 = vmul.f32 %v4215, %v4226
  %v4291 = vld [vmem:[%s2] sm:$0x1]
  %v4293 = vperm.slane %v4291, 0
  %v4295 = vmul.f32 %v4227, %v4293
  %v4296 = vmul.f32 %v4228, %v4293
  %v4297 = vmul.f32 %v4229, %v4293
  %v4298 = vmul.f32 %v4230, %v4293
  %v4299 = vmul.f32 %v4231, %v4293
  %v4300 = vmul.f32 %v4232, %v4293
  %v4301 = vmul.f32 %v4233, %v4293
  %v4302 = vmul.f32 %v4234, %v4293
  %v4303 = vmul.f32 %v4235, %v4293
  %v4304 = vmul.f32 %v4236, %v4293
  %v4305 = vmul.f32 %v4237, %v4293
  %v4306 = vmul.f32 %v4238, %v4293
  %v4307 = vmul.f32 %v4239, %v4293
  %v4308 = vmul.f32 %v4240, %v4293
  %v4309 = vmul.f32 %v4241, %v4293
  %v4310 = vmul.f32 %v4242, %v4293
  %v4311 = vmul.f32 %v4243, %v4293
  %v4312 = vmul.f32 %v4244, %v4293
  %v4313 = vmul.f32 %v4245, %v4293
  %v4314 = vmul.f32 %v4246, %v4293
  %v4315 = vmul.f32 %v4247, %v4293
  %v4316 = vmul.f32 %v4248, %v4293
  %v4317 = vmul.f32 %v4249, %v4293
  %v4318 = vmul.f32 %v4250, %v4293
  %v4319 = vmul.f32 %v4251, %v4293
  %v4320 = vmul.f32 %v4252, %v4293
  %v4321 = vmul.f32 %v4253, %v4293
  %v4322 = vmul.f32 %v4254, %v4293
  %v4323 = vmul.f32 %v4255, %v4293
  %v4324 = vmul.f32 %v4256, %v4293
  %v4325 = vmul.f32 %v4257, %v4293
  %v4326 = vmul.f32 %v4258, %v4293
  %v4327 = vmul.f32 %v4259, %v4293
  %v4328 = vmul.f32 %v4260, %v4293
  %v4329 = vmul.f32 %v4261, %v4293
  %v4330 = vmul.f32 %v4262, %v4293
  %v4331 = vmul.f32 %v4263, %v4293
  %v4332 = vmul.f32 %v4264, %v4293
  %v4333 = vmul.f32 %v4265, %v4293
  %v4334 = vmul.f32 %v4266, %v4293
  %v4335 = vmul.f32 %v4267, %v4293
  %v4336 = vmul.f32 %v4268, %v4293
  %v4337 = vmul.f32 %v4269, %v4293
  %v4338 = vmul.f32 %v4270, %v4293
  %v4339 = vmul.f32 %v4271, %v4293
  %v4340 = vmul.f32 %v4272, %v4293
  %v4341 = vmul.f32 %v4273, %v4293
  %v4342 = vmul.f32 %v4274, %v4293
  %v4343 = vmul.f32 %v4275, %v4293
  %v4344 = vmul.f32 %v4276, %v4293
  %v4345 = vmul.f32 %v4277, %v4293
  %v4346 = vmul.f32 %v4278, %v4293
  %v4347 = vmul.f32 %v4279, %v4293
  %v4348 = vmul.f32 %v4280, %v4293
  %v4349 = vmul.f32 %v4281, %v4293
  %v4350 = vmul.f32 %v4282, %v4293
  %v4351 = vmul.f32 %v4283, %v4293
  %v4352 = vmul.f32 %v4284, %v4293
  %v4353 = vmul.f32 %v4285, %v4293
  %v4354 = vmul.f32 %v4286, %v4293
  %v4355 = vmul.f32 %v4287, %v4293
  %v4356 = vmul.f32 %v4288, %v4293
  %v4357 = vmul.f32 %v4289, %v4293
  %v4358 = vmul.f32 %v4290, %v4293
  %v4359 = vld [vmem:[%s3] sm:$0x1]
  %v4361 = vperm.slane %v4359, 0
  %v4363 = vadd.f32 %v4295, %v4361
  %v4364 = vadd.f32 %v4296, %v4361
  %v4365 = vadd.f32 %v4297, %v4361
  %v4366 = vadd.f32 %v4298, %v4361
  %v4367 = vadd.f32 %v4299, %v4361
  %v4368 = vadd.f32 %v4300, %v4361
  %v4369 = vadd.f32 %v4301, %v4361
  %v4370 = vadd.f32 %v4302, %v4361
  %v4371 = vadd.f32 %v4303, %v4361
  %v4372 = vadd.f32 %v4304, %v4361
  %v4373 = vadd.f32 %v4305, %v4361
  %v4374 = vadd.f32 %v4306, %v4361
  %v4375 = vadd.f32 %v4307, %v4361
  %v4376 = vadd.f32 %v4308, %v4361
  %v4377 = vadd.f32 %v4309, %v4361
  %v4378 = vadd.f32 %v4310, %v4361
  %v4379 = vadd.f32 %v4311, %v4361
  %v4380 = vadd.f32 %v4312, %v4361
  %v4381 = vadd.f32 %v4313, %v4361
  %v4382 = vadd.f32 %v4314, %v4361
  %v4383 = vadd.f32 %v4315, %v4361
  %v4384 = vadd.f32 %v4316, %v4361
  %v4385 = vadd.f32 %v4317, %v4361
  %v4386 = vadd.f32 %v4318, %v4361
  %v4387 = vadd.f32 %v4319, %v4361
  %v4388 = vadd.f32 %v4320, %v4361
  %v4389 = vadd.f32 %v4321, %v4361
  %v4390 = vadd.f32 %v4322, %v4361
  %v4391 = vadd.f32 %v4323, %v4361
  %v4392 = vadd.f32 %v4324, %v4361
  %v4393 = vadd.f32 %v4325, %v4361
  %v4394 = vadd.f32 %v4326, %v4361
  %v4395 = vadd.f32 %v4327, %v4361
  %v4396 = vadd.f32 %v4328, %v4361
  %v4397 = vadd.f32 %v4329, %v4361
  %v4398 = vadd.f32 %v4330, %v4361
  %v4399 = vadd.f32 %v4331, %v4361
  %v4400 = vadd.f32 %v4332, %v4361
  %v4401 = vadd.f32 %v4333, %v4361
  %v4402 = vadd.f32 %v4334, %v4361
  %v4403 = vadd.f32 %v4335, %v4361
  %v4404 = vadd.f32 %v4336, %v4361
  %v4405 = vadd.f32 %v4337, %v4361
  %v4406 = vadd.f32 %v4338, %v4361
  %v4407 = vadd.f32 %v4339, %v4361
  %v4408 = vadd.f32 %v4340, %v4361
  %v4409 = vadd.f32 %v4341, %v4361
  %v4410 = vadd.f32 %v4342, %v4361
  %v4411 = vadd.f32 %v4343, %v4361
  %v4412 = vadd.f32 %v4344, %v4361
  %v4413 = vadd.f32 %v4345, %v4361
  %v4414 = vadd.f32 %v4346, %v4361
  %v4415 = vadd.f32 %v4347, %v4361
  %v4416 = vadd.f32 %v4348, %v4361
  %v4417 = vadd.f32 %v4349, %v4361
  %v4418 = vadd.f32 %v4350, %v4361
  %v4419 = vadd.f32 %v4351, %v4361
  %v4420 = vadd.f32 %v4352, %v4361
  %v4421 = vadd.f32 %v4353, %v4361
  %v4422 = vadd.f32 %v4354, %v4361
  %v4423 = vadd.f32 %v4355, %v4361
  %v4424 = vadd.f32 %v4356, %v4361
  %v4425 = vadd.f32 %v4357, %v4361
  %v4426 = vadd.f32 %v4358, %v4361
  %v4427 = vmax.f32 %v4363, 0.0
  %v4428 = vmax.f32 %v4364, 0.0
  %v4429 = vmax.f32 %v4365, 0.0
  %v4430 = vmax.f32 %v4366, 0.0
  %v4431 = vmax.f32 %v4367, 0.0
  %v4432 = vmax.f32 %v4368, 0.0
  %v4433 = vmax.f32 %v4369, 0.0
  %v4434 = vmax.f32 %v4370, 0.0
  %v4435 = vmax.f32 %v4371, 0.0
  %v4436 = vmax.f32 %v4372, 0.0
  %v4437 = vmax.f32 %v4373, 0.0
  %v4438 = vmax.f32 %v4374, 0.0
  %v4439 = vmax.f32 %v4375, 0.0
  %v4440 = vmax.f32 %v4376, 0.0
  %v4441 = vmax.f32 %v4377, 0.0
  %v4442 = vmax.f32 %v4378, 0.0
  %v4443 = vmax.f32 %v4379, 0.0
  %v4444 = vmax.f32 %v4380, 0.0
  %v4445 = vmax.f32 %v4381, 0.0
  %v4446 = vmax.f32 %v4382, 0.0
  %v4447 = vmax.f32 %v4383, 0.0
  %v4448 = vmax.f32 %v4384, 0.0
  %v4449 = vmax.f32 %v4385, 0.0
  %v4450 = vmax.f32 %v4386, 0.0
  %v4451 = vmax.f32 %v4387, 0.0
  %v4452 = vmax.f32 %v4388, 0.0
  %v4453 = vmax.f32 %v4389, 0.0
  %v4454 = vmax.f32 %v4390, 0.0
  %v4455 = vmax.f32 %v4391, 0.0
  %v4456 = vmax.f32 %v4392, 0.0
  %v4457 = vmax.f32 %v4393, 0.0
  %v4458 = vmax.f32 %v4394, 0.0
  %v4459 = vmax.f32 %v4395, 0.0
  %v4460 = vmax.f32 %v4396, 0.0
  %v4461 = vmax.f32 %v4397, 0.0
  %v4462 = vmax.f32 %v4398, 0.0
  %v4463 = vmax.f32 %v4399, 0.0
  %v4464 = vmax.f32 %v4400, 0.0
  %v4465 = vmax.f32 %v4401, 0.0
  %v4466 = vmax.f32 %v4402, 0.0
  %v4467 = vmax.f32 %v4403, 0.0
  %v4468 = vmax.f32 %v4404, 0.0
  %v4469 = vmax.f32 %v4405, 0.0
  %v4470 = vmax.f32 %v4406, 0.0
  %v4471 = vmax.f32 %v4407, 0.0
  %v4472 = vmax.f32 %v4408, 0.0
  %v4473 = vmax.f32 %v4409, 0.0
  %v4474 = vmax.f32 %v4410, 0.0
  %v4475 = vmax.f32 %v4411, 0.0
  %v4476 = vmax.f32 %v4412, 0.0
  %v4477 = vmax.f32 %v4413, 0.0
  %v4478 = vmax.f32 %v4414, 0.0
  %v4479 = vmax.f32 %v4415, 0.0
  %v4480 = vmax.f32 %v4416, 0.0
  %v4481 = vmax.f32 %v4417, 0.0
  %v4482 = vmax.f32 %v4418, 0.0
  %v4483 = vmax.f32 %v4419, 0.0
  %v4484 = vmax.f32 %v4420, 0.0
  %v4485 = vmax.f32 %v4421, 0.0
  %v4486 = vmax.f32 %v4422, 0.0
  %v4487 = vmax.f32 %v4423, 0.0
  %v4488 = vmax.f32 %v4424, 0.0
  %v4489 = vmax.f32 %v4425, 0.0
  %v4490 = vmax.f32 %v4426, 0.0
  %4491 = vst [vmem:[%s198 + $0x1] sm:$0xff] %v4427
  %4492 = vst [vmem:[%s198 + $0x9] sm:$0xff] %v4428
  %4493 = vst [vmem:[%s198 + $0x19] sm:$0xff] %v4429
  %4494 = vst [vmem:[%s198 + $0x21] sm:$0xff] %v4430
  %4495 = vst [vmem:[%s198 + $0x31] sm:$0xff] %v4431
  %4496 = vst [vmem:[%s198 + $0x39] sm:$0xff] %v4432
  %4497 = vst [vmem:[%s198 + $0x49] sm:$0xff] %v4433
  %4498 = vst [vmem:[%s198 + $0x51] sm:$0xff] %v4434
  %4499 = vst [vmem:[%s198 + $0x61] sm:$0xff] %v4435
  %4500 = vst [vmem:[%s198 + $0x69] sm:$0xff] %v4436
  %4501 = vst [vmem:[%s198 + $0x79] sm:$0xff] %v4437
  %4502 = vst [vmem:[%s198 + $0x81] sm:$0xff] %v4438
  %4503 = vst [vmem:[%s198 + $0x91] sm:$0xff] %v4439
  %4504 = vst [vmem:[%s198 + $0x99] sm:$0xff] %v4440
  %4505 = vst [vmem:[%s198 + $0xa9] sm:$0xff] %v4441
  %4506 = vst [vmem:[%s198 + $0xb1] sm:$0xff] %v4442
  %4507 = vst [vmem:[%s198 + $0xc1] sm:$0xff] %v4443
  %4508 = vst [vmem:[%s198 + $0xc9] sm:$0xff] %v4444
  %4509 = vst [vmem:[%s198 + $0xd9] sm:$0xff] %v4445
  %4510 = vst [vmem:[%s198 + $0xe1] sm:$0xff] %v4446
  %4511 = vst [vmem:[%s198 + $0xf1] sm:$0xff] %v4447
  %4512 = vst [vmem:[%s198 + $0xf9] sm:$0xff] %v4448
  %4513 = vst [vmem:[%s198 + $0x109] sm:$0xff] %v4449
  %4514 = vst [vmem:[%s198 + $0x111] sm:$0xff] %v4450
  %4515 = vst [vmem:[%s198 + $0x121] sm:$0xff] %v4451
  %4516 = vst [vmem:[%s198 + $0x129] sm:$0xff] %v4452
  %4517 = vst [vmem:[%s198 + $0x139] sm:$0xff] %v4453
  %4518 = vst [vmem:[%s198 + $0x141] sm:$0xff] %v4454
  %4519 = vst [vmem:[%s198 + $0x151] sm:$0xff] %v4455
  %4520 = vst [vmem:[%s198 + $0x159] sm:$0xff] %v4456
  %4521 = vst [vmem:[%s198 + $0x169] sm:$0xff] %v4457
  %4522 = vst [vmem:[%s198 + $0x171] sm:$0xff] %v4458
  %4523 = vst [vmem:[%s198 + $0x1b1] sm:$0xff] %v4459
  %4524 = vst [vmem:[%s198 + $0x1b9] sm:$0xff] %v4460
  %4525 = vst [vmem:[%s198 + $0x1c9] sm:$0xff] %v4461
  %4526 = vst [vmem:[%s198 + $0x1d1] sm:$0xff] %v4462
  %4527 = vst [vmem:[%s198 + $0x1e1] sm:$0xff] %v4463
  %4528 = vst [vmem:[%s198 + $0x1e9] sm:$0xff] %v4464
  %4529 = vst [vmem:[%s198 + $0x1f9] sm:$0xff] %v4465
  %4530 = vst [vmem:[%s198 + $0x201] sm:$0xff] %v4466
  %4531 = vst [vmem:[%s198 + $0x211] sm:$0xff] %v4467
  %4532 = vst [vmem:[%s198 + $0x219] sm:$0xff] %v4468
  %4533 = vst [vmem:[%s198 + $0x229] sm:$0xff] %v4469
  %4534 = vst [vmem:[%s198 + $0x231] sm:$0xff] %v4470
  %4535 = vst [vmem:[%s198 + $0x241] sm:$0xff] %v4471
  %4536 = vst [vmem:[%s198 + $0x249] sm:$0xff] %v4472
  %4537 = vst [vmem:[%s198 + $0x259] sm:$0xff] %v4473
  %4538 = vst [vmem:[%s198 + $0x261] sm:$0xff] %v4474
  %4539 = vst [vmem:[%s198 + $0x271] sm:$0xff] %v4475
  %4540 = vst [vmem:[%s198 + $0x279] sm:$0xff] %v4476
  %4541 = vst [vmem:[%s198 + $0x289] sm:$0xff] %v4477
  %4542 = vst [vmem:[%s198 + $0x291] sm:$0xff] %v4478
  %4543 = vst [vmem:[%s198 + $0x2a1] sm:$0xff] %v4479
  %4544 = vst [vmem:[%s198 + $0x2a9] sm:$0xff] %v4480
  %4545 = vst [vmem:[%s198 + $0x2b9] sm:$0xff] %v4481
  %4546 = vst [vmem:[%s198 + $0x2c1] sm:$0xff] %v4482
  %4547 = vst [vmem:[%s198 + $0x2d1] sm:$0xff] %v4483
  %4548 = vst [vmem:[%s198 + $0x2d9] sm:$0xff] %v4484
  %4549 = vst [vmem:[%s198 + $0x2e9] sm:$0xff] %v4485
  %4550 = vst [vmem:[%s198 + $0x2f1] sm:$0xff] %v4486
  %4551 = vst [vmem:[%s198 + $0x301] sm:$0xff] %v4487
  %4552 = vst [vmem:[%s198 + $0x309] sm:$0xff] %v4488
  %4553 = vst [vmem:[%s198 + $0x319] sm:$0xff] %v4489
  %4554 = vst [vmem:[%s198 + $0x321] sm:$0xff] %v4490
  %v4555 = vld [vmem:[#allocation2] sm:$0xff]
  %v4556 = vld [vmem:[#allocation2 + $0x8] sm:$0xff]
  %v4557 = vld [vmem:[#allocation2 + $0x10] sm:$0x3]
  %v4558 = vld [vmem:[#allocation2 + $0x18] sm:$0xff]
  %v4559 = vld [vmem:[#allocation2 + $0x20] sm:$0xff]
  %v4560 = vld [vmem:[#allocation2 + $0x28] sm:$0x3]
  %v4561 = vld [vmem:[#allocation2 + $0x30] sm:$0xff]
  %v4562 = vld [vmem:[#allocation2 + $0x38] sm:$0xff]
  %v4563 = vld [vmem:[#allocation2 + $0x40] sm:$0x3]
  %v4564 = vld [vmem:[#allocation2 + $0x48] sm:$0xff]
  %v4565 = vld [vmem:[#allocation2 + $0x50] sm:$0xff]
  %v4566 = vld [vmem:[#allocation2 + $0x58] sm:$0x3]
  %v4567 = vld [vmem:[#allocation2 + $0x60] sm:$0xff]
  %v4568 = vld [vmem:[#allocation2 + $0x68] sm:$0xff]
  %v4569 = vld [vmem:[#allocation2 + $0x70] sm:$0x3]
  %v4570 = vld [vmem:[#allocation2 + $0x78] sm:$0xff]
  %v4571 = vld [vmem:[#allocation2 + $0x80] sm:$0xff]
  %v4572 = vld [vmem:[#allocation2 + $0x88] sm:$0x3]
  %v4573 = vld [vmem:[#allocation2 + $0x90] sm:$0xff]
  %v4574 = vld [vmem:[#allocation2 + $0x98] sm:$0xff]
  %v4575 = vld [vmem:[#allocation2 + $0xa0] sm:$0x3]
  %v4576 = vld [vmem:[#allocation2 + $0xa8] sm:$0xff]
  %v4577 = vld [vmem:[#allocation2 + $0xb0] sm:$0xff]
  %v4578 = vld [vmem:[#allocation2 + $0xb8] sm:$0x3]
  %v4579 = vld [vmem:[#allocation2 + $0xc0] sm:$0xff]
  %v4580 = vld [vmem:[#allocation2 + $0xc8] sm:$0xff]
  %v4581 = vld [vmem:[#allocation2 + $0xd0] sm:$0x3]
  %v4582 = vld [vmem:[#allocation2 + $0xd8] sm:$0xff]
  %v4583 = vld [vmem:[#allocation2 + $0xe0] sm:$0xff]
  %v4584 = vld [vmem:[#allocation2 + $0xe8] sm:$0x3]
  %v4585 = vld [vmem:[#allocation2 + $0xf0] sm:$0xff]
  %v4586 = vld [vmem:[#allocation2 + $0xf8] sm:$0xff]
  %v4587 = vld [vmem:[#allocation2 + $0x100] sm:$0x3]
  %v4588 = vld [vmem:[#allocation2 + $0x108] sm:$0xff]
  %v4589 = vld [vmem:[#allocation2 + $0x110] sm:$0xff]
  %v4590 = vld [vmem:[#allocation2 + $0x118] sm:$0x3]
  %v4591 = vld [vmem:[#allocation2 + $0x120] sm:$0xff]
  %v4592 = vld [vmem:[#allocation2 + $0x128] sm:$0xff]
  %v4593 = vld [vmem:[#allocation2 + $0x130] sm:$0x3]
  %v4594 = vld [vmem:[#allocation2 + $0x138] sm:$0xff]
  %v4595 = vld [vmem:[#allocation2 + $0x140] sm:$0xff]
  %v4596 = vld [vmem:[#allocation2 + $0x148] sm:$0x3]
  %v4597 = vld [vmem:[#allocation2 + $0x150] sm:$0xff]
  %v4598 = vld [vmem:[#allocation2 + $0x158] sm:$0xff]
  %v4599 = vld [vmem:[#allocation2 + $0x160] sm:$0x3]
  %v4600 = vld [vmem:[#allocation2 + $0x168] sm:$0xff]
  %v4601 = vld [vmem:[#allocation2 + $0x170] sm:$0xff]
  %v4602 = vld [vmem:[#allocation2 + $0x178] sm:$0x3]
  %v4603 = vld [vmem:[#allocation2 + $0x180] sm:$0xff]
  %v4604 = vld [vmem:[#allocation2 + $0x188] sm:$0xff]
  %v4605 = vld [vmem:[#allocation2 + $0x190] sm:$0x3]
  %v4606 = vld [vmem:[#allocation2 + $0x198] sm:$0xff]
  %v4607 = vld [vmem:[#allocation2 + $0x1a0] sm:$0xff]
  %v4608 = vld [vmem:[#allocation2 + $0x1a8] sm:$0x3]
  %v4609 = vld [vmem:[#allocation2 + $0x1b0] sm:$0xff]
  %v4610 = vld [vmem:[#allocation2 + $0x1b8] sm:$0xff]
  %v4611 = vld [vmem:[#allocation2 + $0x1c0] sm:$0x3]
  %v4612 = vld [vmem:[#allocation2 + $0x1c8] sm:$0xff]
  %v4613 = vld [vmem:[#allocation2 + $0x1d0] sm:$0xff]
  %v4614 = vld [vmem:[#allocation2 + $0x1d8] sm:$0x3]
  %v4615 = vld [vmem:[#allocation2 + $0x1e0] sm:$0xff]
  %v4616 = vld [vmem:[#allocation2 + $0x1e8] sm:$0xff]
  %v4617 = vld [vmem:[#allocation2 + $0x1f0] sm:$0x3]
  %v4618 = vld [vmem:[#allocation2 + $0x1f8] sm:$0xff]
  %v4619 = vld [vmem:[#allocation2 + $0x200] sm:$0xff]
  %v4620 = vld [vmem:[#allocation2 + $0x208] sm:$0x3]
  %v4621 = vld [vmem:[#allocation2 + $0x210] sm:$0xff]
  %v4622 = vld [vmem:[#allocation2 + $0x218] sm:$0xff]
  %v4623 = vld [vmem:[#allocation2 + $0x220] sm:$0x3]
  %v4624 = vld [vmem:[#allocation2 + $0x228] sm:$0xff]
  %v4625 = vld [vmem:[#allocation2 + $0x230] sm:$0xff]
  %v4626 = vld [vmem:[#allocation2 + $0x238] sm:$0x3]
  %v4627 = vld [vmem:[#allocation2 + $0x240] sm:$0xff]
  %v4628 = vld [vmem:[#allocation2 + $0x248] sm:$0xff]
  %v4629 = vld [vmem:[#allocation2 + $0x250] sm:$0x3]
  %v4630 = vld [vmem:[#allocation2 + $0x258] sm:$0xff]
  %v4631 = vld [vmem:[#allocation2 + $0x260] sm:$0xff]
  %v4632 = vld [vmem:[#allocation2 + $0x268] sm:$0x3]
  %v4633 = vld [vmem:[#allocation2 + $0x270] sm:$0xff]
  %v4634 = vld [vmem:[#allocation2 + $0x278] sm:$0xff]
  %v4635 = vld [vmem:[#allocation2 + $0x280] sm:$0x3]
  %v4636 = vld [vmem:[#allocation2 + $0x288] sm:$0xff]
  %v4637 = vld [vmem:[#allocation2 + $0x290] sm:$0xff]
  %v4638 = vld [vmem:[#allocation2 + $0x298] sm:$0x3]
  %v4639 = vld [vmem:[#allocation2 + $0x2a0] sm:$0xff]
  %v4640 = vld [vmem:[#allocation2 + $0x2a8] sm:$0xff]
  %v4641 = vld [vmem:[#allocation2 + $0x2b0] sm:$0x3]
  %v4642 = vld [vmem:[#allocation2 + $0x2b8] sm:$0xff]
  %v4643 = vld [vmem:[#allocation2 + $0x2c0] sm:$0xff]
  %v4644 = vld [vmem:[#allocation2 + $0x2c8] sm:$0x3]
  %v4645 = vld [vmem:[#allocation2 + $0x2d0] sm:$0xff]
  %v4646 = vld [vmem:[#allocation2 + $0x2d8] sm:$0xff]
  %v4647 = vld [vmem:[#allocation2 + $0x2e0] sm:$0x3]
  %v4648 = vld [vmem:[#allocation2 + $0x2e8] sm:$0xff]
  %v4649 = vld [vmem:[#allocation2 + $0x2f0] sm:$0xff]
  %v4650 = vld [vmem:[#allocation2 + $0x2f8] sm:$0x3]
  %v4651 = vld [vmem:[#allocation2 + $0x300] sm:$0xff]
  %v4652 = vld [vmem:[#allocation2 + $0x308] sm:$0xff]
  %v4653 = vld [vmem:[#allocation2 + $0x310] sm:$0x3]
  %v4654 = vld [vmem:[#allocation2 + $0x318] sm:$0xff]
  %v4655 = vld [vmem:[#allocation2 + $0x320] sm:$0xff]
  %v4656 = vld [vmem:[#allocation2 + $0x328] sm:$0x3]
  %v4657 = vld [vmem:[#allocation2 + $0x330] sm:$0xff]
  %v4658 = vld [vmem:[#allocation2 + $0x338] sm:$0xff]
  %v4659 = vld [vmem:[#allocation2 + $0x340] sm:$0x3]
  %v4660 = vld [vmem:[#allocation2 + $0x348] sm:$0xff]
  %v4661 = vld [vmem:[#allocation2 + $0x350] sm:$0xff]
  %v4662 = vld [vmem:[#allocation2 + $0x358] sm:$0x3]
  %v4663 = vpack.c.bf16 %v4555, %v4555
  %v4664 = vpack.c.bf16 %v4556, %v4556
  %v4665 = vpack.c.bf16 %v4558, %v4558
  %v4666 = vpack.c.bf16 %v4559, %v4559
  %v4667 = vpack.c.bf16 %v4561, %v4561
  %v4668 = vpack.c.bf16 %v4562, %v4562
  %v4669 = vpack.c.bf16 %v4564, %v4564
  %v4670 = vpack.c.bf16 %v4565, %v4565
  %v4671 = vpack.c.bf16 %v4567, %v4567
  %v4672 = vpack.c.bf16 %v4568, %v4568
  %v4673 = vpack.c.bf16 %v4570, %v4570
  %v4674 = vpack.c.bf16 %v4571, %v4571
  %v4675 = vpack.c.bf16 %v4573, %v4573
  %v4676 = vpack.c.bf16 %v4574, %v4574
  %v4677 = vpack.c.bf16 %v4576, %v4576
  %v4678 = vpack.c.bf16 %v4577, %v4577
  %v4679 = vpack.c.bf16 %v4579, %v4579
  %v4680 = vpack.c.bf16 %v4580, %v4580
  %v4681 = vpack.c.bf16 %v4582, %v4582
  %v4682 = vpack.c.bf16 %v4583, %v4583
  %v4683 = vpack.c.bf16 %v4585, %v4585
  %v4684 = vpack.c.bf16 %v4586, %v4586
  %v4685 = vpack.c.bf16 %v4588, %v4588
  %v4686 = vpack.c.bf16 %v4589, %v4589
  %v4687 = vpack.c.bf16 %v4591, %v4591
  %v4688 = vpack.c.bf16 %v4592, %v4592
  %v4689 = vpack.c.bf16 %v4594, %v4594
  %v4690 = vpack.c.bf16 %v4595, %v4595
  %v4691 = vpack.c.bf16 %v4597, %v4597
  %v4692 = vpack.c.bf16 %v4598, %v4598
  %v4693 = vpack.c.bf16 %v4600, %v4600
  %v4694 = vpack.c.bf16 %v4601, %v4601
  %v4695 = vpack.c.bf16 %v4609, %v4609
  %v4696 = vpack.c.bf16 %v4610, %v4610
  %v4697 = vpack.c.bf16 %v4612, %v4612
  %v4698 = vpack.c.bf16 %v4613, %v4613
  %v4699 = vpack.c.bf16 %v4615, %v4615
  %v4700 = vpack.c.bf16 %v4616, %v4616
  %v4701 = vpack.c.bf16 %v4618, %v4618
  %v4702 = vpack.c.bf16 %v4619, %v4619
  %v4703 = vpack.c.bf16 %v4621, %v4621
  %v4704 = vpack.c.bf16 %v4622, %v4622
  %v4705 = vpack.c.bf16 %v4624, %v4624
  %v4706 = vpack.c.bf16 %v4625, %v4625
  %v4707 = vpack.c.bf16 %v4627, %v4627
  %v4708 = vpack.c.bf16 %v4628, %v4628
  %v4709 = vpack.c.bf16 %v4630, %v4630
  %v4710 = vpack.c.bf16 %v4631, %v4631
  %v4711 = vpack.c.bf16 %v4633, %v4633
  %v4712 = vpack.c.bf16 %v4634, %v4634
  %v4713 = vpack.c.bf16 %v4636, %v4636
  %v4714 = vpack.c.bf16 %v4637, %v4637
  %v4715 = vpack.c.bf16 %v4639, %v4639
  %v4716 = vpack.c.bf16 %v4640, %v4640
  %v4717 = vpack.c.bf16 %v4642, %v4642
  %v4718 = vpack.c.bf16 %v4643, %v4643
  %v4719 = vpack.c.bf16 %v4645, %v4645
  %v4720 = vpack.c.bf16 %v4646, %v4646
  %v4721 = vpack.c.bf16 %v4648, %v4648
  %v4722 = vpack.c.bf16 %v4649, %v4649
  %v4723 = vpack.c.bf16 %v4651, %v4651
  %v4724 = vpack.c.bf16 %v4652, %v4652
  %v4725 = vpack.c.bf16 %v4654, %v4654
  %v4726 = vpack.c.bf16 %v4655, %v4655
  %v4823 = vrot.slane %v4555, 1
  %v4824 = vrot.slane %v4556, 1
  %v4825 = vsel %vm531, %v4823, %v4824
  %v4826 = vrot.slane %v4557, 1
  %v4827 = vsel %vm531, %v4824, %v4826
  %v4828 = vrot.slane %v4558, 1
  %v4829 = vrot.slane %v4559, 1
  %v4830 = vsel %vm531, %v4828, %v4829
  %v4831 = vrot.slane %v4560, 1
  %v4832 = vsel %vm531, %v4829, %v4831
  %v4833 = vrot.slane %v4561, 1
  %v4834 = vrot.slane %v4562, 1
  %v4835 = vsel %vm531, %v4833, %v4834
  %v4836 = vrot.slane %v4563, 1
  %v4837 = vsel %vm531, %v4834, %v4836
  %v4838 = vrot.slane %v4564, 1
  %v4839 = vrot.slane %v4565, 1
  %v4840 = vsel %vm531, %v4838, %v4839
  %v4841 = vrot.slane %v4566, 1
  %v4842 = vsel %vm531, %v4839, %v4841
  %v4843 = vrot.slane %v4567, 1
  %v4844 = vrot.slane %v4568, 1
  %v4845 = vsel %vm531, %v4843, %v4844
  %v4846 = vrot.slane %v4569, 1
  %v4847 = vsel %vm531, %v4844, %v4846
  %v4848 = vrot.slane %v4570, 1
  %v4849 = vrot.slane %v4571, 1
  %v4850 = vsel %vm531, %v4848, %v4849
  %v4851 = vrot.slane %v4572, 1
  %v4852 = vsel %vm531, %v4849, %v4851
  %v4853 = vrot.slane %v4573, 1
  %v4854 = vrot.slane %v4574, 1
  %v4855 = vsel %vm531, %v4853, %v4854
  %v4856 = vrot.slane %v4575, 1
  %v4857 = vsel %vm531, %v4854, %v4856
  %v4858 = vrot.slane %v4576, 1
  %v4859 = vrot.slane %v4577, 1
  %v4860 = vsel %vm531, %v4858, %v4859
  %v4861 = vrot.slane %v4578, 1
  %v4862 = vsel %vm531, %v4859, %v4861
  %v4863 = vrot.slane %v4579, 1
  %v4864 = vrot.slane %v4580, 1
  %v4865 = vsel %vm531, %v4863, %v4864
  %v4866 = vrot.slane %v4581, 1
  %v4867 = vsel %vm531, %v4864, %v4866
  %v4868 = vrot.slane %v4582, 1
  %v4869 = vrot.slane %v4583, 1
  %v4870 = vsel %vm531, %v4868, %v4869
  %v4871 = vrot.slane %v4584, 1
  %v4872 = vsel %vm531, %v4869, %v4871
  %v4873 = vrot.slane %v4585, 1
  %v4874 = vrot.slane %v4586, 1
  %v4875 = vsel %vm531, %v4873, %v4874
  %v4876 = vrot.slane %v4587, 1
  %v4877 = vsel %vm531, %v4874, %v4876
  %v4878 = vrot.slane %v4588, 1
  %v4879 = vrot.slane %v4589, 1
  %v4880 = vsel %vm531, %v4878, %v4879
  %v4881 = vrot.slane %v4590, 1
  %v4882 = vsel %vm531, %v4879, %v4881
  %v4883 = vrot.slane %v4591, 1
  %v4884 = vrot.slane %v4592, 1
  %v4885 = vsel %vm531, %v4883, %v4884
  %v4886 = vrot.slane %v4593, 1
  %v4887 = vsel %vm531, %v4884, %v4886
  %v4888 = vrot.slane %v4594, 1
  %v4889 = vrot.slane %v4595, 1
  %v4890 = vsel %vm531, %v4888, %v4889
  %v4891 = vrot.slane %v4596, 1
  %v4892 = vsel %vm531, %v4889, %v4891
  %v4893 = vrot.slane %v4597, 1
  %v4894 = vrot.slane %v4598, 1
  %v4895 = vsel %vm531, %v4893, %v4894
  %v4896 = vrot.slane %v4599, 1
  %v4897 = vsel %vm531, %v4894, %v4896
  %v4898 = vrot.slane %v4600, 1
  %v4899 = vrot.slane %v4601, 1
  %v4900 = vsel %vm531, %v4898, %v4899
  %v4901 = vrot.slane %v4602, 1
  %v4902 = vsel %vm531, %v4899, %v4901
  %v4903 = vrot.slane %v4609, 1
  %v4904 = vrot.slane %v4610, 1
  %v4905 = vsel %vm531, %v4903, %v4904
  %v4906 = vrot.slane %v4611, 1
  %v4907 = vsel %vm531, %v4904, %v4906
  %v4908 = vrot.slane %v4612, 1
  %v4909 = vrot.slane %v4613, 1
  %v4910 = vsel %vm531, %v4908, %v4909
  %v4911 = vrot.slane %v4614, 1
  %v4912 = vsel %vm531, %v4909, %v4911
  %v4913 = vrot.slane %v4615, 1
  %v4914 = vrot.slane %v4616, 1
  %v4915 = vsel %vm531, %v4913, %v4914
  %v4916 = vrot.slane %v4617, 1
  %v4917 = vsel %vm531, %v4914, %v4916
  %v4918 = vrot.slane %v4618, 1
  %v4919 = vrot.slane %v4619, 1
  %v4920 = vsel %vm531, %v4918, %v4919
  %v4921 = vrot.slane %v4620, 1
  %v4922 = vsel %vm531, %v4919, %v4921
  %v4923 = vrot.slane %v4621, 1
  %v4924 = vrot.slane %v4622, 1
  %v4925 = vsel %vm531, %v4923, %v4924
  %v4926 = vrot.slane %v4623, 1
  %v4927 = vsel %vm531, %v4924, %v4926
  %v4928 = vrot.slane %v4624, 1
  %v4929 = vrot.slane %v4625, 1
  %v4930 = vsel %vm531, %v4928, %v4929
  %v4931 = vrot.slane %v4626, 1
  %v4932 = vsel %vm531, %v4929, %v4931
  %v4933 = vrot.slane %v4627, 1
  %v4934 = vrot.slane %v4628, 1
  %v4935 = vsel %vm531, %v4933, %v4934
  %v4936 = vrot.slane %v4629, 1
  %v4937 = vsel %vm531, %v4934, %v4936
  %v4938 = vrot.slane %v4630, 1
  %v4939 = vrot.slane %v4631, 1
  %v4940 = vsel %vm531, %v4938, %v4939
  %v4941 = vrot.slane %v4632, 1
  %v4942 = vsel %vm531, %v4939, %v4941
  %v4943 = vrot.slane %v4633, 1
  %v4944 = vrot.slane %v4634, 1
  %v4945 = vsel %vm531, %v4943, %v4944
  %v4946 = vrot.slane %v4635, 1
  %v4947 = vsel %vm531, %v4944, %v4946
  %v4948 = vrot.slane %v4636, 1
  %v4949 = vrot.slane %v4637, 1
  %v4950 = vsel %vm531, %v4948, %v4949
  %v4951 = vrot.slane %v4638, 1
  %v4952 = vsel %vm531, %v4949, %v4951
  %v4953 = vrot.slane %v4639, 1
  %v4954 = vrot.slane %v4640, 1
  %v4955 = vsel %vm531, %v4953, %v4954
  %v4956 = vrot.slane %v4641, 1
  %v4957 = vsel %vm531, %v4954, %v4956
  %v4958 = vrot.slane %v4642, 1
  %v4959 = vrot.slane %v4643, 1
  %v4960 = vsel %vm531, %v4958, %v4959
  %v4961 = vrot.slane %v4644, 1
  %v4962 = vsel %vm531, %v4959, %v4961
  %v4963 = vrot.slane %v4645, 1
  %v4964 = vrot.slane %v4646, 1
  %v4965 = vsel %vm531, %v4963, %v4964
  %v4966 = vrot.slane %v4647, 1
  %v4967 = vsel %vm531, %v4964, %v4966
  %v4968 = vrot.slane %v4648, 1
  %v4969 = vrot.slane %v4649, 1
  %v4970 = vsel %vm531, %v4968, %v4969
  %v4971 = vrot.slane %v4650, 1
  %v4972 = vsel %vm531, %v4969, %v4971
  %v4973 = vrot.slane %v4651, 1
  %v4974 = vrot.slane %v4652, 1
  %v4975 = vsel %vm531, %v4973, %v4974
  %v4976 = vrot.slane %v4653, 1
  %v4977 = vsel %vm531, %v4974, %v4976
  %v4978 = vrot.slane %v4654, 1
  %v4979 = vrot.slane %v4655, 1
  %v4980 = vsel %vm531, %v4978, %v4979
  %v4981 = vrot.slane %v4656, 1
  %v4982 = vsel %vm531, %v4979, %v4981
  %v5047 = vpack.c.bf16 %v4825, %v4825
  %v5048 = vpack.c.bf16 %v4827, %v4827
  %v5049 = vpack.c.bf16 %v4830, %v4830
  %v5050 = vpack.c.bf16 %v4832, %v4832
  %v5051 = vpack.c.bf16 %v4835, %v4835
  %v5052 = vpack.c.bf16 %v4837, %v4837
  %v5053 = vpack.c.bf16 %v4840, %v4840
  %v5054 = vpack.c.bf16 %v4842, %v4842
  %v5055 = vpack.c.bf16 %v4845, %v4845
  %v5056 = vpack.c.bf16 %v4847, %v4847
  %v5057 = vpack.c.bf16 %v4850, %v4850
  %v5058 = vpack.c.bf16 %v4852, %v4852
  %v5059 = vpack.c.bf16 %v4855, %v4855
  %v5060 = vpack.c.bf16 %v4857, %v4857
  %v5061 = vpack.c.bf16 %v4860, %v4860
  %v5062 = vpack.c.bf16 %v4862, %v4862
  %v5063 = vpack.c.bf16 %v4865, %v4865
  %v5064 = vpack.c.bf16 %v4867, %v4867
  %v5065 = vpack.c.bf16 %v4870, %v4870
  %v5066 = vpack.c.bf16 %v4872, %v4872
  %v5067 = vpack.c.bf16 %v4875, %v4875
  %v5068 = vpack.c.bf16 %v4877, %v4877
  %v5069 = vpack.c.bf16 %v4880, %v4880
  %v5070 = vpack.c.bf16 %v4882, %v4882
  %v5071 = vpack.c.bf16 %v4885, %v4885
  %v5072 = vpack.c.bf16 %v4887, %v4887
  %v5073 = vpack.c.bf16 %v4890, %v4890
  %v5074 = vpack.c.bf16 %v4892, %v4892
  %v5075 = vpack.c.bf16 %v4895, %v4895
  %v5076 = vpack.c.bf16 %v4897, %v4897
  %v5077 = vpack.c.bf16 %v4900, %v4900
  %v5078 = vpack.c.bf16 %v4902, %v4902
  %v5079 = vpack.c.bf16 %v4905, %v4905
  %v5080 = vpack.c.bf16 %v4907, %v4907
  %v5081 = vpack.c.bf16 %v4910, %v4910
  %v5082 = vpack.c.bf16 %v4912, %v4912
  %v5083 = vpack.c.bf16 %v4915, %v4915
  %v5084 = vpack.c.bf16 %v4917, %v4917
  %v5085 = vpack.c.bf16 %v4920, %v4920
  %v5086 = vpack.c.bf16 %v4922, %v4922
  %v5087 = vpack.c.bf16 %v4925, %v4925
  %v5088 = vpack.c.bf16 %v4927, %v4927
  %v5089 = vpack.c.bf16 %v4930, %v4930
  %v5090 = vpack.c.bf16 %v4932, %v4932
  %v5091 = vpack.c.bf16 %v4935, %v4935
  %v5092 = vpack.c.bf16 %v4937, %v4937
  %v5093 = vpack.c.bf16 %v4940, %v4940
  %v5094 = vpack.c.bf16 %v4942, %v4942
  %v5095 = vpack.c.bf16 %v4945, %v4945
  %v5096 = vpack.c.bf16 %v4947, %v4947
  %v5097 = vpack.c.bf16 %v4950, %v4950
  %v5098 = vpack.c.bf16 %v4952, %v4952
  %v5099 = vpack.c.bf16 %v4955, %v4955
  %v5100 = vpack.c.bf16 %v4957, %v4957
  %v5101 = vpack.c.bf16 %v4960, %v4960
  %v5102 = vpack.c.bf16 %v4962, %v4962
  %v5103 = vpack.c.bf16 %v4965, %v4965
  %v5104 = vpack.c.bf16 %v4967, %v4967
  %v5105 = vpack.c.bf16 %v4970, %v4970
  %v5106 = vpack.c.bf16 %v4972, %v4972
  %v5107 = vpack.c.bf16 %v4975, %v4975
  %v5108 = vpack.c.bf16 %v4977, %v4977
  %v5109 = vpack.c.bf16 %v4980, %v4980
  %v5110 = vpack.c.bf16 %v4982, %v4982
  %v5111 = vrot.slane %v4555, 2
  %v5112 = vrot.slane %v4556, 2
  %v5113 = vsel %vm820, %v5111, %v5112
  %v5114 = vrot.slane %v4557, 2
  %v5115 = vsel %vm820, %v5112, %v5114
  %v5116 = vrot.slane %v4558, 2
  %v5117 = vrot.slane %v4559, 2
  %v5118 = vsel %vm820, %v5116, %v5117
  %v5119 = vrot.slane %v4560, 2
  %v5120 = vsel %vm820, %v5117, %v5119
  %v5121 = vrot.slane %v4561, 2
  %v5122 = vrot.slane %v4562, 2
  %v5123 = vsel %vm820, %v5121, %v5122
  %v5124 = vrot.slane %v4563, 2
  %v5125 = vsel %vm820, %v5122, %v5124
  %v5126 = vrot.slane %v4564, 2
  %v5127 = vrot.slane %v4565, 2
  %v5128 = vsel %vm820, %v5126, %v5127
  %v5129 = vrot.slane %v4566, 2
  %v5130 = vsel %vm820, %v5127, %v5129
  %v5131 = vrot.slane %v4567, 2
  %v5132 = vrot.slane %v4568, 2
  %v5133 = vsel %vm820, %v5131, %v5132
  %v5134 = vrot.slane %v4569, 2
  %v5135 = vsel %vm820, %v5132, %v5134
  %v5136 = vrot.slane %v4570, 2
  %v5137 = vrot.slane %v4571, 2
  %v5138 = vsel %vm820, %v5136, %v5137
  %v5139 = vrot.slane %v4572, 2
  %v5140 = vsel %vm820, %v5137, %v5139
  %v5141 = vrot.slane %v4573, 2
  %v5142 = vrot.slane %v4574, 2
  %v5143 = vsel %vm820, %v5141, %v5142
  %v5144 = vrot.slane %v4575, 2
  %v5145 = vsel %vm820, %v5142, %v5144
  %v5146 = vrot.slane %v4576, 2
  %v5147 = vrot.slane %v4577, 2
  %v5148 = vsel %vm820, %v5146, %v5147
  %v5149 = vrot.slane %v4578, 2
  %v5150 = vsel %vm820, %v5147, %v5149
  %v5151 = vrot.slane %v4579, 2
  %v5152 = vrot.slane %v4580, 2
  %v5153 = vsel %vm820, %v5151, %v5152
  %v5154 = vrot.slane %v4581, 2
  %v5155 = vsel %vm820, %v5152, %v5154
  %v5156 = vrot.slane %v4582, 2
  %v5157 = vrot.slane %v4583, 2
  %v5158 = vsel %vm820, %v5156, %v5157
  %v5159 = vrot.slane %v4584, 2
  %v5160 = vsel %vm820, %v5157, %v5159
  %v5161 = vrot.slane %v4585, 2
  %v5162 = vrot.slane %v4586, 2
  %v5163 = vsel %vm820, %v5161, %v5162
  %v5164 = vrot.slane %v4587, 2
  %v5165 = vsel %vm820, %v5162, %v5164
  %v5166 = vrot.slane %v4588, 2
  %v5167 = vrot.slane %v4589, 2
  %v5168 = vsel %vm820, %v5166, %v5167
  %v5169 = vrot.slane %v4590, 2
  %v5170 = vsel %vm820, %v5167, %v5169
  %v5171 = vrot.slane %v4591, 2
  %v5172 = vrot.slane %v4592, 2
  %v5173 = vsel %vm820, %v5171, %v5172
  %v5174 = vrot.slane %v4593, 2
  %v5175 = vsel %vm820, %v5172, %v5174
  %v5176 = vrot.slane %v4594, 2
  %v5177 = vrot.slane %v4595, 2
  %v5178 = vsel %vm820, %v5176, %v5177
  %v5179 = vrot.slane %v4596, 2
  %v5180 = vsel %vm820, %v5177, %v5179
  %v5181 = vrot.slane %v4597, 2
  %v5182 = vrot.slane %v4598, 2
  %v5183 = vsel %vm820, %v5181, %v5182
  %v5184 = vrot.slane %v4599, 2
  %v5185 = vsel %vm820, %v5182, %v5184
  %v5186 = vrot.slane %v4600, 2
  %v5187 = vrot.slane %v4601, 2
  %v5188 = vsel %vm820, %v5186, %v5187
  %v5189 = vrot.slane %v4602, 2
  %v5190 = vsel %vm820, %v5187, %v5189
  %v5191 = vrot.slane %v4609, 2
  %v5192 = vrot.slane %v4610, 2
  %v5193 = vsel %vm820, %v5191, %v5192
  %v5194 = vrot.slane %v4611, 2
  %v5195 = vsel %vm820, %v5192, %v5194
  %v5196 = vrot.slane %v4612, 2
  %v5197 = vrot.slane %v4613, 2
  %v5198 = vsel %vm820, %v5196, %v5197
  %v5199 = vrot.slane %v4614, 2
  %v5200 = vsel %vm820, %v5197, %v5199
  %v5201 = vrot.slane %v4615, 2
  %v5202 = vrot.slane %v4616, 2
  %v5203 = vsel %vm820, %v5201, %v5202
  %v5204 = vrot.slane %v4617, 2
  %v5205 = vsel %vm820, %v5202, %v5204
  %v5206 = vrot.slane %v4618, 2
  %v5207 = vrot.slane %v4619, 2
  %v5208 = vsel %vm820, %v5206, %v5207
  %v5209 = vrot.slane %v4620, 2
  %v5210 = vsel %vm820, %v5207, %v5209
  %v5211 = vrot.slane %v4621, 2
  %v5212 = vrot.slane %v4622, 2
  %v5213 = vsel %vm820, %v5211, %v5212
  %v5214 = vrot.slane %v4623, 2
  %v5215 = vsel %vm820, %v5212, %v5214
  %v5216 = vrot.slane %v4624, 2
  %v5217 = vrot.slane %v4625, 2
  %v5218 = vsel %vm820, %v5216, %v5217
  %v5219 = vrot.slane %v4626, 2
  %v5220 = vsel %vm820, %v5217, %v5219
  %v5221 = vrot.slane %v4627, 2
  %v5222 = vrot.slane %v4628, 2
  %v5223 = vsel %vm820, %v5221, %v5222
  %v5224 = vrot.slane %v4629, 2
  %v5225 = vsel %vm820, %v5222, %v5224
  %v5226 = vrot.slane %v4630, 2
  %v5227 = vrot.slane %v4631, 2
  %v5228 = vsel %vm820, %v5226, %v5227
  %v5229 = vrot.slane %v4632, 2
  %v5230 = vsel %vm820, %v5227, %v5229
  %v5231 = vrot.slane %v4633, 2
  %v5232 = vrot.slane %v4634, 2
  %v5233 = vsel %vm820, %v5231, %v5232
  %v5234 = vrot.slane %v4635, 2
  %v5235 = vsel %vm820, %v5232, %v5234
  %v5236 = vrot.slane %v4636, 2
  %v5237 = vrot.slane %v4637, 2
  %v5238 = vsel %vm820, %v5236, %v5237
  %v5239 = vrot.slane %v4638, 2
  %v5240 = vsel %vm820, %v5237, %v5239
  %v5241 = vrot.slane %v4639, 2
  %v5242 = vrot.slane %v4640, 2
  %v5243 = vsel %vm820, %v5241, %v5242
  %v5244 = vrot.slane %v4641, 2
  %v5245 = vsel %vm820, %v5242, %v5244
  %v5246 = vrot.slane %v4642, 2
  %v5247 = vrot.slane %v4643, 2
  %v5248 = vsel %vm820, %v5246, %v5247
  %v5249 = vrot.slane %v4644, 2
  %v5250 = vsel %vm820, %v5247, %v5249
  %v5251 = vrot.slane %v4645, 2
  %v5252 = vrot.slane %v4646, 2
  %v5253 = vsel %vm820, %v5251, %v5252
  %v5254 = vrot.slane %v4647, 2
  %v5255 = vsel %vm820, %v5252, %v5254
  %v5256 = vrot.slane %v4648, 2
  %v5257 = vrot.slane %v4649, 2
  %v5258 = vsel %vm820, %v5256, %v5257
  %v5259 = vrot.slane %v4650, 2
  %v5260 = vsel %vm820, %v5257, %v5259
  %v5261 = vrot.slane %v4651, 2
  %v5262 = vrot.slane %v4652, 2
  %v5263 = vsel %vm820, %v5261, %v5262
  %v5264 = vrot.slane %v4653, 2
  %v5265 = vsel %vm820, %v5262, %v5264
  %v5266 = vrot.slane %v4654, 2
  %v5267 = vrot.slane %v4655, 2
  %v5268 = vsel %vm820, %v5266, %v5267
  %v5269 = vrot.slane %v4656, 2
  %v5270 = vsel %vm820, %v5267, %v5269
  %v5335 = vpack.c.bf16 %v5113, %v5113
  %v5336 = vpack.c.bf16 %v5115, %v5115
  %v5337 = vpack.c.bf16 %v5118, %v5118
  %v5338 = vpack.c.bf16 %v5120, %v5120
  %v5339 = vpack.c.bf16 %v5123, %v5123
  %v5340 = vpack.c.bf16 %v5125, %v5125
  %v5341 = vpack.c.bf16 %v5128, %v5128
  %v5342 = vpack.c.bf16 %v5130, %v5130
  %v5343 = vpack.c.bf16 %v5133, %v5133
  %v5344 = vpack.c.bf16 %v5135, %v5135
  %v5345 = vpack.c.bf16 %v5138, %v5138
  %v5346 = vpack.c.bf16 %v5140, %v5140
  %v5347 = vpack.c.bf16 %v5143, %v5143
  %v5348 = vpack.c.bf16 %v5145, %v5145
  %v5349 = vpack.c.bf16 %v5148, %v5148
  %v5350 = vpack.c.bf16 %v5150, %v5150
  %v5351 = vpack.c.bf16 %v5153, %v5153
  %v5352 = vpack.c.bf16 %v5155, %v5155
  %v5353 = vpack.c.bf16 %v5158, %v5158
  %v5354 = vpack.c.bf16 %v5160, %v5160
  %v5355 = vpack.c.bf16 %v5163, %v5163
  %v5356 = vpack.c.bf16 %v5165, %v5165
  %v5357 = vpack.c.bf16 %v5168, %v5168
  %v5358 = vpack.c.bf16 %v5170, %v5170
  %v5359 = vpack.c.bf16 %v5173, %v5173
  %v5360 = vpack.c.bf16 %v5175, %v5175
  %v5361 = vpack.c.bf16 %v5178, %v5178
  %v5362 = vpack.c.bf16 %v5180, %v5180
  %v5363 = vpack.c.bf16 %v5183, %v5183
  %v5364 = vpack.c.bf16 %v5185, %v5185
  %v5365 = vpack.c.bf16 %v5188, %v5188
  %v5366 = vpack.c.bf16 %v5190, %v5190
  %v5367 = vpack.c.bf16 %v5193, %v5193
  %v5368 = vpack.c.bf16 %v5195, %v5195
  %v5369 = vpack.c.bf16 %v5198, %v5198
  %v5370 = vpack.c.bf16 %v5200, %v5200
  %v5371 = vpack.c.bf16 %v5203, %v5203
  %v5372 = vpack.c.bf16 %v5205, %v5205
  %v5373 = vpack.c.bf16 %v5208, %v5208
  %v5374 = vpack.c.bf16 %v5210, %v5210
  %v5375 = vpack.c.bf16 %v5213, %v5213
  %v5376 = vpack.c.bf16 %v5215, %v5215
  %v5377 = vpack.c.bf16 %v5218, %v5218
  %v5378 = vpack.c.bf16 %v5220, %v5220
  %v5379 = vpack.c.bf16 %v5223, %v5223
  %v5380 = vpack.c.bf16 %v5225, %v5225
  %v5381 = vpack.c.bf16 %v5228, %v5228
  %v5382 = vpack.c.bf16 %v5230, %v5230
  %v5383 = vpack.c.bf16 %v5233, %v5233
  %v5384 = vpack.c.bf16 %v5235, %v5235
  %v5385 = vpack.c.bf16 %v5238, %v5238
  %v5386 = vpack.c.bf16 %v5240, %v5240
  %v5387 = vpack.c.bf16 %v5243, %v5243
  %v5388 = vpack.c.bf16 %v5245, %v5245
  %v5389 = vpack.c.bf16 %v5248, %v5248
  %v5390 = vpack.c.bf16 %v5250, %v5250
  %v5391 = vpack.c.bf16 %v5253, %v5253
  %v5392 = vpack.c.bf16 %v5255, %v5255
  %v5393 = vpack.c.bf16 %v5258, %v5258
  %v5394 = vpack.c.bf16 %v5260, %v5260
  %v5395 = vpack.c.bf16 %v5263, %v5263
  %v5396 = vpack.c.bf16 %v5265, %v5265
  %v5397 = vpack.c.bf16 %v5268, %v5268
  %v5398 = vpack.c.bf16 %v5270, %v5270
  %v5399 = vpack.c.bf16 %v4603, %v4603
  %v5400 = vpack.c.bf16 %v4604, %v4604
  %v5401 = vpack.c.bf16 %v4657, %v4657
  %v5402 = vpack.c.bf16 %v4658, %v4658
  %v5409 = vrot.slane %v4603, 1
  %v5410 = vrot.slane %v4604, 1
  %v5411 = vsel %vm531, %v5409, %v5410
  %v5412 = vrot.slane %v4605, 1
  %v5413 = vsel %vm531, %v5410, %v5412
  %v5414 = vrot.slane %v4657, 1
  %v5415 = vrot.slane %v4658, 1
  %v5416 = vsel %vm531, %v5414, %v5415
  %v5417 = vrot.slane %v4659, 1
  %v5418 = vsel %vm531, %v5415, %v5417
  %v5423 = vpack.c.bf16 %v5411, %v5411
  %v5424 = vpack.c.bf16 %v5413, %v5413
  %v5425 = vpack.c.bf16 %v5416, %v5416
  %v5426 = vpack.c.bf16 %v5418, %v5418
  %v5427 = vrot.slane %v4603, 2
  %v5428 = vrot.slane %v4604, 2
  %v5429 = vsel %vm820, %v5427, %v5428
  %v5430 = vrot.slane %v4605, 2
  %v5431 = vsel %vm820, %v5428, %v5430
  %v5432 = vrot.slane %v4657, 2
  %v5433 = vrot.slane %v4658, 2
  %v5434 = vsel %vm820, %v5432, %v5433
  %v5435 = vrot.slane %v4659, 2
  %v5436 = vsel %vm820, %v5433, %v5435
  %v5441 = vpack.c.bf16 %v5429, %v5429
  %v5442 = vpack.c.bf16 %v5431, %v5431
  %v5443 = vpack.c.bf16 %v5434, %v5434
  %v5444 = vpack.c.bf16 %v5436, %v5436
  %v5445 = vpack.c.bf16 %v4606, %v4606
  %v5446 = vpack.c.bf16 %v4607, %v4607
  %v5447 = vpack.c.bf16 %v4660, %v4660
  %v5448 = vpack.c.bf16 %v4661, %v4661
  %v5455 = vrot.slane %v4606, 1
  %v5456 = vrot.slane %v4607, 1
  %v5457 = vsel %vm531, %v5455, %v5456
  %v5458 = vrot.slane %v4608, 1
  %v5459 = vsel %vm531, %v5456, %v5458
  %v5460 = vrot.slane %v4660, 1
  %v5461 = vrot.slane %v4661, 1
  %v5462 = vsel %vm531, %v5460, %v5461
  %v5463 = vrot.slane %v4662, 1
  %v5464 = vsel %vm531, %v5461, %v5463
  %v5469 = vpack.c.bf16 %v5457, %v5457
  %v5470 = vpack.c.bf16 %v5459, %v5459
  %v5471 = vpack.c.bf16 %v5462, %v5462
  %v5472 = vpack.c.bf16 %v5464, %v5464
  %v5473 = vrot.slane %v4606, 2
  %v5474 = vrot.slane %v4607, 2
  %v5475 = vsel %vm820, %v5473, %v5474
  %v5476 = vrot.slane %v4608, 2
  %v5477 = vsel %vm820, %v5474, %v5476
  %v5478 = vrot.slane %v4660, 2
  %v5479 = vrot.slane %v4661, 2
  %v5480 = vsel %vm820, %v5478, %v5479
  %v5481 = vrot.slane %v4662, 2
  %v5482 = vsel %vm820, %v5479, %v5481
  %v5487 = vpack.c.bf16 %v5475, %v5475
  %v5488 = vpack.c.bf16 %v5477, %v5477
  %v5489 = vpack.c.bf16 %v5480, %v5480
  %v5490 = vpack.c.bf16 %v5482, %v5482
  %v5555 = vunpack.c.l.b16 %v4663
  %v5556 = vunpack.c.l.b16 %v4664
  %v5557 = vunpack.c.l.b16 %v4665
  %v5558 = vunpack.c.l.b16 %v4666
  %v5559 = vunpack.c.l.b16 %v4667
  %v5560 = vunpack.c.l.b16 %v4668
  %v5561 = vunpack.c.l.b16 %v4669
  %v5562 = vunpack.c.l.b16 %v4670
  %v5563 = vunpack.c.l.b16 %v4671
  %v5564 = vunpack.c.l.b16 %v4672
  %v5565 = vunpack.c.l.b16 %v4673
  %v5566 = vunpack.c.l.b16 %v4674
  %v5567 = vunpack.c.l.b16 %v4675
  %v5568 = vunpack.c.l.b16 %v4676
  %v5569 = vunpack.c.l.b16 %v4677
  %v5570 = vunpack.c.l.b16 %v4678
  %v5571 = vunpack.c.l.b16 %v4679
  %v5572 = vunpack.c.l.b16 %v4680
  %v5573 = vunpack.c.l.b16 %v4681
  %v5574 = vunpack.c.l.b16 %v4682
  %v5575 = vunpack.c.l.b16 %v4683
  %v5576 = vunpack.c.l.b16 %v4684
  %v5577 = vunpack.c.l.b16 %v4685
  %v5578 = vunpack.c.l.b16 %v4686
  %v5579 = vunpack.c.l.b16 %v4687
  %v5580 = vunpack.c.l.b16 %v4688
  %v5581 = vunpack.c.l.b16 %v4689
  %v5582 = vunpack.c.l.b16 %v4690
  %v5583 = vunpack.c.l.b16 %v4691
  %v5584 = vunpack.c.l.b16 %v4692
  %v5585 = vunpack.c.l.b16 %v4693
  %v5586 = vunpack.c.l.b16 %v4694
  %v5587 = vunpack.c.l.b16 %v4695
  %v5588 = vunpack.c.l.b16 %v4696
  %v5589 = vunpack.c.l.b16 %v4697
  %v5590 = vunpack.c.l.b16 %v4698
  %v5591 = vunpack.c.l.b16 %v4699
  %v5592 = vunpack.c.l.b16 %v4700
  %v5593 = vunpack.c.l.b16 %v4701
  %v5594 = vunpack.c.l.b16 %v4702
  %v5595 = vunpack.c.l.b16 %v4703
  %v5596 = vunpack.c.l.b16 %v4704
  %v5597 = vunpack.c.l.b16 %v4705
  %v5598 = vunpack.c.l.b16 %v4706
  %v5599 = vunpack.c.l.b16 %v4707
  %v5600 = vunpack.c.l.b16 %v4708
  %v5601 = vunpack.c.l.b16 %v4709
  %v5602 = vunpack.c.l.b16 %v4710
  %v5603 = vunpack.c.l.b16 %v4711
  %v5604 = vunpack.c.l.b16 %v4712
  %v5605 = vunpack.c.l.b16 %v4713
  %v5606 = vunpack.c.l.b16 %v4714
  %v5607 = vunpack.c.l.b16 %v4715
  %v5608 = vunpack.c.l.b16 %v4716
  %v5609 = vunpack.c.l.b16 %v4717
  %v5610 = vunpack.c.l.b16 %v4718
  %v5611 = vunpack.c.l.b16 %v4719
  %v5612 = vunpack.c.l.b16 %v4720
  %v5613 = vunpack.c.l.b16 %v4721
  %v5614 = vunpack.c.l.b16 %v4722
  %v5615 = vunpack.c.l.b16 %v4723
  %v5616 = vunpack.c.l.b16 %v4724
  %v5617 = vunpack.c.l.b16 %v4725
  %v5618 = vunpack.c.l.b16 %v4726
  %v5619 = vpack.c.b16 %v5556, %v5555
  %v5620 = vpack.c.b16 %v5558, %v5557
  %v5621 = vpack.c.b16 %v5560, %v5559
  %v5622 = vpack.c.b16 %v5562, %v5561
  %v5623 = vpack.c.b16 %v5564, %v5563
  %v5624 = vpack.c.b16 %v5566, %v5565
  %v5625 = vpack.c.b16 %v5568, %v5567
  %v5626 = vpack.c.b16 %v5570, %v5569
  %v5627 = vpack.c.b16 %v5572, %v5571
  %v5628 = vpack.c.b16 %v5574, %v5573
  %v5629 = vpack.c.b16 %v5576, %v5575
  %v5630 = vpack.c.b16 %v5578, %v5577
  %v5631 = vpack.c.b16 %v5580, %v5579
  %v5632 = vpack.c.b16 %v5582, %v5581
  %v5633 = vpack.c.b16 %v5584, %v5583
  %v5634 = vpack.c.b16 %v5586, %v5585
  %v5635 = vpack.c.b16 %v5588, %v5587
  %v5636 = vpack.c.b16 %v5590, %v5589
  %v5637 = vpack.c.b16 %v5592, %v5591
  %v5638 = vpack.c.b16 %v5594, %v5593
  %v5639 = vpack.c.b16 %v5596, %v5595
  %v5640 = vpack.c.b16 %v5598, %v5597
  %v5641 = vpack.c.b16 %v5600, %v5599
  %v5642 = vpack.c.b16 %v5602, %v5601
  %v5643 = vpack.c.b16 %v5604, %v5603
  %v5644 = vpack.c.b16 %v5606, %v5605
  %v5645 = vpack.c.b16 %v5608, %v5607
  %v5646 = vpack.c.b16 %v5610, %v5609
  %v5647 = vpack.c.b16 %v5612, %v5611
  %v5648 = vpack.c.b16 %v5614, %v5613
  %v5649 = vpack.c.b16 %v5616, %v5615
  %v5650 = vpack.c.b16 %v5618, %v5617
  %v5747 = vunpack.c.l.b16 %v5047
  %v5748 = vunpack.c.l.b16 %v5048
  %v5749 = vunpack.c.l.b16 %v5049
  %v5750 = vunpack.c.l.b16 %v5050
  %v5751 = vunpack.c.l.b16 %v5051
  %v5752 = vunpack.c.l.b16 %v5052
  %v5753 = vunpack.c.l.b16 %v5053
  %v5754 = vunpack.c.l.b16 %v5054
  %v5755 = vunpack.c.l.b16 %v5055
  %v5756 = vunpack.c.l.b16 %v5056
  %v5757 = vunpack.c.l.b16 %v5057
  %v5758 = vunpack.c.l.b16 %v5058
  %v5759 = vunpack.c.l.b16 %v5059
  %v5760 = vunpack.c.l.b16 %v5060
  %v5761 = vunpack.c.l.b16 %v5061
  %v5762 = vunpack.c.l.b16 %v5062
  %v5763 = vunpack.c.l.b16 %v5063
  %v5764 = vunpack.c.l.b16 %v5064
  %v5765 = vunpack.c.l.b16 %v5065
  %v5766 = vunpack.c.l.b16 %v5066
  %v5767 = vunpack.c.l.b16 %v5067
  %v5768 = vunpack.c.l.b16 %v5068
  %v5769 = vunpack.c.l.b16 %v5069
  %v5770 = vunpack.c.l.b16 %v5070
  %v5771 = vunpack.c.l.b16 %v5071
  %v5772 = vunpack.c.l.b16 %v5072
  %v5773 = vunpack.c.l.b16 %v5073
  %v5774 = vunpack.c.l.b16 %v5074
  %v5775 = vunpack.c.l.b16 %v5075
  %v5776 = vunpack.c.l.b16 %v5076
  %v5777 = vunpack.c.l.b16 %v5077
  %v5778 = vunpack.c.l.b16 %v5078
  %v5779 = vunpack.c.l.b16 %v5079
  %v5780 = vunpack.c.l.b16 %v5080
  %v5781 = vunpack.c.l.b16 %v5081
  %v5782 = vunpack.c.l.b16 %v5082
  %v5783 = vunpack.c.l.b16 %v5083
  %v5784 = vunpack.c.l.b16 %v5084
  %v5785 = vunpack.c.l.b16 %v5085
  %v5786 = vunpack.c.l.b16 %v5086
  %v5787 = vunpack.c.l.b16 %v5087
  %v5788 = vunpack.c.l.b16 %v5088
  %v5789 = vunpack.c.l.b16 %v5089
  %v5790 = vunpack.c.l.b16 %v5090
  %v5791 = vunpack.c.l.b16 %v5091
  %v5792 = vunpack.c.l.b16 %v5092
  %v5793 = vunpack.c.l.b16 %v5093
  %v5794 = vunpack.c.l.b16 %v5094
  %v5795 = vunpack.c.l.b16 %v5095
  %v5796 = vunpack.c.l.b16 %v5096
  %v5797 = vunpack.c.l.b16 %v5097
  %v5798 = vunpack.c.l.b16 %v5098
  %v5799 = vunpack.c.l.b16 %v5099
  %v5800 = vunpack.c.l.b16 %v5100
  %v5801 = vunpack.c.l.b16 %v5101
  %v5802 = vunpack.c.l.b16 %v5102
  %v5803 = vunpack.c.l.b16 %v5103
  %v5804 = vunpack.c.l.b16 %v5104
  %v5805 = vunpack.c.l.b16 %v5105
  %v5806 = vunpack.c.l.b16 %v5106
  %v5807 = vunpack.c.l.b16 %v5107
  %v5808 = vunpack.c.l.b16 %v5108
  %v5809 = vunpack.c.l.b16 %v5109
  %v5810 = vunpack.c.l.b16 %v5110
  %v5811 = vpack.c.b16 %v5748, %v5747
  %v5812 = vpack.c.b16 %v5750, %v5749
  %v5813 = vpack.c.b16 %v5752, %v5751
  %v5814 = vpack.c.b16 %v5754, %v5753
  %v5815 = vpack.c.b16 %v5756, %v5755
  %v5816 = vpack.c.b16 %v5758, %v5757
  %v5817 = vpack.c.b16 %v5760, %v5759
  %v5818 = vpack.c.b16 %v5762, %v5761
  %v5819 = vpack.c.b16 %v5764, %v5763
  %v5820 = vpack.c.b16 %v5766, %v5765
  %v5821 = vpack.c.b16 %v5768, %v5767
  %v5822 = vpack.c.b16 %v5770, %v5769
  %v5823 = vpack.c.b16 %v5772, %v5771
  %v5824 = vpack.c.b16 %v5774, %v5773
  %v5825 = vpack.c.b16 %v5776, %v5775
  %v5826 = vpack.c.b16 %v5778, %v5777
  %v5827 = vpack.c.b16 %v5780, %v5779
  %v5828 = vpack.c.b16 %v5782, %v5781
  %v5829 = vpack.c.b16 %v5784, %v5783
  %v5830 = vpack.c.b16 %v5786, %v5785
  %v5831 = vpack.c.b16 %v5788, %v5787
  %v5832 = vpack.c.b16 %v5790, %v5789
  %v5833 = vpack.c.b16 %v5792, %v5791
  %v5834 = vpack.c.b16 %v5794, %v5793
  %v5835 = vpack.c.b16 %v5796, %v5795
  %v5836 = vpack.c.b16 %v5798, %v5797
  %v5837 = vpack.c.b16 %v5800, %v5799
  %v5838 = vpack.c.b16 %v5802, %v5801
  %v5839 = vpack.c.b16 %v5804, %v5803
  %v5840 = vpack.c.b16 %v5806, %v5805
  %v5841 = vpack.c.b16 %v5808, %v5807
  %v5842 = vpack.c.b16 %v5810, %v5809
  %v5939 = vunpack.c.l.b16 %v5335
  %v5940 = vunpack.c.l.b16 %v5336
  %v5941 = vunpack.c.l.b16 %v5337
  %v5942 = vunpack.c.l.b16 %v5338
  %v5943 = vunpack.c.l.b16 %v5339
  %v5944 = vunpack.c.l.b16 %v5340
  %v5945 = vunpack.c.l.b16 %v5341
  %v5946 = vunpack.c.l.b16 %v5342
  %v5947 = vunpack.c.l.b16 %v5343
  %v5948 = vunpack.c.l.b16 %v5344
  %v5949 = vunpack.c.l.b16 %v5345
  %v5950 = vunpack.c.l.b16 %v5346
  %v5951 = vunpack.c.l.b16 %v5347
  %v5952 = vunpack.c.l.b16 %v5348
  %v5953 = vunpack.c.l.b16 %v5349
  %v5954 = vunpack.c.l.b16 %v5350
  %v5955 = vunpack.c.l.b16 %v5351
  %v5956 = vunpack.c.l.b16 %v5352
  %v5957 = vunpack.c.l.b16 %v5353
  %v5958 = vunpack.c.l.b16 %v5354
  %v5959 = vunpack.c.l.b16 %v5355
  %v5960 = vunpack.c.l.b16 %v5356
  %v5961 = vunpack.c.l.b16 %v5357
  %v5962 = vunpack.c.l.b16 %v5358
  %v5963 = vunpack.c.l.b16 %v5359
  %v5964 = vunpack.c.l.b16 %v5360
  %v5965 = vunpack.c.l.b16 %v5361
  %v5966 = vunpack.c.l.b16 %v5362
  %v5967 = vunpack.c.l.b16 %v5363
  %v5968 = vunpack.c.l.b16 %v5364
  %v5969 = vunpack.c.l.b16 %v5365
  %v5970 = vunpack.c.l.b16 %v5366
  %v5971 = vunpack.c.l.b16 %v5367
  %v5972 = vunpack.c.l.b16 %v5368
  %v5973 = vunpack.c.l.b16 %v5369
  %v5974 = vunpack.c.l.b16 %v5370
  %v5975 = vunpack.c.l.b16 %v5371
  %v5976 = vunpack.c.l.b16 %v5372
  %v5977 = vunpack.c.l.b16 %v5373
  %v5978 = vunpack.c.l.b16 %v5374
  %v5979 = vunpack.c.l.b16 %v5375
  %v5980 = vunpack.c.l.b16 %v5376
  %v5981 = vunpack.c.l.b16 %v5377
  %v5982 = vunpack.c.l.b16 %v5378
  %v5983 = vunpack.c.l.b16 %v5379
  %v5984 = vunpack.c.l.b16 %v5380
  %v5985 = vunpack.c.l.b16 %v5381
  %v5986 = vunpack.c.l.b16 %v5382
  %v5987 = vunpack.c.l.b16 %v5383
  %v5988 = vunpack.c.l.b16 %v5384
  %v5989 = vunpack.c.l.b16 %v5385
  %v5990 = vunpack.c.l.b16 %v5386
  %v5991 = vunpack.c.l.b16 %v5387
  %v5992 = vunpack.c.l.b16 %v5388
  %v5993 = vunpack.c.l.b16 %v5389
  %v5994 = vunpack.c.l.b16 %v5390
  %v5995 = vunpack.c.l.b16 %v5391
  %v5996 = vunpack.c.l.b16 %v5392
  %v5997 = vunpack.c.l.b16 %v5393
  %v5998 = vunpack.c.l.b16 %v5394
  %v5999 = vunpack.c.l.b16 %v5395
  %v6000 = vunpack.c.l.b16 %v5396
  %v6001 = vunpack.c.l.b16 %v5397
  %v6002 = vunpack.c.l.b16 %v5398
  %v6003 = vpack.c.b16 %v5940, %v5939
  %v6004 = vpack.c.b16 %v5942, %v5941
  %v6005 = vpack.c.b16 %v5944, %v5943
  %v6006 = vpack.c.b16 %v5946, %v5945
  %v6007 = vpack.c.b16 %v5948, %v5947
  %v6008 = vpack.c.b16 %v5950, %v5949
  %v6009 = vpack.c.b16 %v5952, %v5951
  %v6010 = vpack.c.b16 %v5954, %v5953
  %v6011 = vpack.c.b16 %v5956, %v5955
  %v6012 = vpack.c.b16 %v5958, %v5957
  %v6013 = vpack.c.b16 %v5960, %v5959
  %v6014 = vpack.c.b16 %v5962, %v5961
  %v6015 = vpack.c.b16 %v5964, %v5963
  %v6016 = vpack.c.b16 %v5966, %v5965
  %v6017 = vpack.c.b16 %v5968, %v5967
  %v6018 = vpack.c.b16 %v5970, %v5969
  %v6019 = vpack.c.b16 %v5972, %v5971
  %v6020 = vpack.c.b16 %v5974, %v5973
  %v6021 = vpack.c.b16 %v5976, %v5975
  %v6022 = vpack.c.b16 %v5978, %v5977
  %v6023 = vpack.c.b16 %v5980, %v5979
  %v6024 = vpack.c.b16 %v5982, %v5981
  %v6025 = vpack.c.b16 %v5984, %v5983
  %v6026 = vpack.c.b16 %v5986, %v5985
  %v6027 = vpack.c.b16 %v5988, %v5987
  %v6028 = vpack.c.b16 %v5990, %v5989
  %v6029 = vpack.c.b16 %v5992, %v5991
  %v6030 = vpack.c.b16 %v5994, %v5993
  %v6031 = vpack.c.b16 %v5996, %v5995
  %v6032 = vpack.c.b16 %v5998, %v5997
  %v6033 = vpack.c.b16 %v6000, %v5999
  %v6034 = vpack.c.b16 %v6002, %v6001
  %v6071 = vunpack.c.l.b16 %v5399
  %v6072 = vunpack.c.l.b16 %v5400
  %v6073 = vunpack.c.l.b16 %v5401
  %v6074 = vunpack.c.l.b16 %v5402
  %v6075 = vpack.c.b16 %v6072, %v6071
  %v6076 = vpack.c.b16 %v6074, %v6073
  %v6083 = vunpack.c.l.b16 %v5423
  %v6084 = vunpack.c.l.b16 %v5424
  %v6085 = vunpack.c.l.b16 %v5425
  %v6086 = vunpack.c.l.b16 %v5426
  %v6087 = vpack.c.b16 %v6084, %v6083
  %v6088 = vpack.c.b16 %v6086, %v6085
  %v6095 = vunpack.c.l.b16 %v5441
  %v6096 = vunpack.c.l.b16 %v5442
  %v6097 = vunpack.c.l.b16 %v5443
  %v6098 = vunpack.c.l.b16 %v5444
  %v6099 = vpack.c.b16 %v6096, %v6095
  %v6100 = vpack.c.b16 %v6098, %v6097
  %v6107 = vunpack.c.l.b16 %v5445
  %v6108 = vunpack.c.l.b16 %v5446
  %v6109 = vunpack.c.l.b16 %v5447
  %v6110 = vunpack.c.l.b16 %v5448
  %v6111 = vpack.c.b16 %v6108, %v6107
  %v6112 = vpack.c.b16 %v6110, %v6109
  %v6119 = vunpack.c.l.b16 %v5469
  %v6120 = vunpack.c.l.b16 %v5470
  %v6121 = vunpack.c.l.b16 %v5471
  %v6122 = vunpack.c.l.b16 %v5472
  %v6123 = vpack.c.b16 %v6120, %v6119
  %v6124 = vpack.c.b16 %v6122, %v6121
  %v6131 = vunpack.c.l.b16 %v5487
  %v6132 = vunpack.c.l.b16 %v5488
  %v6133 = vunpack.c.l.b16 %v5489
  %v6134 = vunpack.c.l.b16 %v5490
  %v6135 = vpack.c.b16 %v6132, %v6131
  %v6136 = vpack.c.b16 %v6134, %v6133
  %v6139 = vld [vmem:[%s4] sm:$0xf]
  %v6140 = vld [vmem:[%s4 + $0x4] sm:$0xf]
  %v6141 = vld [vmem:[%s4 + $0x8] sm:$0xf]
  %v6142 = vld [vmem:[%s4 + $0xc] sm:$0xf]
  %v6143 = vld [vmem:[%s4 + $0x10] sm:$0xf]
  %v6144 = vld [vmem:[%s4 + $0x14] sm:$0xf]
  %v6145 = vld [vmem:[%s4 + $0x18] sm:$0xf]
  %v6146 = vld [vmem:[%s4 + $0x1c] sm:$0xf]
  %v6147 = vld [vmem:[%s4 + $0x20] sm:$0xf]
  %v6148 = vld [vmem:[%s4 + $0x24] sm:$0xf]
  %v6149 = vld [vmem:[%s4 + $0x28] sm:$0xf]
  %v6150 = vld [vmem:[%s4 + $0x2c] sm:$0xf]
  %v6151 = vld [vmem:[%s4 + $0x30] sm:$0xf]
  %v6152 = vld [vmem:[%s4 + $0x34] sm:$0xf]
  %v6153 = vld [vmem:[%s4 + $0x38] sm:$0xf]
  %v6154 = vld [vmem:[%s4 + $0x3c] sm:$0xf]
  %v6155 = vld [vmem:[%s4 + $0x40] sm:$0xf]
  %v6156 = vld [vmem:[%s4 + $0x44] sm:$0xf]
  %v6157 = vld [vmem:[%s4 + $0x48] sm:$0xf]
  %v6158 = vld [vmem:[%s4 + $0x4c] sm:$0xf]
  %v6159 = vld [vmem:[%s4 + $0x50] sm:$0xf]
  %v6160 = vld [vmem:[%s4 + $0x54] sm:$0xf]
  %v6161 = vld [vmem:[%s4 + $0x58] sm:$0xf]
  %v6162 = vld [vmem:[%s4 + $0x5c] sm:$0xf]
  %v6163 = vld [vmem:[%s4 + $0x60] sm:$0xf]
  %v6164 = vld [vmem:[%s4 + $0x64] sm:$0xf]
  %v6165 = vld [vmem:[%s4 + $0x68] sm:$0xf]
  %v6166 = vld [vmem:[%s4 + $0x6c] sm:$0xf]
  %v6167 = vld [vmem:[%s4 + $0x70] sm:$0xf]
  %v6168 = vld [vmem:[%s4 + $0x74] sm:$0xf]
  %v6169 = vld [vmem:[%s4 + $0x78] sm:$0xf]
  %v6170 = vld [vmem:[%s4 + $0x7c] sm:$0xf]
  %v6171 = vld [vmem:[%s4 + $0x80] sm:$0xf]
  %v6172 = vld [vmem:[%s4 + $0x84] sm:$0xf]
  %v6173 = vld [vmem:[%s4 + $0x88] sm:$0xf]
  %v6174 = vld [vmem:[%s4 + $0x8c] sm:$0xf]
  %v6175 = vld [vmem:[%s4 + $0x90] sm:$0xf]
  %v6176 = vld [vmem:[%s4 + $0x94] sm:$0xf]
  %v6177 = vld [vmem:[%s4 + $0x98] sm:$0xf]
  %v6178 = vld [vmem:[%s4 + $0x9c] sm:$0xf]
  %v6179 = vld [vmem:[%s4 + $0xa0] sm:$0xf]
  %v6180 = vld [vmem:[%s4 + $0xa4] sm:$0xf]
  %v6181 = vld [vmem:[%s4 + $0xa8] sm:$0xf]
  %v6182 = vld [vmem:[%s4 + $0xac] sm:$0xf]
  %v6183 = vld [vmem:[%s4 + $0xb0] sm:$0xf]
  %v6184 = vld [vmem:[%s4 + $0xb4] sm:$0xf]
  %v6185 = vld [vmem:[%s4 + $0xb8] sm:$0xf]
  %v6186 = vld [vmem:[%s4 + $0xbc] sm:$0xf]
  %v6187 = vld [vmem:[%s4 + $0xc0] sm:$0xf]
  %v6188 = vld [vmem:[%s4 + $0xc4] sm:$0xf]
  %v6189 = vld [vmem:[%s4 + $0xc8] sm:$0xf]
  %v6190 = vld [vmem:[%s4 + $0xcc] sm:$0xf]
  %v6191 = vld [vmem:[%s4 + $0xd0] sm:$0xf]
  %v6192 = vld [vmem:[%s4 + $0xd4] sm:$0xf]
  %v6193 = vld [vmem:[%s4 + $0xd8] sm:$0xf]
  %v6194 = vld [vmem:[%s4 + $0xdc] sm:$0xf]
  %v6195 = vld [vmem:[%s4 + $0xe0] sm:$0xf]
  %v6196 = vld [vmem:[%s4 + $0xe4] sm:$0xf]
  %v6197 = vld [vmem:[%s4 + $0xe8] sm:$0xf]
  %v6198 = vld [vmem:[%s4 + $0xec] sm:$0xf]
  %v6199 = vld [vmem:[%s4 + $0xf0] sm:$0xf]
  %v6200 = vld [vmem:[%s4 + $0xf4] sm:$0xf]
  %v6201 = vld [vmem:[%s4 + $0xf8] sm:$0xf]
  %v6202 = vld [vmem:[%s4 + $0xfc] sm:$0xf]
  %v6203 = vld [vmem:[%s4 + $0x100] sm:$0xf]
  %v6204 = vld [vmem:[%s4 + $0x104] sm:$0xf]
  %v6205 = vld [vmem:[%s4 + $0x108] sm:$0xf]
  %v6206 = vld [vmem:[%s4 + $0x10c] sm:$0xf]
  %v6207 = vld [vmem:[%s4 + $0x110] sm:$0xf]
  %v6208 = vld [vmem:[%s4 + $0x114] sm:$0xf]
  %v6209 = vld [vmem:[%s4 + $0x118] sm:$0xf]
  %v6210 = vld [vmem:[%s4 + $0x11c] sm:$0xf]
  %v6211 = vld [vmem:[%s4 + $0x120] sm:$0xf]
  %v6212 = vld [vmem:[%s4 + $0x124] sm:$0xf]
  %v6213 = vld [vmem:[%s4 + $0x128] sm:$0xf]
  %v6214 = vld [vmem:[%s4 + $0x12c] sm:$0xf]
  %v6215 = vld [vmem:[%s4 + $0x130] sm:$0xf]
  %v6216 = vld [vmem:[%s4 + $0x134] sm:$0xf]
  %v6217 = vld [vmem:[%s4 + $0x138] sm:$0xf]
  %v6218 = vld [vmem:[%s4 + $0x13c] sm:$0xf]
  %v6219 = vld [vmem:[%s4 + $0x140] sm:$0xf]
  %v6220 = vld [vmem:[%s4 + $0x144] sm:$0xf]
  %v6221 = vld [vmem:[%s4 + $0x148] sm:$0xf]
  %v6222 = vld [vmem:[%s4 + $0x14c] sm:$0xf]
  %v6223 = vld [vmem:[%s4 + $0x150] sm:$0xf]
  %v6224 = vld [vmem:[%s4 + $0x154] sm:$0xf]
  %v6225 = vld [vmem:[%s4 + $0x158] sm:$0xf]
  %v6226 = vld [vmem:[%s4 + $0x15c] sm:$0xf]
  %v6227 = vld [vmem:[%s4 + $0x160] sm:$0xf]
  %v6228 = vld [vmem:[%s4 + $0x164] sm:$0xf]
  %v6229 = vld [vmem:[%s4 + $0x168] sm:$0xf]
  %v6230 = vld [vmem:[%s4 + $0x16c] sm:$0xf]
  %v6231 = vld [vmem:[%s4 + $0x170] sm:$0xf]
  %v6232 = vld [vmem:[%s4 + $0x174] sm:$0xf]
  %v6233 = vld [vmem:[%s4 + $0x178] sm:$0xf]
  %v6234 = vld [vmem:[%s4 + $0x17c] sm:$0xf]
  %v6235 = vld [vmem:[%s4 + $0x180] sm:$0xf]
  %v6236 = vld [vmem:[%s4 + $0x184] sm:$0xf]
  %v6237 = vld [vmem:[%s4 + $0x188] sm:$0xf]
  %v6238 = vld [vmem:[%s4 + $0x18c] sm:$0xf]
  %v6239 = vld [vmem:[%s4 + $0x190] sm:$0xf]
  %v6240 = vld [vmem:[%s4 + $0x194] sm:$0xf]
  %v6241 = vld [vmem:[%s4 + $0x198] sm:$0xf]
  %v6242 = vld [vmem:[%s4 + $0x19c] sm:$0xf]
  %v6243 = vld [vmem:[%s4 + $0x1a0] sm:$0xf]
  %v6244 = vld [vmem:[%s4 + $0x1a4] sm:$0xf]
  %v6245 = vld [vmem:[%s4 + $0x1a8] sm:$0xf]
  %v6246 = vld [vmem:[%s4 + $0x1ac] sm:$0xf]
  %v6247 = vld [vmem:[%s4 + $0x1b0] sm:$0xf]
  %v6248 = vld [vmem:[%s4 + $0x1b4] sm:$0xf]
  %v6249 = vld [vmem:[%s4 + $0x1b8] sm:$0xf]
  %v6250 = vld [vmem:[%s4 + $0x1bc] sm:$0xf]
  %v6251 = vld [vmem:[%s4 + $0x1c0] sm:$0xf]
  %v6252 = vld [vmem:[%s4 + $0x1c4] sm:$0xf]
  %v6253 = vld [vmem:[%s4 + $0x1c8] sm:$0xf]
  %v6254 = vld [vmem:[%s4 + $0x1cc] sm:$0xf]
  %v6255 = vld [vmem:[%s4 + $0x1d0] sm:$0xf]
  %v6256 = vld [vmem:[%s4 + $0x1d4] sm:$0xf]
  %v6257 = vld [vmem:[%s4 + $0x1d8] sm:$0xf]
  %v6258 = vld [vmem:[%s4 + $0x1dc] sm:$0xf]
  %v6259 = vld [vmem:[%s4 + $0x1e0] sm:$0xf]
  %v6260 = vld [vmem:[%s4 + $0x1e4] sm:$0xf]
  %v6261 = vld [vmem:[%s4 + $0x1e8] sm:$0xf]
  %v6262 = vld [vmem:[%s4 + $0x1ec] sm:$0xf]
  %v6263 = vld [vmem:[%s4 + $0x1f0] sm:$0xf]
  %v6264 = vld [vmem:[%s4 + $0x1f4] sm:$0xf]
  %v6265 = vld [vmem:[%s4 + $0x1f8] sm:$0xf]
  %v6266 = vld [vmem:[%s4 + $0x1fc] sm:$0xf]
  %v6267 = vld [vmem:[%s4 + $0x200] sm:$0xf]
  %v6268 = vld [vmem:[%s4 + $0x204] sm:$0xf]
  %v6269 = vld [vmem:[%s4 + $0x208] sm:$0xf]
  %v6270 = vld [vmem:[%s4 + $0x20c] sm:$0xf]
  %v6271 = vld [vmem:[%s4 + $0x210] sm:$0xf]
  %v6272 = vld [vmem:[%s4 + $0x214] sm:$0xf]
  %v6273 = vld [vmem:[%s4 + $0x218] sm:$0xf]
  %v6274 = vld [vmem:[%s4 + $0x21c] sm:$0xf]
  %v6275 = vld [vmem:[%s4 + $0x220] sm:$0xf]
  %v6276 = vld [vmem:[%s4 + $0x224] sm:$0xf]
  %v6277 = vld [vmem:[%s4 + $0x228] sm:$0xf]
  %v6278 = vld [vmem:[%s4 + $0x22c] sm:$0xf]
  %v6279 = vld [vmem:[%s4 + $0x230] sm:$0xf]
  %v6280 = vld [vmem:[%s4 + $0x234] sm:$0xf]
  %v6281 = vld [vmem:[%s4 + $0x238] sm:$0xf]
  %v6282 = vld [vmem:[%s4 + $0x23c] sm:$0xf]
  %v6427 = vunpack.c.l.b16 %v6139
  %v6428 = vunpack.c.l.b16 %v6140
  %v6429 = vunpack.c.l.b16 %v6141
  %v6430 = vunpack.c.l.b16 %v6142
  %v6431 = vunpack.c.l.b16 %v6143
  %v6432 = vunpack.c.l.b16 %v6144
  %v6433 = vunpack.c.l.b16 %v6145
  %v6434 = vunpack.c.l.b16 %v6146
  %v6435 = vunpack.c.l.b16 %v6147
  %v6436 = vunpack.c.l.b16 %v6148
  %v6437 = vunpack.c.l.b16 %v6149
  %v6438 = vunpack.c.l.b16 %v6150
  %v6439 = vunpack.c.l.b16 %v6151
  %v6440 = vunpack.c.l.b16 %v6152
  %v6441 = vunpack.c.l.b16 %v6153
  %v6442 = vunpack.c.l.b16 %v6154
  %v6443 = vunpack.c.l.b16 %v6155
  %v6444 = vunpack.c.l.b16 %v6156
  %v6445 = vunpack.c.l.b16 %v6157
  %v6446 = vunpack.c.l.b16 %v6158
  %v6447 = vunpack.c.l.b16 %v6159
  %v6448 = vunpack.c.l.b16 %v6160
  %v6449 = vunpack.c.l.b16 %v6161
  %v6450 = vunpack.c.l.b16 %v6162
  %v6451 = vunpack.c.l.b16 %v6163
  %v6452 = vunpack.c.l.b16 %v6164
  %v6453 = vunpack.c.l.b16 %v6165
  %v6454 = vunpack.c.l.b16 %v6166
  %v6455 = vunpack.c.l.b16 %v6167
  %v6456 = vunpack.c.l.b16 %v6168
  %v6457 = vunpack.c.l.b16 %v6169
  %v6458 = vunpack.c.l.b16 %v6170
  %v6459 = vunpack.c.l.b16 %v6171
  %v6460 = vunpack.c.l.b16 %v6172
  %v6461 = vunpack.c.l.b16 %v6173
  %v6462 = vunpack.c.l.b16 %v6174
  %v6463 = vunpack.c.l.b16 %v6175
  %v6464 = vunpack.c.l.b16 %v6176
  %v6465 = vunpack.c.l.b16 %v6177
  %v6466 = vunpack.c.l.b16 %v6178
  %v6467 = vunpack.c.l.b16 %v6179
  %v6468 = vunpack.c.l.b16 %v6180
  %v6469 = vunpack.c.l.b16 %v6181
  %v6470 = vunpack.c.l.b16 %v6182
  %v6471 = vunpack.c.l.b16 %v6183
  %v6472 = vunpack.c.l.b16 %v6184
  %v6473 = vunpack.c.l.b16 %v6185
  %v6474 = vunpack.c.l.b16 %v6186
  %v6475 = vunpack.c.l.b16 %v6187
  %v6476 = vunpack.c.l.b16 %v6188
  %v6477 = vunpack.c.l.b16 %v6189
  %v6478 = vunpack.c.l.b16 %v6190
  %v6479 = vunpack.c.l.b16 %v6191
  %v6480 = vunpack.c.l.b16 %v6192
  %v6481 = vunpack.c.l.b16 %v6193
  %v6482 = vunpack.c.l.b16 %v6194
  %v6483 = vunpack.c.l.b16 %v6195
  %v6484 = vunpack.c.l.b16 %v6196
  %v6485 = vunpack.c.l.b16 %v6197
  %v6486 = vunpack.c.l.b16 %v6198
  %v6487 = vunpack.c.l.b16 %v6199
  %v6488 = vunpack.c.l.b16 %v6200
  %v6489 = vunpack.c.l.b16 %v6201
  %v6490 = vunpack.c.l.b16 %v6202
  %v6491 = vunpack.c.l.b16 %v6203
  %v6492 = vunpack.c.l.b16 %v6204
  %v6493 = vunpack.c.l.b16 %v6205
  %v6494 = vunpack.c.l.b16 %v6206
  %v6495 = vunpack.c.l.b16 %v6207
  %v6496 = vunpack.c.l.b16 %v6208
  %v6497 = vunpack.c.l.b16 %v6209
  %v6498 = vunpack.c.l.b16 %v6210
  %v6499 = vunpack.c.l.b16 %v6211
  %v6500 = vunpack.c.l.b16 %v6212
  %v6501 = vunpack.c.l.b16 %v6213
  %v6502 = vunpack.c.l.b16 %v6214
  %v6503 = vunpack.c.l.b16 %v6215
  %v6504 = vunpack.c.l.b16 %v6216
  %v6505 = vunpack.c.l.b16 %v6217
  %v6506 = vunpack.c.l.b16 %v6218
  %v6507 = vunpack.c.l.b16 %v6219
  %v6508 = vunpack.c.l.b16 %v6220
  %v6509 = vunpack.c.l.b16 %v6221
  %v6510 = vunpack.c.l.b16 %v6222
  %v6511 = vunpack.c.l.b16 %v6223
  %v6512 = vunpack.c.l.b16 %v6224
  %v6513 = vunpack.c.l.b16 %v6225
  %v6514 = vunpack.c.l.b16 %v6226
  %v6515 = vunpack.c.l.b16 %v6227
  %v6516 = vunpack.c.l.b16 %v6228
  %v6517 = vunpack.c.l.b16 %v6229
  %v6518 = vunpack.c.l.b16 %v6230
  %v6519 = vunpack.c.l.b16 %v6231
  %v6520 = vunpack.c.l.b16 %v6232
  %v6521 = vunpack.c.l.b16 %v6233
  %v6522 = vunpack.c.l.b16 %v6234
  %v6523 = vunpack.c.l.b16 %v6235
  %v6524 = vunpack.c.l.b16 %v6236
  %v6525 = vunpack.c.l.b16 %v6237
  %v6526 = vunpack.c.l.b16 %v6238
  %v6527 = vunpack.c.l.b16 %v6239
  %v6528 = vunpack.c.l.b16 %v6240
  %v6529 = vunpack.c.l.b16 %v6241
  %v6530 = vunpack.c.l.b16 %v6242
  %v6531 = vunpack.c.l.b16 %v6243
  %v6532 = vunpack.c.l.b16 %v6244
  %v6533 = vunpack.c.l.b16 %v6245
  %v6534 = vunpack.c.l.b16 %v6246
  %v6535 = vunpack.c.l.b16 %v6247
  %v6536 = vunpack.c.l.b16 %v6248
  %v6537 = vunpack.c.l.b16 %v6249
  %v6538 = vunpack.c.l.b16 %v6250
  %v6539 = vunpack.c.l.b16 %v6251
  %v6540 = vunpack.c.l.b16 %v6252
  %v6541 = vunpack.c.l.b16 %v6253
  %v6542 = vunpack.c.l.b16 %v6254
  %v6543 = vunpack.c.l.b16 %v6255
  %v6544 = vunpack.c.l.b16 %v6256
  %v6545 = vunpack.c.l.b16 %v6257
  %v6546 = vunpack.c.l.b16 %v6258
  %v6547 = vunpack.c.l.b16 %v6259
  %v6548 = vunpack.c.l.b16 %v6260
  %v6549 = vunpack.c.l.b16 %v6261
  %v6550 = vunpack.c.l.b16 %v6262
  %v6551 = vunpack.c.l.b16 %v6263
  %v6552 = vunpack.c.l.b16 %v6264
  %v6553 = vunpack.c.l.b16 %v6265
  %v6554 = vunpack.c.l.b16 %v6266
  %v6555 = vunpack.c.l.b16 %v6267
  %v6556 = vunpack.c.l.b16 %v6268
  %v6557 = vunpack.c.l.b16 %v6269
  %v6558 = vunpack.c.l.b16 %v6270
  %v6559 = vunpack.c.l.b16 %v6271
  %v6560 = vunpack.c.l.b16 %v6272
  %v6561 = vunpack.c.l.b16 %v6273
  %v6562 = vunpack.c.l.b16 %v6274
  %v6563 = vunpack.c.l.b16 %v6275
  %v6564 = vunpack.c.l.b16 %v6276
  %v6565 = vunpack.c.l.b16 %v6277
  %v6566 = vunpack.c.l.b16 %v6278
  %v6567 = vunpack.c.l.b16 %v6279
  %v6568 = vunpack.c.l.b16 %v6280
  %v6569 = vunpack.c.l.b16 %v6281
  %v6570 = vunpack.c.l.b16 %v6282
  %v6571 = vpack.c.b16 %v6428, %v6427
  %v6572 = vpack.c.b16 %v6430, %v6429
  %v6573 = vpack.c.b16 %v6432, %v6431
  %v6574 = vpack.c.b16 %v6434, %v6433
  %v6575 = vpack.c.b16 %v6436, %v6435
  %v6576 = vpack.c.b16 %v6438, %v6437
  %v6577 = vpack.c.b16 %v6440, %v6439
  %v6578 = vpack.c.b16 %v6442, %v6441
  %v6579 = vpack.c.b16 %v6444, %v6443
  %v6580 = vpack.c.b16 %v6446, %v6445
  %v6581 = vpack.c.b16 %v6448, %v6447
  %v6582 = vpack.c.b16 %v6450, %v6449
  %v6583 = vpack.c.b16 %v6452, %v6451
  %v6584 = vpack.c.b16 %v6454, %v6453
  %v6585 = vpack.c.b16 %v6456, %v6455
  %v6586 = vpack.c.b16 %v6458, %v6457
  %v6587 = vpack.c.b16 %v6460, %v6459
  %v6588 = vpack.c.b16 %v6462, %v6461
  %v6589 = vpack.c.b16 %v6464, %v6463
  %v6590 = vpack.c.b16 %v6466, %v6465
  %v6591 = vpack.c.b16 %v6468, %v6467
  %v6592 = vpack.c.b16 %v6470, %v6469
  %v6593 = vpack.c.b16 %v6472, %v6471
  %v6594 = vpack.c.b16 %v6474, %v6473
  %v6595 = vpack.c.b16 %v6476, %v6475
  %v6596 = vpack.c.b16 %v6478, %v6477
  %v6597 = vpack.c.b16 %v6480, %v6479
  %v6598 = vpack.c.b16 %v6482, %v6481
  %v6599 = vpack.c.b16 %v6484, %v6483
  %v6600 = vpack.c.b16 %v6486, %v6485
  %v6601 = vpack.c.b16 %v6488, %v6487
  %v6602 = vpack.c.b16 %v6490, %v6489
  %v6603 = vpack.c.b16 %v6492, %v6491
  %v6604 = vpack.c.b16 %v6494, %v6493
  %v6605 = vpack.c.b16 %v6496, %v6495
  %v6606 = vpack.c.b16 %v6498, %v6497
  %v6607 = vpack.c.b16 %v6500, %v6499
  %v6608 = vpack.c.b16 %v6502, %v6501
  %v6609 = vpack.c.b16 %v6504, %v6503
  %v6610 = vpack.c.b16 %v6506, %v6505
  %v6611 = vpack.c.b16 %v6508, %v6507
  %v6612 = vpack.c.b16 %v6510, %v6509
  %v6613 = vpack.c.b16 %v6512, %v6511
  %v6614 = vpack.c.b16 %v6514, %v6513
  %v6615 = vpack.c.b16 %v6516, %v6515
  %v6616 = vpack.c.b16 %v6518, %v6517
  %v6617 = vpack.c.b16 %v6520, %v6519
  %v6618 = vpack.c.b16 %v6522, %v6521
  %v6619 = vpack.c.b16 %v6524, %v6523
  %v6620 = vpack.c.b16 %v6526, %v6525
  %v6621 = vpack.c.b16 %v6528, %v6527
  %v6622 = vpack.c.b16 %v6530, %v6529
  %v6623 = vpack.c.b16 %v6532, %v6531
  %v6624 = vpack.c.b16 %v6534, %v6533
  %v6625 = vpack.c.b16 %v6536, %v6535
  %v6626 = vpack.c.b16 %v6538, %v6537
  %v6627 = vpack.c.b16 %v6540, %v6539
  %v6628 = vpack.c.b16 %v6542, %v6541
  %v6629 = vpack.c.b16 %v6544, %v6543
  %v6630 = vpack.c.b16 %v6546, %v6545
  %v6631 = vpack.c.b16 %v6548, %v6547
  %v6632 = vpack.c.b16 %v6550, %v6549
  %v6633 = vpack.c.b16 %v6552, %v6551
  %v6634 = vpack.c.b16 %v6554, %v6553
  %v6635 = vpack.c.b16 %v6556, %v6555
  %v6636 = vpack.c.b16 %v6558, %v6557
  %v6637 = vpack.c.b16 %v6560, %v6559
  %v6638 = vpack.c.b16 %v6562, %v6561
  %v6639 = vpack.c.b16 %v6564, %v6563
  %v6640 = vpack.c.b16 %v6566, %v6565
  %v6641 = vpack.c.b16 %v6568, %v6567
  %v6642 = vpack.c.b16 %v6570, %v6569
  %6715 = vmatpush.bf16.msra.mxu0 %v6578
  %6716 = vmatpush.bf16.msra.mxu0 %v6577
  %6717 = vmatpush.bf16.msra.mxu0 %v6576
  %6718 = vmatpush.bf16.msra.mxu0 %v6575
  %6719 = vmatpush.bf16.msra.mxu0 %v6574
  %6720 = vmatpush.bf16.msra.mxu0 %v6573
  %6721 = vmatpush.bf16.msra.mxu0 %v6572
  %6722 = vmatpush.bf16.msra.mxu0 %v6571
  %6723 = vmatmul.bf16.gmra.mxu0 %v5619
  %v6724 = vpop.f32.mrf.mxu0
  %v6725 = vadd.f32 0.0, %v6724
  %v6726 = vpop.f32.mrf.mxu0
  %v6727 = vadd.f32 0.0, %v6726
  %6728 = vmatmul.bf16.gmra.mxu0 %v5620
  %v6729 = vpop.f32.mrf.mxu0
  %v6730 = vadd.f32 0.0, %v6729
  %v6731 = vpop.f32.mrf.mxu0
  %v6732 = vadd.f32 0.0, %v6731
  %6733 = vmatmul.bf16.gmra.mxu0 %v5621
  %v6734 = vpop.f32.mrf.mxu0
  %v6735 = vadd.f32 0.0, %v6734
  %v6736 = vpop.f32.mrf.mxu0
  %v6737 = vadd.f32 0.0, %v6736
  %6738 = vmatmul.bf16.gmra.mxu0 %v5622
  %v6739 = vpop.f32.mrf.mxu0
  %v6740 = vadd.f32 0.0, %v6739
  %v6741 = vpop.f32.mrf.mxu0
  %v6742 = vadd.f32 0.0, %v6741
  %6743 = vmatmul.bf16.gmra.mxu0 %v5623
  %v6744 = vpop.f32.mrf.mxu0
  %v6745 = vadd.f32 0.0, %v6744
  %v6746 = vpop.f32.mrf.mxu0
  %v6747 = vadd.f32 0.0, %v6746
  %6748 = vmatmul.bf16.gmra.mxu0 %v5624
  %v6749 = vpop.f32.mrf.mxu0
  %v6750 = vadd.f32 0.0, %v6749
  %v6751 = vpop.f32.mrf.mxu0
  %v6752 = vadd.f32 0.0, %v6751
  %6753 = vmatmul.bf16.gmra.mxu0 %v5625
  %v6754 = vpop.f32.mrf.mxu0
  %v6755 = vadd.f32 0.0, %v6754
  %v6756 = vpop.f32.mrf.mxu0
  %v6757 = vadd.f32 0.0, %v6756
  %6758 = vmatmul.bf16.gmra.mxu0 %v5626
  %v6759 = vpop.f32.mrf.mxu0
  %v6760 = vadd.f32 0.0, %v6759
  %v6761 = vpop.f32.mrf.mxu0
  %v6762 = vadd.f32 0.0, %v6761
  %6763 = vmatmul.bf16.gmra.mxu0 %v5627
  %v6764 = vpop.f32.mrf.mxu0
  %v6765 = vadd.f32 0.0, %v6764
  %v6766 = vpop.f32.mrf.mxu0
  %v6767 = vadd.f32 0.0, %v6766
  %6768 = vmatmul.bf16.gmra.mxu0 %v5628
  %v6769 = vpop.f32.mrf.mxu0
  %v6770 = vadd.f32 0.0, %v6769
  %v6771 = vpop.f32.mrf.mxu0
  %v6772 = vadd.f32 0.0, %v6771
  %6773 = vmatmul.bf16.gmra.mxu0 %v5629
  %v6774 = vpop.f32.mrf.mxu0
  %v6775 = vadd.f32 0.0, %v6774
  %v6776 = vpop.f32.mrf.mxu0
  %v6777 = vadd.f32 0.0, %v6776
  %6778 = vmatmul.bf16.gmra.mxu0 %v5630
  %v6779 = vpop.f32.mrf.mxu0
  %v6780 = vadd.f32 0.0, %v6779
  %v6781 = vpop.f32.mrf.mxu0
  %v6782 = vadd.f32 0.0, %v6781
  %6783 = vmatmul.bf16.gmra.mxu0 %v5631
  %v6784 = vpop.f32.mrf.mxu0
  %v6785 = vadd.f32 0.0, %v6784
  %v6786 = vpop.f32.mrf.mxu0
  %v6787 = vadd.f32 0.0, %v6786
  %6788 = vmatmul.bf16.gmra.mxu0 %v5632
  %v6789 = vpop.f32.mrf.mxu0
  %v6790 = vadd.f32 0.0, %v6789
  %v6791 = vpop.f32.mrf.mxu0
  %v6792 = vadd.f32 0.0, %v6791
  %6793 = vmatmul.bf16.gmra.mxu0 %v5633
  %v6794 = vpop.f32.mrf.mxu0
  %v6795 = vadd.f32 0.0, %v6794
  %v6796 = vpop.f32.mrf.mxu0
  %v6797 = vadd.f32 0.0, %v6796
  %6798 = vmatmul.bf16.gmra.mxu0 %v5634
  %v6799 = vpop.f32.mrf.mxu0
  %v6800 = vadd.f32 0.0, %v6799
  %v6801 = vpop.f32.mrf.mxu0
  %v6802 = vadd.f32 0.0, %v6801
  %6803 = vmatmul.bf16.gmra.mxu0 %v5635
  %v6804 = vpop.f32.mrf.mxu0
  %v6805 = vadd.f32 0.0, %v6804
  %v6806 = vpop.f32.mrf.mxu0
  %v6807 = vadd.f32 0.0, %v6806
  %6808 = vmatmul.bf16.gmra.mxu0 %v5636
  %v6809 = vpop.f32.mrf.mxu0
  %v6810 = vadd.f32 0.0, %v6809
  %v6811 = vpop.f32.mrf.mxu0
  %v6812 = vadd.f32 0.0, %v6811
  %6813 = vmatmul.bf16.gmra.mxu0 %v5637
  %v6814 = vpop.f32.mrf.mxu0
  %v6815 = vadd.f32 0.0, %v6814
  %v6816 = vpop.f32.mrf.mxu0
  %v6817 = vadd.f32 0.0, %v6816
  %6818 = vmatmul.bf16.gmra.mxu0 %v5638
  %v6819 = vpop.f32.mrf.mxu0
  %v6820 = vadd.f32 0.0, %v6819
  %v6821 = vpop.f32.mrf.mxu0
  %v6822 = vadd.f32 0.0, %v6821
  %6823 = vmatmul.bf16.gmra.mxu0 %v5639
  %v6824 = vpop.f32.mrf.mxu0
  %v6825 = vadd.f32 0.0, %v6824
  %v6826 = vpop.f32.mrf.mxu0
  %v6827 = vadd.f32 0.0, %v6826
  %6828 = vmatmul.bf16.gmra.mxu0 %v5640
  %v6829 = vpop.f32.mrf.mxu0
  %v6830 = vadd.f32 0.0, %v6829
  %v6831 = vpop.f32.mrf.mxu0
  %v6832 = vadd.f32 0.0, %v6831
  %6833 = vmatmul.bf16.gmra.mxu0 %v5641
  %v6834 = vpop.f32.mrf.mxu0
  %v6835 = vadd.f32 0.0, %v6834
  %v6836 = vpop.f32.mrf.mxu0
  %v6837 = vadd.f32 0.0, %v6836
  %6838 = vmatmul.bf16.gmra.mxu0 %v5642
  %v6839 = vpop.f32.mrf.mxu0
  %v6840 = vadd.f32 0.0, %v6839
  %v6841 = vpop.f32.mrf.mxu0
  %v6842 = vadd.f32 0.0, %v6841
  %6843 = vmatmul.bf16.gmra.mxu0 %v5643
  %v6844 = vpop.f32.mrf.mxu0
  %v6845 = vadd.f32 0.0, %v6844
  %v6846 = vpop.f32.mrf.mxu0
  %v6847 = vadd.f32 0.0, %v6846
  %6848 = vmatmul.bf16.gmra.mxu0 %v5644
  %v6849 = vpop.f32.mrf.mxu0
  %v6850 = vadd.f32 0.0, %v6849
  %v6851 = vpop.f32.mrf.mxu0
  %v6852 = vadd.f32 0.0, %v6851
  %6853 = vmatmul.bf16.gmra.mxu0 %v5645
  %v6854 = vpop.f32.mrf.mxu0
  %v6855 = vadd.f32 0.0, %v6854
  %v6856 = vpop.f32.mrf.mxu0
  %v6857 = vadd.f32 0.0, %v6856
  %6858 = vmatmul.bf16.gmra.mxu0 %v5646
  %v6859 = vpop.f32.mrf.mxu0
  %v6860 = vadd.f32 0.0, %v6859
  %v6861 = vpop.f32.mrf.mxu0
  %v6862 = vadd.f32 0.0, %v6861
  %6863 = vmatmul.bf16.gmra.mxu0 %v5647
  %v6864 = vpop.f32.mrf.mxu0
  %v6865 = vadd.f32 0.0, %v6864
  %v6866 = vpop.f32.mrf.mxu0
  %v6867 = vadd.f32 0.0, %v6866
  %6868 = vmatmul.bf16.gmra.mxu0 %v5648
  %v6869 = vpop.f32.mrf.mxu0
  %v6870 = vadd.f32 0.0, %v6869
  %v6871 = vpop.f32.mrf.mxu0
  %v6872 = vadd.f32 0.0, %v6871
  %6873 = vmatmul.bf16.gmra.mxu0 %v5649
  %v6874 = vpop.f32.mrf.mxu0
  %v6875 = vadd.f32 0.0, %v6874
  %v6876 = vpop.f32.mrf.mxu0
  %v6877 = vadd.f32 0.0, %v6876
  %6878 = vmatmul.bf16.gmra.mxu0 %v5650
  %v6879 = vpop.f32.mrf.mxu0
  %v6880 = vadd.f32 0.0, %v6879
  %v6881 = vpop.f32.mrf.mxu0
  %v6882 = vadd.f32 0.0, %v6881
  %6883 = vdwg.mxu0
  %6884 = vmatpush.bf16.msra.mxu0 %v6586
  %6885 = vmatpush.bf16.msra.mxu0 %v6585
  %6886 = vmatpush.bf16.msra.mxu0 %v6584
  %6887 = vmatpush.bf16.msra.mxu0 %v6583
  %6888 = vmatpush.bf16.msra.mxu0 %v6582
  %6889 = vmatpush.bf16.msra.mxu0 %v6581
  %6890 = vmatpush.bf16.msra.mxu0 %v6580
  %6891 = vmatpush.bf16.msra.mxu0 %v6579
  %6892 = vmatmul.bf16.gmra.mxu0 %v5811
  %v6893 = vpop.f32.mrf.mxu0
  %v6894 = vadd.f32 %v6725, %v6893
  %v6895 = vpop.f32.mrf.mxu0
  %v6896 = vadd.f32 %v6727, %v6895
  %6897 = vmatmul.bf16.gmra.mxu0 %v5812
  %v6898 = vpop.f32.mrf.mxu0
  %v6899 = vadd.f32 %v6730, %v6898
  %v6900 = vpop.f32.mrf.mxu0
  %v6901 = vadd.f32 %v6732, %v6900
  %6902 = vmatmul.bf16.gmra.mxu0 %v5813
  %v6903 = vpop.f32.mrf.mxu0
  %v6904 = vadd.f32 %v6735, %v6903
  %v6905 = vpop.f32.mrf.mxu0
  %v6906 = vadd.f32 %v6737, %v6905
  %6907 = vmatmul.bf16.gmra.mxu0 %v5814
  %v6908 = vpop.f32.mrf.mxu0
  %v6909 = vadd.f32 %v6740, %v6908
  %v6910 = vpop.f32.mrf.mxu0
  %v6911 = vadd.f32 %v6742, %v6910
  %6912 = vmatmul.bf16.gmra.mxu0 %v5815
  %v6913 = vpop.f32.mrf.mxu0
  %v6914 = vadd.f32 %v6745, %v6913
  %v6915 = vpop.f32.mrf.mxu0
  %v6916 = vadd.f32 %v6747, %v6915
  %6917 = vmatmul.bf16.gmra.mxu0 %v5816
  %v6918 = vpop.f32.mrf.mxu0
  %v6919 = vadd.f32 %v6750, %v6918
  %v6920 = vpop.f32.mrf.mxu0
  %v6921 = vadd.f32 %v6752, %v6920
  %6922 = vmatmul.bf16.gmra.mxu0 %v5817
  %v6923 = vpop.f32.mrf.mxu0
  %v6924 = vadd.f32 %v6755, %v6923
  %v6925 = vpop.f32.mrf.mxu0
  %v6926 = vadd.f32 %v6757, %v6925
  %6927 = vmatmul.bf16.gmra.mxu0 %v5818
  %v6928 = vpop.f32.mrf.mxu0
  %v6929 = vadd.f32 %v6760, %v6928
  %v6930 = vpop.f32.mrf.mxu0
  %v6931 = vadd.f32 %v6762, %v6930
  %6932 = vmatmul.bf16.gmra.mxu0 %v5819
  %v6933 = vpop.f32.mrf.mxu0
  %v6934 = vadd.f32 %v6765, %v6933
  %v6935 = vpop.f32.mrf.mxu0
  %v6936 = vadd.f32 %v6767, %v6935
  %6937 = vmatmul.bf16.gmra.mxu0 %v5820
  %v6938 = vpop.f32.mrf.mxu0
  %v6939 = vadd.f32 %v6770, %v6938
  %v6940 = vpop.f32.mrf.mxu0
  %v6941 = vadd.f32 %v6772, %v6940
  %6942 = vmatmul.bf16.gmra.mxu0 %v5821
  %v6943 = vpop.f32.mrf.mxu0
  %v6944 = vadd.f32 %v6775, %v6943
  %v6945 = vpop.f32.mrf.mxu0
  %v6946 = vadd.f32 %v6777, %v6945
  %6947 = vmatmul.bf16.gmra.mxu0 %v5822
  %v6948 = vpop.f32.mrf.mxu0
  %v6949 = vadd.f32 %v6780, %v6948
  %v6950 = vpop.f32.mrf.mxu0
  %v6951 = vadd.f32 %v6782, %v6950
  %6952 = vmatmul.bf16.gmra.mxu0 %v5823
  %v6953 = vpop.f32.mrf.mxu0
  %v6954 = vadd.f32 %v6785, %v6953
  %v6955 = vpop.f32.mrf.mxu0
  %v6956 = vadd.f32 %v6787, %v6955
  %6957 = vmatmul.bf16.gmra.mxu0 %v5824
  %v6958 = vpop.f32.mrf.mxu0
  %v6959 = vadd.f32 %v6790, %v6958
  %v6960 = vpop.f32.mrf.mxu0
  %v6961 = vadd.f32 %v6792, %v6960
  %6962 = vmatmul.bf16.gmra.mxu0 %v5825
  %v6963 = vpop.f32.mrf.mxu0
  %v6964 = vadd.f32 %v6795, %v6963
  %v6965 = vpop.f32.mrf.mxu0
  %v6966 = vadd.f32 %v6797, %v6965
  %6967 = vmatmul.bf16.gmra.mxu0 %v5826
  %v6968 = vpop.f32.mrf.mxu0
  %v6969 = vadd.f32 %v6800, %v6968
  %v6970 = vpop.f32.mrf.mxu0
  %v6971 = vadd.f32 %v6802, %v6970
  %6972 = vmatmul.bf16.gmra.mxu0 %v5827
  %v6973 = vpop.f32.mrf.mxu0
  %v6974 = vadd.f32 %v6805, %v6973
  %v6975 = vpop.f32.mrf.mxu0
  %v6976 = vadd.f32 %v6807, %v6975
  %6977 = vmatmul.bf16.gmra.mxu0 %v5828
  %v6978 = vpop.f32.mrf.mxu0
  %v6979 = vadd.f32 %v6810, %v6978
  %v6980 = vpop.f32.mrf.mxu0
  %v6981 = vadd.f32 %v6812, %v6980
  %6982 = vmatmul.bf16.gmra.mxu0 %v5829
  %v6983 = vpop.f32.mrf.mxu0
  %v6984 = vadd.f32 %v6815, %v6983
  %v6985 = vpop.f32.mrf.mxu0
  %v6986 = vadd.f32 %v6817, %v6985
  %6987 = vmatmul.bf16.gmra.mxu0 %v5830
  %v6988 = vpop.f32.mrf.mxu0
  %v6989 = vadd.f32 %v6820, %v6988
  %v6990 = vpop.f32.mrf.mxu0
  %v6991 = vadd.f32 %v6822, %v6990
  %6992 = vmatmul.bf16.gmra.mxu0 %v5831
  %v6993 = vpop.f32.mrf.mxu0
  %v6994 = vadd.f32 %v6825, %v6993
  %v6995 = vpop.f32.mrf.mxu0
  %v6996 = vadd.f32 %v6827, %v6995
  %6997 = vmatmul.bf16.gmra.mxu0 %v5832
  %v6998 = vpop.f32.mrf.mxu0
  %v6999 = vadd.f32 %v6830, %v6998
  %v7000 = vpop.f32.mrf.mxu0
  %v7001 = vadd.f32 %v6832, %v7000
  %7002 = vmatmul.bf16.gmra.mxu0 %v5833
  %v7003 = vpop.f32.mrf.mxu0
  %v7004 = vadd.f32 %v6835, %v7003
  %v7005 = vpop.f32.mrf.mxu0
  %v7006 = vadd.f32 %v6837, %v7005
  %7007 = vmatmul.bf16.gmra.mxu0 %v5834
  %v7008 = vpop.f32.mrf.mxu0
  %v7009 = vadd.f32 %v6840, %v7008
  %v7010 = vpop.f32.mrf.mxu0
  %v7011 = vadd.f32 %v6842, %v7010
  %7012 = vmatmul.bf16.gmra.mxu0 %v5835
  %v7013 = vpop.f32.mrf.mxu0
  %v7014 = vadd.f32 %v6845, %v7013
  %v7015 = vpop.f32.mrf.mxu0
  %v7016 = vadd.f32 %v6847, %v7015
  %7017 = vmatmul.bf16.gmra.mxu0 %v5836
  %v7018 = vpop.f32.mrf.mxu0
  %v7019 = vadd.f32 %v6850, %v7018
  %v7020 = vpop.f32.mrf.mxu0
  %v7021 = vadd.f32 %v6852, %v7020
  %7022 = vmatmul.bf16.gmra.mxu0 %v5837
  %v7023 = vpop.f32.mrf.mxu0
  %v7024 = vadd.f32 %v6855, %v7023
  %v7025 = vpop.f32.mrf.mxu0
  %v7026 = vadd.f32 %v6857, %v7025
  %7027 = vmatmul.bf16.gmra.mxu0 %v5838
  %v7028 = vpop.f32.mrf.mxu0
  %v7029 = vadd.f32 %v6860, %v7028
  %v7030 = vpop.f32.mrf.mxu0
  %v7031 = vadd.f32 %v6862, %v7030
  %7032 = vmatmul.bf16.gmra.mxu0 %v5839
  %v7033 = vpop.f32.mrf.mxu0
  %v7034 = vadd.f32 %v6865, %v7033
  %v7035 = vpop.f32.mrf.mxu0
  %v7036 = vadd.f32 %v6867, %v7035
  %7037 = vmatmul.bf16.gmra.mxu0 %v5840
  %v7038 = vpop.f32.mrf.mxu0
  %v7039 = vadd.f32 %v6870, %v7038
  %v7040 = vpop.f32.mrf.mxu0
  %v7041 = vadd.f32 %v6872, %v7040
  %7042 = vmatmul.bf16.gmra.mxu0 %v5841
  %v7043 = vpop.f32.mrf.mxu0
  %v7044 = vadd.f32 %v6875, %v7043
  %v7045 = vpop.f32.mrf.mxu0
  %v7046 = vadd.f32 %v6877, %v7045
  %7047 = vmatmul.bf16.gmra.mxu0 %v5842
  %v7048 = vpop.f32.mrf.mxu0
  %v7049 = vadd.f32 %v6880, %v7048
  %v7050 = vpop.f32.mrf.mxu0
  %v7051 = vadd.f32 %v6882, %v7050
  %7052 = vdwg.mxu0
  %7053 = vmatpush.bf16.msra.mxu0 %v6594
  %7054 = vmatpush.bf16.msra.mxu0 %v6593
  %7055 = vmatpush.bf16.msra.mxu0 %v6592
  %7056 = vmatpush.bf16.msra.mxu0 %v6591
  %7057 = vmatpush.bf16.msra.mxu0 %v6590
  %7058 = vmatpush.bf16.msra.mxu0 %v6589
  %7059 = vmatpush.bf16.msra.mxu0 %v6588
  %7060 = vmatpush.bf16.msra.mxu0 %v6587
  %7061 = vmatmul.bf16.gmra.mxu0 %v6003
  %v7062 = vpop.f32.mrf.mxu0
  %v7063 = vadd.f32 %v6894, %v7062
  %v7064 = vpop.f32.mrf.mxu0
  %v7065 = vadd.f32 %v6896, %v7064
  %7066 = vmatmul.bf16.gmra.mxu0 %v6004
  %v7067 = vpop.f32.mrf.mxu0
  %v7068 = vadd.f32 %v6899, %v7067
  %v7069 = vpop.f32.mrf.mxu0
  %v7070 = vadd.f32 %v6901, %v7069
  %7071 = vmatmul.bf16.gmra.mxu0 %v6005
  %v7072 = vpop.f32.mrf.mxu0
  %v7073 = vadd.f32 %v6904, %v7072
  %v7074 = vpop.f32.mrf.mxu0
  %v7075 = vadd.f32 %v6906, %v7074
  %7076 = vmatmul.bf16.gmra.mxu0 %v6006
  %v7077 = vpop.f32.mrf.mxu0
  %v7078 = vadd.f32 %v6909, %v7077
  %v7079 = vpop.f32.mrf.mxu0
  %v7080 = vadd.f32 %v6911, %v7079
  %7081 = vmatmul.bf16.gmra.mxu0 %v6007
  %v7082 = vpop.f32.mrf.mxu0
  %v7083 = vadd.f32 %v6914, %v7082
  %v7084 = vpop.f32.mrf.mxu0
  %v7085 = vadd.f32 %v6916, %v7084
  %7086 = vmatmul.bf16.gmra.mxu0 %v6008
  %v7087 = vpop.f32.mrf.mxu0
  %v7088 = vadd.f32 %v6919, %v7087
  %v7089 = vpop.f32.mrf.mxu0
  %v7090 = vadd.f32 %v6921, %v7089
  %7091 = vmatmul.bf16.gmra.mxu0 %v6009
  %v7092 = vpop.f32.mrf.mxu0
  %v7093 = vadd.f32 %v6924, %v7092
  %v7094 = vpop.f32.mrf.mxu0
  %v7095 = vadd.f32 %v6926, %v7094
  %7096 = vmatmul.bf16.gmra.mxu0 %v6010
  %v7097 = vpop.f32.mrf.mxu0
  %v7098 = vadd.f32 %v6929, %v7097
  %v7099 = vpop.f32.mrf.mxu0
  %v7100 = vadd.f32 %v6931, %v7099
  %7101 = vmatmul.bf16.gmra.mxu0 %v6011
  %v7102 = vpop.f32.mrf.mxu0
  %v7103 = vadd.f32 %v6934, %v7102
  %v7104 = vpop.f32.mrf.mxu0
  %v7105 = vadd.f32 %v6936, %v7104
  %7106 = vmatmul.bf16.gmra.mxu0 %v6012
  %v7107 = vpop.f32.mrf.mxu0
  %v7108 = vadd.f32 %v6939, %v7107
  %v7109 = vpop.f32.mrf.mxu0
  %v7110 = vadd.f32 %v6941, %v7109
  %7111 = vmatmul.bf16.gmra.mxu0 %v6013
  %v7112 = vpop.f32.mrf.mxu0
  %v7113 = vadd.f32 %v6944, %v7112
  %v7114 = vpop.f32.mrf.mxu0
  %v7115 = vadd.f32 %v6946, %v7114
  %7116 = vmatmul.bf16.gmra.mxu0 %v6014
  %v7117 = vpop.f32.mrf.mxu0
  %v7118 = vadd.f32 %v6949, %v7117
  %v7119 = vpop.f32.mrf.mxu0
  %v7120 = vadd.f32 %v6951, %v7119
  %7121 = vmatmul.bf16.gmra.mxu0 %v6015
  %v7122 = vpop.f32.mrf.mxu0
  %v7123 = vadd.f32 %v6954, %v7122
  %v7124 = vpop.f32.mrf.mxu0
  %v7125 = vadd.f32 %v6956, %v7124
  %7126 = vmatmul.bf16.gmra.mxu0 %v6016
  %v7127 = vpop.f32.mrf.mxu0
  %v7128 = vadd.f32 %v6959, %v7127
  %v7129 = vpop.f32.mrf.mxu0
  %v7130 = vadd.f32 %v6961, %v7129
  %7131 = vmatmul.bf16.gmra.mxu0 %v6017
  %v7132 = vpop.f32.mrf.mxu0
  %v7133 = vadd.f32 %v6964, %v7132
  %v7134 = vpop.f32.mrf.mxu0
  %v7135 = vadd.f32 %v6966, %v7134
  %7136 = vmatmul.bf16.gmra.mxu0 %v6018
  %v7137 = vpop.f32.mrf.mxu0
  %v7138 = vadd.f32 %v6969, %v7137
  %v7139 = vpop.f32.mrf.mxu0
  %v7140 = vadd.f32 %v6971, %v7139
  %7141 = vmatmul.bf16.gmra.mxu0 %v6019
  %v7142 = vpop.f32.mrf.mxu0
  %v7143 = vadd.f32 %v6974, %v7142
  %v7144 = vpop.f32.mrf.mxu0
  %v7145 = vadd.f32 %v6976, %v7144
  %7146 = vmatmul.bf16.gmra.mxu0 %v6020
  %v7147 = vpop.f32.mrf.mxu0
  %v7148 = vadd.f32 %v6979, %v7147
  %v7149 = vpop.f32.mrf.mxu0
  %v7150 = vadd.f32 %v6981, %v7149
  %7151 = vmatmul.bf16.gmra.mxu0 %v6021
  %v7152 = vpop.f32.mrf.mxu0
  %v7153 = vadd.f32 %v6984, %v7152
  %v7154 = vpop.f32.mrf.mxu0
  %v7155 = vadd.f32 %v6986, %v7154
  %7156 = vmatmul.bf16.gmra.mxu0 %v6022
  %v7157 = vpop.f32.mrf.mxu0
  %v7158 = vadd.f32 %v6989, %v7157
  %v7159 = vpop.f32.mrf.mxu0
  %v7160 = vadd.f32 %v6991, %v7159
  %7161 = vmatmul.bf16.gmra.mxu0 %v6023
  %v7162 = vpop.f32.mrf.mxu0
  %v7163 = vadd.f32 %v6994, %v7162
  %v7164 = vpop.f32.mrf.mxu0
  %v7165 = vadd.f32 %v6996, %v7164
  %7166 = vmatmul.bf16.gmra.mxu0 %v6024
  %v7167 = vpop.f32.mrf.mxu0
  %v7168 = vadd.f32 %v6999, %v7167
  %v7169 = vpop.f32.mrf.mxu0
  %v7170 = vadd.f32 %v7001, %v7169
  %7171 = vmatmul.bf16.gmra.mxu0 %v6025
  %v7172 = vpop.f32.mrf.mxu0
  %v7173 = vadd.f32 %v7004, %v7172
  %v7174 = vpop.f32.mrf.mxu0
  %v7175 = vadd.f32 %v7006, %v7174
  %7176 = vmatmul.bf16.gmra.mxu0 %v6026
  %v7177 = vpop.f32.mrf.mxu0
  %v7178 = vadd.f32 %v7009, %v7177
  %v7179 = vpop.f32.mrf.mxu0
  %v7180 = vadd.f32 %v7011, %v7179
  %7181 = vmatmul.bf16.gmra.mxu0 %v6027
  %v7182 = vpop.f32.mrf.mxu0
  %v7183 = vadd.f32 %v7014, %v7182
  %v7184 = vpop.f32.mrf.mxu0
  %v7185 = vadd.f32 %v7016, %v7184
  %7186 = vmatmul.bf16.gmra.mxu0 %v6028
  %v7187 = vpop.f32.mrf.mxu0
  %v7188 = vadd.f32 %v7019, %v7187
  %v7189 = vpop.f32.mrf.mxu0
  %v7190 = vadd.f32 %v7021, %v7189
  %7191 = vmatmul.bf16.gmra.mxu0 %v6029
  %v7192 = vpop.f32.mrf.mxu0
  %v7193 = vadd.f32 %v7024, %v7192
  %v7194 = vpop.f32.mrf.mxu0
  %v7195 = vadd.f32 %v7026, %v7194
  %7196 = vmatmul.bf16.gmra.mxu0 %v6030
  %v7197 = vpop.f32.mrf.mxu0
  %v7198 = vadd.f32 %v7029, %v7197
  %v7199 = vpop.f32.mrf.mxu0
  %v7200 = vadd.f32 %v7031, %v7199
  %7201 = vmatmul.bf16.gmra.mxu0 %v6031
  %v7202 = vpop.f32.mrf.mxu0
  %v7203 = vadd.f32 %v7034, %v7202
  %v7204 = vpop.f32.mrf.mxu0
  %v7205 = vadd.f32 %v7036, %v7204
  %7206 = vmatmul.bf16.gmra.mxu0 %v6032
  %v7207 = vpop.f32.mrf.mxu0
  %v7208 = vadd.f32 %v7039, %v7207
  %v7209 = vpop.f32.mrf.mxu0
  %v7210 = vadd.f32 %v7041, %v7209
  %7211 = vmatmul.bf16.gmra.mxu0 %v6033
  %v7212 = vpop.f32.mrf.mxu0
  %v7213 = vadd.f32 %v7044, %v7212
  %v7214 = vpop.f32.mrf.mxu0
  %v7215 = vadd.f32 %v7046, %v7214
  %7216 = vmatmul.bf16.gmra.mxu0 %v6034
  %v7217 = vpop.f32.mrf.mxu0
  %v7218 = vadd.f32 %v7049, %v7217
  %v7219 = vpop.f32.mrf.mxu0
  %v7220 = vadd.f32 %v7051, %v7219
  %7221 = vdwg.mxu0
  %7222 = vmatpush.bf16.msra.mxu0 %v6602
  %7223 = vmatpush.bf16.msra.mxu0 %v6601
  %7224 = vmatpush.bf16.msra.mxu0 %v6600
  %7225 = vmatpush.bf16.msra.mxu0 %v6599
  %7226 = vmatpush.bf16.msra.mxu0 %v6598
  %7227 = vmatpush.bf16.msra.mxu0 %v6597
  %7228 = vmatpush.bf16.msra.mxu0 %v6596
  %7229 = vmatpush.bf16.msra.mxu0 %v6595
  %7230 = vmatmul.bf16.gmra.mxu0 %v5620
  %v7231 = vpop.f32.mrf.mxu0
  %v7232 = vadd.f32 %v7063, %v7231
  %v7233 = vpop.f32.mrf.mxu0
  %v7234 = vadd.f32 %v7065, %v7233
  %7235 = vmatmul.bf16.gmra.mxu0 %v5621
  %v7236 = vpop.f32.mrf.mxu0
  %v7237 = vadd.f32 %v7068, %v7236
  %v7238 = vpop.f32.mrf.mxu0
  %v7239 = vadd.f32 %v7070, %v7238
  %7240 = vmatmul.bf16.gmra.mxu0 %v5622
  %v7241 = vpop.f32.mrf.mxu0
  %v7242 = vadd.f32 %v7073, %v7241
  %v7243 = vpop.f32.mrf.mxu0
  %v7244 = vadd.f32 %v7075, %v7243
  %7245 = vmatmul.bf16.gmra.mxu0 %v5623
  %v7246 = vpop.f32.mrf.mxu0
  %v7247 = vadd.f32 %v7078, %v7246
  %v7248 = vpop.f32.mrf.mxu0
  %v7249 = vadd.f32 %v7080, %v7248
  %7250 = vmatmul.bf16.gmra.mxu0 %v5624
  %v7251 = vpop.f32.mrf.mxu0
  %v7252 = vadd.f32 %v7083, %v7251
  %v7253 = vpop.f32.mrf.mxu0
  %v7254 = vadd.f32 %v7085, %v7253
  %7255 = vmatmul.bf16.gmra.mxu0 %v5625
  %v7256 = vpop.f32.mrf.mxu0
  %v7257 = vadd.f32 %v7088, %v7256
  %v7258 = vpop.f32.mrf.mxu0
  %v7259 = vadd.f32 %v7090, %v7258
  %7260 = vmatmul.bf16.gmra.mxu0 %v5626
  %v7261 = vpop.f32.mrf.mxu0
  %v7262 = vadd.f32 %v7093, %v7261
  %v7263 = vpop.f32.mrf.mxu0
  %v7264 = vadd.f32 %v7095, %v7263
  %7265 = vmatmul.bf16.gmra.mxu0 %v5627
  %v7266 = vpop.f32.mrf.mxu0
  %v7267 = vadd.f32 %v7098, %v7266
  %v7268 = vpop.f32.mrf.mxu0
  %v7269 = vadd.f32 %v7100, %v7268
  %7270 = vmatmul.bf16.gmra.mxu0 %v5628
  %v7271 = vpop.f32.mrf.mxu0
  %v7272 = vadd.f32 %v7103, %v7271
  %v7273 = vpop.f32.mrf.mxu0
  %v7274 = vadd.f32 %v7105, %v7273
  %7275 = vmatmul.bf16.gmra.mxu0 %v5629
  %v7276 = vpop.f32.mrf.mxu0
  %v7277 = vadd.f32 %v7108, %v7276
  %v7278 = vpop.f32.mrf.mxu0
  %v7279 = vadd.f32 %v7110, %v7278
  %7280 = vmatmul.bf16.gmra.mxu0 %v5630
  %v7281 = vpop.f32.mrf.mxu0
  %v7282 = vadd.f32 %v7113, %v7281
  %v7283 = vpop.f32.mrf.mxu0
  %v7284 = vadd.f32 %v7115, %v7283
  %7285 = vmatmul.bf16.gmra.mxu0 %v5631
  %v7286 = vpop.f32.mrf.mxu0
  %v7287 = vadd.f32 %v7118, %v7286
  %v7288 = vpop.f32.mrf.mxu0
  %v7289 = vadd.f32 %v7120, %v7288
  %7290 = vmatmul.bf16.gmra.mxu0 %v5632
  %v7291 = vpop.f32.mrf.mxu0
  %v7292 = vadd.f32 %v7123, %v7291
  %v7293 = vpop.f32.mrf.mxu0
  %v7294 = vadd.f32 %v7125, %v7293
  %7295 = vmatmul.bf16.gmra.mxu0 %v5633
  %v7296 = vpop.f32.mrf.mxu0
  %v7297 = vadd.f32 %v7128, %v7296
  %v7298 = vpop.f32.mrf.mxu0
  %v7299 = vadd.f32 %v7130, %v7298
  %7300 = vmatmul.bf16.gmra.mxu0 %v5634
  %v7301 = vpop.f32.mrf.mxu0
  %v7302 = vadd.f32 %v7133, %v7301
  %v7303 = vpop.f32.mrf.mxu0
  %v7304 = vadd.f32 %v7135, %v7303
  %7305 = vmatmul.bf16.gmra.mxu0 %v6075
  %v7306 = vpop.f32.mrf.mxu0
  %v7307 = vadd.f32 %v7138, %v7306
  %v7308 = vpop.f32.mrf.mxu0
  %v7309 = vadd.f32 %v7140, %v7308
  %7310 = vmatmul.bf16.gmra.mxu0 %v5636
  %v7311 = vpop.f32.mrf.mxu0
  %v7312 = vadd.f32 %v7143, %v7311
  %v7313 = vpop.f32.mrf.mxu0
  %v7314 = vadd.f32 %v7145, %v7313
  %7315 = vmatmul.bf16.gmra.mxu0 %v5637
  %v7316 = vpop.f32.mrf.mxu0
  %v7317 = vadd.f32 %v7148, %v7316
  %v7318 = vpop.f32.mrf.mxu0
  %v7319 = vadd.f32 %v7150, %v7318
  %7320 = vmatmul.bf16.gmra.mxu0 %v5638
  %v7321 = vpop.f32.mrf.mxu0
  %v7322 = vadd.f32 %v7153, %v7321
  %v7323 = vpop.f32.mrf.mxu0
  %v7324 = vadd.f32 %v7155, %v7323
  %7325 = vmatmul.bf16.gmra.mxu0 %v5639
  %v7326 = vpop.f32.mrf.mxu0
  %v7327 = vadd.f32 %v7158, %v7326
  %v7328 = vpop.f32.mrf.mxu0
  %v7329 = vadd.f32 %v7160, %v7328
  %7330 = vmatmul.bf16.gmra.mxu0 %v5640
  %v7331 = vpop.f32.mrf.mxu0
  %v7332 = vadd.f32 %v7163, %v7331
  %v7333 = vpop.f32.mrf.mxu0
  %v7334 = vadd.f32 %v7165, %v7333
  %7335 = vmatmul.bf16.gmra.mxu0 %v5641
  %v7336 = vpop.f32.mrf.mxu0
  %v7337 = vadd.f32 %v7168, %v7336
  %v7338 = vpop.f32.mrf.mxu0
  %v7339 = vadd.f32 %v7170, %v7338
  %7340 = vmatmul.bf16.gmra.mxu0 %v5642
  %v7341 = vpop.f32.mrf.mxu0
  %v7342 = vadd.f32 %v7173, %v7341
  %v7343 = vpop.f32.mrf.mxu0
  %v7344 = vadd.f32 %v7175, %v7343
  %7345 = vmatmul.bf16.gmra.mxu0 %v5643
  %v7346 = vpop.f32.mrf.mxu0
  %v7347 = vadd.f32 %v7178, %v7346
  %v7348 = vpop.f32.mrf.mxu0
  %v7349 = vadd.f32 %v7180, %v7348
  %7350 = vmatmul.bf16.gmra.mxu0 %v5644
  %v7351 = vpop.f32.mrf.mxu0
  %v7352 = vadd.f32 %v7183, %v7351
  %v7353 = vpop.f32.mrf.mxu0
  %v7354 = vadd.f32 %v7185, %v7353
  %7355 = vmatmul.bf16.gmra.mxu0 %v5645
  %v7356 = vpop.f32.mrf.mxu0
  %v7357 = vadd.f32 %v7188, %v7356
  %v7358 = vpop.f32.mrf.mxu0
  %v7359 = vadd.f32 %v7190, %v7358
  %7360 = vmatmul.bf16.gmra.mxu0 %v5646
  %v7361 = vpop.f32.mrf.mxu0
  %v7362 = vadd.f32 %v7193, %v7361
  %v7363 = vpop.f32.mrf.mxu0
  %v7364 = vadd.f32 %v7195, %v7363
  %7365 = vmatmul.bf16.gmra.mxu0 %v5647
  %v7366 = vpop.f32.mrf.mxu0
  %v7367 = vadd.f32 %v7198, %v7366
  %v7368 = vpop.f32.mrf.mxu0
  %v7369 = vadd.f32 %v7200, %v7368
  %7370 = vmatmul.bf16.gmra.mxu0 %v5648
  %v7371 = vpop.f32.mrf.mxu0
  %v7372 = vadd.f32 %v7203, %v7371
  %v7373 = vpop.f32.mrf.mxu0
  %v7374 = vadd.f32 %v7205, %v7373
  %7375 = vmatmul.bf16.gmra.mxu0 %v5649
  %v7376 = vpop.f32.mrf.mxu0
  %v7377 = vadd.f32 %v7208, %v7376
  %v7378 = vpop.f32.mrf.mxu0
  %v7379 = vadd.f32 %v7210, %v7378
  %7380 = vmatmul.bf16.gmra.mxu0 %v5650
  %v7381 = vpop.f32.mrf.mxu0
  %v7382 = vadd.f32 %v7213, %v7381
  %v7383 = vpop.f32.mrf.mxu0
  %v7384 = vadd.f32 %v7215, %v7383
  %7385 = vmatmul.bf16.gmra.mxu0 %v6076
  %v7386 = vpop.f32.mrf.mxu0
  %v7387 = vadd.f32 %v7218, %v7386
  %v7388 = vpop.f32.mrf.mxu0
  %v7389 = vadd.f32 %v7220, %v7388
  %7390 = vdwg.mxu0
  %7391 = vmatpush.bf16.msra.mxu0 %v6610
  %7392 = vmatpush.bf16.msra.mxu0 %v6609
  %7393 = vmatpush.bf16.msra.mxu0 %v6608
  %7394 = vmatpush.bf16.msra.mxu0 %v6607
  %7395 = vmatpush.bf16.msra.mxu0 %v6606
  %7396 = vmatpush.bf16.msra.mxu0 %v6605
  %7397 = vmatpush.bf16.msra.mxu0 %v6604
  %7398 = vmatpush.bf16.msra.mxu0 %v6603
  %7399 = vmatmul.bf16.gmra.mxu0 %v5812
  %v7400 = vpop.f32.mrf.mxu0
  %v7401 = vadd.f32 %v7232, %v7400
  %v7402 = vpop.f32.mrf.mxu0
  %v7403 = vadd.f32 %v7234, %v7402
  %7404 = vmatmul.bf16.gmra.mxu0 %v5813
  %v7405 = vpop.f32.mrf.mxu0
  %v7406 = vadd.f32 %v7237, %v7405
  %v7407 = vpop.f32.mrf.mxu0
  %v7408 = vadd.f32 %v7239, %v7407
  %7409 = vmatmul.bf16.gmra.mxu0 %v5814
  %v7410 = vpop.f32.mrf.mxu0
  %v7411 = vadd.f32 %v7242, %v7410
  %v7412 = vpop.f32.mrf.mxu0
  %v7413 = vadd.f32 %v7244, %v7412
  %7414 = vmatmul.bf16.gmra.mxu0 %v5815
  %v7415 = vpop.f32.mrf.mxu0
  %v7416 = vadd.f32 %v7247, %v7415
  %v7417 = vpop.f32.mrf.mxu0
  %v7418 = vadd.f32 %v7249, %v7417
  %7419 = vmatmul.bf16.gmra.mxu0 %v5816
  %v7420 = vpop.f32.mrf.mxu0
  %v7421 = vadd.f32 %v7252, %v7420
  %v7422 = vpop.f32.mrf.mxu0
  %v7423 = vadd.f32 %v7254, %v7422
  %7424 = vmatmul.bf16.gmra.mxu0 %v5817
  %v7425 = vpop.f32.mrf.mxu0
  %v7426 = vadd.f32 %v7257, %v7425
  %v7427 = vpop.f32.mrf.mxu0
  %v7428 = vadd.f32 %v7259, %v7427
  %7429 = vmatmul.bf16.gmra.mxu0 %v5818
  %v7430 = vpop.f32.mrf.mxu0
  %v7431 = vadd.f32 %v7262, %v7430
  %v7432 = vpop.f32.mrf.mxu0
  %v7433 = vadd.f32 %v7264, %v7432
  %7434 = vmatmul.bf16.gmra.mxu0 %v5819
  %v7435 = vpop.f32.mrf.mxu0
  %v7436 = vadd.f32 %v7267, %v7435
  %v7437 = vpop.f32.mrf.mxu0
  %v7438 = vadd.f32 %v7269, %v7437
  %7439 = vmatmul.bf16.gmra.mxu0 %v5820
  %v7440 = vpop.f32.mrf.mxu0
  %v7441 = vadd.f32 %v7272, %v7440
  %v7442 = vpop.f32.mrf.mxu0
  %v7443 = vadd.f32 %v7274, %v7442
  %7444 = vmatmul.bf16.gmra.mxu0 %v5821
  %v7445 = vpop.f32.mrf.mxu0
  %v7446 = vadd.f32 %v7277, %v7445
  %v7447 = vpop.f32.mrf.mxu0
  %v7448 = vadd.f32 %v7279, %v7447
  %7449 = vmatmul.bf16.gmra.mxu0 %v5822
  %v7450 = vpop.f32.mrf.mxu0
  %v7451 = vadd.f32 %v7282, %v7450
  %v7452 = vpop.f32.mrf.mxu0
  %v7453 = vadd.f32 %v7284, %v7452
  %7454 = vmatmul.bf16.gmra.mxu0 %v5823
  %v7455 = vpop.f32.mrf.mxu0
  %v7456 = vadd.f32 %v7287, %v7455
  %v7457 = vpop.f32.mrf.mxu0
  %v7458 = vadd.f32 %v7289, %v7457
  %7459 = vmatmul.bf16.gmra.mxu0 %v5824
  %v7460 = vpop.f32.mrf.mxu0
  %v7461 = vadd.f32 %v7292, %v7460
  %v7462 = vpop.f32.mrf.mxu0
  %v7463 = vadd.f32 %v7294, %v7462
  %7464 = vmatmul.bf16.gmra.mxu0 %v5825
  %v7465 = vpop.f32.mrf.mxu0
  %v7466 = vadd.f32 %v7297, %v7465
  %v7467 = vpop.f32.mrf.mxu0
  %v7468 = vadd.f32 %v7299, %v7467
  %7469 = vmatmul.bf16.gmra.mxu0 %v5826
  %v7470 = vpop.f32.mrf.mxu0
  %v7471 = vadd.f32 %v7302, %v7470
  %v7472 = vpop.f32.mrf.mxu0
  %v7473 = vadd.f32 %v7304, %v7472
  %7474 = vmatmul.bf16.gmra.mxu0 %v6087
  %v7475 = vpop.f32.mrf.mxu0
  %v7476 = vadd.f32 %v7307, %v7475
  %v7477 = vpop.f32.mrf.mxu0
  %v7478 = vadd.f32 %v7309, %v7477
  %7479 = vmatmul.bf16.gmra.mxu0 %v5828
  %v7480 = vpop.f32.mrf.mxu0
  %v7481 = vadd.f32 %v7312, %v7480
  %v7482 = vpop.f32.mrf.mxu0
  %v7483 = vadd.f32 %v7314, %v7482
  %7484 = vmatmul.bf16.gmra.mxu0 %v5829
  %v7485 = vpop.f32.mrf.mxu0
  %v7486 = vadd.f32 %v7317, %v7485
  %v7487 = vpop.f32.mrf.mxu0
  %v7488 = vadd.f32 %v7319, %v7487
  %7489 = vmatmul.bf16.gmra.mxu0 %v5830
  %v7490 = vpop.f32.mrf.mxu0
  %v7491 = vadd.f32 %v7322, %v7490
  %v7492 = vpop.f32.mrf.mxu0
  %v7493 = vadd.f32 %v7324, %v7492
  %7494 = vmatmul.bf16.gmra.mxu0 %v5831
  %v7495 = vpop.f32.mrf.mxu0
  %v7496 = vadd.f32 %v7327, %v7495
  %v7497 = vpop.f32.mrf.mxu0
  %v7498 = vadd.f32 %v7329, %v7497
  %7499 = vmatmul.bf16.gmra.mxu0 %v5832
  %v7500 = vpop.f32.mrf.mxu0
  %v7501 = vadd.f32 %v7332, %v7500
  %v7502 = vpop.f32.mrf.mxu0
  %v7503 = vadd.f32 %v7334, %v7502
  %7504 = vmatmul.bf16.gmra.mxu0 %v5833
  %v7505 = vpop.f32.mrf.mxu0
  %v7506 = vadd.f32 %v7337, %v7505
  %v7507 = vpop.f32.mrf.mxu0
  %v7508 = vadd.f32 %v7339, %v7507
  %7509 = vmatmul.bf16.gmra.mxu0 %v5834
  %v7510 = vpop.f32.mrf.mxu0
  %v7511 = vadd.f32 %v7342, %v7510
  %v7512 = vpop.f32.mrf.mxu0
  %v7513 = vadd.f32 %v7344, %v7512
  %7514 = vmatmul.bf16.gmra.mxu0 %v5835
  %v7515 = vpop.f32.mrf.mxu0
  %v7516 = vadd.f32 %v7347, %v7515
  %v7517 = vpop.f32.mrf.mxu0
  %v7518 = vadd.f32 %v7349, %v7517
  %7519 = vmatmul.bf16.gmra.mxu0 %v5836
  %v7520 = vpop.f32.mrf.mxu0
  %v7521 = vadd.f32 %v7352, %v7520
  %v7522 = vpop.f32.mrf.mxu0
  %v7523 = vadd.f32 %v7354, %v7522
  %7524 = vmatmul.bf16.gmra.mxu0 %v5837
  %v7525 = vpop.f32.mrf.mxu0
  %v7526 = vadd.f32 %v7357, %v7525
  %v7527 = vpop.f32.mrf.mxu0
  %v7528 = vadd.f32 %v7359, %v7527
  %7529 = vmatmul.bf16.gmra.mxu0 %v5838
  %v7530 = vpop.f32.mrf.mxu0
  %v7531 = vadd.f32 %v7362, %v7530
  %v7532 = vpop.f32.mrf.mxu0
  %v7533 = vadd.f32 %v7364, %v7532
  %7534 = vmatmul.bf16.gmra.mxu0 %v5839
  %v7535 = vpop.f32.mrf.mxu0
  %v7536 = vadd.f32 %v7367, %v7535
  %v7537 = vpop.f32.mrf.mxu0
  %v7538 = vadd.f32 %v7369, %v7537
  %7539 = vmatmul.bf16.gmra.mxu0 %v5840
  %v7540 = vpop.f32.mrf.mxu0
  %v7541 = vadd.f32 %v7372, %v7540
  %v7542 = vpop.f32.mrf.mxu0
  %v7543 = vadd.f32 %v7374, %v7542
  %7544 = vmatmul.bf16.gmra.mxu0 %v5841
  %v7545 = vpop.f32.mrf.mxu0
  %v7546 = vadd.f32 %v7377, %v7545
  %v7547 = vpop.f32.mrf.mxu0
  %v7548 = vadd.f32 %v7379, %v7547
  %7549 = vmatmul.bf16.gmra.mxu0 %v5842
  %v7550 = vpop.f32.mrf.mxu0
  %v7551 = vadd.f32 %v7382, %v7550
  %v7552 = vpop.f32.mrf.mxu0
  %v7553 = vadd.f32 %v7384, %v7552
  %7554 = vmatmul.bf16.gmra.mxu0 %v6088
  %v7555 = vpop.f32.mrf.mxu0
  %v7556 = vadd.f32 %v7387, %v7555
  %v7557 = vpop.f32.mrf.mxu0
  %v7558 = vadd.f32 %v7389, %v7557
  %7559 = vdwg.mxu0
  %7560 = vmatpush.bf16.msra.mxu0 %v6618
  %7561 = vmatpush.bf16.msra.mxu0 %v6617
  %7562 = vmatpush.bf16.msra.mxu0 %v6616
  %7563 = vmatpush.bf16.msra.mxu0 %v6615
  %7564 = vmatpush.bf16.msra.mxu0 %v6614
  %7565 = vmatpush.bf16.msra.mxu0 %v6613
  %7566 = vmatpush.bf16.msra.mxu0 %v6612
  %7567 = vmatpush.bf16.msra.mxu0 %v6611
  %7568 = vmatmul.bf16.gmra.mxu0 %v6004
  %v7569 = vpop.f32.mrf.mxu0
  %v7570 = vadd.f32 %v7401, %v7569
  %v7571 = vpop.f32.mrf.mxu0
  %v7572 = vadd.f32 %v7403, %v7571
  %7573 = vmatmul.bf16.gmra.mxu0 %v6005
  %v7574 = vpop.f32.mrf.mxu0
  %v7575 = vadd.f32 %v7406, %v7574
  %v7576 = vpop.f32.mrf.mxu0
  %v7577 = vadd.f32 %v7408, %v7576
  %7578 = vmatmul.bf16.gmra.mxu0 %v6006
  %v7579 = vpop.f32.mrf.mxu0
  %v7580 = vadd.f32 %v7411, %v7579
  %v7581 = vpop.f32.mrf.mxu0
  %v7582 = vadd.f32 %v7413, %v7581
  %7583 = vmatmul.bf16.gmra.mxu0 %v6007
  %v7584 = vpop.f32.mrf.mxu0
  %v7585 = vadd.f32 %v7416, %v7584
  %v7586 = vpop.f32.mrf.mxu0
  %v7587 = vadd.f32 %v7418, %v7586
  %7588 = vmatmul.bf16.gmra.mxu0 %v6008
  %v7589 = vpop.f32.mrf.mxu0
  %v7590 = vadd.f32 %v7421, %v7589
  %v7591 = vpop.f32.mrf.mxu0
  %v7592 = vadd.f32 %v7423, %v7591
  %7593 = vmatmul.bf16.gmra.mxu0 %v6009
  %v7594 = vpop.f32.mrf.mxu0
  %v7595 = vadd.f32 %v7426, %v7594
  %v7596 = vpop.f32.mrf.mxu0
  %v7597 = vadd.f32 %v7428, %v7596
  %7598 = vmatmul.bf16.gmra.mxu0 %v6010
  %v7599 = vpop.f32.mrf.mxu0
  %v7600 = vadd.f32 %v7431, %v7599
  %v7601 = vpop.f32.mrf.mxu0
  %v7602 = vadd.f32 %v7433, %v7601
  %7603 = vmatmul.bf16.gmra.mxu0 %v6011
  %v7604 = vpop.f32.mrf.mxu0
  %v7605 = vadd.f32 %v7436, %v7604
  %v7606 = vpop.f32.mrf.mxu0
  %v7607 = vadd.f32 %v7438, %v7606
  %7608 = vmatmul.bf16.gmra.mxu0 %v6012
  %v7609 = vpop.f32.mrf.mxu0
  %v7610 = vadd.f32 %v7441, %v7609
  %v7611 = vpop.f32.mrf.mxu0
  %v7612 = vadd.f32 %v7443, %v7611
  %7613 = vmatmul.bf16.gmra.mxu0 %v6013
  %v7614 = vpop.f32.mrf.mxu0
  %v7615 = vadd.f32 %v7446, %v7614
  %v7616 = vpop.f32.mrf.mxu0
  %v7617 = vadd.f32 %v7448, %v7616
  %7618 = vmatmul.bf16.gmra.mxu0 %v6014
  %v7619 = vpop.f32.mrf.mxu0
  %v7620 = vadd.f32 %v7451, %v7619
  %v7621 = vpop.f32.mrf.mxu0
  %v7622 = vadd.f32 %v7453, %v7621
  %7623 = vmatmul.bf16.gmra.mxu0 %v6015
  %v7624 = vpop.f32.mrf.mxu0
  %v7625 = vadd.f32 %v7456, %v7624
  %v7626 = vpop.f32.mrf.mxu0
  %v7627 = vadd.f32 %v7458, %v7626
  %7628 = vmatmul.bf16.gmra.mxu0 %v6016
  %v7629 = vpop.f32.mrf.mxu0
  %v7630 = vadd.f32 %v7461, %v7629
  %v7631 = vpop.f32.mrf.mxu0
  %v7632 = vadd.f32 %v7463, %v7631
  %7633 = vmatmul.bf16.gmra.mxu0 %v6017
  %v7634 = vpop.f32.mrf.mxu0
  %v7635 = vadd.f32 %v7466, %v7634
  %v7636 = vpop.f32.mrf.mxu0
  %v7637 = vadd.f32 %v7468, %v7636
  %7638 = vmatmul.bf16.gmra.mxu0 %v6018
  %v7639 = vpop.f32.mrf.mxu0
  %v7640 = vadd.f32 %v7471, %v7639
  %v7641 = vpop.f32.mrf.mxu0
  %v7642 = vadd.f32 %v7473, %v7641
  %7643 = vmatmul.bf16.gmra.mxu0 %v6099
  %v7644 = vpop.f32.mrf.mxu0
  %v7645 = vadd.f32 %v7476, %v7644
  %v7646 = vpop.f32.mrf.mxu0
  %v7647 = vadd.f32 %v7478, %v7646
  %7648 = vmatmul.bf16.gmra.mxu0 %v6020
  %v7649 = vpop.f32.mrf.mxu0
  %v7650 = vadd.f32 %v7481, %v7649
  %v7651 = vpop.f32.mrf.mxu0
  %v7652 = vadd.f32 %v7483, %v7651
  %7653 = vmatmul.bf16.gmra.mxu0 %v6021
  %v7654 = vpop.f32.mrf.mxu0
  %v7655 = vadd.f32 %v7486, %v7654
  %v7656 = vpop.f32.mrf.mxu0
  %v7657 = vadd.f32 %v7488, %v7656
  %7658 = vmatmul.bf16.gmra.mxu0 %v6022
  %v7659 = vpop.f32.mrf.mxu0
  %v7660 = vadd.f32 %v7491, %v7659
  %v7661 = vpop.f32.mrf.mxu0
  %v7662 = vadd.f32 %v7493, %v7661
  %7663 = vmatmul.bf16.gmra.mxu0 %v6023
  %v7664 = vpop.f32.mrf.mxu0
  %v7665 = vadd.f32 %v7496, %v7664
  %v7666 = vpop.f32.mrf.mxu0
  %v7667 = vadd.f32 %v7498, %v7666
  %7668 = vmatmul.bf16.gmra.mxu0 %v6024
  %v7669 = vpop.f32.mrf.mxu0
  %v7670 = vadd.f32 %v7501, %v7669
  %v7671 = vpop.f32.mrf.mxu0
  %v7672 = vadd.f32 %v7503, %v7671
  %7673 = vmatmul.bf16.gmra.mxu0 %v6025
  %v7674 = vpop.f32.mrf.mxu0
  %v7675 = vadd.f32 %v7506, %v7674
  %v7676 = vpop.f32.mrf.mxu0
  %v7677 = vadd.f32 %v7508, %v7676
  %7678 = vmatmul.bf16.gmra.mxu0 %v6026
  %v7679 = vpop.f32.mrf.mxu0
  %v7680 = vadd.f32 %v7511, %v7679
  %v7681 = vpop.f32.mrf.mxu0
  %v7682 = vadd.f32 %v7513, %v7681
  %7683 = vmatmul.bf16.gmra.mxu0 %v6027
  %v7684 = vpop.f32.mrf.mxu0
  %v7685 = vadd.f32 %v7516, %v7684
  %v7686 = vpop.f32.mrf.mxu0
  %v7687 = vadd.f32 %v7518, %v7686
  %7688 = vmatmul.bf16.gmra.mxu0 %v6028
  %v7689 = vpop.f32.mrf.mxu0
  %v7690 = vadd.f32 %v7521, %v7689
  %v7691 = vpop.f32.mrf.mxu0
  %v7692 = vadd.f32 %v7523, %v7691
  %7693 = vmatmul.bf16.gmra.mxu0 %v6029
  %v7694 = vpop.f32.mrf.mxu0
  %v7695 = vadd.f32 %v7526, %v7694
  %v7696 = vpop.f32.mrf.mxu0
  %v7697 = vadd.f32 %v7528, %v7696
  %7698 = vmatmul.bf16.gmra.mxu0 %v6030
  %v7699 = vpop.f32.mrf.mxu0
  %v7700 = vadd.f32 %v7531, %v7699
  %v7701 = vpop.f32.mrf.mxu0
  %v7702 = vadd.f32 %v7533, %v7701
  %7703 = vmatmul.bf16.gmra.mxu0 %v6031
  %v7704 = vpop.f32.mrf.mxu0
  %v7705 = vadd.f32 %v7536, %v7704
  %v7706 = vpop.f32.mrf.mxu0
  %v7707 = vadd.f32 %v7538, %v7706
  %7708 = vmatmul.bf16.gmra.mxu0 %v6032
  %v7709 = vpop.f32.mrf.mxu0
  %v7710 = vadd.f32 %v7541, %v7709
  %v7711 = vpop.f32.mrf.mxu0
  %v7712 = vadd.f32 %v7543, %v7711
  %7713 = vmatmul.bf16.gmra.mxu0 %v6033
  %v7714 = vpop.f32.mrf.mxu0
  %v7715 = vadd.f32 %v7546, %v7714
  %v7716 = vpop.f32.mrf.mxu0
  %v7717 = vadd.f32 %v7548, %v7716
  %7718 = vmatmul.bf16.gmra.mxu0 %v6034
  %v7719 = vpop.f32.mrf.mxu0
  %v7720 = vadd.f32 %v7551, %v7719
  %v7721 = vpop.f32.mrf.mxu0
  %v7722 = vadd.f32 %v7553, %v7721
  %7723 = vmatmul.bf16.gmra.mxu0 %v6100
  %v7724 = vpop.f32.mrf.mxu0
  %v7725 = vadd.f32 %v7556, %v7724
  %v7726 = vpop.f32.mrf.mxu0
  %v7727 = vadd.f32 %v7558, %v7726
  %7728 = vdwg.mxu0
  %7729 = vmatpush.bf16.msra.mxu0 %v6626
  %7730 = vmatpush.bf16.msra.mxu0 %v6625
  %7731 = vmatpush.bf16.msra.mxu0 %v6624
  %7732 = vmatpush.bf16.msra.mxu0 %v6623
  %7733 = vmatpush.bf16.msra.mxu0 %v6622
  %7734 = vmatpush.bf16.msra.mxu0 %v6621
  %7735 = vmatpush.bf16.msra.mxu0 %v6620
  %7736 = vmatpush.bf16.msra.mxu0 %v6619
  %7737 = vmatmul.bf16.gmra.mxu0 %v5621
  %v7738 = vpop.f32.mrf.mxu0
  %v7739 = vadd.f32 %v7570, %v7738
  %v7740 = vpop.f32.mrf.mxu0
  %v7741 = vadd.f32 %v7572, %v7740
  %7742 = vmatmul.bf16.gmra.mxu0 %v5622
  %v7743 = vpop.f32.mrf.mxu0
  %v7744 = vadd.f32 %v7575, %v7743
  %v7745 = vpop.f32.mrf.mxu0
  %v7746 = vadd.f32 %v7577, %v7745
  %7747 = vmatmul.bf16.gmra.mxu0 %v5623
  %v7748 = vpop.f32.mrf.mxu0
  %v7749 = vadd.f32 %v7580, %v7748
  %v7750 = vpop.f32.mrf.mxu0
  %v7751 = vadd.f32 %v7582, %v7750
  %7752 = vmatmul.bf16.gmra.mxu0 %v5624
  %v7753 = vpop.f32.mrf.mxu0
  %v7754 = vadd.f32 %v7585, %v7753
  %v7755 = vpop.f32.mrf.mxu0
  %v7756 = vadd.f32 %v7587, %v7755
  %7757 = vmatmul.bf16.gmra.mxu0 %v5625
  %v7758 = vpop.f32.mrf.mxu0
  %v7759 = vadd.f32 %v7590, %v7758
  %v7760 = vpop.f32.mrf.mxu0
  %v7761 = vadd.f32 %v7592, %v7760
  %7762 = vmatmul.bf16.gmra.mxu0 %v5626
  %v7763 = vpop.f32.mrf.mxu0
  %v7764 = vadd.f32 %v7595, %v7763
  %v7765 = vpop.f32.mrf.mxu0
  %v7766 = vadd.f32 %v7597, %v7765
  %7767 = vmatmul.bf16.gmra.mxu0 %v5627
  %v7768 = vpop.f32.mrf.mxu0
  %v7769 = vadd.f32 %v7600, %v7768
  %v7770 = vpop.f32.mrf.mxu0
  %v7771 = vadd.f32 %v7602, %v7770
  %7772 = vmatmul.bf16.gmra.mxu0 %v5628
  %v7773 = vpop.f32.mrf.mxu0
  %v7774 = vadd.f32 %v7605, %v7773
  %v7775 = vpop.f32.mrf.mxu0
  %v7776 = vadd.f32 %v7607, %v7775
  %7777 = vmatmul.bf16.gmra.mxu0 %v5629
  %v7778 = vpop.f32.mrf.mxu0
  %v7779 = vadd.f32 %v7610, %v7778
  %v7780 = vpop.f32.mrf.mxu0
  %v7781 = vadd.f32 %v7612, %v7780
  %7782 = vmatmul.bf16.gmra.mxu0 %v5630
  %v7783 = vpop.f32.mrf.mxu0
  %v7784 = vadd.f32 %v7615, %v7783
  %v7785 = vpop.f32.mrf.mxu0
  %v7786 = vadd.f32 %v7617, %v7785
  %7787 = vmatmul.bf16.gmra.mxu0 %v5631
  %v7788 = vpop.f32.mrf.mxu0
  %v7789 = vadd.f32 %v7620, %v7788
  %v7790 = vpop.f32.mrf.mxu0
  %v7791 = vadd.f32 %v7622, %v7790
  %7792 = vmatmul.bf16.gmra.mxu0 %v5632
  %v7793 = vpop.f32.mrf.mxu0
  %v7794 = vadd.f32 %v7625, %v7793
  %v7795 = vpop.f32.mrf.mxu0
  %v7796 = vadd.f32 %v7627, %v7795
  %7797 = vmatmul.bf16.gmra.mxu0 %v5633
  %v7798 = vpop.f32.mrf.mxu0
  %v7799 = vadd.f32 %v7630, %v7798
  %v7800 = vpop.f32.mrf.mxu0
  %v7801 = vadd.f32 %v7632, %v7800
  %7802 = vmatmul.bf16.gmra.mxu0 %v5634
  %v7803 = vpop.f32.mrf.mxu0
  %v7804 = vadd.f32 %v7635, %v7803
  %v7805 = vpop.f32.mrf.mxu0
  %v7806 = vadd.f32 %v7637, %v7805
  %7807 = vmatmul.bf16.gmra.mxu0 %v6075
  %v7808 = vpop.f32.mrf.mxu0
  %v7809 = vadd.f32 %v7640, %v7808
  %v7810 = vpop.f32.mrf.mxu0
  %v7811 = vadd.f32 %v7642, %v7810
  %7812 = vmatmul.bf16.gmra.mxu0 %v6111
  %v7813 = vpop.f32.mrf.mxu0
  %v7814 = vadd.f32 %v7645, %v7813
  %v7815 = vpop.f32.mrf.mxu0
  %v7816 = vadd.f32 %v7647, %v7815
  %7817 = vmatmul.bf16.gmra.mxu0 %v5637
  %v7818 = vpop.f32.mrf.mxu0
  %v7819 = vadd.f32 %v7650, %v7818
  %v7820 = vpop.f32.mrf.mxu0
  %v7821 = vadd.f32 %v7652, %v7820
  %7822 = vmatmul.bf16.gmra.mxu0 %v5638
  %v7823 = vpop.f32.mrf.mxu0
  %v7824 = vadd.f32 %v7655, %v7823
  %v7825 = vpop.f32.mrf.mxu0
  %v7826 = vadd.f32 %v7657, %v7825
  %7827 = vmatmul.bf16.gmra.mxu0 %v5639
  %v7828 = vpop.f32.mrf.mxu0
  %v7829 = vadd.f32 %v7660, %v7828
  %v7830 = vpop.f32.mrf.mxu0
  %v7831 = vadd.f32 %v7662, %v7830
  %7832 = vmatmul.bf16.gmra.mxu0 %v5640
  %v7833 = vpop.f32.mrf.mxu0
  %v7834 = vadd.f32 %v7665, %v7833
  %v7835 = vpop.f32.mrf.mxu0
  %v7836 = vadd.f32 %v7667, %v7835
  %7837 = vmatmul.bf16.gmra.mxu0 %v5641
  %v7838 = vpop.f32.mrf.mxu0
  %v7839 = vadd.f32 %v7670, %v7838
  %v7840 = vpop.f32.mrf.mxu0
  %v7841 = vadd.f32 %v7672, %v7840
  %7842 = vmatmul.bf16.gmra.mxu0 %v5642
  %v7843 = vpop.f32.mrf.mxu0
  %v7844 = vadd.f32 %v7675, %v7843
  %v7845 = vpop.f32.mrf.mxu0
  %v7846 = vadd.f32 %v7677, %v7845
  %7847 = vmatmul.bf16.gmra.mxu0 %v5643
  %v7848 = vpop.f32.mrf.mxu0
  %v7849 = vadd.f32 %v7680, %v7848
  %v7850 = vpop.f32.mrf.mxu0
  %v7851 = vadd.f32 %v7682, %v7850
  %7852 = vmatmul.bf16.gmra.mxu0 %v5644
  %v7853 = vpop.f32.mrf.mxu0
  %v7854 = vadd.f32 %v7685, %v7853
  %v7855 = vpop.f32.mrf.mxu0
  %v7856 = vadd.f32 %v7687, %v7855
  %7857 = vmatmul.bf16.gmra.mxu0 %v5645
  %v7858 = vpop.f32.mrf.mxu0
  %v7859 = vadd.f32 %v7690, %v7858
  %v7860 = vpop.f32.mrf.mxu0
  %v7861 = vadd.f32 %v7692, %v7860
  %7862 = vmatmul.bf16.gmra.mxu0 %v5646
  %v7863 = vpop.f32.mrf.mxu0
  %v7864 = vadd.f32 %v7695, %v7863
  %v7865 = vpop.f32.mrf.mxu0
  %v7866 = vadd.f32 %v7697, %v7865
  %7867 = vmatmul.bf16.gmra.mxu0 %v5647
  %v7868 = vpop.f32.mrf.mxu0
  %v7869 = vadd.f32 %v7700, %v7868
  %v7870 = vpop.f32.mrf.mxu0
  %v7871 = vadd.f32 %v7702, %v7870
  %7872 = vmatmul.bf16.gmra.mxu0 %v5648
  %v7873 = vpop.f32.mrf.mxu0
  %v7874 = vadd.f32 %v7705, %v7873
  %v7875 = vpop.f32.mrf.mxu0
  %v7876 = vadd.f32 %v7707, %v7875
  %7877 = vmatmul.bf16.gmra.mxu0 %v5649
  %v7878 = vpop.f32.mrf.mxu0
  %v7879 = vadd.f32 %v7710, %v7878
  %v7880 = vpop.f32.mrf.mxu0
  %v7881 = vadd.f32 %v7712, %v7880
  %7882 = vmatmul.bf16.gmra.mxu0 %v5650
  %v7883 = vpop.f32.mrf.mxu0
  %v7884 = vadd.f32 %v7715, %v7883
  %v7885 = vpop.f32.mrf.mxu0
  %v7886 = vadd.f32 %v7717, %v7885
  %7887 = vmatmul.bf16.gmra.mxu0 %v6076
  %v7888 = vpop.f32.mrf.mxu0
  %v7889 = vadd.f32 %v7720, %v7888
  %v7890 = vpop.f32.mrf.mxu0
  %v7891 = vadd.f32 %v7722, %v7890
  %7892 = vmatmul.bf16.gmra.mxu0 %v6112
  %v7893 = vpop.f32.mrf.mxu0
  %v7894 = vadd.f32 %v7725, %v7893
  %v7895 = vpop.f32.mrf.mxu0
  %v7896 = vadd.f32 %v7727, %v7895
  %7897 = vdwg.mxu0
  %7898 = vmatpush.bf16.msra.mxu0 %v6634
  %7899 = vmatpush.bf16.msra.mxu0 %v6633
  %7900 = vmatpush.bf16.msra.mxu0 %v6632
  %7901 = vmatpush.bf16.msra.mxu0 %v6631
  %7902 = vmatpush.bf16.msra.mxu0 %v6630
  %7903 = vmatpush.bf16.msra.mxu0 %v6629
  %7904 = vmatpush.bf16.msra.mxu0 %v6628
  %7905 = vmatpush.bf16.msra.mxu0 %v6627
  %7906 = vmatmul.bf16.gmra.mxu0 %v5813
  %v7907 = vpop.f32.mrf.mxu0
  %v7908 = vadd.f32 %v7739, %v7907
  %v7909 = vpop.f32.mrf.mxu0
  %v7910 = vadd.f32 %v7741, %v7909
  %7911 = vmatmul.bf16.gmra.mxu0 %v5814
  %v7912 = vpop.f32.mrf.mxu0
  %v7913 = vadd.f32 %v7744, %v7912
  %v7914 = vpop.f32.mrf.mxu0
  %v7915 = vadd.f32 %v7746, %v7914
  %7916 = vmatmul.bf16.gmra.mxu0 %v5815
  %v7917 = vpop.f32.mrf.mxu0
  %v7918 = vadd.f32 %v7749, %v7917
  %v7919 = vpop.f32.mrf.mxu0
  %v7920 = vadd.f32 %v7751, %v7919
  %7921 = vmatmul.bf16.gmra.mxu0 %v5816
  %v7922 = vpop.f32.mrf.mxu0
  %v7923 = vadd.f32 %v7754, %v7922
  %v7924 = vpop.f32.mrf.mxu0
  %v7925 = vadd.f32 %v7756, %v7924
  %7926 = vmatmul.bf16.gmra.mxu0 %v5817
  %v7927 = vpop.f32.mrf.mxu0
  %v7928 = vadd.f32 %v7759, %v7927
  %v7929 = vpop.f32.mrf.mxu0
  %v7930 = vadd.f32 %v7761, %v7929
  %7931 = vmatmul.bf16.gmra.mxu0 %v5818
  %v7932 = vpop.f32.mrf.mxu0
  %v7933 = vadd.f32 %v7764, %v7932
  %v7934 = vpop.f32.mrf.mxu0
  %v7935 = vadd.f32 %v7766, %v7934
  %7936 = vmatmul.bf16.gmra.mxu0 %v5819
  %v7937 = vpop.f32.mrf.mxu0
  %v7938 = vadd.f32 %v7769, %v7937
  %v7939 = vpop.f32.mrf.mxu0
  %v7940 = vadd.f32 %v7771, %v7939
  %7941 = vmatmul.bf16.gmra.mxu0 %v5820
  %v7942 = vpop.f32.mrf.mxu0
  %v7943 = vadd.f32 %v7774, %v7942
  %v7944 = vpop.f32.mrf.mxu0
  %v7945 = vadd.f32 %v7776, %v7944
  %7946 = vmatmul.bf16.gmra.mxu0 %v5821
  %v7947 = vpop.f32.mrf.mxu0
  %v7948 = vadd.f32 %v7779, %v7947
  %v7949 = vpop.f32.mrf.mxu0
  %v7950 = vadd.f32 %v7781, %v7949
  %7951 = vmatmul.bf16.gmra.mxu0 %v5822
  %v7952 = vpop.f32.mrf.mxu0
  %v7953 = vadd.f32 %v7784, %v7952
  %v7954 = vpop.f32.mrf.mxu0
  %v7955 = vadd.f32 %v7786, %v7954
  %7956 = vmatmul.bf16.gmra.mxu0 %v5823
  %v7957 = vpop.f32.mrf.mxu0
  %v7958 = vadd.f32 %v7789, %v7957
  %v7959 = vpop.f32.mrf.mxu0
  %v7960 = vadd.f32 %v7791, %v7959
  %7961 = vmatmul.bf16.gmra.mxu0 %v5824
  %v7962 = vpop.f32.mrf.mxu0
  %v7963 = vadd.f32 %v7794, %v7962
  %v7964 = vpop.f32.mrf.mxu0
  %v7965 = vadd.f32 %v7796, %v7964
  %7966 = vmatmul.bf16.gmra.mxu0 %v5825
  %v7967 = vpop.f32.mrf.mxu0
  %v7968 = vadd.f32 %v7799, %v7967
  %v7969 = vpop.f32.mrf.mxu0
  %v7970 = vadd.f32 %v7801, %v7969
  %7971 = vmatmul.bf16.gmra.mxu0 %v5826
  %v7972 = vpop.f32.mrf.mxu0
  %v7973 = vadd.f32 %v7804, %v7972
  %v7974 = vpop.f32.mrf.mxu0
  %v7975 = vadd.f32 %v7806, %v7974
  %7976 = vmatmul.bf16.gmra.mxu0 %v6087
  %v7977 = vpop.f32.mrf.mxu0
  %v7978 = vadd.f32 %v7809, %v7977
  %v7979 = vpop.f32.mrf.mxu0
  %v7980 = vadd.f32 %v7811, %v7979
  %7981 = vmatmul.bf16.gmra.mxu0 %v6123
  %v7982 = vpop.f32.mrf.mxu0
  %v7983 = vadd.f32 %v7814, %v7982
  %v7984 = vpop.f32.mrf.mxu0
  %v7985 = vadd.f32 %v7816, %v7984
  %7986 = vmatmul.bf16.gmra.mxu0 %v5829
  %v7987 = vpop.f32.mrf.mxu0
  %v7988 = vadd.f32 %v7819, %v7987
  %v7989 = vpop.f32.mrf.mxu0
  %v7990 = vadd.f32 %v7821, %v7989
  %7991 = vmatmul.bf16.gmra.mxu0 %v5830
  %v7992 = vpop.f32.mrf.mxu0
  %v7993 = vadd.f32 %v7824, %v7992
  %v7994 = vpop.f32.mrf.mxu0
  %v7995 = vadd.f32 %v7826, %v7994
  %7996 = vmatmul.bf16.gmra.mxu0 %v5831
  %v7997 = vpop.f32.mrf.mxu0
  %v7998 = vadd.f32 %v7829, %v7997
  %v7999 = vpop.f32.mrf.mxu0
  %v8000 = vadd.f32 %v7831, %v7999
  %8001 = vmatmul.bf16.gmra.mxu0 %v5832
  %v8002 = vpop.f32.mrf.mxu0
  %v8003 = vadd.f32 %v7834, %v8002
  %v8004 = vpop.f32.mrf.mxu0
  %v8005 = vadd.f32 %v7836, %v8004
  %8006 = vmatmul.bf16.gmra.mxu0 %v5833
  %v8007 = vpop.f32.mrf.mxu0
  %v8008 = vadd.f32 %v7839, %v8007
  %v8009 = vpop.f32.mrf.mxu0
  %v8010 = vadd.f32 %v7841, %v8009
  %8011 = vmatmul.bf16.gmra.mxu0 %v5834
  %v8012 = vpop.f32.mrf.mxu0
  %v8013 = vadd.f32 %v7844, %v8012
  %v8014 = vpop.f32.mrf.mxu0
  %v8015 = vadd.f32 %v7846, %v8014
  %8016 = vmatmul.bf16.gmra.mxu0 %v5835
  %v8017 = vpop.f32.mrf.mxu0
  %v8018 = vadd.f32 %v7849, %v8017
  %v8019 = vpop.f32.mrf.mxu0
  %v8020 = vadd.f32 %v7851, %v8019
  %8021 = vmatmul.bf16.gmra.mxu0 %v5836
  %v8022 = vpop.f32.mrf.mxu0
  %v8023 = vadd.f32 %v7854, %v8022
  %v8024 = vpop.f32.mrf.mxu0
  %v8025 = vadd.f32 %v7856, %v8024
  %8026 = vmatmul.bf16.gmra.mxu0 %v5837
  %v8027 = vpop.f32.mrf.mxu0
  %v8028 = vadd.f32 %v7859, %v8027
  %v8029 = vpop.f32.mrf.mxu0
  %v8030 = vadd.f32 %v7861, %v8029
  %8031 = vmatmul.bf16.gmra.mxu0 %v5838
  %v8032 = vpop.f32.mrf.mxu0
  %v8033 = vadd.f32 %v7864, %v8032
  %v8034 = vpop.f32.mrf.mxu0
  %v8035 = vadd.f32 %v7866, %v8034
  %8036 = vmatmul.bf16.gmra.mxu0 %v5839
  %v8037 = vpop.f32.mrf.mxu0
  %v8038 = vadd.f32 %v7869, %v8037
  %v8039 = vpop.f32.mrf.mxu0
  %v8040 = vadd.f32 %v7871, %v8039
  %8041 = vmatmul.bf16.gmra.mxu0 %v5840
  %v8042 = vpop.f32.mrf.mxu0
  %v8043 = vadd.f32 %v7874, %v8042
  %v8044 = vpop.f32.mrf.mxu0
  %v8045 = vadd.f32 %v7876, %v8044
  %8046 = vmatmul.bf16.gmra.mxu0 %v5841
  %v8047 = vpop.f32.mrf.mxu0
  %v8048 = vadd.f32 %v7879, %v8047
  %v8049 = vpop.f32.mrf.mxu0
  %v8050 = vadd.f32 %v7881, %v8049
  %8051 = vmatmul.bf16.gmra.mxu0 %v5842
  %v8052 = vpop.f32.mrf.mxu0
  %v8053 = vadd.f32 %v7884, %v8052
  %v8054 = vpop.f32.mrf.mxu0
  %v8055 = vadd.f32 %v7886, %v8054
  %8056 = vmatmul.bf16.gmra.mxu0 %v6088
  %v8057 = vpop.f32.mrf.mxu0
  %v8058 = vadd.f32 %v7889, %v8057
  %v8059 = vpop.f32.mrf.mxu0
  %v8060 = vadd.f32 %v7891, %v8059
  %8061 = vmatmul.bf16.gmra.mxu0 %v6124
  %v8062 = vpop.f32.mrf.mxu0
  %v8063 = vadd.f32 %v7894, %v8062
  %v8064 = vpop.f32.mrf.mxu0
  %v8065 = vadd.f32 %v7896, %v8064
  %8066 = vdwg.mxu0
  %8067 = vmatpush.bf16.msra.mxu0 %v6642
  %8068 = vmatpush.bf16.msra.mxu0 %v6641
  %8069 = vmatpush.bf16.msra.mxu0 %v6640
  %8070 = vmatpush.bf16.msra.mxu0 %v6639
  %8071 = vmatpush.bf16.msra.mxu0 %v6638
  %8072 = vmatpush.bf16.msra.mxu0 %v6637
  %8073 = vmatpush.bf16.msra.mxu0 %v6636
  %8074 = vmatpush.bf16.msra.mxu0 %v6635
  %8075 = vmatmul.bf16.gmra.mxu0 %v6005
  %v8076 = vpop.f32.mrf.mxu0
  %v8077 = vadd.f32 %v7908, %v8076
  %v8078 = vpop.f32.mrf.mxu0
  %v8079 = vadd.f32 %v7910, %v8078
  %8080 = vmatmul.bf16.gmra.mxu0 %v6006
  %v8081 = vpop.f32.mrf.mxu0
  %v8082 = vadd.f32 %v7913, %v8081
  %v8083 = vpop.f32.mrf.mxu0
  %v8084 = vadd.f32 %v7915, %v8083
  %8085 = vmatmul.bf16.gmra.mxu0 %v6007
  %v8086 = vpop.f32.mrf.mxu0
  %v8087 = vadd.f32 %v7918, %v8086
  %v8088 = vpop.f32.mrf.mxu0
  %v8089 = vadd.f32 %v7920, %v8088
  %8090 = vmatmul.bf16.gmra.mxu0 %v6008
  %v8091 = vpop.f32.mrf.mxu0
  %v8092 = vadd.f32 %v7923, %v8091
  %v8093 = vpop.f32.mrf.mxu0
  %v8094 = vadd.f32 %v7925, %v8093
  %8095 = vmatmul.bf16.gmra.mxu0 %v6009
  %v8096 = vpop.f32.mrf.mxu0
  %v8097 = vadd.f32 %v7928, %v8096
  %v8098 = vpop.f32.mrf.mxu0
  %v8099 = vadd.f32 %v7930, %v8098
  %8100 = vmatmul.bf16.gmra.mxu0 %v6010
  %v8101 = vpop.f32.mrf.mxu0
  %v8102 = vadd.f32 %v7933, %v8101
  %v8103 = vpop.f32.mrf.mxu0
  %v8104 = vadd.f32 %v7935, %v8103
  %8105 = vmatmul.bf16.gmra.mxu0 %v6011
  %v8106 = vpop.f32.mrf.mxu0
  %v8107 = vadd.f32 %v7938, %v8106
  %v8108 = vpop.f32.mrf.mxu0
  %v8109 = vadd.f32 %v7940, %v8108
  %8110 = vmatmul.bf16.gmra.mxu0 %v6012
  %v8111 = vpop.f32.mrf.mxu0
  %v8112 = vadd.f32 %v7943, %v8111
  %v8113 = vpop.f32.mrf.mxu0
  %v8114 = vadd.f32 %v7945, %v8113
  %8115 = vmatmul.bf16.gmra.mxu0 %v6013
  %v8116 = vpop.f32.mrf.mxu0
  %v8117 = vadd.f32 %v7948, %v8116
  %v8118 = vpop.f32.mrf.mxu0
  %v8119 = vadd.f32 %v7950, %v8118
  %8120 = vmatmul.bf16.gmra.mxu0 %v6014
  %v8121 = vpop.f32.mrf.mxu0
  %v8122 = vadd.f32 %v7953, %v8121
  %v8123 = vpop.f32.mrf.mxu0
  %v8124 = vadd.f32 %v7955, %v8123
  %8125 = vmatmul.bf16.gmra.mxu0 %v6015
  %v8126 = vpop.f32.mrf.mxu0
  %v8127 = vadd.f32 %v7958, %v8126
  %v8128 = vpop.f32.mrf.mxu0
  %v8129 = vadd.f32 %v7960, %v8128
  %8130 = vmatmul.bf16.gmra.mxu0 %v6016
  %v8131 = vpop.f32.mrf.mxu0
  %v8132 = vadd.f32 %v7963, %v8131
  %v8133 = vpop.f32.mrf.mxu0
  %v8134 = vadd.f32 %v7965, %v8133
  %8135 = vmatmul.bf16.gmra.mxu0 %v6017
  %v8136 = vpop.f32.mrf.mxu0
  %v8137 = vadd.f32 %v7968, %v8136
  %v8138 = vpop.f32.mrf.mxu0
  %v8139 = vadd.f32 %v7970, %v8138
  %8140 = vmatmul.bf16.gmra.mxu0 %v6018
  %v8141 = vpop.f32.mrf.mxu0
  %v8142 = vadd.f32 %v7973, %v8141
  %v8143 = vpop.f32.mrf.mxu0
  %v8144 = vadd.f32 %v7975, %v8143
  %8145 = vmatmul.bf16.gmra.mxu0 %v6099
  %v8146 = vpop.f32.mrf.mxu0
  %v8147 = vadd.f32 %v7978, %v8146
  %v8148 = vpop.f32.mrf.mxu0
  %v8149 = vadd.f32 %v7980, %v8148
  %8150 = vmatmul.bf16.gmra.mxu0 %v6135
  %v8151 = vpop.f32.mrf.mxu0
  %v8152 = vadd.f32 %v7983, %v8151
  %v8153 = vpop.f32.mrf.mxu0
  %v8154 = vadd.f32 %v7985, %v8153
  %8155 = vmatmul.bf16.gmra.mxu0 %v6021
  %v8156 = vpop.f32.mrf.mxu0
  %v8157 = vadd.f32 %v7988, %v8156
  %v8158 = vpop.f32.mrf.mxu0
  %v8159 = vadd.f32 %v7990, %v8158
  %8160 = vmatmul.bf16.gmra.mxu0 %v6022
  %v8161 = vpop.f32.mrf.mxu0
  %v8162 = vadd.f32 %v7993, %v8161
  %v8163 = vpop.f32.mrf.mxu0
  %v8164 = vadd.f32 %v7995, %v8163
  %8165 = vmatmul.bf16.gmra.mxu0 %v6023
  %v8166 = vpop.f32.mrf.mxu0
  %v8167 = vadd.f32 %v7998, %v8166
  %v8168 = vpop.f32.mrf.mxu0
  %v8169 = vadd.f32 %v8000, %v8168
  %8170 = vmatmul.bf16.gmra.mxu0 %v6024
  %v8171 = vpop.f32.mrf.mxu0
  %v8172 = vadd.f32 %v8003, %v8171
  %v8173 = vpop.f32.mrf.mxu0
  %v8174 = vadd.f32 %v8005, %v8173
  %8175 = vmatmul.bf16.gmra.mxu0 %v6025
  %v8176 = vpop.f32.mrf.mxu0
  %v8177 = vadd.f32 %v8008, %v8176
  %v8178 = vpop.f32.mrf.mxu0
  %v8179 = vadd.f32 %v8010, %v8178
  %8180 = vmatmul.bf16.gmra.mxu0 %v6026
  %v8181 = vpop.f32.mrf.mxu0
  %v8182 = vadd.f32 %v8013, %v8181
  %v8183 = vpop.f32.mrf.mxu0
  %v8184 = vadd.f32 %v8015, %v8183
  %8185 = vmatmul.bf16.gmra.mxu0 %v6027
  %v8186 = vpop.f32.mrf.mxu0
  %v8187 = vadd.f32 %v8018, %v8186
  %v8188 = vpop.f32.mrf.mxu0
  %v8189 = vadd.f32 %v8020, %v8188
  %8190 = vmatmul.bf16.gmra.mxu0 %v6028
  %v8191 = vpop.f32.mrf.mxu0
  %v8192 = vadd.f32 %v8023, %v8191
  %v8193 = vpop.f32.mrf.mxu0
  %v8194 = vadd.f32 %v8025, %v8193
  %8195 = vmatmul.bf16.gmra.mxu0 %v6029
  %v8196 = vpop.f32.mrf.mxu0
  %v8197 = vadd.f32 %v8028, %v8196
  %v8198 = vpop.f32.mrf.mxu0
  %v8199 = vadd.f32 %v8030, %v8198
  %8200 = vmatmul.bf16.gmra.mxu0 %v6030
  %v8201 = vpop.f32.mrf.mxu0
  %v8202 = vadd.f32 %v8033, %v8201
  %v8203 = vpop.f32.mrf.mxu0
  %v8204 = vadd.f32 %v8035, %v8203
  %8205 = vmatmul.bf16.gmra.mxu0 %v6031
  %v8206 = vpop.f32.mrf.mxu0
  %v8207 = vadd.f32 %v8038, %v8206
  %v8208 = vpop.f32.mrf.mxu0
  %v8209 = vadd.f32 %v8040, %v8208
  %8210 = vmatmul.bf16.gmra.mxu0 %v6032
  %v8211 = vpop.f32.mrf.mxu0
  %v8212 = vadd.f32 %v8043, %v8211
  %v8213 = vpop.f32.mrf.mxu0
  %v8214 = vadd.f32 %v8045, %v8213
  %8215 = vmatmul.bf16.gmra.mxu0 %v6033
  %v8216 = vpop.f32.mrf.mxu0
  %v8217 = vadd.f32 %v8048, %v8216
  %v8218 = vpop.f32.mrf.mxu0
  %v8219 = vadd.f32 %v8050, %v8218
  %8220 = vmatmul.bf16.gmra.mxu0 %v6034
  %v8221 = vpop.f32.mrf.mxu0
  %v8222 = vadd.f32 %v8053, %v8221
  %v8223 = vpop.f32.mrf.mxu0
  %v8224 = vadd.f32 %v8055, %v8223
  %8225 = vmatmul.bf16.gmra.mxu0 %v6100
  %v8226 = vpop.f32.mrf.mxu0
  %v8227 = vadd.f32 %v8058, %v8226
  %v8228 = vpop.f32.mrf.mxu0
  %v8229 = vadd.f32 %v8060, %v8228
  %8230 = vmatmul.bf16.gmra.mxu0 %v6136
  %v8231 = vpop.f32.mrf.mxu0
  %v8232 = vadd.f32 %v8063, %v8231
  %v8233 = vpop.f32.mrf.mxu0
  %v8234 = vadd.f32 %v8065, %v8233
  %8235 = vdwg.mxu0
  %v8236 = vadd.f32 %v8077, %v8079
  %v8237 = vadd.f32 %v8236, %v8082
  %v8238 = vadd.f32 %v8237, %v8084
  %v8239 = vadd.f32 %v8238, %v8087
  %v8240 = vadd.f32 %v8239, %v8089
  %v8241 = vadd.f32 %v8240, %v8092
  %v8242 = vadd.f32 %v8241, %v8094
  %v8243 = vadd.f32 %v8242, %v8097
  %v8244 = vadd.f32 %v8243, %v8099
  %v8245 = vadd.f32 %v8244, %v8102
  %v8246 = vadd.f32 %v8245, %v8104
  %v8247 = vadd.f32 %v8246, %v8107
  %v8248 = vadd.f32 %v8247, %v8109
  %v8249 = vadd.f32 %v8248, %v8112
  %v8250 = vadd.f32 %v8249, %v8114
  %v8251 = vadd.f32 %v8250, %v8117
  %v8252 = vadd.f32 %v8251, %v8119
  %v8253 = vadd.f32 %v8252, %v8122
  %v8254 = vadd.f32 %v8253, %v8124
  %v8255 = vadd.f32 %v8254, %v8127
  %v8256 = vadd.f32 %v8255, %v8129
  %v8257 = vadd.f32 %v8256, %v8132
  %v8258 = vadd.f32 %v8257, %v8134
  %v8259 = vadd.f32 %v8258, %v8137
  %v8260 = vadd.f32 %v8259, %v8139
  %v8261 = vadd.f32 %v8260, %v8142
  %v8262 = vadd.f32 %v8261, %v8144
  %v8263 = vadd.f32 %v8262, %v8147
  %v8264 = vadd.f32 %v8263, %v8149
  %v8265 = vadd.f32 %v8264, %v8152
  %v8266 = vadd.f32 %v8265, %v8154
  %v8267 = vadd.f32 %v8266, %v8157
  %v8268 = vadd.f32 %v8267, %v8159
  %v8269 = vadd.f32 %v8268, %v8162
  %v8270 = vadd.f32 %v8269, %v8164
  %v8271 = vadd.f32 %v8270, %v8167
  %v8272 = vadd.f32 %v8271, %v8169
  %v8273 = vadd.f32 %v8272, %v8172
  %v8274 = vadd.f32 %v8273, %v8174
  %v8275 = vadd.f32 %v8274, %v8177
  %v8276 = vadd.f32 %v8275, %v8179
  %v8277 = vadd.f32 %v8276, %v8182
  %v8278 = vadd.f32 %v8277, %v8184
  %v8279 = vadd.f32 %v8278, %v8187
  %v8280 = vadd.f32 %v8279, %v8189
  %v8281 = vadd.f32 %v8280, %v8192
  %v8282 = vadd.f32 %v8281, %v8194
  %v8283 = vadd.f32 %v8282, %v8197
  %v8284 = vadd.f32 %v8283, %v8199
  %v8285 = vadd.f32 %v8284, %v8202
  %v8286 = vadd.f32 %v8285, %v8204
  %v8287 = vadd.f32 %v8286, %v8207
  %v8288 = vadd.f32 %v8287, %v8209
  %v8289 = vadd.f32 %v8288, %v8212
  %v8290 = vadd.f32 %v8289, %v8214
  %v8291 = vadd.f32 %v8290, %v8217
  %v8292 = vadd.f32 %v8291, %v8219
  %v8293 = vadd.f32 %v8292, %v8222
  %v8294 = vadd.f32 %v8293, %v8224
  %v8295 = vadd.f32 %v8294, %v8227
  %v8296 = vadd.f32 %v8295, %v8229
  %v8297 = vadd.f32 %v8296, %v8232
  %v8298 = vadd.f32 %v8297, %v8234
  %v8299 = vrot.slane %v8298, 4
  %v8300 = vadd.f32 %v8298, %v8299
  %v8301 = vrot.slane %v8300, 2
  %v8302 = vadd.f32 %v8300, %v8301
  %v8303 = vrot.slane %v8302, 1
  %v8304 = vadd.f32 %v8302, %v8303
  %v8305 = vmul.f32 %v8304, 0.001953125
  %v8306 = vmul.f32 %v8077, %v8077
  %v8307 = vmul.f32 %v8079, %v8079
  %v8308 = vmul.f32 %v8082, %v8082
  %v8309 = vmul.f32 %v8084, %v8084
  %v8310 = vmul.f32 %v8087, %v8087
  %v8311 = vmul.f32 %v8089, %v8089
  %v8312 = vmul.f32 %v8092, %v8092
  %v8313 = vmul.f32 %v8094, %v8094
  %v8314 = vmul.f32 %v8097, %v8097
  %v8315 = vmul.f32 %v8099, %v8099
  %v8316 = vmul.f32 %v8102, %v8102
  %v8317 = vmul.f32 %v8104, %v8104
  %v8318 = vmul.f32 %v8107, %v8107
  %v8319 = vmul.f32 %v8109, %v8109
  %v8320 = vmul.f32 %v8112, %v8112
  %v8321 = vmul.f32 %v8114, %v8114
  %v8322 = vmul.f32 %v8117, %v8117
  %v8323 = vmul.f32 %v8119, %v8119
  %v8324 = vmul.f32 %v8122, %v8122
  %v8325 = vmul.f32 %v8124, %v8124
  %v8326 = vmul.f32 %v8127, %v8127
  %v8327 = vmul.f32 %v8129, %v8129
  %v8328 = vmul.f32 %v8132, %v8132
  %v8329 = vmul.f32 %v8134, %v8134
  %v8330 = vmul.f32 %v8137, %v8137
  %v8331 = vmul.f32 %v8139, %v8139
  %v8332 = vmul.f32 %v8142, %v8142
  %v8333 = vmul.f32 %v8144, %v8144
  %v8334 = vmul.f32 %v8147, %v8147
  %v8335 = vmul.f32 %v8149, %v8149
  %v8336 = vmul.f32 %v8152, %v8152
  %v8337 = vmul.f32 %v8154, %v8154
  %v8338 = vmul.f32 %v8157, %v8157
  %v8339 = vmul.f32 %v8159, %v8159
  %v8340 = vmul.f32 %v8162, %v8162
  %v8341 = vmul.f32 %v8164, %v8164
  %v8342 = vmul.f32 %v8167, %v8167
  %v8343 = vmul.f32 %v8169, %v8169
  %v8344 = vmul.f32 %v8172, %v8172
  %v8345 = vmul.f32 %v8174, %v8174
  %v8346 = vmul.f32 %v8177, %v8177
  %v8347 = vmul.f32 %v8179, %v8179
  %v8348 = vmul.f32 %v8182, %v8182
  %v8349 = vmul.f32 %v8184, %v8184
  %v8350 = vmul.f32 %v8187, %v8187
  %v8351 = vmul.f32 %v8189, %v8189
  %v8352 = vmul.f32 %v8192, %v8192
  %v8353 = vmul.f32 %v8194, %v8194
  %v8354 = vmul.f32 %v8197, %v8197
  %v8355 = vmul.f32 %v8199, %v8199
  %v8356 = vmul.f32 %v8202, %v8202
  %v8357 = vmul.f32 %v8204, %v8204
  %v8358 = vmul.f32 %v8207, %v8207
  %v8359 = vmul.f32 %v8209, %v8209
  %v8360 = vmul.f32 %v8212, %v8212
  %v8361 = vmul.f32 %v8214, %v8214
  %v8362 = vmul.f32 %v8217, %v8217
  %v8363 = vmul.f32 %v8219, %v8219
  %v8364 = vmul.f32 %v8222, %v8222
  %v8365 = vmul.f32 %v8224, %v8224
  %v8366 = vmul.f32 %v8227, %v8227
  %v8367 = vmul.f32 %v8229, %v8229
  %v8368 = vmul.f32 %v8232, %v8232
  %v8369 = vmul.f32 %v8234, %v8234
  %v8370 = vadd.f32 %v8306, %v8307
  %v8371 = vadd.f32 %v8370, %v8308
  %v8372 = vadd.f32 %v8371, %v8309
  %v8373 = vadd.f32 %v8372, %v8310
  %v8374 = vadd.f32 %v8373, %v8311
  %v8375 = vadd.f32 %v8374, %v8312
  %v8376 = vadd.f32 %v8375, %v8313
  %v8377 = vadd.f32 %v8376, %v8314
  %v8378 = vadd.f32 %v8377, %v8315
  %v8379 = vadd.f32 %v8378, %v8316
  %v8380 = vadd.f32 %v8379, %v8317
  %v8381 = vadd.f32 %v8380, %v8318
  %v8382 = vadd.f32 %v8381, %v8319
  %v8383 = vadd.f32 %v8382, %v8320
  %v8384 = vadd.f32 %v8383, %v8321
  %v8385 = vadd.f32 %v8384, %v8322
  %v8386 = vadd.f32 %v8385, %v8323
  %v8387 = vadd.f32 %v8386, %v8324
  %v8388 = vadd.f32 %v8387, %v8325
  %v8389 = vadd.f32 %v8388, %v8326
  %v8390 = vadd.f32 %v8389, %v8327
  %v8391 = vadd.f32 %v8390, %v8328
  %v8392 = vadd.f32 %v8391, %v8329
  %v8393 = vadd.f32 %v8392, %v8330
  %v8394 = vadd.f32 %v8393, %v8331
  %v8395 = vadd.f32 %v8394, %v8332
  %v8396 = vadd.f32 %v8395, %v8333
  %v8397 = vadd.f32 %v8396, %v8334
  %v8398 = vadd.f32 %v8397, %v8335
  %v8399 = vadd.f32 %v8398, %v8336
  %v8400 = vadd.f32 %v8399, %v8337
  %v8401 = vadd.f32 %v8400, %v8338
  %v8402 = vadd.f32 %v8401, %v8339
  %v8403 = vadd.f32 %v8402, %v8340
  %v8404 = vadd.f32 %v8403, %v8341
  %v8405 = vadd.f32 %v8404, %v8342
  %v8406 = vadd.f32 %v8405, %v8343
  %v8407 = vadd.f32 %v8406, %v8344
  %v8408 = vadd.f32 %v8407, %v8345
  %v8409 = vadd.f32 %v8408, %v8346
  %v8410 = vadd.f32 %v8409, %v8347
  %v8411 = vadd.f32 %v8410, %v8348
  %v8412 = vadd.f32 %v8411, %v8349
  %v8413 = vadd.f32 %v8412, %v8350
  %v8414 = vadd.f32 %v8413, %v8351
  %v8415 = vadd.f32 %v8414, %v8352
  %v8416 = vadd.f32 %v8415, %v8353
  %v8417 = vadd.f32 %v8416, %v8354
  %v8418 = vadd.f32 %v8417, %v8355
  %v8419 = vadd.f32 %v8418, %v8356
  %v8420 = vadd.f32 %v8419, %v8357
  %v8421 = vadd.f32 %v8420, %v8358
  %v8422 = vadd.f32 %v8421, %v8359
  %v8423 = vadd.f32 %v8422, %v8360
  %v8424 = vadd.f32 %v8423, %v8361
  %v8425 = vadd.f32 %v8424, %v8362
  %v8426 = vadd.f32 %v8425, %v8363
  %v8427 = vadd.f32 %v8426, %v8364
  %v8428 = vadd.f32 %v8427, %v8365
  %v8429 = vadd.f32 %v8428, %v8366
  %v8430 = vadd.f32 %v8429, %v8367
  %v8431 = vadd.f32 %v8430, %v8368
  %v8432 = vadd.f32 %v8431, %v8369
  %v8433 = vrot.slane %v8432, 4
  %v8434 = vadd.f32 %v8432, %v8433
  %v8435 = vrot.slane %v8434, 2
  %v8436 = vadd.f32 %v8434, %v8435
  %v8437 = vrot.slane %v8436, 1
  %v8438 = vadd.f32 %v8436, %v8437
  %v8439 = vmul.f32 %v8438, 0.001953125
  %v8440 = vmul.f32 %v8305, %v8305
  %v8441 = vsub.f32 %v8439, %v8440
  %v8442 = vsub.f32 %v8077, %v8305
  %v8443 = vsub.f32 %v8079, %v8305
  %v8444 = vsub.f32 %v8082, %v8305
  %v8445 = vsub.f32 %v8084, %v8305
  %v8446 = vsub.f32 %v8087, %v8305
  %v8447 = vsub.f32 %v8089, %v8305
  %v8448 = vsub.f32 %v8092, %v8305
  %v8449 = vsub.f32 %v8094, %v8305
  %v8450 = vsub.f32 %v8097, %v8305
  %v8451 = vsub.f32 %v8099, %v8305
  %v8452 = vsub.f32 %v8102, %v8305
  %v8453 = vsub.f32 %v8104, %v8305
  %v8454 = vsub.f32 %v8107, %v8305
  %v8455 = vsub.f32 %v8109, %v8305
  %v8456 = vsub.f32 %v8112, %v8305
  %v8457 = vsub.f32 %v8114, %v8305
  %v8458 = vsub.f32 %v8117, %v8305
  %v8459 = vsub.f32 %v8119, %v8305
  %v8460 = vsub.f32 %v8122, %v8305
  %v8461 = vsub.f32 %v8124, %v8305
  %v8462 = vsub.f32 %v8127, %v8305
  %v8463 = vsub.f32 %v8129, %v8305
  %v8464 = vsub.f32 %v8132, %v8305
  %v8465 = vsub.f32 %v8134, %v8305
  %v8466 = vsub.f32 %v8137, %v8305
  %v8467 = vsub.f32 %v8139, %v8305
  %v8468 = vsub.f32 %v8142, %v8305
  %v8469 = vsub.f32 %v8144, %v8305
  %v8470 = vsub.f32 %v8147, %v8305
  %v8471 = vsub.f32 %v8149, %v8305
  %v8472 = vsub.f32 %v8152, %v8305
  %v8473 = vsub.f32 %v8154, %v8305
  %v8474 = vsub.f32 %v8157, %v8305
  %v8475 = vsub.f32 %v8159, %v8305
  %v8476 = vsub.f32 %v8162, %v8305
  %v8477 = vsub.f32 %v8164, %v8305
  %v8478 = vsub.f32 %v8167, %v8305
  %v8479 = vsub.f32 %v8169, %v8305
  %v8480 = vsub.f32 %v8172, %v8305
  %v8481 = vsub.f32 %v8174, %v8305
  %v8482 = vsub.f32 %v8177, %v8305
  %v8483 = vsub.f32 %v8179, %v8305
  %v8484 = vsub.f32 %v8182, %v8305
  %v8485 = vsub.f32 %v8184, %v8305
  %v8486 = vsub.f32 %v8187, %v8305
  %v8487 = vsub.f32 %v8189, %v8305
  %v8488 = vsub.f32 %v8192, %v8305
  %v8489 = vsub.f32 %v8194, %v8305
  %v8490 = vsub.f32 %v8197, %v8305
  %v8491 = vsub.f32 %v8199, %v8305
  %v8492 = vsub.f32 %v8202, %v8305
  %v8493 = vsub.f32 %v8204, %v8305
  %v8494 = vsub.f32 %v8207, %v8305
  %v8495 = vsub.f32 %v8209, %v8305
  %v8496 = vsub.f32 %v8212, %v8305
  %v8497 = vsub.f32 %v8214, %v8305
  %v8498 = vsub.f32 %v8217, %v8305
  %v8499 = vsub.f32 %v8219, %v8305
  %v8500 = vsub.f32 %v8222, %v8305
  %v8501 = vsub.f32 %v8224, %v8305
  %v8502 = vsub.f32 %v8227, %v8305
  %v8503 = vsub.f32 %v8229, %v8305
  %v8504 = vsub.f32 %v8232, %v8305
  %v8505 = vsub.f32 %v8234, %v8305
  %v8506 = vadd.f32 %v8441, 1e-05
  %v8507 = vrsqrt.pop %v8506
  %v8508 = vmul.f32 %v8507, %v8506
  %v8509 = vmul.f32 %v8508, %v8507
  %v8510 = vmul.f32 0.5, %v8509
  %v8511 = vsub.f32 1.5, %v8510
  %v8512 = vmul.f32 %v8507, %v8511
  %vm8513 = vweird.f32 %v8506
  %vm8514 = vweird.f32 %v8507
  %vm8515 = vmor %vm8513, %vm8514
  %v8516 = vsel %vm8515, %v8507, %v8512
  %v8517 = vmul.f32 %v8442, %v8516
  %v8518 = vmul.f32 %v8443, %v8516
  %v8519 = vmul.f32 %v8444, %v8516
  %v8520 = vmul.f32 %v8445, %v8516
  %v8521 = vmul.f32 %v8446, %v8516
  %v8522 = vmul.f32 %v8447, %v8516
  %v8523 = vmul.f32 %v8448, %v8516
  %v8524 = vmul.f32 %v8449, %v8516
  %v8525 = vmul.f32 %v8450, %v8516
  %v8526 = vmul.f32 %v8451, %v8516
  %v8527 = vmul.f32 %v8452, %v8516
  %v8528 = vmul.f32 %v8453, %v8516
  %v8529 = vmul.f32 %v8454, %v8516
  %v8530 = vmul.f32 %v8455, %v8516
  %v8531 = vmul.f32 %v8456, %v8516
  %v8532 = vmul.f32 %v8457, %v8516
  %v8533 = vmul.f32 %v8458, %v8516
  %v8534 = vmul.f32 %v8459, %v8516
  %v8535 = vmul.f32 %v8460, %v8516
  %v8536 = vmul.f32 %v8461, %v8516
  %v8537 = vmul.f32 %v8462, %v8516
  %v8538 = vmul.f32 %v8463, %v8516
  %v8539 = vmul.f32 %v8464, %v8516
  %v8540 = vmul.f32 %v8465, %v8516
  %v8541 = vmul.f32 %v8466, %v8516
  %v8542 = vmul.f32 %v8467, %v8516
  %v8543 = vmul.f32 %v8468, %v8516
  %v8544 = vmul.f32 %v8469, %v8516
  %v8545 = vmul.f32 %v8470, %v8516
  %v8546 = vmul.f32 %v8471, %v8516
  %v8547 = vmul.f32 %v8472, %v8516
  %v8548 = vmul.f32 %v8473, %v8516
  %v8549 = vmul.f32 %v8474, %v8516
  %v8550 = vmul.f32 %v8475, %v8516
  %v8551 = vmul.f32 %v8476, %v8516
  %v8552 = vmul.f32 %v8477, %v8516
  %v8553 = vmul.f32 %v8478, %v8516
  %v8554 = vmul.f32 %v8479, %v8516
  %v8555 = vmul.f32 %v8480, %v8516
  %v8556 = vmul.f32 %v8481, %v8516
  %v8557 = vmul.f32 %v8482, %v8516
  %v8558 = vmul.f32 %v8483, %v8516
  %v8559 = vmul.f32 %v8484, %v8516
  %v8560 = vmul.f32 %v8485, %v8516
  %v8561 = vmul.f32 %v8486, %v8516
  %v8562 = vmul.f32 %v8487, %v8516
  %v8563 = vmul.f32 %v8488, %v8516
  %v8564 = vmul.f32 %v8489, %v8516
  %v8565 = vmul.f32 %v8490, %v8516
  %v8566 = vmul.f32 %v8491, %v8516
  %v8567 = vmul.f32 %v8492, %v8516
  %v8568 = vmul.f32 %v8493, %v8516
  %v8569 = vmul.f32 %v8494, %v8516
  %v8570 = vmul.f32 %v8495, %v8516
  %v8571 = vmul.f32 %v8496, %v8516
  %v8572 = vmul.f32 %v8497, %v8516
  %v8573 = vmul.f32 %v8498, %v8516
  %v8574 = vmul.f32 %v8499, %v8516
  %v8575 = vmul.f32 %v8500, %v8516
  %v8576 = vmul.f32 %v8501, %v8516
  %v8577 = vmul.f32 %v8502, %v8516
  %v8578 = vmul.f32 %v8503, %v8516
  %v8579 = vmul.f32 %v8504, %v8516
  %v8580 = vmul.f32 %v8505, %v8516
  %v8581 = vld [vmem:[%s5] sm:$0x1]
  %v8583 = vperm.slane %v8581, 0
  %v8585 = vmul.f32 %v8517, %v8583
  %v8586 = vmul.f32 %v8518, %v8583
  %v8587 = vmul.f32 %v8519, %v8583
  %v8588 = vmul.f32 %v8520, %v8583
  %v8589 = vmul.f32 %v8521, %v8583
  %v8590 = vmul.f32 %v8522, %v8583
  %v8591 = vmul.f32 %v8523, %v8583
  %v8592 = vmul.f32 %v8524, %v8583
  %v8593 = vmul.f32 %v8525, %v8583
  %v8594 = vmul.f32 %v8526, %v8583
  %v8595 = vmul.f32 %v8527, %v8583
  %v8596 = vmul.f32 %v8528, %v8583
  %v8597 = vmul.f32 %v8529, %v8583
  %v8598 = vmul.f32 %v8530, %v8583
  %v8599 = vmul.f32 %v8531, %v8583
  %v8600 = vmul.f32 %v8532, %v8583
  %v8601 = vmul.f32 %v8533, %v8583
  %v8602 = vmul.f32 %v8534, %v8583
  %v8603 = vmul.f32 %v8535, %v8583
  %v8604 = vmul.f32 %v8536, %v8583
  %v8605 = vmul.f32 %v8537, %v8583
  %v8606 = vmul.f32 %v8538, %v8583
  %v8607 = vmul.f32 %v8539, %v8583
  %v8608 = vmul.f32 %v8540, %v8583
  %v8609 = vmul.f32 %v8541, %v8583
  %v8610 = vmul.f32 %v8542, %v8583
  %v8611 = vmul.f32 %v8543, %v8583
  %v8612 = vmul.f32 %v8544, %v8583
  %v8613 = vmul.f32 %v8545, %v8583
  %v8614 = vmul.f32 %v8546, %v8583
  %v8615 = vmul.f32 %v8547, %v8583
  %v8616 = vmul.f32 %v8548, %v8583
  %v8617 = vmul.f32 %v8549, %v8583
  %v8618 = vmul.f32 %v8550, %v8583
  %v8619 = vmul.f32 %v8551, %v8583
  %v8620 = vmul.f32 %v8552, %v8583
  %v8621 = vmul.f32 %v8553, %v8583
  %v8622 = vmul.f32 %v8554, %v8583
  %v8623 = vmul.f32 %v8555, %v8583
  %v8624 = vmul.f32 %v8556, %v8583
  %v8625 = vmul.f32 %v8557, %v8583
  %v8626 = vmul.f32 %v8558, %v8583
  %v8627 = vmul.f32 %v8559, %v8583
  %v8628 = vmul.f32 %v8560, %v8583
  %v8629 = vmul.f32 %v8561, %v8583
  %v8630 = vmul.f32 %v8562, %v8583
  %v8631 = vmul.f32 %v8563, %v8583
  %v8632 = vmul.f32 %v8564, %v8583
  %v8633 = vmul.f32 %v8565, %v8583
  %v8634 = vmul.f32 %v8566, %v8583
  %v8635 = vmul.f32 %v8567, %v8583
  %v8636 = vmul.f32 %v8568, %v8583
  %v8637 = vmul.f32 %v8569, %v8583
  %v8638 = vmul.f32 %v8570, %v8583
  %v8639 = vmul.f32 %v8571, %v8583
  %v8640 = vmul.f32 %v8572, %v8583
  %v8641 = vmul.f32 %v8573, %v8583
  %v8642 = vmul.f32 %v8574, %v8583
  %v8643 = vmul.f32 %v8575, %v8583
  %v8644 = vmul.f32 %v8576, %v8583
  %v8645 = vmul.f32 %v8577, %v8583
  %v8646 = vmul.f32 %v8578, %v8583
  %v8647 = vmul.f32 %v8579, %v8583
  %v8648 = vmul.f32 %v8580, %v8583
  %v8649 = vld [vmem:[%s6] sm:$0x1]
  %v8651 = vperm.slane %v8649, 0
  %v8653 = vadd.f32 %v8585, %v8651
  %v8654 = vadd.f32 %v8586, %v8651
  %v8655 = vadd.f32 %v8587, %v8651
  %v8656 = vadd.f32 %v8588, %v8651
  %v8657 = vadd.f32 %v8589, %v8651
  %v8658 = vadd.f32 %v8590, %v8651
  %v8659 = vadd.f32 %v8591, %v8651
  %v8660 = vadd.f32 %v8592, %v8651
  %v8661 = vadd.f32 %v8593, %v8651
  %v8662 = vadd.f32 %v8594, %v8651
  %v8663 = vadd.f32 %v8595, %v8651
  %v8664 = vadd.f32 %v8596, %v8651
  %v8665 = vadd.f32 %v8597, %v8651
  %v8666 = vadd.f32 %v8598, %v8651
  %v8667 = vadd.f32 %v8599, %v8651
  %v8668 = vadd.f32 %v8600, %v8651
  %v8669 = vadd.f32 %v8601, %v8651
  %v8670 = vadd.f32 %v8602, %v8651
  %v8671 = vadd.f32 %v8603, %v8651
  %v8672 = vadd.f32 %v8604, %v8651
  %v8673 = vadd.f32 %v8605, %v8651
  %v8674 = vadd.f32 %v8606, %v8651
  %v8675 = vadd.f32 %v8607, %v8651
  %v8676 = vadd.f32 %v8608, %v8651
  %v8677 = vadd.f32 %v8609, %v8651
  %v8678 = vadd.f32 %v8610, %v8651
  %v8679 = vadd.f32 %v8611, %v8651
  %v8680 = vadd.f32 %v8612, %v8651
  %v8681 = vadd.f32 %v8613, %v8651
  %v8682 = vadd.f32 %v8614, %v8651
  %v8683 = vadd.f32 %v8615, %v8651
  %v8684 = vadd.f32 %v8616, %v8651
  %v8685 = vadd.f32 %v8617, %v8651
  %v8686 = vadd.f32 %v8618, %v8651
  %v8687 = vadd.f32 %v8619, %v8651
  %v8688 = vadd.f32 %v8620, %v8651
  %v8689 = vadd.f32 %v8621, %v8651
  %v8690 = vadd.f32 %v8622, %v8651
  %v8691 = vadd.f32 %v8623, %v8651
  %v8692 = vadd.f32 %v8624, %v8651
  %v8693 = vadd.f32 %v8625, %v8651
  %v8694 = vadd.f32 %v8626, %v8651
  %v8695 = vadd.f32 %v8627, %v8651
  %v8696 = vadd.f32 %v8628, %v8651
  %v8697 = vadd.f32 %v8629, %v8651
  %v8698 = vadd.f32 %v8630, %v8651
  %v8699 = vadd.f32 %v8631, %v8651
  %v8700 = vadd.f32 %v8632, %v8651
  %v8701 = vadd.f32 %v8633, %v8651
  %v8702 = vadd.f32 %v8634, %v8651
  %v8703 = vadd.f32 %v8635, %v8651
  %v8704 = vadd.f32 %v8636, %v8651
  %v8705 = vadd.f32 %v8637, %v8651
  %v8706 = vadd.f32 %v8638, %v8651
  %v8707 = vadd.f32 %v8639, %v8651
  %v8708 = vadd.f32 %v8640, %v8651
  %v8709 = vadd.f32 %v8641, %v8651
  %v8710 = vadd.f32 %v8642, %v8651
  %v8711 = vadd.f32 %v8643, %v8651
  %v8712 = vadd.f32 %v8644, %v8651
  %v8713 = vadd.f32 %v8645, %v8651
  %v8714 = vadd.f32 %v8646, %v8651
  %v8715 = vadd.f32 %v8647, %v8651
  %v8716 = vadd.f32 %v8648, %v8651
  %v8717 = vadd.f32 %v8653, %v134
  %v8718 = vadd.f32 %v8654, %v135
  %v8719 = vadd.f32 %v8655, %v136
  %v8720 = vadd.f32 %v8656, %v137
  %v8721 = vadd.f32 %v8657, %v138
  %v8722 = vadd.f32 %v8658, %v139
  %v8723 = vadd.f32 %v8659, %v140
  %v8724 = vadd.f32 %v8660, %v141
  %v8725 = vadd.f32 %v8661, %v142
  %v8726 = vadd.f32 %v8662, %v143
  %v8727 = vadd.f32 %v8663, %v144
  %v8728 = vadd.f32 %v8664, %v145
  %v8729 = vadd.f32 %v8665, %v146
  %v8730 = vadd.f32 %v8666, %v147
  %v8731 = vadd.f32 %v8667, %v148
  %v8732 = vadd.f32 %v8668, %v149
  %v8733 = vadd.f32 %v8669, %v150
  %v8734 = vadd.f32 %v8670, %v151
  %v8735 = vadd.f32 %v8671, %v152
  %v8736 = vadd.f32 %v8672, %v153
  %v8737 = vadd.f32 %v8673, %v154
  %v8738 = vadd.f32 %v8674, %v155
  %v8739 = vadd.f32 %v8675, %v156
  %v8740 = vadd.f32 %v8676, %v157
  %v8741 = vadd.f32 %v8677, %v158
  %v8742 = vadd.f32 %v8678, %v159
  %v8743 = vadd.f32 %v8679, %v160
  %v8744 = vadd.f32 %v8680, %v161
  %v8745 = vadd.f32 %v8681, %v162
  %v8746 = vadd.f32 %v8682, %v163
  %v8747 = vadd.f32 %v8683, %v164
  %v8748 = vadd.f32 %v8684, %v165
  %v8749 = vadd.f32 %v8685, %v166
  %v8750 = vadd.f32 %v8686, %v167
  %v8751 = vadd.f32 %v8687, %v168
  %v8752 = vadd.f32 %v8688, %v169
  %v8753 = vadd.f32 %v8689, %v170
  %v8754 = vadd.f32 %v8690, %v171
  %v8755 = vadd.f32 %v8691, %v172
  %v8756 = vadd.f32 %v8692, %v173
  %v8757 = vadd.f32 %v8693, %v174
  %v8758 = vadd.f32 %v8694, %v175
  %v8759 = vadd.f32 %v8695, %v176
  %v8760 = vadd.f32 %v8696, %v177
  %v8761 = vadd.f32 %v8697, %v178
  %v8762 = vadd.f32 %v8698, %v179
  %v8763 = vadd.f32 %v8699, %v180
  %v8764 = vadd.f32 %v8700, %v181
  %v8765 = vadd.f32 %v8701, %v182
  %v8766 = vadd.f32 %v8702, %v183
  %v8767 = vadd.f32 %v8703, %v184
  %v8768 = vadd.f32 %v8704, %v185
  %v8769 = vadd.f32 %v8705, %v186
  %v8770 = vadd.f32 %v8706, %v187
  %v8771 = vadd.f32 %v8707, %v188
  %v8772 = vadd.f32 %v8708, %v189
  %v8773 = vadd.f32 %v8709, %v190
  %v8774 = vadd.f32 %v8710, %v191
  %v8775 = vadd.f32 %v8711, %v192
  %v8776 = vadd.f32 %v8712, %v193
  %v8777 = vadd.f32 %v8713, %v194
  %v8778 = vadd.f32 %v8714, %v195
  %v8779 = vadd.f32 %v8715, %v196
  %v8780 = vadd.f32 %v8716, %v197
  %v8781 = vmax.f32 %v8717, 0.0
  %v8782 = vmax.f32 %v8718, 0.0
  %v8783 = vmax.f32 %v8719, 0.0
  %v8784 = vmax.f32 %v8720, 0.0
  %v8785 = vmax.f32 %v8721, 0.0
  %v8786 = vmax.f32 %v8722, 0.0
  %v8787 = vmax.f32 %v8723, 0.0
  %v8788 = vmax.f32 %v8724, 0.0
  %v8789 = vmax.f32 %v8725, 0.0
  %v8790 = vmax.f32 %v8726, 0.0
  %v8791 = vmax.f32 %v8727, 0.0
  %v8792 = vmax.f32 %v8728, 0.0
  %v8793 = vmax.f32 %v8729, 0.0
  %v8794 = vmax.f32 %v8730, 0.0
  %v8795 = vmax.f32 %v8731, 0.0
  %v8796 = vmax.f32 %v8732, 0.0
  %v8797 = vmax.f32 %v8733, 0.0
  %v8798 = vmax.f32 %v8734, 0.0
  %v8799 = vmax.f32 %v8735, 0.0
  %v8800 = vmax.f32 %v8736, 0.0
  %v8801 = vmax.f32 %v8737, 0.0
  %v8802 = vmax.f32 %v8738, 0.0
  %v8803 = vmax.f32 %v8739, 0.0
  %v8804 = vmax.f32 %v8740, 0.0
  %v8805 = vmax.f32 %v8741, 0.0
  %v8806 = vmax.f32 %v8742, 0.0
  %v8807 = vmax.f32 %v8743, 0.0
  %v8808 = vmax.f32 %v8744, 0.0
  %v8809 = vmax.f32 %v8745, 0.0
  %v8810 = vmax.f32 %v8746, 0.0
  %v8811 = vmax.f32 %v8747, 0.0
  %v8812 = vmax.f32 %v8748, 0.0
  %v8813 = vmax.f32 %v8749, 0.0
  %v8814 = vmax.f32 %v8750, 0.0
  %v8815 = vmax.f32 %v8751, 0.0
  %v8816 = vmax.f32 %v8752, 0.0
  %v8817 = vmax.f32 %v8753, 0.0
  %v8818 = vmax.f32 %v8754, 0.0
  %v8819 = vmax.f32 %v8755, 0.0
  %v8820 = vmax.f32 %v8756, 0.0
  %v8821 = vmax.f32 %v8757, 0.0
  %v8822 = vmax.f32 %v8758, 0.0
  %v8823 = vmax.f32 %v8759, 0.0
  %v8824 = vmax.f32 %v8760, 0.0
  %v8825 = vmax.f32 %v8761, 0.0
  %v8826 = vmax.f32 %v8762, 0.0
  %v8827 = vmax.f32 %v8763, 0.0
  %v8828 = vmax.f32 %v8764, 0.0
  %v8829 = vmax.f32 %v8765, 0.0
  %v8830 = vmax.f32 %v8766, 0.0
  %v8831 = vmax.f32 %v8767, 0.0
  %v8832 = vmax.f32 %v8768, 0.0
  %v8833 = vmax.f32 %v8769, 0.0
  %v8834 = vmax.f32 %v8770, 0.0
  %v8835 = vmax.f32 %v8771, 0.0
  %v8836 = vmax.f32 %v8772, 0.0
  %v8837 = vmax.f32 %v8773, 0.0
  %v8838 = vmax.f32 %v8774, 0.0
  %v8839 = vmax.f32 %v8775, 0.0
  %v8840 = vmax.f32 %v8776, 0.0
  %v8841 = vmax.f32 %v8777, 0.0
  %v8842 = vmax.f32 %v8778, 0.0
  %v8843 = vmax.f32 %v8779, 0.0
  %v8844 = vmax.f32 %v8780, 0.0
  %8845 = vst [vmem:[%s7] sm:$0xff] %v8781
  %8846 = vst [vmem:[%s7 + $0x8] sm:$0xff] %v8782
  %8847 = vst [vmem:[%s7 + $0x10] sm:$0xff] %v8783
  %8848 = vst [vmem:[%s7 + $0x18] sm:$0xff] %v8784
  %8849 = vst [vmem:[%s7 + $0x20] sm:$0xff] %v8785
  %8850 = vst [vmem:[%s7 + $0x28] sm:$0xff] %v8786
  %8851 = vst [vmem:[%s7 + $0x30] sm:$0xff] %v8787
  %8852 = vst [vmem:[%s7 + $0x38] sm:$0xff] %v8788
  %8853 = vst [vmem:[%s7 + $0x40] sm:$0xff] %v8789
  %8854 = vst [vmem:[%s7 + $0x48] sm:$0xff] %v8790
  %8855 = vst [vmem:[%s7 + $0x50] sm:$0xff] %v8791
  %8856 = vst [vmem:[%s7 + $0x58] sm:$0xff] %v8792
  %8857 = vst [vmem:[%s7 + $0x60] sm:$0xff] %v8793
  %8858 = vst [vmem:[%s7 + $0x68] sm:$0xff] %v8794
  %8859 = vst [vmem:[%s7 + $0x70] sm:$0xff] %v8795
  %8860 = vst [vmem:[%s7 + $0x78] sm:$0xff] %v8796
  %8861 = vst [vmem:[%s7 + $0x80] sm:$0xff] %v8797
  %8862 = vst [vmem:[%s7 + $0x88] sm:$0xff] %v8798
  %8863 = vst [vmem:[%s7 + $0x90] sm:$0xff] %v8799
  %8864 = vst [vmem:[%s7 + $0x98] sm:$0xff] %v8800
  %8865 = vst [vmem:[%s7 + $0xa0] sm:$0xff] %v8801
  %8866 = vst [vmem:[%s7 + $0xa8] sm:$0xff] %v8802
  %8867 = vst [vmem:[%s7 + $0xb0] sm:$0xff] %v8803
  %8868 = vst [vmem:[%s7 + $0xb8] sm:$0xff] %v8804
  %8869 = vst [vmem:[%s7 + $0xc0] sm:$0xff] %v8805
  %8870 = vst [vmem:[%s7 + $0xc8] sm:$0xff] %v8806
  %8871 = vst [vmem:[%s7 + $0xd0] sm:$0xff] %v8807
  %8872 = vst [vmem:[%s7 + $0xd8] sm:$0xff] %v8808
  %8873 = vst [vmem:[%s7 + $0xe0] sm:$0xff] %v8809
  %8874 = vst [vmem:[%s7 + $0xe8] sm:$0xff] %v8810
  %8875 = vst [vmem:[%s7 + $0xf0] sm:$0xff] %v8811
  %8876 = vst [vmem:[%s7 + $0xf8] sm:$0xff] %v8812
  %8877 = vst [vmem:[%s7 + $0x100] sm:$0xff] %v8813
  %8878 = vst [vmem:[%s7 + $0x108] sm:$0xff] %v8814
  %8879 = vst [vmem:[%s7 + $0x110] sm:$0xff] %v8815
  %8880 = vst [vmem:[%s7 + $0x118] sm:$0xff] %v8816
  %8881 = vst [vmem:[%s7 + $0x120] sm:$0xff] %v8817
  %8882 = vst [vmem:[%s7 + $0x128] sm:$0xff] %v8818
  %8883 = vst [vmem:[%s7 + $0x130] sm:$0xff] %v8819
  %8884 = vst [vmem:[%s7 + $0x138] sm:$0xff] %v8820
  %8885 = vst [vmem:[%s7 + $0x140] sm:$0xff] %v8821
  %8886 = vst [vmem:[%s7 + $0x148] sm:$0xff] %v8822
  %8887 = vst [vmem:[%s7 + $0x150] sm:$0xff] %v8823
  %8888 = vst [vmem:[%s7 + $0x158] sm:$0xff] %v8824
  %8889 = vst [vmem:[%s7 + $0x160] sm:$0xff] %v8825
  %8890 = vst [vmem:[%s7 + $0x168] sm:$0xff] %v8826
  %8891 = vst [vmem:[%s7 + $0x170] sm:$0xff] %v8827
  %8892 = vst [vmem:[%s7 + $0x178] sm:$0xff] %v8828
  %8893 = vst [vmem:[%s7 + $0x180] sm:$0xff] %v8829
  %8894 = vst [vmem:[%s7 + $0x188] sm:$0xff] %v8830
  %8895 = vst [vmem:[%s7 + $0x190] sm:$0xff] %v8831
  %8896 = vst [vmem:[%s7 + $0x198] sm:$0xff] %v8832
  %8897 = vst [vmem:[%s7 + $0x1a0] sm:$0xff] %v8833
  %8898 = vst [vmem:[%s7 + $0x1a8] sm:$0xff] %v8834
  %8899 = vst [vmem:[%s7 + $0x1b0] sm:$0xff] %v8835
  %8900 = vst [vmem:[%s7 + $0x1b8] sm:$0xff] %v8836
  %8901 = vst [vmem:[%s7 + $0x1c0] sm:$0xff] %v8837
  %8902 = vst [vmem:[%s7 + $0x1c8] sm:$0xff] %v8838
  %8903 = vst [vmem:[%s7 + $0x1d0] sm:$0xff] %v8839
  %8904 = vst [vmem:[%s7 + $0x1d8] sm:$0xff] %v8840
  %8905 = vst [vmem:[%s7 + $0x1e0] sm:$0xff] %v8841
  %8906 = vst [vmem:[%s7 + $0x1e8] sm:$0xff] %v8842
  %8907 = vst [vmem:[%s7 + $0x1f0] sm:$0xff] %v8843
  %8908 = vst [vmem:[%s7 + $0x1f8] sm:$0xff] %v8844
  // Predicated region
  $region30: #{basic_block_forward.1} parent=0 // pred_check
    _
  $region31: #{basic_block_forward.1} parent=0 // pred_check_branch
    %8910 = sbr.rel (0) target = $region33
  $region32: #{basic_block_forward.1} parent=0 // pred_region
    _
  $region33: #{basic_block_forward.1} parent=0 // pred_fallthru
    _
  // Predicated region
  $region34: #{basic_block_forward.1} parent=0 // pred_check
    _
  $region35: #{basic_block_forward.1} parent=0 // pred_check_branch
    %8912 = sbr.rel (0) target = $region37
  $region36: #{basic_block_forward.1} parent=0 // pred_region
    _
  $region37: #{basic_block_forward.1} parent=0 // pred_fallthru
    _

</llo_original>
